<compile_context>
chip_gen: v6e
topology: v6e:2x2x1
jax: 0.10.0
libtpu: 0.0.40
codegen_flags: <defaults>
</compile_context>

<pallas_src>
import functools

import jax
import jax.numpy as jnp
from jax.experimental import pallas as pl
from jax.experimental.pallas import tpu as pltpu


# --------------------------------------------------------------------------- helpers
def _round_up(x, m):
    return (x + m - 1) // m * m


def _pick_tile(total, cap=512):
    """Largest lane-dense tile (<= cap) that divides `total`."""
    if total <= cap:
        return total
    for cand in (cap, 256, 128):
        if total % cand == 0:
            return cand
    return total


def _cparams(*sem):
    return pltpu.CompilerParams(
        dimension_semantics=sem,
        vmem_limit_bytes=48 * 1024 * 1024,
    )


# --------------------------------------------------------------------------- weights
def _pack_convt_weight(w, c4p):
    """PyTorch ConvTranspose2d weight (Cin, Cout, 5, 5) -> phase-packed (9*Cin, c4p).

    Row index   : (dy*3 + dx)*Cin + cin  with dy, dx in {0,1,2} (3x3 shifted taps of the
                  1-pixel zero-padded input).
    Column index: cout*4 + (py*2 + px)   with (py, px) the output sub-pixel phase
                  (out[2m+py, 2n+px]).  Taps that do not hit a phase are 0; columns
                  beyond 4*Cout are zero padding so the lane dim is a 128-multiple.
    """
    Cin, Cout = w.shape[0], w.shape[1]
    zeros = jnp.zeros((Cin, Cout), w.dtype)
    row_blocks = []
    for dy in range(3):
        for dx in range(3):
            phase_slices = []
            for py in range(2):
                ky = 4 - 2 * dy if py == 0 else 5 - 2 * dy
                for px in range(2):
                    kx = 4 - 2 * dx if px == 0 else 5 - 2 * dx
                    if 0 <= ky <= 4 and 0 <= kx <= 4:
                        phase_slices.append(w[:, :, ky, kx])
                    else:
                        phase_slices.append(zeros)
            tap = jnp.stack(phase_slices, axis=-1)          # (Cin, Cout, 4)
            row_blocks.append(tap.reshape(Cin, 4 * Cout))   # cout-major, phase-minor
    wp = jnp.concatenate(row_blocks, axis=0)                # (9*Cin, 4*Cout)
    return jnp.pad(wp, ((0, 0), (0, c4p - 4 * Cout)))


# --------------------------------------------------------------------------- kernels
def _fc_bn_lrelu_kernel(x_ref, w_ref, g_ref, b_ref, out_ref):
    """Linear (no bias) + BatchNorm1d (batch stats, two-pass variance) + LeakyReLU."""
    y = jnp.dot(x_ref[...], w_ref[...], preferred_element_type=jnp.float32)  # (N, TD)
    mean = jnp.mean(y, axis=0, keepdims=True)
    var = jnp.mean(jnp.square(y - mean), axis=0, keepdims=True)              # biased
    scale = g_ref[...] * jax.lax.rsqrt(var + 1e-5)
    shift = b_ref[...] - mean * scale
    out = y * scale + shift
    out_ref[...] = jnp.where(out > 0, out, 0.2 * out).astype(out_ref.dtype)


def _conv_core(x_ref, w_ref, sc_ref, sh_ref, prep_input):
    """Shared transposed-conv core for one image / one cout-block.

    x_ref : (1, H+2, W+2, Cin) bf16  (zero halo; raw previous-layer acc if prep_input)
    w_ref : (9*Cin, TC4)       bf16  phase-packed weight block
    sc/sh : (1, Cin)           f32   previous layer's BN scale/shift (prep_input only)
    returns (H*W, TC4) f32 accumulator.
    """
    _, Hp, Wp, Cin = x_ref.shape
    H, W = Hp - 2, Wp - 2
    TC4 = w_ref.shape[1]

    if prep_input:
        # fused input prologue: BatchNorm (precomputed scale/shift) + LeakyReLU(0.2),
        # halo forced back to zero so the transposed-conv decomposition stays exact.
        xf = x_ref[0].astype(jnp.float32)
        a = xf * sc_ref[...].reshape(1, 1, Cin) + sh_ref[...].reshape(1, 1, Cin)
        a = jnp.where(a > 0, a, 0.2 * a)
        row = jax.lax.broadcasted_iota(jnp.int32, (Hp, Wp, 1), 0)
        col = jax.lax.broadcasted_iota(jnp.int32, (Hp, Wp, 1), 1)
        interior = (row >= 1) & (row <= H) & (col >= 1) & (col <= W)
        x = jnp.where(interior, a, 0.0).astype(jnp.bfloat16)
    else:
        x = x_ref[0]                                          # already activated, bf16

    if Cin >= 128:
        # 9 accumulating matmuls (K = Cin already fills the MXU; no materialized im2col)
        acc = jnp.zeros((H * W, TC4), jnp.float32)
        t = 0
        for dy in range(3):
            for dx in range(3):
                lhs = x[dy:dy + H, dx:dx + W, :].reshape(H * W, Cin)
                acc = acc + jnp.dot(lhs, w_ref[t * Cin:(t + 1) * Cin, :],
                                    preferred_element_type=jnp.float32)
                t += 1
        return acc

    # small Cin: fused single matmul with K = 9*Cin (per-image operand, stays tiny)
    taps = []
    for dy in range(3):
        for dx in range(3):
            taps.append(x[dy:dy + H, dx:dx + W, :].reshape(H * W, Cin))
    cols = jnp.concatenate(taps, axis=1)                      # (H*W, 9*Cin) bf16
    return jnp.dot(cols, w_ref[...], preferred_element_type=jnp.float32)


def _convt_bn_kernel(x_ref, w_ref, sc_ref, sh_ref, acc_ref, s1_ref, s2_ref, *, prep_input):
    """ConvTranspose2d block: emit raw (bf16) accumulator + partial BN sums."""
    acc = _conv_core(x_ref, w_ref, sc_ref, sh_ref, prep_input)
    # quantize once, then take statistics of exactly the values the next layer will read
    accq = acc.astype(jnp.bfloat16).astype(jnp.float32)
    acc_ref[0] = accq.astype(jnp.bfloat16)
    s1_ref[0] = jnp.sum(accq, axis=0, keepdims=True)
    s2_ref[0] = jnp.sum(accq * accq, axis=0, keepdims=True)


def _convt_tanh_kernel(x_ref, w_ref, sc_ref, sh_ref, out_ref, *, prep_input):
    """Final Gz layer: ConvTranspose2d + Tanh (input prologue = conv4's BN+LeakyReLU)."""
    acc = _conv_core(x_ref, w_ref, sc_ref, sh_ref, prep_input)
    out_ref[0] = jnp.tanh(acc)


# --------------------------------------------------------------------------- wrappers
def fc_bn_lrelu(x, w_fc, gamma, beta):
    """x: (N, Din) f32; w_fc: (Dout, Din) PyTorch Linear weight.  Returns bf16 (N, Dout)."""
    N, Din = x.shape
    Dout = w_fc.shape[0]
    TD = _pick_tile(Dout, cap=512)
    wt = jnp.transpose(w_fc).astype(jnp.float32)           # keep f32 (tiny K, stable stats)
    g = gamma.reshape(1, Dout).astype(jnp.float32)
    b = beta.reshape(1, Dout).astype(jnp.float32)
    return pl.pallas_call(
        _fc_bn_lrelu_kernel,
        out_shape=jax.ShapeDtypeStruct((N, Dout), jnp.bfloat16),
        grid=(Dout // TD,),
        in_specs=[
            pl.BlockSpec((N, Din), lambda d: (0, 0)),
            pl.BlockSpec((Din, TD), lambda d: (0, d)),
            pl.BlockSpec((1, TD), lambda d: (0, d)),
            pl.BlockSpec((1, TD), lambda d: (0, d)),
        ],
        out_specs=pl.BlockSpec((N, TD), lambda d: (0, d)),
        compiler_params=_cparams("parallel"),
    )(x.astype(jnp.float32), wt, g, b)


def convt_layer(xpad, wp, sc_in, sh_in, *, prep_input, final):
    """One ConvTranspose2d layer.

    xpad  : (N, H+2, W+2, Cin) bf16 zero-halo input (raw prev-layer acc if prep_input)
    wp    : (9*Cin, C4p) bf16 phase-packed weight (C4p = 4*Cout rounded up to 128)
    sc/sh : (1, Cin) f32 previous layer's BN scale/shift (identity if not prep_input)
    Returns (acc, s1, s2) for BN layers or the tanh'd f32 output for the final layer.
    """
    N, Hp, Wp, Cin = xpad.shape
    H, W = Hp - 2, Wp - 2
    HW = H * W
    C4p = wp.shape[1]
    TC4 = _pick_tile(C4p, cap=512)
    grid = (N, C4p // TC4)

    in_specs = [
        pl.BlockSpec((1, Hp, Wp, Cin), lambda n, c: (n, 0, 0, 0)),
        pl.BlockSpec((9 * Cin, TC4), lambda n, c: (0, c)),
        pl.BlockSpec((1, Cin), lambda n, c: (0, 0)),
        pl.BlockSpec((1, Cin), lambda n, c: (0, 0)),
    ]
    cparams = _cparams("parallel", "parallel")

    if final:
        return pl.pallas_call(
            functools.partial(_convt_tanh_kernel, prep_input=prep_input),
            out_shape=jax.ShapeDtypeStruct((N, HW, C4p), jnp.float32),
            grid=grid,
            in_specs=in_specs,
            out_specs=pl.BlockSpec((1, HW, TC4), lambda n, c: (n, 0, c)),
            compiler_params=cparams,
        )(xpad, wp, sc_in, sh_in)

    return pl.pallas_call(
        functools.partial(_convt_bn_kernel, prep_input=prep_input),
        out_shape=(
            jax.ShapeDtypeStruct((N, HW, C4p), jnp.bfloat16),   # raw conv accumulator
            jax.ShapeDtypeStruct((N, 1, C4p), jnp.float32),     # partial sum
            jax.ShapeDtypeStruct((N, 1, C4p), jnp.float32),     # partial sum of squares
        ),
        grid=grid,
        in_specs=in_specs,
        out_specs=(
            pl.BlockSpec((1, HW, TC4), lambda n, c: (n, 0, c)),
            pl.BlockSpec((1, 1, TC4), lambda n, c: (n, 0, c)),
            pl.BlockSpec((1, 1, TC4), lambda n, c: (n, 0, c)),
        ),
        compiler_params=cparams,
    )(xpad, wp, sc_in, sh_in)


def _bn_params_from_stats(s1, s2, gamma, beta, count, cout):
    """Per-channel BN scale/shift from per-image partial sums (tiny XLA reduction)."""
    s1 = jnp.sum(s1, axis=(0, 1))[: 4 * cout].reshape(cout, 4).sum(axis=1)
    s2 = jnp.sum(s2, axis=(0, 1))[: 4 * cout].reshape(cout, 4).sum(axis=1)
    mean = s1 / count
    var = s2 / count - mean * mean
    scale = gamma.astype(jnp.float32) * jax.lax.rsqrt(var + 1e-5)
    shift = beta.astype(jnp.float32) - mean * scale
    return scale.reshape(1, cout), shift.reshape(1, cout)


def _acc_to_padded_input(acc, n, h, w, cout):
    """Phase de-interleave (wrapper-side layout plumbing, bf16) + zero halo pad."""
    y = acc[:, :, : 4 * cout].reshape(n, h, w, cout, 2, 2)
    y = jnp.transpose(y, (0, 1, 4, 2, 5, 3)).reshape(n, 2 * h, 2 * w, cout)
    return jnp.pad(y, ((0, 0), (1, 1), (1, 1), (0, 0)))


def generator_forward(z, p):
    """Pallas implementation of generator.forward.  z: (N, input_dim) -> (N, 3, 64, 64)."""
    N = z.shape[0]
    feats = p["w_fc"].shape[0] // 16

    # conv1: Linear + BatchNorm1d + LeakyReLU    -> (N, feats*16) bf16, already activated
    h = fc_bn_lrelu(z, p["w_fc"], p["g_fc"], p["b_fc"])
    x = jnp.transpose(h.reshape(N, feats, 4, 4), (0, 2, 3, 1))        # x.view(N,-1,4,4) -> NHWC
    xpad = jnp.pad(x, ((0, 0), (1, 1), (1, 1), (0, 0)))               # (N, 6, 6, feats)

    sc = jnp.ones((1, feats), jnp.float32)     # identity prologue for conv2
    sh = jnp.zeros((1, feats), jnp.float32)
    prep = False
    for wk, gk, bk in (("w2", "g2", "b2"), ("w3", "g3", "b3"), ("w4", "g4", "b4")):
        w = p[wk]
        cout = w.shape[1]
        hin = xpad.shape[1] - 2
        c4p = _round_up(4 * cout, 128)
        wp = _pack_convt_weight(w, c4p).astype(jnp.bfloat16)
        acc, s1, s2 = convt_layer(xpad, wp, sc, sh, prep_input=prep, final=False)
        count = N * (2 * hin) * (2 * hin)                              # N * H_out * W_out
        sc, sh = _bn_params_from_stats(s1, s2, p[gk], p[bk], count, cout)
        xpad = _acc_to_padded_input(acc, N, hin, hin, cout)
        prep = True

    # Gz: ConvTranspose2d + Tanh (input prologue applies conv4's BN + LeakyReLU)
    wg = p["wg"]
    cout_g = wg.shape[1]
    hin = xpad.shape[1] - 2
    c4p_g = _round_up(4 * cout_g, 128)
    wpg = _pack_convt_weight(wg, c4p_g).astype(jnp.bfloat16)
    out = convt_layer(xpad, wpg, sc, sh, prep_input=True, final=True)  # (N, hin*hin, c4p_g) f32
    y = out[:, :, : 4 * cout_g].reshape(N, hin, hin, cout_g, 2, 2)
    y = jnp.transpose(y, (0, 1, 4, 2, 5, 3)).reshape(N, 2 * hin, 2 * hin, cout_g)
    return jnp.transpose(y, (0, 3, 1, 2))                              # NCHW


# --------------------------------------------------------------------------- reference
def generator_ref(z, p):
    def lrelu(x):
        return jnp.where(x > 0, x, 0.2 * x)

    def bn(x, g, b):
        axes = (0,) if x.ndim == 2 else (0, 2, 3)
        shape = (1, -1) if x.ndim == 2 else (1, -1, 1, 1)
        mean = jnp.mean(x, axis=axes, keepdims=True)
        var = jnp.mean((x - mean) ** 2, axis=axes, keepdims=True)
        return (x - mean) * jax.lax.rsqrt(var + 1e-5) * g.reshape(shape) + b.reshape(shape)

    def convT(x, w):   # x NCHW, w (Cin, Cout, 5, 5); stride 2, pad 2, output_padding 1
        wf = jnp.transpose(w, (1, 0, 2, 3))[:, :, ::-1, ::-1]
        return jax.lax.conv_general_dilated(
            x, wf, window_strides=(1, 1), padding=((2, 3), (2, 3)),
            lhs_dilation=(2, 2), dimension_numbers=("NCHW", "OIHW", "NCHW"))

    x = lrelu(bn(z @ p["w_fc"].T, p["g_fc"], p["b_fc"]))
    x = x.reshape(z.shape[0], -1, 4, 4)
    x = lrelu(bn(convT(x, p["w2"]), p["g2"], p["b2"]))
    x = lrelu(bn(convT(x, p["w3"]), p["g3"], p["b3"]))
    x = lrelu(bn(convT(x, p["w4"]), p["g4"], p["b4"]))
    return jnp.tanh(convT(x, p["wg"]))


# --------------------------------------------------------------------------- main
if __name__ == "__main__":
    key = jax.random.PRNGKey(0)
    ks = jax.random.split(key, 16)

    # scaled-down generator: input_dim=16, feats_dim=32, batch=2  ->  output (2, 3, 64, 64)
    N, input_dim, feats = 2, 16, 32

    p = {
        "w_fc": 0.1 * jax.random.normal(ks[0], (feats * 16, input_dim), jnp.float32),
        "g_fc": 1.0 + 0.02 * jax.random.normal(ks[1], (feats * 16,), jnp.float32),
        "b_fc": 0.02 * jax.random.normal(ks[2], (feats * 16,), jnp.float32),
        "w2": 0.02 * jax.random.normal(ks[3], (feats, feats // 2, 5, 5), jnp.float32),
        "g2": 1.0 + 0.02 * jax.random.normal(ks[4], (feats // 2,), jnp.float32),
        "b2": 0.02 * jax.random.normal(ks[5], (feats // 2,), jnp.float32),
        "w3": 0.02 * jax.random.normal(ks[6], (feats // 2, feats // 4, 5, 5), jnp.float32),
        "g3": 1.0 + 0.02 * jax.random.normal(ks[7], (feats // 4,), jnp.float32),
        "b3": 0.02 * jax.random.normal(ks[8], (feats // 4,), jnp.float32),
        "w4": 0.02 * jax.random.normal(ks[9], (feats // 4, feats // 8, 5, 5), jnp.float32),
        "g4": 1.0 + 0.02 * jax.random.normal(ks[10], (feats // 8,), jnp.float32),
        "b4": 0.02 * jax.random.normal(ks[11], (feats // 8,), jnp.float32),
        "wg": 0.02 * jax.random.normal(ks[12], (feats // 8, 3, 5, 5), jnp.float32),
    }
    z = jax.random.normal(ks[13], (N, input_dim), jnp.float32)

    out = jax.jit(generator_forward)(z, p)
    jax.block_until_ready(out)
    assert out.shape == (N, 3, 64, 64), out.shape

    ref = generator_ref(z, p)
    err = float(jnp.max(jnp.abs(out - ref)))
    # conv matmuls and layer-to-layer activations are bf16 (f32 accumulation / BN math);
    # tolerance sized accordingly
    assert jnp.allclose(out, ref, atol=2e-2, rtol=2e-2), f"max abs err = {err}"

    print("KERNEL_OK")
</pallas_src>

<mosaic_0001>
module attributes {stable_mosaic.version = 11 : i64} {
  func.func @_fc_bn_lrelu_kernel(%arg0: i32, %arg1: memref<2x16xf32, #tpu.memory_space<vmem>>, %arg2: memref<16x512xf32, #tpu.memory_space<vmem>>, %arg3: memref<1x512xf32, #tpu.memory_space<vmem>>, %arg4: memref<1x512xf32, #tpu.memory_space<vmem>>, %arg5: memref<2x512xbf16, #tpu.memory_space<vmem>>) attributes {dimension_semantics = [#tpu.dimension_semantics<parallel>], iteration_bounds = array<i64: 1>, scalar_prefetch = 0 : i64, scratch_operands = 0 : i64, tpu.core_type = #tpu.core_type<tc>, window_params = [{pipeline_mode = #tpu.pipeline_mode<synchronous>, transform_indices = @transform_0, window_bounds = array<i64: 2, 16>}, {transform_indices = @transform_1, window_bounds = array<i64: 16, 512>}, {transform_indices = @transform_2, window_bounds = array<i64: 1, 512>}, {transform_indices = @transform_3, window_bounds = array<i64: 1, 512>}, {transform_indices = @transform_4, window_bounds = array<i64: 2, 512>}]} {
    %c0 = arith.constant 0 : index
    %c0_0 = arith.constant 0 : index
    %0 = vector.load %arg1[%c0, %c0_0] : memref<2x16xf32, #tpu.memory_space<vmem>>, vector<2x16xf32>
    %c0_1 = arith.constant 0 : index
    %c0_2 = arith.constant 0 : index
    %1 = vector.load %arg2[%c0_1, %c0_2] : memref<16x512xf32, #tpu.memory_space<vmem>>, vector<16x512xf32>
    %cst = arith.constant dense<0.000000e+00> : vector<2x512xf32>
    %2 = tpu.matmul %0, %1, %cst {dimension_numbers = #tpu.dot_dimension_numbers<[1], [0], [0], [1], [0, 0, 1, 1], [], []>} : vector<2x16xf32>, vector<16x512xf32>, vector<2x512xf32> -> vector<2x512xf32>
    %cst_3 = arith.constant dense<0.000000e+00> : vector<512xf32>
    %3 = vector.multi_reduction <add>, %2, %cst_3 [0] : vector<2x512xf32> to vector<512xf32>
    %4 = vector.shape_cast %3 : vector<512xf32> to vector<1x512xf32>
    %cst_4 = arith.constant 2.000000e+00 : f32
    %5 = vector.broadcast %cst_4 : f32 to vector<1x512xf32>
    %6 = arith.divf %4, %5 : vector<1x512xf32>
    %7 = vector.broadcast %6 : vector<1x512xf32> to vector<2x512xf32>
    %8 = arith.subf %2, %7 : vector<2x512xf32>
    %9 = arith.mulf %8, %8 : vector<2x512xf32>
    %cst_5 = arith.constant dense<0.000000e+00> : vector<512xf32>
    %10 = vector.multi_reduction <add>, %9, %cst_5 [0] : vector<2x512xf32> to vector<512xf32>
    %11 = vector.shape_cast %10 : vector<512xf32> to vector<1x512xf32>
    %cst_6 = arith.constant 2.000000e+00 : f32
    %12 = vector.broadcast %cst_6 : f32 to vector<1x512xf32>
    %13 = arith.divf %11, %12 : vector<1x512xf32>
    %c0_7 = arith.constant 0 : index
    %c0_8 = arith.constant 0 : index
    %14 = vector.load %arg3[%c0_7, %c0_8] : memref<1x512xf32, #tpu.memory_space<vmem>>, vector<1x512xf32>
    %cst_9 = arith.constant 9.99999974E-6 : f32
    %15 = vector.broadcast %cst_9 : f32 to vector<1x512xf32>
    %16 = arith.addf %13, %15 : vector<1x512xf32>
    %17 = math.rsqrt %16 : vector<1x512xf32>
    %18 = arith.mulf %14, %17 : vector<1x512xf32>
    %c0_10 = arith.constant 0 : index
    %c0_11 = arith.constant 0 : index
    %19 = vector.load %arg4[%c0_10, %c0_11] : memref<1x512xf32, #tpu.memory_space<vmem>>, vector<1x512xf32>
    %20 = arith.mulf %6, %18 : vector<1x512xf32>
    %21 = arith.subf %19, %20 : vector<1x512xf32>
    %22 = vector.broadcast %18 : vector<1x512xf32> to vector<2x512xf32>
    %23 = arith.mulf %2, %22 : vector<2x512xf32>
    %24 = vector.broadcast %21 : vector<1x512xf32> to vector<2x512xf32>
    %25 = arith.addf %23, %24 : vector<2x512xf32>
    %cst_12 = arith.constant 0.000000e+00 : f32
    %26 = vector.broadcast %cst_12 : f32 to vector<2x512xf32>
    %27 = arith.cmpf ogt, %25, %26 : vector<2x512xf32>
    %cst_13 = arith.constant 2.000000e-01 : f32
    %28 = vector.broadcast %cst_13 : f32 to vector<2x512xf32>
    %29 = arith.mulf %28, %25 : vector<2x512xf32>
    %30 = arith.select %27, %25, %29 : vector<2x512xi1>, vector<2x512xf32>
    %31 = arith.truncf %30 : vector<2x512xf32> to vector<2x512xbf16>
    %c0_14 = arith.constant 0 : index
    %c0_15 = arith.constant 0 : index
    %32 = vector.load %arg5[%c0_14, %c0_15] : memref<2x512xbf16, #tpu.memory_space<vmem>>, vector<2x512xbf16>
    tpu.vector_store %arg5[%c0_14, %c0_15], %31 {strides = array<i32>} : memref<2x512xbf16, #tpu.memory_space<vmem>>, vector<2x512xbf16>,
    return
  }
  func.func @transform_0(%arg0: i32) -> (i32, i32) {
    %c0_i32 = arith.constant 0 : i32
    %c0_i32_0 = arith.constant 0 : i32
    %c0_i32_1 = arith.constant 0 : i32
    return %c0_i32, %c0_i32_0 : i32, i32
  }
  func.func @transform_1(%arg0: i32) -> (i32, i32) {
    %c0_i32 = arith.constant 0 : i32
    %c0_i32_0 = arith.constant 0 : i32
    return %c0_i32, %arg0 : i32, i32
  }
  func.func @transform_2(%arg0: i32) -> (i32, i32) {
    %c0_i32 = arith.constant 0 : i32
    %c0_i32_0 = arith.constant 0 : i32
    return %c0_i32, %arg0 : i32, i32
  }
  func.func @transform_3(%arg0: i32) -> (i32, i32) {
    %c0_i32 = arith.constant 0 : i32
    %c0_i32_0 = arith.constant 0 : i32
    return %c0_i32, %arg0 : i32, i32
  }
  func.func @transform_4(%arg0: i32) -> (i32, i32) {
    %c0_i32 = arith.constant 0 : i32
    %c0_i32_0 = arith.constant 0 : i32
    return %c0_i32, %arg0 : i32, i32
  }
}

module attributes {stable_mosaic.version = 11 : i64} {
  func.func @_convt_bn_kernel(%arg0: i32, %arg1: i32, %arg2: memref<1x6x6x32xbf16, #tpu.memory_space<vmem>>, %arg3: memref<288x128xbf16, #tpu.memory_space<vmem>>, %arg4: memref<1x32xf32, #tpu.memory_space<vmem>>, %arg5: memref<1x32xf32, #tpu.memory_space<vmem>>, %arg6: memref<1x16x128xbf16, #tpu.memory_space<vmem>>, %arg7: memref<1x1x128xf32, #tpu.memory_space<vmem>>, %arg8: memref<1x1x128xf32, #tpu.memory_space<vmem>>) attributes {dimension_semantics = [#tpu.dimension_semantics<parallel>, #tpu.dimension_semantics<parallel>], iteration_bounds = array<i64: 2, 1>, scalar_prefetch = 0 : i64, scratch_operands = 0 : i64, tpu.core_type = #tpu.core_type<tc>, window_params = [{transform_indices = @transform_0, window_bounds = array<i64: 1, 6, 6, 32>}, {transform_indices = @transform_1, window_bounds = array<i64: 288, 128>}, {pipeline_mode = #tpu.pipeline_mode<synchronous>, transform_indices = @transform_2, window_bounds = array<i64: 1, 32>}, {pipeline_mode = #tpu.pipeline_mode<synchronous>, transform_indices = @transform_3, window_bounds = array<i64: 1, 32>}, {transform_indices = @transform_4, window_bounds = array<i64: 1, 16, 128>}, {transform_indices = @transform_5, window_bounds = array<i64: 1, 1, 128>}, {transform_indices = @transform_6, window_bounds = array<i64: 1, 1, 128>}]} {
    %c0 = arith.constant 0 : index
    %c0_0 = arith.constant 0 : index
    %c0_1 = arith.constant 0 : index
    %c0_2 = arith.constant 0 : index
    %0 = vector.load %arg2[%c0, %c0_0, %c0_1, %c0_2] : memref<1x6x6x32xbf16, #tpu.memory_space<vmem>>, vector<1x6x6x32xbf16>
    %1 = vector.shape_cast %0 : vector<1x6x6x32xbf16> to vector<6x6x32xbf16>
    %2 = vector.extract_strided_slice %1 {offsets = [0, 0, 0], sizes = [4, 4, 32], strides = [1, 1, 1]} : vector<6x6x32xbf16> to vector<4x4x32xbf16>
    %3 = vector.shape_cast %2 : vector<4x4x32xbf16> to vector<16x32xbf16>
    %4 = vector.extract_strided_slice %1 {offsets = [0, 1, 0], sizes = [4, 4, 32], strides = [1, 1, 1]} : vector<6x6x32xbf16> to vector<4x4x32xbf16>
    %5 = vector.shape_cast %4 : vector<4x4x32xbf16> to vector<16x32xbf16>
    %6 = vector.extract_strided_slice %1 {offsets = [0, 2, 0], sizes = [4, 4, 32], strides = [1, 1, 1]} : vector<6x6x32xbf16> to vector<4x4x32xbf16>
    %7 = vector.shape_cast %6 : vector<4x4x32xbf16> to vector<16x32xbf16>
    %8 = vector.extract_strided_slice %1 {offsets = [1, 0, 0], sizes = [4, 4, 32], strides = [1, 1, 1]} : vector<6x6x32xbf16> to vector<4x4x32xbf16>
    %9 = vector.shape_cast %8 : vector<4x4x32xbf16> to vector<16x32xbf16>
    %10 = vector.extract_strided_slice %1 {offsets = [1, 1, 0], sizes = [4, 4, 32], strides = [1, 1, 1]} : vector<6x6x32xbf16> to vector<4x4x32xbf16>
    %11 = vector.shape_cast %10 : vector<4x4x32xbf16> to vector<16x32xbf16>
    %12 = vector.extract_strided_slice %1 {offsets = [1, 2, 0], sizes = [4, 4, 32], strides = [1, 1, 1]} : vector<6x6x32xbf16> to vector<4x4x32xbf16>
    %13 = vector.shape_cast %12 : vector<4x4x32xbf16> to vector<16x32xbf16>
    %14 = vector.extract_strided_slice %1 {offsets = [2, 0, 0], sizes = [4, 4, 32], strides = [1, 1, 1]} : vector<6x6x32xbf16> to vector<4x4x32xbf16>
    %15 = vector.shape_cast %14 : vector<4x4x32xbf16> to vector<16x32xbf16>
    %16 = vector.extract_strided_slice %1 {offsets = [2, 1, 0], sizes = [4, 4, 32], strides = [1, 1, 1]} : vector<6x6x32xbf16> to vector<4x4x32xbf16>
    %17 = vector.shape_cast %16 : vector<4x4x32xbf16> to vector<16x32xbf16>
    %18 = vector.extract_strided_slice %1 {offsets = [2, 2, 0], sizes = [4, 4, 32], strides = [1, 1, 1]} : vector<6x6x32xbf16> to vector<4x4x32xbf16>
    %19 = vector.shape_cast %18 : vector<4x4x32xbf16> to vector<16x32xbf16>
    %20 = tpu.concatenate %3, %5, %7, %9, %11, %13, %15, %17, %19 in 1 : vector<16x32xbf16>, vector<16x32xbf16>, vector<16x32xbf16>, vector<16x32xbf16>, vector<16x32xbf16>, vector<16x32xbf16>, vector<16x32xbf16>, vector<16x32xbf16>, vector<16x32xbf16> -> vector<16x288xbf16>
    %c0_3 = arith.constant 0 : index
    %c0_4 = arith.constant 0 : index
    %21 = vector.load %arg3[%c0_3, %c0_4] : memref<288x128xbf16, #tpu.memory_space<vmem>>, vector<288x128xbf16>
    %cst = arith.constant dense<0.000000e+00> : vector<16x128xf32>
    %22 = tpu.matmul %20, %21, %cst {dimension_numbers = #tpu.dot_dimension_numbers<[1], [0], [0], [1], [0, 0, 1, 1], [], []>} : vector<16x288xbf16>, vector<288x128xbf16>, vector<16x128xf32> -> vector<16x128xf32>
    %23 = arith.truncf %22 : vector<16x128xf32> to vector<16x128xbf16>
    %24 = arith.extf %23 : vector<16x128xbf16> to vector<16x128xf32>
    %25 = arith.truncf %24 : vector<16x128xf32> to vector<16x128xbf16>
    %c0_5 = arith.constant 0 : index
    %c0_6 = arith.constant 0 : index
    %c0_7 = arith.constant 0 : index
    %26 = vector.load %arg6[%c0_5, %c0_6, %c0_7] : memref<1x16x128xbf16, #tpu.memory_space<vmem>>, vector<1x16x128xbf16>
    %27 = vector.shape_cast %26 : vector<1x16x128xbf16> to vector<16x128xbf16>
    %28 = vector.shape_cast %25 : vector<16x128xbf16> to vector<1x16x128xbf16>
    tpu.vector_store %arg6[%c0_5, %c0_6, %c0_7], %28 {strides = array<i32>} : memref<1x16x128xbf16, #tpu.memory_space<vmem>>, vector<1x16x128xbf16>,
    %cst_8 = arith.constant dense<0.000000e+00> : vector<128xf32>
    %29 = vector.multi_reduction <add>, %24, %cst_8 [0] : vector<16x128xf32> to vector<128xf32>
    %30 = vector.shape_cast %29 : vector<128xf32> to vector<1x128xf32>
    %c0_9 = arith.constant 0 : index
    %c0_10 = arith.constant 0 : index
    %c0_11 = arith.constant 0 : index
    %31 = vector.load %arg7[%c0_9, %c0_10, %c0_11] : memref<1x1x128xf32, #tpu.memory_space<vmem>>, vector<1x1x128xf32>
    %32 = vector.shape_cast %31 : vector<1x1x128xf32> to vector<1x128xf32>
    %33 = vector.shape_cast %30 : vector<1x128xf32> to vector<1x1x128xf32>
    tpu.vector_store %arg7[%c0_9, %c0_10, %c0_11], %33 {strides = array<i32>} : memref<1x1x128xf32, #tpu.memory_space<vmem>>, vector<1x1x128xf32>,
    %34 = arith.mulf %24, %24 : vector<16x128xf32>
    %cst_12 = arith.constant dense<0.000000e+00> : vector<128xf32>
    %35 = vector.multi_reduction <add>, %34, %cst_12 [0] : vector<16x128xf32> to vector<128xf32>
    %36 = vector.shape_cast %35 : vector<128xf32> to vector<1x128xf32>
    %c0_13 = arith.constant 0 : index
    %c0_14 = arith.constant 0 : index
    %c0_15 = arith.constant 0 : index
    %37 = vector.load %arg8[%c0_13, %c0_14, %c0_15] : memref<1x1x128xf32, #tpu.memory_space<vmem>>, vector<1x1x128xf32>
    %38 = vector.shape_cast %37 : vector<1x1x128xf32> to vector<1x128xf32>
    %39 = vector.shape_cast %36 : vector<1x128xf32> to vector<1x1x128xf32>
    tpu.vector_store %arg8[%c0_13, %c0_14, %c0_15], %39 {strides = array<i32>} : memref<1x1x128xf32, #tpu.memory_space<vmem>>, vector<1x1x128xf32>,
    return
  }
  func.func @transform_0(%arg0: i32, %arg1: i32) -> (i32, i32, i32, i32) {
    %c0_i32 = arith.constant 0 : i32
    %c0_i32_0 = arith.constant 0 : i32
    %c0_i32_1 = arith.constant 0 : i32
    %c0_i32_2 = arith.constant 0 : i32
    return %arg0, %c0_i32, %c0_i32_0, %c0_i32_1 : i32, i32, i32, i32
  }
  func.func @transform_1(%arg0: i32, %arg1: i32) -> (i32, i32) {
    %c0_i32 = arith.constant 0 : i32
    %c0_i32_0 = arith.constant 0 : i32
    return %c0_i32, %arg1 : i32, i32
  }
  func.func @transform_2(%arg0: i32, %arg1: i32) -> (i32, i32) {
    %c0_i32 = arith.constant 0 : i32
    %c0_i32_0 = arith.constant 0 : i32
    %c0_i32_1 = arith.constant 0 : i32
    return %c0_i32, %c0_i32_0 : i32, i32
  }
  func.func @transform_3(%arg0: i32, %arg1: i32) -> (i32, i32) {
    %c0_i32 = arith.constant 0 : i32
    %c0_i32_0 = arith.constant 0 : i32
    %c0_i32_1 = arith.constant 0 : i32
    return %c0_i32, %c0_i32_0 : i32, i32
  }
  func.func @transform_4(%arg0: i32, %arg1: i32) -> (i32, i32, i32) {
    %c0_i32 = arith.constant 0 : i32
    %c0_i32_0 = arith.constant 0 : i32
    return %arg0, %c0_i32, %arg1 : i32, i32, i32
  }
  func.func @transform_5(%arg0: i32, %arg1: i32) -> (i32, i32, i32) {
    %c0_i32 = arith.constant 0 : i32
    %c0_i32_0 = arith.constant 0 : i32
    return %arg0, %c0_i32, %arg1 : i32, i32, i32
  }
  func.func @transform_6(%arg0: i32, %arg1: i32) -> (i32, i32, i32) {
    %c0_i32 = arith.constant 0 : i32
    %c0_i32_0 = arith.constant 0 : i32
    return %arg0, %c0_i32, %arg1 : i32, i32, i32
  }
}

module attributes {stable_mosaic.version = 11 : i64} {
  func.func @_convt_bn_kernel(%arg0: i32, %arg1: i32, %arg2: memref<1x10x10x16xbf16, #tpu.memory_space<vmem>>, %arg3: memref<144x128xbf16, #tpu.memory_space<vmem>>, %arg4: memref<1x16xf32, #tpu.memory_space<vmem>>, %arg5: memref<1x16xf32, #tpu.memory_space<vmem>>, %arg6: memref<1x64x128xbf16, #tpu.memory_space<vmem>>, %arg7: memref<1x1x128xf32, #tpu.memory_space<vmem>>, %arg8: memref<1x1x128xf32, #tpu.memory_space<vmem>>) attributes {dimension_semantics = [#tpu.dimension_semantics<parallel>, #tpu.dimension_semantics<parallel>], iteration_bounds = array<i64: 2, 1>, scalar_prefetch = 0 : i64, scratch_operands = 0 : i64, tpu.core_type = #tpu.core_type<tc>, window_params = [{transform_indices = @transform_0, window_bounds = array<i64: 1, 10, 10, 16>}, {transform_indices = @transform_1, window_bounds = array<i64: 144, 128>}, {pipeline_mode = #tpu.pipeline_mode<synchronous>, transform_indices = @transform_2, window_bounds = array<i64: 1, 16>}, {pipeline_mode = #tpu.pipeline_mode<synchronous>, transform_indices = @transform_3, window_bounds = array<i64: 1, 16>}, {transform_indices = @transform_4, window_bounds = array<i64: 1, 64, 128>}, {transform_indices = @transform_5, window_bounds = array<i64: 1, 1, 128>}, {transform_indices = @transform_6, window_bounds = array<i64: 1, 1, 128>}]} {
    %c0 = arith.constant 0 : index
    %c0_0 = arith.constant 0 : index
    %c0_1 = arith.constant 0 : index
    %c0_2 = arith.constant 0 : index
    %0 = vector.load %arg2[%c0, %c0_0, %c0_1, %c0_2] : memref<1x10x10x16xbf16, #tpu.memory_space<vmem>>, vector<1x10x10x16xbf16>
    %1 = vector.shape_cast %0 : vector<1x10x10x16xbf16> to vector<10x10x16xbf16>
    %2 = arith.extf %1 : vector<10x10x16xbf16> to vector<10x10x16xf32>
    %c0_3 = arith.constant 0 : index
    %c0_4 = arith.constant 0 : index
    %3 = vector.load %arg4[%c0_3, %c0_4] : memref<1x16xf32, #tpu.memory_space<vmem>>, vector<1x16xf32>
    %4 = vector.shape_cast %3 : vector<1x16xf32> to vector<1x1x16xf32>
    %5 = vector.broadcast %4 : vector<1x1x16xf32> to vector<10x10x16xf32>
    %6 = arith.mulf %2, %5 : vector<10x10x16xf32>
    %c0_5 = arith.constant 0 : index
    %c0_6 = arith.constant 0 : index
    %7 = vector.load %arg5[%c0_5, %c0_6] : memref<1x16xf32, #tpu.memory_space<vmem>>, vector<1x16xf32>
    %8 = vector.shape_cast %7 : vector<1x16xf32> to vector<1x1x16xf32>
    %9 = vector.broadcast %8 : vector<1x1x16xf32> to vector<10x10x16xf32>
    %10 = arith.addf %6, %9 : vector<10x10x16xf32>
    %cst = arith.constant 0.000000e+00 : f32
    %11 = vector.broadcast %cst : f32 to vector<10x10x16xf32>
    %12 = arith.cmpf ogt, %10, %11 : vector<10x10x16xf32>
    %cst_7 = arith.constant 2.000000e-01 : f32
    %13 = vector.broadcast %cst_7 : f32 to vector<10x10x16xf32>
    %14 = arith.mulf %13, %10 : vector<10x10x16xf32>
    %15 = arith.select %12, %10, %14 : vector<10x10x16xi1>, vector<10x10x16xf32>
    %16 = tpu.iota {dimensions = array<i32: 0>} : vector<10x10x1xi32>
    %17 = tpu.iota {dimensions = array<i32: 1>} : vector<10x10x1xi32>
    %c1_i32 = arith.constant 1 : i32
    %18 = vector.broadcast %c1_i32 : i32 to vector<10x10x1xi32>
    %19 = arith.cmpi sge, %16, %18 : vector<10x10x1xi32>
    %c8_i32 = arith.constant 8 : i32
    %20 = vector.broadcast %c8_i32 : i32 to vector<10x10x1xi32>
    %21 = arith.cmpi sle, %16, %20 : vector<10x10x1xi32>
    %22 = arith.andi %19, %21 : vector<10x10x1xi1>
    %c1_i32_8 = arith.constant 1 : i32
    %23 = vector.broadcast %c1_i32_8 : i32 to vector<10x10x1xi32>
    %24 = arith.cmpi sge, %17, %23 : vector<10x10x1xi32>
    %25 = arith.andi %22, %24 : vector<10x10x1xi1>
    %c8_i32_9 = arith.constant 8 : i32
    %26 = vector.broadcast %c8_i32_9 : i32 to vector<10x10x1xi32>
    %27 = arith.cmpi sle, %17, %26 : vector<10x10x1xi32>
    %28 = arith.andi %25, %27 : vector<10x10x1xi1>
    %cst_10 = arith.constant 0.000000e+00 : f32
    %29 = vector.shape_cast %28 : vector<10x10x1xi1> to vector<10x10x1xi1>
    %30 = vector.broadcast %29 : vector<10x10x1xi1> to vector<10x10x16xi1>
    %31 = vector.broadcast %cst_10 : f32 to vector<10x10x16xf32>
    %32 = arith.select %30, %15, %31 : vector<10x10x16xi1>, vector<10x10x16xf32>
    %33 = arith.truncf %32 : vector<10x10x16xf32> to vector<10x10x16xbf16>
    %34 = vector.extract_strided_slice %33 {offsets = [0, 0, 0], sizes = [8, 8, 16], strides = [1, 1, 1]} : vector<10x10x16xbf16> to vector<8x8x16xbf16>
    %35 = vector.shape_cast %34 : vector<8x8x16xbf16> to vector<64x16xbf16>
    %36 = vector.extract_strided_slice %33 {offsets = [0, 1, 0], sizes = [8, 8, 16], strides = [1, 1, 1]} : vector<10x10x16xbf16> to vector<8x8x16xbf16>
    %37 = vector.shape_cast %36 : vector<8x8x16xbf16> to vector<64x16xbf16>
    %38 = vector.extract_strided_slice %33 {offsets = [0, 2, 0], sizes = [8, 8, 16], strides = [1, 1, 1]} : vector<10x10x16xbf16> to vector<8x8x16xbf16>
    %39 = vector.shape_cast %38 : vector<8x8x16xbf16> to vector<64x16xbf16>
    %40 = vector.extract_strided_slice %33 {offsets = [1, 0, 0], sizes = [8, 8, 16], strides = [1, 1, 1]} : vector<10x10x16xbf16> to vector<8x8x16xbf16>
    %41 = vector.shape_cast %40 : vector<8x8x16xbf16> to vector<64x16xbf16>
    %42 = vector.extract_strided_slice %33 {offsets = [1, 1, 0], sizes = [8, 8, 16], strides = [1, 1, 1]} : vector<10x10x16xbf16> to vector<8x8x16xbf16>
    %43 = vector.shape_cast %42 : vector<8x8x16xbf16> to vector<64x16xbf16>
    %44 = vector.extract_strided_slice %33 {offsets = [1, 2, 0], sizes = [8, 8, 16], strides = [1, 1, 1]} : vector<10x10x16xbf16> to vector<8x8x16xbf16>
    %45 = vector.shape_cast %44 : vector<8x8x16xbf16> to vector<64x16xbf16>
    %46 = vector.extract_strided_slice %33 {offsets = [2, 0, 0], sizes = [8, 8, 16], strides = [1, 1, 1]} : vector<10x10x16xbf16> to vector<8x8x16xbf16>
    %47 = vector.shape_cast %46 : vector<8x8x16xbf16> to vector<64x16xbf16>
    %48 = vector.extract_strided_slice %33 {offsets = [2, 1, 0], sizes = [8, 8, 16], strides = [1, 1, 1]} : vector<10x10x16xbf16> to vector<8x8x16xbf16>
    %49 = vector.shape_cast %48 : vector<8x8x16xbf16> to vector<64x16xbf16>
    %50 = vector.extract_strided_slice %33 {offsets = [2, 2, 0], sizes = [8, 8, 16], strides = [1, 1, 1]} : vector<10x10x16xbf16> to vector<8x8x16xbf16>
    %51 = vector.shape_cast %50 : vector<8x8x16xbf16> to vector<64x16xbf16>
    %52 = tpu.concatenate %35, %37, %39, %41, %43, %45, %47, %49, %51 in 1 : vector<64x16xbf16>, vector<64x16xbf16>, vector<64x16xbf16>, vector<64x16xbf16>, vector<64x16xbf16>, vector<64x16xbf16>, vector<64x16xbf16>, vector<64x16xbf16>, vector<64x16xbf16> -> vector<64x144xbf16>
    %c0_11 = arith.constant 0 : index
    %c0_12 = arith.constant 0 : index
    %53 = vector.load %arg3[%c0_11, %c0_12] : memref<144x128xbf16, #tpu.memory_space<vmem>>, vector<144x128xbf16>
    %cst_13 = arith.constant dense<0.000000e+00> : vector<64x128xf32>
    %54 = tpu.matmul %52, %53, %cst_13 {dimension_numbers = #tpu.dot_dimension_numbers<[1], [0], [0], [1], [0, 0, 1, 1], [], []>} : vector<64x144xbf16>, vector<144x128xbf16>, vector<64x128xf32> -> vector<64x128xf32>
    %55 = arith.truncf %54 : vector<64x128xf32> to vector<64x128xbf16>
    %56 = arith.extf %55 : vector<64x128xbf16> to vector<64x128xf32>
    %57 = arith.truncf %56 : vector<64x128xf32> to vector<64x128xbf16>
    %c0_14 = arith.constant 0 : index
    %c0_15 = arith.constant 0 : index
    %c0_16 = arith.constant 0 : index
    %58 = vector.load %arg6[%c0_14, %c0_15, %c0_16] : memref<1x64x128xbf16, #tpu.memory_space<vmem>>, vector<1x64x128xbf16>
    %59 = vector.shape_cast %58 : vector<1x64x128xbf16> to vector<64x128xbf16>
    %60 = vector.shape_cast %57 : vector<64x128xbf16> to vector<1x64x128xbf16>
    tpu.vector_store %arg6[%c0_14, %c0_15, %c0_16], %60 {strides = array<i32>} : memref<1x64x128xbf16, #tpu.memory_space<vmem>>, vector<1x64x128xbf16>,
    %cst_17 = arith.constant dense<0.000000e+00> : vector<128xf32>
    %61 = vector.multi_reduction <add>, %56, %cst_17 [0] : vector<64x128xf32> to vector<128xf32>
    %62 = vector.shape_cast %61 : vector<128xf32> to vector<1x128xf32>
    %c0_18 = arith.constant 0 : index
    %c0_19 = arith.constant 0 : index
    %c0_20 = arith.constant 0 : index
    %63 = vector.load %arg7[%c0_18, %c0_19, %c0_20] : memref<1x1x128xf32, #tpu.memory_space<vmem>>, vector<1x1x128xf32>
    %64 = vector.shape_cast %63 : vector<1x1x128xf32> to vector<1x128xf32>
    %65 = vector.shape_cast %62 : vector<1x128xf32> to vector<1x1x128xf32>
    tpu.vector_store %arg7[%c0_18, %c0_19, %c0_20], %65 {strides = array<i32>} : memref<1x1x128xf32, #tpu.memory_space<vmem>>, vector<1x1x128xf32>,
    %66 = arith.mulf %56, %56 : vector<64x128xf32>
    %cst_21 = arith.constant dense<0.000000e+00> : vector<128xf32>
    %67 = vector.multi_reduction <add>, %66, %cst_21 [0] : vector<64x128xf32> to vector<128xf32>
    %68 = vector.shape_cast %67 : vector<128xf32> to vector<1x128xf32>
    %c0_22 = arith.constant 0 : index
    %c0_23 = arith.constant 0 : index
    %c0_24 = arith.constant 0 : index
    %69 = vector.load %arg8[%c0_22, %c0_23, %c0_24] : memref<1x1x128xf32, #tpu.memory_space<vmem>>, vector<1x1x128xf32>
    %70 = vector.shape_cast %69 : vector<1x1x128xf32> to vector<1x128xf32>
    %71 = vector.shape_cast %68 : vector<1x128xf32> to vector<1x1x128xf32>
    tpu.vector_store %arg8[%c0_22, %c0_23, %c0_24], %71 {strides = array<i32>} : memref<1x1x128xf32, #tpu.memory_space<vmem>>, vector<1x1x128xf32>,
    return
  }
  func.func @transform_0(%arg0: i32, %arg1: i32) -> (i32, i32, i32, i32) {
    %c0_i32 = arith.constant 0 : i32
    %c0_i32_0 = arith.constant 0 : i32
    %c0_i32_1 = arith.constant 0 : i32
    %c0_i32_2 = arith.constant 0 : i32
    return %arg0, %c0_i32, %c0_i32_0, %c0_i32_1 : i32, i32, i32, i32
  }
  func.func @transform_1(%arg0: i32, %arg1: i32) -> (i32, i32) {
    %c0_i32 = arith.constant 0 : i32
    %c0_i32_0 = arith.constant 0 : i32
    return %c0_i32, %arg1 : i32, i32
  }
  func.func @transform_2(%arg0: i32, %arg1: i32) -> (i32, i32) {
    %c0_i32 = arith.constant 0 : i32
    %c0_i32_0 = arith.constant 0 : i32
    %c0_i32_1 = arith.constant 0 : i32
    return %c0_i32, %c0_i32_0 : i32, i32
  }
  func.func @transform_3(%arg0: i32, %arg1: i32) -> (i32, i32) {
    %c0_i32 = arith.constant 0 : i32
    %c0_i32_0 = arith.constant 0 : i32
    %c0_i32_1 = arith.constant 0 : i32
    return %c0_i32, %c0_i32_0 : i32, i32
  }
  func.func @transform_4(%arg0: i32, %arg1: i32) -> (i32, i32, i32) {
    %c0_i32 = arith.constant 0 : i32
    %c0_i32_0 = arith.constant 0 : i32
    return %arg0, %c0_i32, %arg1 : i32, i32, i32
  }
  func.func @transform_5(%arg0: i32, %arg1: i32) -> (i32, i32, i32) {
    %c0_i32 = arith.constant 0 : i32
    %c0_i32_0 = arith.constant 0 : i32
    return %arg0, %c0_i32, %arg1 : i32, i32, i32
  }
  func.func @transform_6(%arg0: i32, %arg1: i32) -> (i32, i32, i32) {
    %c0_i32 = arith.constant 0 : i32
    %c0_i32_0 = arith.constant 0 : i32
    return %arg0, %c0_i32, %arg1 : i32, i32, i32
  }
}

module attributes {stable_mosaic.version = 11 : i64} {
  func.func @_convt_bn_kernel(%arg0: i32, %arg1: i32, %arg2: memref<1x18x18x8xbf16, #tpu.memory_space<vmem>>, %arg3: memref<72x128xbf16, #tpu.memory_space<vmem>>, %arg4: memref<1x8xf32, #tpu.memory_space<vmem>>, %arg5: memref<1x8xf32, #tpu.memory_space<vmem>>, %arg6: memref<1x256x128xbf16, #tpu.memory_space<vmem>>, %arg7: memref<1x1x128xf32, #tpu.memory_space<vmem>>, %arg8: memref<1x1x128xf32, #tpu.memory_space<vmem>>) attributes {dimension_semantics = [#tpu.dimension_semantics<parallel>, #tpu.dimension_semantics<parallel>], iteration_bounds = array<i64: 2, 1>, scalar_prefetch = 0 : i64, scratch_operands = 0 : i64, tpu.core_type = #tpu.core_type<tc>, window_params = [{transform_indices = @transform_0, window_bounds = array<i64: 1, 18, 18, 8>}, {transform_indices = @transform_1, window_bounds = array<i64: 72, 128>}, {pipeline_mode = #tpu.pipeline_mode<synchronous>, transform_indices = @transform_2, window_bounds = array<i64: 1, 8>}, {pipeline_mode = #tpu.pipeline_mode<synchronous>, transform_indices = @transform_3, window_bounds = array<i64: 1, 8>}, {transform_indices = @transform_4, window_bounds = array<i64: 1, 256, 128>}, {transform_indices = @transform_5, window_bounds = array<i64: 1, 1, 128>}, {transform_indices = @transform_6, window_bounds = array<i64: 1, 1, 128>}]} {
    %c0 = arith.constant 0 : index
    %c0_0 = arith.constant 0 : index
    %c0_1 = arith.constant 0 : index
    %c0_2 = arith.constant 0 : index
    %0 = vector.load %arg2[%c0, %c0_0, %c0_1, %c0_2] : memref<1x18x18x8xbf16, #tpu.memory_space<vmem>>, vector<1x18x18x8xbf16>
    %1 = vector.shape_cast %0 : vector<1x18x18x8xbf16> to vector<18x18x8xbf16>
    %2 = arith.extf %1 : vector<18x18x8xbf16> to vector<18x18x8xf32>
    %c0_3 = arith.constant 0 : index
    %c0_4 = arith.constant 0 : index
    %3 = vector.load %arg4[%c0_3, %c0_4] : memref<1x8xf32, #tpu.memory_space<vmem>>, vector<1x8xf32>
    %4 = vector.shape_cast %3 : vector<1x8xf32> to vector<1x1x8xf32>
    %5 = vector.broadcast %4 : vector<1x1x8xf32> to vector<18x18x8xf32>
    %6 = arith.mulf %2, %5 : vector<18x18x8xf32>
    %c0_5 = arith.constant 0 : index
    %c0_6 = arith.constant 0 : index
    %7 = vector.load %arg5[%c0_5, %c0_6] : memref<1x8xf32, #tpu.memory_space<vmem>>, vector<1x8xf32>
    %8 = vector.shape_cast %7 : vector<1x8xf32> to vector<1x1x8xf32>
    %9 = vector.broadcast %8 : vector<1x1x8xf32> to vector<18x18x8xf32>
    %10 = arith.addf %6, %9 : vector<18x18x8xf32>
    %cst = arith.constant 0.000000e+00 : f32
    %11 = vector.broadcast %cst : f32 to vector<18x18x8xf32>
    %12 = arith.cmpf ogt, %10, %11 : vector<18x18x8xf32>
    %cst_7 = arith.constant 2.000000e-01 : f32
    %13 = vector.broadcast %cst_7 : f32 to vector<18x18x8xf32>
    %14 = arith.mulf %13, %10 : vector<18x18x8xf32>
    %15 = arith.select %12, %10, %14 : vector<18x18x8xi1>, vector<18x18x8xf32>
    %16 = tpu.iota {dimensions = array<i32: 0>} : vector<18x18x1xi32>
    %17 = tpu.iota {dimensions = array<i32: 1>} : vector<18x18x1xi32>
    %c1_i32 = arith.constant 1 : i32
    %18 = vector.broadcast %c1_i32 : i32 to vector<18x18x1xi32>
    %19 = arith.cmpi sge, %16, %18 : vector<18x18x1xi32>
    %c16_i32 = arith.constant 16 : i32
    %20 = vector.broadcast %c16_i32 : i32 to vector<18x18x1xi32>
    %21 = arith.cmpi sle, %16, %20 : vector<18x18x1xi32>
    %22 = arith.andi %19, %21 : vector<18x18x1xi1>
    %c1_i32_8 = arith.constant 1 : i32
    %23 = vector.broadcast %c1_i32_8 : i32 to vector<18x18x1xi32>
    %24 = arith.cmpi sge, %17, %23 : vector<18x18x1xi32>
    %25 = arith.andi %22, %24 : vector<18x18x1xi1>
    %c16_i32_9 = arith.constant 16 : i32
    %26 = vector.broadcast %c16_i32_9 : i32 to vector<18x18x1xi32>
    %27 = arith.cmpi sle, %17, %26 : vector<18x18x1xi32>
    %28 = arith.andi %25, %27 : vector<18x18x1xi1>
    %cst_10 = arith.constant 0.000000e+00 : f32
    %29 = vector.shape_cast %28 : vector<18x18x1xi1> to vector<18x18x1xi1>
    %30 = vector.broadcast %29 : vector<18x18x1xi1> to vector<18x18x8xi1>
    %31 = vector.broadcast %cst_10 : f32 to vector<18x18x8xf32>
    %32 = arith.select %30, %15, %31 : vector<18x18x8xi1>, vector<18x18x8xf32>
    %33 = arith.truncf %32 : vector<18x18x8xf32> to vector<18x18x8xbf16>
    %34 = vector.extract_strided_slice %33 {offsets = [0, 0, 0], sizes = [16, 16, 8], strides = [1, 1, 1]} : vector<18x18x8xbf16> to vector<16x16x8xbf16>
    %35 = vector.shape_cast %34 : vector<16x16x8xbf16> to vector<256x8xbf16>
    %36 = vector.extract_strided_slice %33 {offsets = [0, 1, 0], sizes = [16, 16, 8], strides = [1, 1, 1]} : vector<18x18x8xbf16> to vector<16x16x8xbf16>
    %37 = vector.shape_cast %36 : vector<16x16x8xbf16> to vector<256x8xbf16>
    %38 = vector.extract_strided_slice %33 {offsets = [0, 2, 0], sizes = [16, 16, 8], strides = [1, 1, 1]} : vector<18x18x8xbf16> to vector<16x16x8xbf16>
    %39 = vector.shape_cast %38 : vector<16x16x8xbf16> to vector<256x8xbf16>
    %40 = vector.extract_strided_slice %33 {offsets = [1, 0, 0], sizes = [16, 16, 8], strides = [1, 1, 1]} : vector<18x18x8xbf16> to vector<16x16x8xbf16>
    %41 = vector.shape_cast %40 : vector<16x16x8xbf16> to vector<256x8xbf16>
    %42 = vector.extract_strided_slice %33 {offsets = [1, 1, 0], sizes = [16, 16, 8], strides = [1, 1, 1]} : vector<18x18x8xbf16> to vector<16x16x8xbf16>
    %43 = vector.shape_cast %42 : vector<16x16x8xbf16> to vector<256x8xbf16>
    %44 = vector.extract_strided_slice %33 {offsets = [1, 2, 0], sizes = [16, 16, 8], strides = [1, 1, 1]} : vector<18x18x8xbf16> to vector<16x16x8xbf16>
    %45 = vector.shape_cast %44 : vector<16x16x8xbf16> to vector<256x8xbf16>
    %46 = vector.extract_strided_slice %33 {offsets = [2, 0, 0], sizes = [16, 16, 8], strides = [1, 1, 1]} : vector<18x18x8xbf16> to vector<16x16x8xbf16>
    %47 = vector.shape_cast %46 : vector<16x16x8xbf16> to vector<256x8xbf16>
    %48 = vector.extract_strided_slice %33 {offsets = [2, 1, 0], sizes = [16, 16, 8], strides = [1, 1, 1]} : vector<18x18x8xbf16> to vector<16x16x8xbf16>
    %49 = vector.shape_cast %48 : vector<16x16x8xbf16> to vector<256x8xbf16>
    %50 = vector.extract_strided_slice %33 {offsets = [2, 2, 0], sizes = [16, 16, 8], strides = [1, 1, 1]} : vector<18x18x8xbf16> to vector<16x16x8xbf16>
    %51 = vector.shape_cast %50 : vector<16x16x8xbf16> to vector<256x8xbf16>
    %52 = tpu.concatenate %35, %37, %39, %41, %43, %45, %47, %49, %51 in 1 : vector<256x8xbf16>, vector<256x8xbf16>, vector<256x8xbf16>, vector<256x8xbf16>, vector<256x8xbf16>, vector<256x8xbf16>, vector<256x8xbf16>, vector<256x8xbf16>, vector<256x8xbf16> -> vector<256x72xbf16>
    %c0_11 = arith.constant 0 : index
    %c0_12 = arith.constant 0 : index
    %53 = vector.load %arg3[%c0_11, %c0_12] : memref<72x128xbf16, #tpu.memory_space<vmem>>, vector<72x128xbf16>
    %cst_13 = arith.constant dense<0.000000e+00> : vector<256x128xf32>
    %54 = tpu.matmul %52, %53, %cst_13 {dimension_numbers = #tpu.dot_dimension_numbers<[1], [0], [0], [1], [0, 0, 1, 1], [], []>} : vector<256x72xbf16>, vector<72x128xbf16>, vector<256x128xf32> -> vector<256x128xf32>
    %55 = arith.truncf %54 : vector<256x128xf32> to vector<256x128xbf16>
    %56 = arith.extf %55 : vector<256x128xbf16> to vector<256x128xf32>
    %57 = arith.truncf %56 : vector<256x128xf32> to vector<256x128xbf16>
    %c0_14 = arith.constant 0 : index
    %c0_15 = arith.constant 0 : index
    %c0_16 = arith.constant 0 : index
    %58 = vector.load %arg6[%c0_14, %c0_15, %c0_16] : memref<1x256x128xbf16, #tpu.memory_space<vmem>>, vector<1x256x128xbf16>
    %59 = vector.shape_cast %58 : vector<1x256x128xbf16> to vector<256x128xbf16>
    %60 = vector.shape_cast %57 : vector<256x128xbf16> to vector<1x256x128xbf16>
    tpu.vector_store %arg6[%c0_14, %c0_15, %c0_16], %60 {strides = array<i32>} : memref<1x256x128xbf16, #tpu.memory_space<vmem>>, vector<1x256x128xbf16>,
    %cst_17 = arith.constant dense<0.000000e+00> : vector<128xf32>
    %61 = vector.multi_reduction <add>, %56, %cst_17 [0] : vector<256x128xf32> to vector<128xf32>
    %62 = vector.shape_cast %61 : vector<128xf32> to vector<1x128xf32>
    %c0_18 = arith.constant 0 : index
    %c0_19 = arith.constant 0 : index
    %c0_20 = arith.constant 0 : index
    %63 = vector.load %arg7[%c0_18, %c0_19, %c0_20] : memref<1x1x128xf32, #tpu.memory_space<vmem>>, vector<1x1x128xf32>
    %64 = vector.shape_cast %63 : vector<1x1x128xf32> to vector<1x128xf32>
    %65 = vector.shape_cast %62 : vector<1x128xf32> to vector<1x1x128xf32>
    tpu.vector_store %arg7[%c0_18, %c0_19, %c0_20], %65 {strides = array<i32>} : memref<1x1x128xf32, #tpu.memory_space<vmem>>, vector<1x1x128xf32>,
    %66 = arith.mulf %56, %56 : vector<256x128xf32>
    %cst_21 = arith.constant dense<0.000000e+00> : vector<128xf32>
    %67 = vector.multi_reduction <add>, %66, %cst_21 [0] : vector<256x128xf32> to vector<128xf32>
    %68 = vector.shape_cast %67 : vector<128xf32> to vector<1x128xf32>
    %c0_22 = arith.constant 0 : index
    %c0_23 = arith.constant 0 : index
    %c0_24 = arith.constant 0 : index
    %69 = vector.load %arg8[%c0_22, %c0_23, %c0_24] : memref<1x1x128xf32, #tpu.memory_space<vmem>>, vector<1x1x128xf32>
    %70 = vector.shape_cast %69 : vector<1x1x128xf32> to vector<1x128xf32>
    %71 = vector.shape_cast %68 : vector<1x128xf32> to vector<1x1x128xf32>
    tpu.vector_store %arg8[%c0_22, %c0_23, %c0_24], %71 {strides = array<i32>} : memref<1x1x128xf32, #tpu.memory_space<vmem>>, vector<1x1x128xf32>,
    return
  }
  func.func @transform_0(%arg0: i32, %arg1: i32) -> (i32, i32, i32, i32) {
    %c0_i32 = arith.constant 0 : i32
    %c0_i32_0 = arith.constant 0 : i32
    %c0_i32_1 = arith.constant 0 : i32
    %c0_i32_2 = arith.constant 0 : i32
    return %arg0, %c0_i32, %c0_i32_0, %c0_i32_1 : i32, i32, i32, i32
  }
  func.func @transform_1(%arg0: i32, %arg1: i32) -> (i32, i32) {
    %c0_i32 = arith.constant 0 : i32
    %c0_i32_0 = arith.constant 0 : i32
    return %c0_i32, %arg1 : i32, i32
  }
  func.func @transform_2(%arg0: i32, %arg1: i32) -> (i32, i32) {
    %c0_i32 = arith.constant 0 : i32
    %c0_i32_0 = arith.constant 0 : i32
    %c0_i32_1 = arith.constant 0 : i32
    return %c0_i32, %c0_i32_0 : i32, i32
  }
  func.func @transform_3(%arg0: i32, %arg1: i32) -> (i32, i32) {
    %c0_i32 = arith.constant 0 : i32
    %c0_i32_0 = arith.constant 0 : i32
    %c0_i32_1 = arith.constant 0 : i32
    return %c0_i32, %c0_i32_0 : i32, i32
  }
  func.func @transform_4(%arg0: i32, %arg1: i32) -> (i32, i32, i32) {
    %c0_i32 = arith.constant 0 : i32
    %c0_i32_0 = arith.constant 0 : i32
    return %arg0, %c0_i32, %arg1 : i32, i32, i32
  }
  func.func @transform_5(%arg0: i32, %arg1: i32) -> (i32, i32, i32) {
    %c0_i32 = arith.constant 0 : i32
    %c0_i32_0 = arith.constant 0 : i32
    return %arg0, %c0_i32, %arg1 : i32, i32, i32
  }
  func.func @transform_6(%arg0: i32, %arg1: i32) -> (i32, i32, i32) {
    %c0_i32 = arith.constant 0 : i32
    %c0_i32_0 = arith.constant 0 : i32
    return %arg0, %c0_i32, %arg1 : i32, i32, i32
  }
}

module attributes {stable_mosaic.version = 11 : i64} {
  func.func @_convt_tanh_kernel(%arg0: i32, %arg1: i32, %arg2: memref<1x34x34x4xbf16, #tpu.memory_space<vmem>>, %arg3: memref<36x128xbf16, #tpu.memory_space<vmem>>, %arg4: memref<1x4xf32, #tpu.memory_space<vmem>>, %arg5: memref<1x4xf32, #tpu.memory_space<vmem>>, %arg6: memref<1x1024x128xf32, #tpu.memory_space<vmem>>) attributes {dimension_semantics = [#tpu.dimension_semantics<parallel>, #tpu.dimension_semantics<parallel>], iteration_bounds = array<i64: 2, 1>, scalar_prefetch = 0 : i64, scratch_operands = 0 : i64, tpu.core_type = #tpu.core_type<tc>, window_params = [{transform_indices = @transform_0, window_bounds = array<i64: 1, 34, 34, 4>}, {transform_indices = @transform_1, window_bounds = array<i64: 36, 128>}, {pipeline_mode = #tpu.pipeline_mode<synchronous>, transform_indices = @transform_2, window_bounds = array<i64: 1, 4>}, {pipeline_mode = #tpu.pipeline_mode<synchronous>, transform_indices = @transform_3, window_bounds = array<i64: 1, 4>}, {transform_indices = @transform_4, window_bounds = array<i64: 1, 1024, 128>}]} {
    %c0 = arith.constant 0 : index
    %c0_0 = arith.constant 0 : index
    %c0_1 = arith.constant 0 : index
    %c0_2 = arith.constant 0 : index
    %0 = vector.load %arg2[%c0, %c0_0, %c0_1, %c0_2] : memref<1x34x34x4xbf16, #tpu.memory_space<vmem>>, vector<1x34x34x4xbf16>
    %1 = vector.shape_cast %0 : vector<1x34x34x4xbf16> to vector<34x34x4xbf16>
    %2 = arith.extf %1 : vector<34x34x4xbf16> to vector<34x34x4xf32>
    %c0_3 = arith.constant 0 : index
    %c0_4 = arith.constant 0 : index
    %3 = vector.load %arg4[%c0_3, %c0_4] : memref<1x4xf32, #tpu.memory_space<vmem>>, vector<1x4xf32>
    %4 = vector.shape_cast %3 : vector<1x4xf32> to vector<1x1x4xf32>
    %5 = vector.broadcast %4 : vector<1x1x4xf32> to vector<34x34x4xf32>
    %6 = arith.mulf %2, %5 : vector<34x34x4xf32>
    %c0_5 = arith.constant 0 : index
    %c0_6 = arith.constant 0 : index
    %7 = vector.load %arg5[%c0_5, %c0_6] : memref<1x4xf32, #tpu.memory_space<vmem>>, vector<1x4xf32>
    %8 = vector.shape_cast %7 : vector<1x4xf32> to vector<1x1x4xf32>
    %9 = vector.broadcast %8 : vector<1x1x4xf32> to vector<34x34x4xf32>
    %10 = arith.addf %6, %9 : vector<34x34x4xf32>
    %cst = arith.constant 0.000000e+00 : f32
    %11 = vector.broadcast %cst : f32 to vector<34x34x4xf32>
    %12 = arith.cmpf ogt, %10, %11 : vector<34x34x4xf32>
    %cst_7 = arith.constant 2.000000e-01 : f32
    %13 = vector.broadcast %cst_7 : f32 to vector<34x34x4xf32>
    %14 = arith.mulf %13, %10 : vector<34x34x4xf32>
    %15 = arith.select %12, %10, %14 : vector<34x34x4xi1>, vector<34x34x4xf32>
    %16 = tpu.iota {dimensions = array<i32: 0>} : vector<34x34x1xi32>
    %17 = tpu.iota {dimensions = array<i32: 1>} : vector<34x34x1xi32>
    %c1_i32 = arith.constant 1 : i32
    %18 = vector.broadcast %c1_i32 : i32 to vector<34x34x1xi32>
    %19 = arith.cmpi sge, %16, %18 : vector<34x34x1xi32>
    %c32_i32 = arith.constant 32 : i32
    %20 = vector.broadcast %c32_i32 : i32 to vector<34x34x1xi32>
    %21 = arith.cmpi sle, %16, %20 : vector<34x34x1xi32>
    %22 = arith.andi %19, %21 : vector<34x34x1xi1>
    %c1_i32_8 = arith.constant 1 : i32
    %23 = vector.broadcast %c1_i32_8 : i32 to vector<34x34x1xi32>
    %24 = arith.cmpi sge, %17, %23 : vector<34x34x1xi32>
    %25 = arith.andi %22, %24 : vector<34x34x1xi1>
    %c32_i32_9 = arith.constant 32 : i32
    %26 = vector.broadcast %c32_i32_9 : i32 to vector<34x34x1xi32>
    %27 = arith.cmpi sle, %17, %26 : vector<34x34x1xi32>
    %28 = arith.andi %25, %27 : vector<34x34x1xi1>
    %cst_10 = arith.constant 0.000000e+00 : f32
    %29 = vector.shape_cast %28 : vector<34x34x1xi1> to vector<34x34x1xi1>
    %30 = vector.broadcast %29 : vector<34x34x1xi1> to vector<34x34x4xi1>
    %31 = vector.broadcast %cst_10 : f32 to vector<34x34x4xf32>
    %32 = arith.select %30, %15, %31 : vector<34x34x4xi1>, vector<34x34x4xf32>
    %33 = arith.truncf %32 : vector<34x34x4xf32> to vector<34x34x4xbf16>
    %34 = vector.extract_strided_slice %33 {offsets = [0, 0, 0], sizes = [32, 32, 4], strides = [1, 1, 1]} : vector<34x34x4xbf16> to vector<32x32x4xbf16>
    %35 = vector.shape_cast %34 : vector<32x32x4xbf16> to vector<1024x4xbf16>
    %36 = vector.extract_strided_slice %33 {offsets = [0, 1, 0], sizes = [32, 32, 4], strides = [1, 1, 1]} : vector<34x34x4xbf16> to vector<32x32x4xbf16>
    %37 = vector.shape_cast %36 : vector<32x32x4xbf16> to vector<1024x4xbf16>
    %38 = vector.extract_strided_slice %33 {offsets = [0, 2, 0], sizes = [32, 32, 4], strides = [1, 1, 1]} : vector<34x34x4xbf16> to vector<32x32x4xbf16>
    %39 = vector.shape_cast %38 : vector<32x32x4xbf16> to vector<1024x4xbf16>
    %40 = vector.extract_strided_slice %33 {offsets = [1, 0, 0], sizes = [32, 32, 4], strides = [1, 1, 1]} : vector<34x34x4xbf16> to vector<32x32x4xbf16>
    %41 = vector.shape_cast %40 : vector<32x32x4xbf16> to vector<1024x4xbf16>
    %42 = vector.extract_strided_slice %33 {offsets = [1, 1, 0], sizes = [32, 32, 4], strides = [1, 1, 1]} : vector<34x34x4xbf16> to vector<32x32x4xbf16>
    %43 = vector.shape_cast %42 : vector<32x32x4xbf16> to vector<1024x4xbf16>
    %44 = vector.extract_strided_slice %33 {offsets = [1, 2, 0], sizes = [32, 32, 4], strides = [1, 1, 1]} : vector<34x34x4xbf16> to vector<32x32x4xbf16>
    %45 = vector.shape_cast %44 : vector<32x32x4xbf16> to vector<1024x4xbf16>
    %46 = vector.extract_strided_slice %33 {offsets = [2, 0, 0], sizes = [32, 32, 4], strides = [1, 1, 1]} : vector<34x34x4xbf16> to vector<32x32x4xbf16>
    %47 = vector.shape_cast %46 : vector<32x32x4xbf16> to vector<1024x4xbf16>
    %48 = vector.extract_strided_slice %33 {offsets = [2, 1, 0], sizes = [32, 32, 4], strides = [1, 1, 1]} : vector<34x34x4xbf16> to vector<32x32x4xbf16>
    %49 = vector.shape_cast %48 : vector<32x32x4xbf16> to vector<1024x4xbf16>
    %50 = vector.extract_strided_slice %33 {offsets = [2, 2, 0], sizes = [32, 32, 4], strides = [1, 1, 1]} : vector<34x34x4xbf16> to vector<32x32x4xbf16>
    %51 = vector.shape_cast %50 : vector<32x32x4xbf16> to vector<1024x4xbf16>
    %52 = tpu.concatenate %35, %37, %39, %41, %43, %45, %47, %49, %51 in 1 : vector<1024x4xbf16>, vector<1024x4xbf16>, vector<1024x4xbf16>, vector<1024x4xbf16>, vector<1024x4xbf16>, vector<1024x4xbf16>, vector<1024x4xbf16>, vector<1024x4xbf16>, vector<1024x4xbf16> -> vector<1024x36xbf16>
    %c0_11 = arith.constant 0 : index
    %c0_12 = arith.constant 0 : index
    %53 = vector.load %arg3[%c0_11, %c0_12] : memref<36x128xbf16, #tpu.memory_space<vmem>>, vector<36x128xbf16>
    %cst_13 = arith.constant dense<0.000000e+00> : vector<1024x128xf32>
    %54 = tpu.matmul %52, %53, %cst_13 {dimension_numbers = #tpu.dot_dimension_numbers<[1], [0], [0], [1], [0, 0, 1, 1], [], []>} : vector<1024x36xbf16>, vector<36x128xbf16>, vector<1024x128xf32> -> vector<1024x128xf32>
    %55 = math.tanh %54 : vector<1024x128xf32>
    %c0_14 = arith.constant 0 : index
    %c0_15 = arith.constant 0 : index
    %c0_16 = arith.constant 0 : index
    %56 = vector.load %arg6[%c0_14, %c0_15, %c0_16] : memref<1x1024x128xf32, #tpu.memory_space<vmem>>, vector<1x1024x128xf32>
    %57 = vector.shape_cast %56 : vector<1x1024x128xf32> to vector<1024x128xf32>
    %58 = vector.shape_cast %55 : vector<1024x128xf32> to vector<1x1024x128xf32>
    tpu.vector_store %arg6[%c0_14, %c0_15, %c0_16], %58 {strides = array<i32>} : memref<1x1024x128xf32, #tpu.memory_space<vmem>>, vector<1x1024x128xf32>,
    return
  }
  func.func @transform_0(%arg0: i32, %arg1: i32) -> (i32, i32, i32, i32) {
    %c0_i32 = arith.constant 0 : i32
    %c0_i32_0 = arith.constant 0 : i32
    %c0_i32_1 = arith.constant 0 : i32
    %c0_i32_2 = arith.constant 0 : i32
    return %arg0, %c0_i32, %c0_i32_0, %c0_i32_1 : i32, i32, i32, i32
  }
  func.func @transform_1(%arg0: i32, %arg1: i32) -> (i32, i32) {
    %c0_i32 = arith.constant 0 : i32
    %c0_i32_0 = arith.constant 0 : i32
    return %c0_i32, %arg1 : i32, i32
  }
  func.func @transform_2(%arg0: i32, %arg1: i32) -> (i32, i32) {
    %c0_i32 = arith.constant 0 : i32
    %c0_i32_0 = arith.constant 0 : i32
    %c0_i32_1 = arith.constant 0 : i32
    return %c0_i32, %c0_i32_0 : i32, i32
  }
  func.func @transform_3(%arg0: i32, %arg1: i32) -> (i32, i32) {
    %c0_i32 = arith.constant 0 : i32
    %c0_i32_0 = arith.constant 0 : i32
    %c0_i32_1 = arith.constant 0 : i32
    return %c0_i32, %c0_i32_0 : i32, i32
  }
  func.func @transform_4(%arg0: i32, %arg1: i32) -> (i32, i32, i32) {
    %c0_i32 = arith.constant 0 : i32
    %c0_i32_0 = arith.constant 0 : i32
    return %arg0, %c0_i32, %arg1 : i32, i32, i32
  }
}

</mosaic_0001>

<llo_original>
// kernel: generator_forward.5
$region0: #{generator_forward.5}
  #allocation0 [shape = 'u32[]', space=smem, size = 0x4, offset = 0x4, fixed_abs, tag = 'smem constant byte address 0x4 - core index']
  #allocation1 [shape = 'u32[144,128]{1,0:T(1,128)}', space=vmem, size = 0x12000, scoped, tag = 'internal scratch']
  %s0 = inlined_call_operand.hbm [shape: f32[2,16], index: 0, kind: input, shape index: {}]
  %s1 = inlined_call_operand.hbm [shape: f32[16,512], index: 1, kind: input, shape index: {}]
  %s2 = inlined_call_operand.hbm [shape: f32[1,512], index: 2, kind: input, shape index: {}]
  %s3 = inlined_call_operand.hbm [shape: f32[1,512], index: 3, kind: input, shape index: {}]
  %s4 = inlined_call_operand.vmem [shape: bf16[2,512], index: 4, kind: output, shape index: {}]
  %s5 = sld [smem:[#allocation0]]
  $region42: #{generator_forward.5} parent=0
    _
  %s7 = ssub.s32 1, %s5
  %s8 = scalar_select 0, %s7, %s5
  $region1: #{generator_forward.5} parent=0
    #allocation2 [shape = 'u8[1024]{0}', space=vmem, size = 0x400, scoped, tag = 'input window, operand 0, single buffered']
    #allocation3 [shape = 's32[1]{0}', space=sflag, size = 0x4, scoped, tag = 'scoped memory for generator_forward.5']
    #allocation4 [shape = 'u8[32768]{0}', space=vmem, size = 0x8000, scoped, tag = 'input window, operand 1, single buffered']
    #allocation5 [shape = 's32[1]{0}', space=sflag, size = 0x4, scoped, tag = 'scoped memory for generator_forward.5']
    #allocation6 [shape = 'u8[2048]{0}', space=vmem, size = 0x800, scoped, tag = 'input window, operand 2, single buffered']
    #allocation7 [shape = 'u8[2048]{0}', space=vmem, size = 0x800, scoped, tag = 'input window, operand 3, single buffered']
    #allocation8 [shape = 's32[1]{0}', space=sflag, size = 0x4, scoped, tag = 'scoped memory for generator_forward.5']
    %9 = vsyncpa [#allocation3], 0
    %10 = vsyncpa [#allocation5], 0
    %11 = vsyncpa [#allocation8], 0
    // Predicated region
    $region2: #{generator_forward.5} parent=1 // pred_check
      _
    $region3: #{generator_forward.5} parent=1 // pred_check_branch
      %13 = sbr.rel (0) target = $region5
    $region4: #{generator_forward.5} parent=1 // pred_region
      %s15 = ssub.s32 32, 32
      %16 = vsyncadd [#allocation3], %s15
      %s18 = sshll.u32 [#allocation2], 4
      %s19 = int_to_ptr.vmem [resolvable:$true] %s18
      %21 = dma.hbm_to_vmem [thread:$0]  %s0, 32, %s19, [#allocation3]
    $region5: #{generator_forward.5} parent=1 // pred_fallthru
      _
    // Predicated region
    $region6: #{generator_forward.5} parent=1 // pred_check
      _
    $region7: #{generator_forward.5} parent=1 // pred_check_branch
      %23 = sbr.rel (0) target = $region9
    $region8: #{generator_forward.5} parent=1 // pred_region
      %s25 = ssub.s32 1024, 1024
      %26 = vsyncadd [#allocation5], %s25
      %s27 = sshll.u32 [#allocation4], 4
      %s28 = int_to_ptr.vmem [resolvable:$true] %s27
      %33 = dma.hbm_to_vmem [thread:$0]  %s1, 1024, %s28, [#allocation5], 512, 512, 32
    $region9: #{generator_forward.5} parent=1 // pred_fallthru
      _
    // Predicated region
    $region10: #{generator_forward.5} parent=1 // pred_check
      _
    $region11: #{generator_forward.5} parent=1 // pred_check_branch
      %35 = sbr.rel (0) target = $region13
    $region12: #{generator_forward.5} parent=1 // pred_region
      %s37 = ssub.s32 64, 64
      %38 = vsyncadd [#allocation5], %s37
      %s40 = sshll.u32 [#allocation6], 4
      %s41 = int_to_ptr.vmem [resolvable:$true] %s40
      %43 = dma.hbm_to_vmem [thread:$0]  %s2, 64, %s41, [#allocation5]
    $region13: #{generator_forward.5} parent=1 // pred_fallthru
      _
    // Predicated region
    $region14: #{generator_forward.5} parent=1 // pred_check
      _
    $region15: #{generator_forward.5} parent=1 // pred_check_branch
      %45 = sbr.rel (0) target = $region17
    $region16: #{generator_forward.5} parent=1 // pred_region
      %s47 = ssub.s32 64, 64
      %48 = vsyncadd [#allocation8], %s47
      %s50 = sshll.u32 [#allocation7], 4
      %s51 = int_to_ptr.vmem [resolvable:$true] %s50
      %53 = dma.hbm_to_vmem [thread:$0]  %s3, 64, %s51, [#allocation8]
    $region17: #{generator_forward.5} parent=1 // pred_fallthru
      _
    // Predicated region
    $region18: #{generator_forward.5} parent=1 // pred_check
      _
    $region19: #{generator_forward.5} parent=1 // pred_check_branch
      %55 = sbr.rel (0) target = $region21
    $region20: #{generator_forward.5} parent=1 // pred_region
      %56 = dma.done [#allocation3], 32
    $region21: #{generator_forward.5} parent=1 // pred_fallthru
      _
    // Predicated region
    $region22: #{generator_forward.5} parent=1 // pred_check
      _
    $region23: #{generator_forward.5} parent=1 // pred_check_branch
      %58 = sbr.rel (0) target = $region25
    $region24: #{generator_forward.5} parent=1 // pred_region
      %59 = dma.done [#allocation5], 1024
    $region25: #{generator_forward.5} parent=1 // pred_fallthru
      _
    // Predicated region
    $region26: #{generator_forward.5} parent=1 // pred_check
      _
    $region27: #{generator_forward.5} parent=1 // pred_check_branch
      %61 = sbr.rel (0) target = $region29
    $region28: #{generator_forward.5} parent=1 // pred_region
      %62 = dma.done [#allocation5], 64
    $region29: #{generator_forward.5} parent=1 // pred_fallthru
      _
    // Predicated region
    $region30: #{generator_forward.5} parent=1 // pred_check
      _
    $region31: #{generator_forward.5} parent=1 // pred_check_branch
      %64 = sbr.rel (0) target = $region33
    $region32: #{generator_forward.5} parent=1 // pred_region
      %65 = dma.done [#allocation8], 64
    $region33: #{generator_forward.5} parent=1 // pred_fallthru
      _
    %v66 = vld [vmem:[#allocation2] sm:$0x3]
    %v67 = vld [vmem:[#allocation4] sm:$0xff]
    %v68 = vld [vmem:[#allocation4 + $0x8] sm:$0xff]
    %v69 = vld [vmem:[#allocation4 + $0x10] sm:$0xff]
    %v70 = vld [vmem:[#allocation4 + $0x18] sm:$0xff]
    %v71 = vld [vmem:[#allocation4 + $0x20] sm:$0xff]
    %v72 = vld [vmem:[#allocation4 + $0x28] sm:$0xff]
    %v73 = vld [vmem:[#allocation4 + $0x30] sm:$0xff]
    %v74 = vld [vmem:[#allocation4 + $0x38] sm:$0xff]
    %vm75 = vcmask 130048
    %v77 = vsel %vm75, %v66, 0
    %79 = vmatprep.subr.mxu0 0.0
    %80 = vmatpush1.msra.mxu0 0.0
    %81 = vmatprep.subr.mxu0 0.0
    %82 = vmatpush1.msra.mxu0 0.0
    %83 = vmatprep.subr.mxu0 0.0
    %84 = vmatpush1.msra.mxu0 0.0
    %85 = vmatprep.subr.mxu0 0.0
    %86 = vmatpush1.msra.mxu0 0.0
    %87 = vmatprep.subr.mxu0 0.0
    %88 = vmatpush1.msra.mxu0 0.0
    %89 = vmatprep.subr.mxu0 0.0
    %90 = vmatpush1.msra.mxu0 0.0
    %91 = vmatprep.subr.mxu0 0.0
    %92 = vmatpush1.msra.mxu0 0.0
    %93 = vmatprep.subr.mxu0 0.0
    %94 = vmatpush1.msra.mxu0 0.0
    %95 = vmatprep.subr.mxu0 0.0
    %96 = vmatpush1.msra.mxu0 0.0
    %97 = vmatprep.subr.mxu0 0.0
    %98 = vmatpush1.msra.mxu0 0.0
    %99 = vmatprep.subr.mxu0 0.0
    %100 = vmatpush1.msra.mxu0 0.0
    %101 = vmatprep.subr.mxu0 0.0
    %102 = vmatpush1.msra.mxu0 0.0
    %103 = vmatprep.subr.mxu0 0.0
    %104 = vmatpush1.msra.mxu0 0.0
    %105 = vmatprep.subr.mxu0 0.0
    %106 = vmatpush1.msra.mxu0 0.0
    %107 = vmatprep.subr.mxu0 %v72
    %108 = vmatpush1.msra.mxu0 %v71
    %109 = vmatprep.subr.mxu0 %v68
    %110 = vmatpush1.msra.mxu0 %v67
    %111 = vmatprep.subr.mxu0 0.0
    %112 = vmatpush2.msra.mxu0 0.0
    %113 = vmatprep.subr.mxu0 0.0
    %114 = vmatpush2.msra.mxu0 0.0
    %115 = vmatprep.subr.mxu0 0.0
    %116 = vmatpush2.msra.mxu0 0.0
    %117 = vmatprep.subr.mxu0 0.0
    %118 = vmatpush2.msra.mxu0 0.0
    %119 = vmatprep.subr.mxu0 0.0
    %120 = vmatpush2.msra.mxu0 0.0
    %121 = vmatprep.subr.mxu0 0.0
    %122 = vmatpush2.msra.mxu0 0.0
    %123 = vmatprep.subr.mxu0 0.0
    %124 = vmatpush2.msra.mxu0 0.0
    %125 = vmatprep.subr.mxu0 0.0
    %126 = vmatpush2.msra.mxu0 0.0
    %127 = vmatprep.subr.mxu0 0.0
    %128 = vmatpush2.msra.mxu0 0.0
    %129 = vmatprep.subr.mxu0 0.0
    %130 = vmatpush2.msra.mxu0 0.0
    %131 = vmatprep.subr.mxu0 0.0
    %132 = vmatpush2.msra.mxu0 0.0
    %133 = vmatprep.subr.mxu0 0.0
    %134 = vmatpush2.msra.mxu0 0.0
    %135 = vmatprep.subr.mxu0 0.0
    %136 = vmatpush2.msra.mxu0 0.0
    %137 = vmatprep.subr.mxu0 0.0
    %138 = vmatpush2.msra.mxu0 0.0
    %139 = vmatprep.subr.mxu0 0.0
    %140 = vmatpush2.msra.mxu0 0.0
    %141 = vmatprep.subr.mxu0 0.0
    %142 = vmatpush2.msra.mxu0 0.0
    %143 = vmatprep.mubr.f32.mxu0 0.0
    %144 = vmatmul.mubr.f32.gmra.mxu0 %v77
    %v145 = vpop.f32.mrf.mxu0
    %v146 = vadd.f32 0.0, %v145
    %v147 = vpop.f32.mrf.mxu0
    %v148 = vadd.f32 0.0, %v147
    %149 = vdwg.mxu0
    %150 = vmatprep.subr.mxu0 0.0
    %151 = vmatpush1.msra.mxu0 0.0
    %152 = vmatprep.subr.mxu0 0.0
    %153 = vmatpush1.msra.mxu0 0.0
    %154 = vmatprep.subr.mxu0 0.0
    %155 = vmatpush1.msra.mxu0 0.0
    %156 = vmatprep.subr.mxu0 0.0
    %157 = vmatpush1.msra.mxu0 0.0
    %158 = vmatprep.subr.mxu0 0.0
    %159 = vmatpush1.msra.mxu0 0.0
    %160 = vmatprep.subr.mxu0 0.0
    %161 = vmatpush1.msra.mxu0 0.0
    %162 = vmatprep.subr.mxu0 0.0
    %163 = vmatpush1.msra.mxu0 0.0
    %164 = vmatprep.subr.mxu0 0.0
    %165 = vmatpush1.msra.mxu0 0.0
    %166 = vmatprep.subr.mxu0 0.0
    %167 = vmatpush1.msra.mxu0 0.0
    %168 = vmatprep.subr.mxu0 0.0
    %169 = vmatpush1.msra.mxu0 0.0
    %170 = vmatprep.subr.mxu0 0.0
    %171 = vmatpush1.msra.mxu0 0.0
    %172 = vmatprep.subr.mxu0 0.0
    %173 = vmatpush1.msra.mxu0 0.0
    %174 = vmatprep.subr.mxu0 0.0
    %175 = vmatpush1.msra.mxu0 0.0
    %176 = vmatprep.subr.mxu0 0.0
    %177 = vmatpush1.msra.mxu0 0.0
    %178 = vmatprep.subr.mxu0 %v74
    %179 = vmatpush1.msra.mxu0 %v73
    %180 = vmatprep.subr.mxu0 %v70
    %181 = vmatpush1.msra.mxu0 %v69
    %182 = vmatprep.subr.mxu0 0.0
    %183 = vmatpush2.msra.mxu0 0.0
    %184 = vmatprep.subr.mxu0 0.0
    %185 = vmatpush2.msra.mxu0 0.0
    %186 = vmatprep.subr.mxu0 0.0
    %187 = vmatpush2.msra.mxu0 0.0
    %188 = vmatprep.subr.mxu0 0.0
    %189 = vmatpush2.msra.mxu0 0.0
    %190 = vmatprep.subr.mxu0 0.0
    %191 = vmatpush2.msra.mxu0 0.0
    %192 = vmatprep.subr.mxu0 0.0
    %193 = vmatpush2.msra.mxu0 0.0
    %194 = vmatprep.subr.mxu0 0.0
    %195 = vmatpush2.msra.mxu0 0.0
    %196 = vmatprep.subr.mxu0 0.0
    %197 = vmatpush2.msra.mxu0 0.0
    %198 = vmatprep.subr.mxu0 0.0
    %199 = vmatpush2.msra.mxu0 0.0
    %200 = vmatprep.subr.mxu0 0.0
    %201 = vmatpush2.msra.mxu0 0.0
    %202 = vmatprep.subr.mxu0 0.0
    %203 = vmatpush2.msra.mxu0 0.0
    %204 = vmatprep.subr.mxu0 0.0
    %205 = vmatpush2.msra.mxu0 0.0
    %206 = vmatprep.subr.mxu0 0.0
    %207 = vmatpush2.msra.mxu0 0.0
    %208 = vmatprep.subr.mxu0 0.0
    %209 = vmatpush2.msra.mxu0 0.0
    %210 = vmatprep.subr.mxu0 0.0
    %211 = vmatpush2.msra.mxu0 0.0
    %212 = vmatprep.subr.mxu0 0.0
    %213 = vmatpush2.msra.mxu0 0.0
    %214 = vmatprep.mubr.f32.mxu0 0.0
    %215 = vmatmul.mubr.f32.gmra.mxu0 %v77
    %v216 = vpop.f32.mrf.mxu0
    %v217 = vadd.f32 0.0, %v216
    %v218 = vpop.f32.mrf.mxu0
    %v219 = vadd.f32 0.0, %v218
    %220 = vdwg.mxu0
    %vm221 = vcmask 1041408
    %v222 = vsel %vm221, %v146, 0.0
    %v223 = vrot.slane %v222, 4
    %v224 = vadd.f32 %v222, %v223
    %v225 = vrot.slane %v224, 2
    %v226 = vadd.f32 %v224, %v225
    %v227 = vrot.slane %v226, 1
    %v228 = vadd.f32 %v226, %v227
    %v229 = vsel %vm221, %v148, 0.0
    %v230 = vrot.slane %v229, 4
    %v231 = vadd.f32 %v229, %v230
    %v232 = vrot.slane %v231, 2
    %v233 = vadd.f32 %v231, %v232
    %v234 = vrot.slane %v233, 1
    %v235 = vadd.f32 %v233, %v234
    %v236 = vsel %vm221, %v217, 0.0
    %v237 = vrot.slane %v236, 4
    %v238 = vadd.f32 %v236, %v237
    %v239 = vrot.slane %v238, 2
    %v240 = vadd.f32 %v238, %v239
    %v241 = vrot.slane %v240, 1
    %v242 = vadd.f32 %v240, %v241
    %v243 = vsel %vm221, %v219, 0.0
    %v244 = vrot.slane %v243, 4
    %v245 = vadd.f32 %v243, %v244
    %v246 = vrot.slane %v245, 2
    %v247 = vadd.f32 %v245, %v246
    %v248 = vrot.slane %v247, 1
    %v249 = vadd.f32 %v247, %v248
    %v250 = vrcp.pop 2.0
    %v251 = vmul.f32 %v228, %v250
    %v252 = vmul.f32 %v235, %v250
    %v253 = vmul.f32 %v242, %v250
    %v254 = vmul.f32 %v249, %v250
    %v255 = vsub.f32 %v146, %v251
    %v256 = vsub.f32 %v148, %v252
    %v257 = vsub.f32 %v217, %v253
    %v258 = vsub.f32 %v219, %v254
    %v259 = vmul.f32 %v255, %v255
    %v260 = vmul.f32 %v256, %v256
    %v261 = vmul.f32 %v257, %v257
    %v262 = vmul.f32 %v258, %v258
    %v263 = vsel %vm221, %v259, 0.0
    %v264 = vrot.slane %v263, 4
    %v265 = vadd.f32 %v263, %v264
    %v266 = vrot.slane %v265, 2
    %v267 = vadd.f32 %v265, %v266
    %v268 = vrot.slane %v267, 1
    %v269 = vadd.f32 %v267, %v268
    %v270 = vsel %vm221, %v260, 0.0
    %v271 = vrot.slane %v270, 4
    %v272 = vadd.f32 %v270, %v271
    %v273 = vrot.slane %v272, 2
    %v274 = vadd.f32 %v272, %v273
    %v275 = vrot.slane %v274, 1
    %v276 = vadd.f32 %v274, %v275
    %v277 = vsel %vm221, %v261, 0.0
    %v278 = vrot.slane %v277, 4
    %v279 = vadd.f32 %v277, %v278
    %v280 = vrot.slane %v279, 2
    %v281 = vadd.f32 %v279, %v280
    %v282 = vrot.slane %v281, 1
    %v283 = vadd.f32 %v281, %v282
    %v284 = vsel %vm221, %v262, 0.0
    %v285 = vrot.slane %v284, 4
    %v286 = vadd.f32 %v284, %v285
    %v287 = vrot.slane %v286, 2
    %v288 = vadd.f32 %v286, %v287
    %v289 = vrot.slane %v288, 1
    %v290 = vadd.f32 %v288, %v289
    %v291 = vmul.f32 %v269, %v250
    %v292 = vmul.f32 %v276, %v250
    %v293 = vmul.f32 %v283, %v250
    %v294 = vmul.f32 %v290, %v250
    %v295 = vld [vmem:[#allocation6] sm:$0xf]
    %v296 = vadd.f32 %v291, 1e-05
    %v297 = vadd.f32 %v292, 1e-05
    %v298 = vadd.f32 %v293, 1e-05
    %v299 = vadd.f32 %v294, 1e-05
    %v300 = vrsqrt.pop %v296
    %v301 = vrsqrt.pop %v297
    %v302 = vrsqrt.pop %v298
    %v303 = vrsqrt.pop %v299
    %v308 = vcombine.low %v300, %v301
    %v309 = vcombine.low %v302, %v303
    %v311 = vunpack.c.l.s4 1966171168
    %v312 = vunpack.c.0.s8 %v311
    %v313 = vlaneseq
    %v314 = vshrl.u32 %v313, 7
    %v315 = vsub.s32 %v312, %v314
    %v316 = vrot.slane %v308, %v315
    %v318 = vunpack.c.l.s4 1966171168
    %v319 = vunpack.c.0.s8 %v318
    %v320 = vlaneseq
    %v321 = vshrl.u32 %v320, 7
    %v322 = vsub.s32 %v319, %v321
    %v323 = vrot.slane %v309, %v322
    %v324 = vcombine.low %v316, %v323
    %v326 = vunpack.c.l.s4 1966171168
    %v327 = vunpack.c.0.s8 %v326
    %v328 = vlaneseq
    %v329 = vshrl.u32 %v328, 7
    %v330 = vsub.s32 %v327, %v329
    %v331 = vrot.slane %v324, %v330
    %v333 = vmul.f32 %v295, %v331
    %v334 = vld [vmem:[#allocation7] sm:$0xf]
    %v336 = vlaneseq
    %v337 = vshrl.u32 %v336, 7
    %v338 = vsub.s32 0, %v337
    %v339 = vrot.slane %v333, %v338
    %v340 = vlaneseq
    %v341 = vshrl.u32 %v340, 7
    %v342 = vsub.s32 1, %v341
    %v343 = vrot.slane %v333, %v342
    %v344 = vlaneseq
    %v345 = vshrl.u32 %v344, 7
    %v346 = vsub.s32 2, %v345
    %v347 = vrot.slane %v333, %v346
    %v348 = vlaneseq
    %v349 = vshrl.u32 %v348, 7
    %v350 = vsub.s32 3, %v349
    %v351 = vrot.slane %v333, %v350
    %v356 = vmul.f32 %v251, %v339
    %v357 = vmul.f32 %v252, %v343
    %v358 = vmul.f32 %v253, %v347
    %v359 = vmul.f32 %v254, %v351
    %v364 = vcombine.low %v356, %v357
    %v365 = vcombine.low %v358, %v359
    %v367 = vunpack.c.l.s4 1966171168
    %v368 = vunpack.c.0.s8 %v367
    %v369 = vlaneseq
    %v370 = vshrl.u32 %v369, 7
    %v371 = vsub.s32 %v368, %v370
    %v372 = vrot.slane %v364, %v371
    %v374 = vunpack.c.l.s4 1966171168
    %v375 = vunpack.c.0.s8 %v374
    %v376 = vlaneseq
    %v377 = vshrl.u32 %v376, 7
    %v378 = vsub.s32 %v375, %v377
    %v379 = vrot.slane %v365, %v378
    %v380 = vcombine.low %v372, %v379
    %v382 = vunpack.c.l.s4 1966171168
    %v383 = vunpack.c.0.s8 %v382
    %v384 = vlaneseq
    %v385 = vshrl.u32 %v384, 7
    %v386 = vsub.s32 %v383, %v385
    %v387 = vrot.slane %v380, %v386
    %v389 = vsub.f32 %v334, %v387
    %v390 = vmul.f32 %v146, %v339
    %v391 = vmul.f32 %v148, %v343
    %v392 = vmul.f32 %v217, %v347
    %v393 = vmul.f32 %v219, %v351
    %v395 = vlaneseq
    %v396 = vshrl.u32 %v395, 7
    %v397 = vsub.s32 0, %v396
    %v398 = vrot.slane %v389, %v397
    %v399 = vlaneseq
    %v400 = vshrl.u32 %v399, 7
    %v401 = vsub.s32 1, %v400
    %v402 = vrot.slane %v389, %v401
    %v403 = vlaneseq
    %v404 = vshrl.u32 %v403, 7
    %v405 = vsub.s32 2, %v404
    %v406 = vrot.slane %v389, %v405
    %v407 = vlaneseq
    %v408 = vshrl.u32 %v407, 7
    %v409 = vsub.s32 3, %v408
    %v410 = vrot.slane %v389, %v409
    %v415 = vadd.f32 %v390, %v398
    %v416 = vadd.f32 %v391, %v402
    %v417 = vadd.f32 %v392, %v406
    %v418 = vadd.f32 %v393, %v410
    %vm419 = vcmp.gt.f32.partialorder %v415, 0.0
    %vm420 = vcmp.gt.f32.partialorder %v416, 0.0
    %vm421 = vcmp.gt.f32.partialorder %v417, 0.0
    %vm422 = vcmp.gt.f32.partialorder %v418, 0.0
    %v423 = vmul.f32 %v415, 0.2
    %v424 = vmul.f32 %v416, 0.2
    %v425 = vmul.f32 %v417, 0.2
    %v426 = vmul.f32 %v418, 0.2
    %v427 = vsel %vm419, %v415, %v423
    %v428 = vsel %vm420, %v416, %v424
    %v429 = vsel %vm421, %v417, %v425
    %v430 = vsel %vm422, %v418, %v426
    %v431 = vpack.c.bf16 %v427, %v427
    %v432 = vpack.c.bf16 %v428, %v428
    %v433 = vpack.c.bf16 %v429, %v429
    %v434 = vpack.c.bf16 %v430, %v430
    %v439 = vcombine.low %v431, %v432
    %v440 = vcombine.low %v433, %v434
    %v442 = vunpack.c.l.s4 1966171168
    %v443 = vunpack.c.0.s8 %v442
    %v444 = vlaneseq
    %v445 = vshrl.u32 %v444, 7
    %v446 = vsub.s32 %v443, %v445
    %v447 = vrot.slane %v439, %v446
    %v449 = vunpack.c.l.s4 1966171168
    %v450 = vunpack.c.0.s8 %v449
    %v451 = vlaneseq
    %v452 = vshrl.u32 %v451, 7
    %v453 = vsub.s32 %v450, %v452
    %v454 = vrot.slane %v440, %v453
    %v455 = vcombine.low %v447, %v454
    %v457 = vunpack.c.l.s4 1966171168
    %v458 = vunpack.c.0.s8 %v457
    %v459 = vlaneseq
    %v460 = vshrl.u32 %v459, 7
    %v461 = vsub.s32 %v458, %v460
    %v462 = vrot.slane %v455, %v461
    %464 = vst [vmem:[%s4] sm:$0xf] %v462
    // Predicated region
    $region34: #{generator_forward.5} parent=1 // pred_check
      _
    $region35: #{generator_forward.5} parent=1 // pred_check_branch
      %466 = sbr.rel (0) target = $region37
    $region36: #{generator_forward.5} parent=1 // pred_region
      _
    $region37: #{generator_forward.5} parent=1 // pred_fallthru
      _
    // Predicated region
    $region38: #{generator_forward.5} parent=1 // pred_check
      _
    $region39: #{generator_forward.5} parent=1 // pred_check_branch
      %468 = sbr.rel (0) target = $region41
    $region40: #{generator_forward.5} parent=1 // pred_region
      _
    $region41: #{generator_forward.5} parent=1 // pred_fallthru
      _
    %469 = vsyncpa [#allocation3], 1
    %470 = vsyncpa [#allocation5], 1
    %471 = vsyncpa [#allocation8], 1

// kernel: generator_forward.6
$region0: #{generator_forward.6}
  #allocation0 [shape = 'u32[]', space=smem, size = 0x4, offset = 0x4, fixed_abs, tag = 'smem constant byte address 0x4 - core index']
  #allocation1 [shape = 'u32[144,128]{1,0:T(1,128)}', space=vmem, size = 0x12000, scoped, tag = 'internal scratch']
  %s0 = inlined_call_operand.vmem [shape: bf16[2,6,6,32], index: 0, kind: input, shape index: {}]
  %s1 = inlined_call_operand.vmem [shape: bf16[288,128], index: 1, kind: input, shape index: {}]
  %s2 = inlined_call_operand.vmem [shape: f32[1,32], index: 2, kind: input, shape index: {}]
  %s3 = inlined_call_operand.vmem [shape: f32[1,32], index: 3, kind: input, shape index: {}]
  %s4 = inlined_call_operand.vmem [shape: bf16[2,16,128], index: 4, kind: output, shape index: {0}]
  %s5 = inlined_call_operand.vmem [shape: f32[2,1,128], index: 5, kind: output, shape index: {1}]
  %s6 = inlined_call_operand.vmem [shape: f32[2,1,128], index: 6, kind: output, shape index: {2}]
  %7 = xla_tuple %s4, %s5, %s6
  %s8 = sld [smem:[#allocation0]]
  $region65: #{generator_forward.6} parent=0
    _
  %s10 = ssub.s32 1, %s8
  %s11 = scalar_select 0, %s10, %s8
  loop: start=0, step=1, limit=4
  $region2: #{generator_forward.6} parent=0 // loop_pre_header
    _
  $region3: #{generator_forward.6} parent=0 // loop_header
    %s13 = sphi 0, %s17
    %p14 = scmp.ge.s32.totalorder %s13, 4
    %s20 = sphi 0, %s32
    %s21 = sphi 0, %s28
    %s22 = sphi 0, %s20
    %s23 = sphi 0, %s21
    %s24 = sphi 0, %s22
    %s25 = sphi 0, %s23
    %s35 = sphi 0, %s37
    %s38 = sphi 0, %s35
    %s39 = sphi 0, %s38
    %s55 = sphi 0, %s39
    %s61 = sphi 0, %s63
    %s64 = sphi 0, %s61
    %s65 = sphi 0, %s64
    %s81 = sphi 0, %s65
    %s85 = sphi 0, %s85
    %s87 = sphi 0, %s85
    %s88 = sphi 0, %s87
    %s102 = sphi 0, %s88
    %s106 = sphi 0, %s106
    %s108 = sphi 0, %s106
    %s109 = sphi 0, %s108
    %s123 = sphi 0, %s109
    %s131 = sphi 0, %s133
    %s134 = sphi 0, %s131
    %s135 = sphi 0, %s134
    %s151 = sphi 0, %s135
    %s159 = sphi 0, %s161
    %s162 = sphi 0, %s159
    %s163 = sphi 0, %s162
    %s179 = sphi 0, %s163
    %s187 = sphi 0, %s189
    %s190 = sphi 0, %s187
    %s191 = sphi 0, %s190
    %s207 = sphi 0, %s191
  $region4: #{generator_forward.6} parent=0 // loop_header_branch
    %16 = sbr.rel (%p14) target = $region8
  $region5: #{generator_forward.6} parent=0 // loop_body
    %s18 = ssub.s32 %s13, 1
    %s19 = ssub.s32 %s13, 2
    %s26 = sadd.s32 1, %s21
    %p27 = scmp.ge.s32.totalorder %s26, 1
    %s28 = scalar_select %p27, 0, %s26
    %s29 = sadd.s32 1, %s20
    %s30 = scalar_select %p27, %s29, %s20
    %p31 = scmp.ge.s32.totalorder %s30, 2
    %s32 = scalar_select %p31, 0, %s30
    %s33 = ssub.s32 %s20, %s32
    %p34 = scmp.eq.s32.totalorder %s33, 0
    %s36 = sadd.s32 %s35, 1
    %s37 = scalar_select %p34, %s35, %s36
    %p40 = pneg %p34
    %p41 = scmp.eq.s32.totalorder %s13, 1
    %p42 = por %p40, %p41
    %p43 = scmp.ne.s32.totalorder %s35, %s38
    %p44 = scmp.eq.s32.totalorder %s13, 0
    %p45 = por %p43, %p44
    %p46 = scmp.ne.s32.totalorder %s35, %s38
    %p47 = scmp.eq.s32.totalorder %s18, 1
    %p48 = por %p46, %p47
    %p49 = scmp.ne.s32.totalorder %s38, %s39
    %p50 = scmp.eq.s32.totalorder %s18, 0
    %p51 = por %p49, %p50
    %p52 = scmp.ne.s32.totalorder %s38, %s39
    %p53 = scmp.eq.s32.totalorder %s19, 1
    %p54 = por %p52, %p53
    %p56 = scmp.ne.s32.totalorder %s39, %s55
    %p57 = scmp.eq.s32.totalorder %s19, 0
    %p58 = por %p56, %p57
    %s59 = ssub.s32 %s21, %s28
    %p60 = scmp.eq.s32.totalorder %s59, 0
    %s62 = sadd.s32 %s61, 1
    %s63 = scalar_select %p60, %s61, %s62
    %p66 = pneg %p60
    %p67 = scmp.eq.s32.totalorder %s13, 1
    %p68 = por %p66, %p67
    %p69 = scmp.ne.s32.totalorder %s61, %s64
    %p70 = scmp.eq.s32.totalorder %s13, 0
    %p71 = por %p69, %p70
    %p72 = scmp.ne.s32.totalorder %s61, %s64
    %p73 = scmp.eq.s32.totalorder %s18, 1
    %p74 = por %p72, %p73
    %p75 = scmp.ne.s32.totalorder %s64, %s65
    %p76 = scmp.eq.s32.totalorder %s18, 0
    %p77 = por %p75, %p76
    %p78 = scmp.ne.s32.totalorder %s64, %s65
    %p79 = scmp.eq.s32.totalorder %s19, 1
    %p80 = por %p78, %p79
    %p82 = scmp.ne.s32.totalorder %s65, %s81
    %p83 = scmp.eq.s32.totalorder %s19, 0
    %p84 = por %p82, %p83
    %s86 = sadd.s32 %s85, 1
    %p89 = scmp.eq.s32.totalorder %s13, 1
    %p90 = scmp.ne.s32.totalorder %s85, %s87
    %p91 = scmp.eq.s32.totalorder %s13, 0
    %p92 = por %p90, %p91
    %p93 = scmp.ne.s32.totalorder %s85, %s87
    %p94 = scmp.eq.s32.totalorder %s18, 1
    %p95 = por %p93, %p94
    %p96 = scmp.ne.s32.totalorder %s87, %s88
    %p97 = scmp.eq.s32.totalorder %s18, 0
    %p98 = por %p96, %p97
    %p99 = scmp.ne.s32.totalorder %s87, %s88
    %p100 = scmp.eq.s32.totalorder %s19, 1
    %p101 = por %p99, %p100
    %p103 = scmp.ne.s32.totalorder %s88, %s102
    %p104 = scmp.eq.s32.totalorder %s19, 0
    %p105 = por %p103, %p104
    %s107 = sadd.s32 %s106, 1
    %p110 = scmp.eq.s32.totalorder %s13, 1
    %p111 = scmp.ne.s32.totalorder %s106, %s108
    %p112 = scmp.eq.s32.totalorder %s13, 0
    %p113 = por %p111, %p112
    %p114 = scmp.ne.s32.totalorder %s106, %s108
    %p115 = scmp.eq.s32.totalorder %s18, 1
    %p116 = por %p114, %p115
    %p117 = scmp.ne.s32.totalorder %s108, %s109
    %p118 = scmp.eq.s32.totalorder %s18, 0
    %p119 = por %p117, %p118
    %p120 = scmp.ne.s32.totalorder %s108, %s109
    %p121 = scmp.eq.s32.totalorder %s19, 1
    %p122 = por %p120, %p121
    %p124 = scmp.ne.s32.totalorder %s109, %s123
    %p125 = scmp.eq.s32.totalorder %s19, 0
    %p126 = por %p124, %p125
    %s127 = ssub.s32 %s20, %s32
    %s128 = ssub.s32 %s21, %s28
    %s129 = sor.u32 %s127, %s128
    %p130 = scmp.eq.s32.totalorder %s129, 0
    %s132 = sadd.s32 %s131, 1
    %s133 = scalar_select %p130, %s131, %s132
    %p136 = pneg %p130
    %p137 = scmp.eq.s32.totalorder %s13, 1
    %p138 = por %p136, %p137
    %p139 = scmp.ne.s32.totalorder %s131, %s134
    %p140 = scmp.eq.s32.totalorder %s13, 0
    %p141 = por %p139, %p140
    %p142 = scmp.ne.s32.totalorder %s131, %s134
    %p143 = scmp.eq.s32.totalorder %s18, 1
    %p144 = por %p142, %p143
    %p145 = scmp.ne.s32.totalorder %s134, %s135
    %p146 = scmp.eq.s32.totalorder %s18, 0
    %p147 = por %p145, %p146
    %p148 = scmp.ne.s32.totalorder %s134, %s135
    %p149 = scmp.eq.s32.totalorder %s19, 1
    %p150 = por %p148, %p149
    %p152 = scmp.ne.s32.totalorder %s135, %s151
    %p153 = scmp.eq.s32.totalorder %s19, 0
    %p154 = por %p152, %p153
    %s155 = ssub.s32 %s20, %s32
    %s156 = ssub.s32 %s21, %s28
    %s157 = sor.u32 %s155, %s156
    %p158 = scmp.eq.s32.totalorder %s157, 0
    %s160 = sadd.s32 %s159, 1
    %s161 = scalar_select %p158, %s159, %s160
    %p164 = pneg %p158
    %p165 = scmp.eq.s32.totalorder %s13, 1
    %p166 = por %p164, %p165
    %p167 = scmp.ne.s32.totalorder %s159, %s162
    %p168 = scmp.eq.s32.totalorder %s13, 0
    %p169 = por %p167, %p168
    %p170 = scmp.ne.s32.totalorder %s159, %s162
    %p171 = scmp.eq.s32.totalorder %s18, 1
    %p172 = por %p170, %p171
    %p173 = scmp.ne.s32.totalorder %s162, %s163
    %p174 = scmp.eq.s32.totalorder %s18, 0
    %p175 = por %p173, %p174
    %p176 = scmp.ne.s32.totalorder %s162, %s163
    %p177 = scmp.eq.s32.totalorder %s19, 1
    %p178 = por %p176, %p177
    %p180 = scmp.ne.s32.totalorder %s163, %s179
    %p181 = scmp.eq.s32.totalorder %s19, 0
    %p182 = por %p180, %p181
    %s183 = ssub.s32 %s20, %s32
    %s184 = ssub.s32 %s21, %s28
    %s185 = sor.u32 %s183, %s184
    %p186 = scmp.eq.s32.totalorder %s185, 0
    %s188 = sadd.s32 %s187, 1
    %s189 = scalar_select %p186, %s187, %s188
    %p192 = pneg %p186
    %p193 = scmp.eq.s32.totalorder %s13, 1
    %p194 = por %p192, %p193
    %p195 = scmp.ne.s32.totalorder %s187, %s190
    %p196 = scmp.eq.s32.totalorder %s13, 0
    %p197 = por %p195, %p196
    %p198 = scmp.ne.s32.totalorder %s187, %s190
    %p199 = scmp.eq.s32.totalorder %s18, 1
    %p200 = por %p198, %p199
    %p201 = scmp.ne.s32.totalorder %s190, %s191
    %p202 = scmp.eq.s32.totalorder %s18, 0
    %p203 = por %p201, %p202
    %p204 = scmp.ne.s32.totalorder %s190, %s191
    %p205 = scmp.eq.s32.totalorder %s19, 1
    %p206 = por %p204, %p205
    %p208 = scmp.ne.s32.totalorder %s191, %s207
    %p209 = scmp.eq.s32.totalorder %s19, 0
    %p210 = por %p208, %p209
    %p211 = scmp.le.s32.totalorder 1, %s13
    %p212 = scmp.lt.s32.totalorder %s13, 3
    %p213 = pnand %p211, %p212
    %p214 = pneg %p213
    // Predicated region
    $region9: #{generator_forward.6} parent=5 // pred_check
      _
    $region10: #{generator_forward.6} parent=5 // pred_check_branch
      %216 = sbr.rel (%p213) target = $region12
    $region11: #{generator_forward.6} parent=5 // pred_region
      %s217 = ssub.s32 %s13, 1
      // Predicated region
      $region13: #{generator_forward.6} parent=11 // pred_check
        %p218 = pneg %p77
      $region14: #{generator_forward.6} parent=11 // pred_check_branch
        %220 = sbr.rel (%p218) target = $region16
      $region15: #{generator_forward.6} parent=11 // pred_region
        %p221 = scmp.lt.s32.totalorder %s23, 0
        %s222 = scalar_select %p221, %s23, 0
        %s223 = smul.addr %s222, 4
        %s224 = scalar_lea.vmem %s1, %s223
      $region16: #{generator_forward.6} parent=11 // pred_fallthru
        _
      // Predicated region
      $region17: #{generator_forward.6} parent=11 // pred_check
        %p225 = pneg %p98
      $region18: #{generator_forward.6} parent=11 // pred_check_branch
        %227 = sbr.rel (%p225) target = $region20
      $region19: #{generator_forward.6} parent=11 // pred_region
        _
      $region20: #{generator_forward.6} parent=11 // pred_fallthru
        _
      // Predicated region
      $region21: #{generator_forward.6} parent=11 // pred_check
        %p228 = pneg %p119
      $region22: #{generator_forward.6} parent=11 // pred_check_branch
        %230 = sbr.rel (%p228) target = $region24
      $region23: #{generator_forward.6} parent=11 // pred_region
        _
      $region24: #{generator_forward.6} parent=11 // pred_fallthru
        _
    $region12: #{generator_forward.6} parent=5 // pred_fallthru
      _
    %p231 = scmp.lt.s32.totalorder %s13, 2
    // Predicated region
    $region25: #{generator_forward.6} parent=5 // pred_check
      %p232 = pneg %p231
    $region26: #{generator_forward.6} parent=5 // pred_check_branch
      %234 = sbr.rel (%p232) target = $region28
    $region27: #{generator_forward.6} parent=5 // pred_region
      // Predicated region
      $region29: #{generator_forward.6} parent=27 // pred_check
        %p235 = pneg %p45
      $region30: #{generator_forward.6} parent=27 // pred_check_branch
        %237 = sbr.rel (%p235) target = $region32
      $region31: #{generator_forward.6} parent=27 // pred_region
        %p238 = scmp.lt.s32.totalorder %s20, 1
        %s239 = scalar_select %p238, %s20, 1
        %s240 = smul.addr %s239, 6
        %s241 = smul.addr %s240, 4
        %s242 = scalar_lea.vmem %s0, %s241
      $region32: #{generator_forward.6} parent=27 // pred_fallthru
        _
    $region28: #{generator_forward.6} parent=5 // pred_fallthru
      _
    %p243 = scmp.le.s32.totalorder 1, %s13
    %p244 = scmp.lt.s32.totalorder %s13, 3
    %p245 = pnand %p243, %p244
    %p246 = pneg %p245
    // Predicated region
    $region33: #{generator_forward.6} parent=5 // pred_check
      _
    $region34: #{generator_forward.6} parent=5 // pred_check_branch
      %248 = sbr.rel (%p245) target = $region36
    $region35: #{generator_forward.6} parent=5 // pred_region
      %s249 = ssub.s32 %s13, 1
      %p250 = scmp.lt.s32.totalorder %s22, 1
      %s251 = scalar_select %p250, %s22, 1
      %s252 = smul.addr %s251, 6
      %s253 = smul.addr %s252, 4
      %s254 = scalar_lea.vmem %s0, %s253
      %p255 = pneg %p51
      %p256 = pneg %p48
      %p257 = scmp.lt.s32.totalorder %s23, 0
      %s258 = scalar_select %p257, %s23, 0
      %s259 = smul.addr %s258, 4
      %s260 = scalar_lea.vmem %s1, %s259
      %p261 = pneg %p77
      %p262 = pneg %p74
      %p263 = pneg %p98
      %p264 = pneg %p95
      %p265 = pneg %p119
      %p266 = pneg %p116
      %p267 = pneg %p147
      %p268 = pneg %p144
      %p269 = scmp.lt.s32.totalorder %s22, 1
      %s270 = scalar_select %p269, %s22, 1
      %p271 = scmp.lt.s32.totalorder %s23, 0
      %s272 = scalar_select %p271, %s23, 0
      %s273 = smul.addr %s270, 2
      %s274 = sadd.s32 %s272, %s273
      %s275 = smul.addr %s274, 4
      %s276 = scalar_lea.vmem %s4, %s275
      %p277 = pneg %p175
      %p278 = pneg %p172
      %p279 = scmp.lt.s32.totalorder %s22, 1
      %s280 = scalar_select %p279, %s22, 1
      %p281 = scmp.lt.s32.totalorder %s23, 0
      %s282 = scalar_select %p281, %s23, 0
      %s283 = sadd.s32 %s282, %s280
      %s284 = scalar_lea.vmem %s5, %s283
      %p285 = pneg %p203
      %p286 = pneg %p200
      %p287 = scmp.lt.s32.totalorder %s22, 1
      %s288 = scalar_select %p287, %s22, 1
      %p289 = scmp.lt.s32.totalorder %s23, 0
      %s290 = scalar_select %p289, %s23, 0
      %s291 = sadd.s32 %s290, %s288
      %s292 = scalar_lea.vmem %s6, %s291
      %p293 = scmp.lt.s32.totalorder %s22, 1
      %s294 = scalar_select %p293, %s22, 1
      %s295 = smul.addr %s294, 6
      %s296 = smul.addr %s295, 4
      %s297 = scalar_lea.vmem %s0, %s296
      %p298 = scmp.lt.s32.totalorder %s23, 0
      %s299 = scalar_select %p298, %s23, 0
      %s300 = smul.addr %s299, 4
      %s301 = scalar_lea.vmem %s1, %s300
      %p302 = scmp.lt.s32.totalorder %s22, 1
      %s303 = scalar_select %p302, %s22, 1
      %p304 = scmp.lt.s32.totalorder %s23, 0
      %s305 = scalar_select %p304, %s23, 0
      %s306 = smul.addr %s303, 2
      %s307 = sadd.s32 %s305, %s306
      %s308 = smul.addr %s307, 4
      %s309 = scalar_lea.vmem %s4, %s308
      %p310 = scmp.lt.s32.totalorder %s22, 1
      %s311 = scalar_select %p310, %s22, 1
      %p312 = scmp.lt.s32.totalorder %s23, 0
      %s313 = scalar_select %p312, %s23, 0
      %s314 = sadd.s32 %s313, %s311
      %s315 = scalar_lea.vmem %s5, %s314
      %p316 = scmp.lt.s32.totalorder %s22, 1
      %s317 = scalar_select %p316, %s22, 1
      %p318 = scmp.lt.s32.totalorder %s23, 0
      %s319 = scalar_select %p318, %s23, 0
      %s320 = sadd.s32 %s319, %s317
      %s321 = scalar_lea.vmem %s6, %s320
      %v323 = vld [vmem:[%s297] sm:$0x7]
      %v324 = vld [vmem:[%s297 + $0x4] sm:$0x7]
      %v325 = vld [vmem:[%s297 + $0x8] sm:$0x7]
      %v326 = vld [vmem:[%s297 + $0xc] sm:$0x7]
      %v327 = vld [vmem:[%s297 + $0x10] sm:$0x7]
      %v328 = vld [vmem:[%s297 + $0x14] sm:$0x7]
      %v334 = vunpack.c.l.s4 1983009808
      %v335 = vunpack.c.0.s8 %v334
      %v336 = vlaneseq
      %v337 = vshrl.u32 %v336, 7
      %v338 = vsub.s32 %v335, %v337
      %v339 = vrot.slane %v323, %v338
      %v340 = vcombine.high %v339, %v339
      %v342 = vunpack.c.l.s4 1983009808
      %v343 = vunpack.c.0.s8 %v342
      %v344 = vlaneseq
      %v345 = vshrl.u32 %v344, 7
      %v346 = vsub.s32 %v343, %v345
      %v347 = vrot.slane %v324, %v346
      %v348 = vcombine.high %v347, %v347
      %v350 = vunpack.c.l.s4 1983009808
      %v351 = vunpack.c.0.s8 %v350
      %v352 = vlaneseq
      %v353 = vshrl.u32 %v352, 7
      %v354 = vsub.s32 %v351, %v353
      %v355 = vrot.slane %v325, %v354
      %v356 = vcombine.high %v355, %v355
      %v358 = vunpack.c.l.s4 1983009808
      %v359 = vunpack.c.0.s8 %v358
      %v360 = vlaneseq
      %v361 = vshrl.u32 %v360, 7
      %v362 = vsub.s32 %v359, %v361
      %v363 = vrot.slane %v326, %v362
      %v364 = vcombine.high %v363, %v363
      %vm365 = vsmask.f32 1280
      %vm366 = vsmask.f32 3336
      %vm367 = vmor %vm365, %vm366
      %vm368 = vsmask.f32 5392
      %vm369 = vmor %vm367, %vm368
      %vm370 = vsmask.f32 7448
      %vm371 = vmor %vm369, %vm370
      %v373 = vshrl.u32 %v339, 16
      %v375 = vrot.slane %v373, 6
      %v376 = vshll.u32 %v339, 16
      %v378 = vrot.slane %v376, 7
      %v379 = vor.u32 %v375, %v378
      %v380 = vrot.slane %v379, 2
      %v382 = vshll.u32 %v340, 16
      %v384 = vrot.slane %v382, 7
      %v385 = vsel %vm371, %v380, %v384
      %v387 = vshrl.u32 %v347, 16
      %v389 = vrot.slane %v387, 6
      %v390 = vshll.u32 %v347, 16
      %v392 = vrot.slane %v390, 7
      %v393 = vor.u32 %v389, %v392
      %v394 = vrot.slane %v393, 2
      %v396 = vshll.u32 %v348, 16
      %v398 = vrot.slane %v396, 7
      %v399 = vsel %vm371, %v394, %v398
      %v401 = vshrl.u32 %v355, 16
      %v403 = vrot.slane %v401, 6
      %v404 = vshll.u32 %v355, 16
      %v406 = vrot.slane %v404, 7
      %v407 = vor.u32 %v403, %v406
      %v408 = vrot.slane %v407, 2
      %v410 = vshll.u32 %v356, 16
      %v412 = vrot.slane %v410, 7
      %v413 = vsel %vm371, %v408, %v412
      %v415 = vshrl.u32 %v363, 16
      %v417 = vrot.slane %v415, 6
      %v418 = vshll.u32 %v363, 16
      %v420 = vrot.slane %v418, 7
      %v421 = vor.u32 %v417, %v420
      %v422 = vrot.slane %v421, 2
      %v424 = vshll.u32 %v364, 16
      %v426 = vrot.slane %v424, 7
      %v427 = vsel %vm371, %v422, %v426
      %vm428 = vcmask 1040384
      %vm429 = vcmask 1042434
      %vm430 = vmor %vm428, %vm429
      %vm431 = vcmask 1044484
      %vm432 = vmor %vm430, %vm431
      %vm433 = vcmask 1046534
      %vm434 = vmor %vm432, %vm433
      %v435 = vrot.slane %v339, 7
      %v436 = vrot.slane %v435, 2
      %v437 = vrot.slane %v340, 7
      %v438 = vsel %vm434, %v436, %v437
      %v439 = vrot.slane %v347, 7
      %v440 = vrot.slane %v439, 2
      %v441 = vrot.slane %v348, 7
      %v442 = vsel %vm434, %v440, %v441
      %v443 = vrot.slane %v355, 7
      %v444 = vrot.slane %v443, 2
      %v445 = vrot.slane %v356, 7
      %v446 = vsel %vm434, %v444, %v445
      %v447 = vrot.slane %v363, 7
      %v448 = vrot.slane %v447, 2
      %v449 = vrot.slane %v364, 7
      %v450 = vsel %vm434, %v448, %v449
      %v453 = vunpack.c.l.s4 1983009808
      %v454 = vunpack.c.0.s8 %v453
      %v455 = vlaneseq
      %v456 = vshrl.u32 %v455, 7
      %v457 = vsub.s32 %v454, %v456
      %v458 = vrot.slane %v327, %v457
      %v459 = vcombine.high %v458, %v458
      %v461 = vshrl.u32 %v458, 16
      %v463 = vrot.slane %v461, 6
      %v464 = vshll.u32 %v458, 16
      %v466 = vrot.slane %v464, 7
      %v467 = vor.u32 %v463, %v466
      %v468 = vrot.slane %v467, 2
      %v470 = vshll.u32 %v459, 16
      %v472 = vrot.slane %v470, 7
      %v473 = vsel %vm371, %v468, %v472
      %v474 = vrot.slane %v458, 7
      %v475 = vrot.slane %v474, 2
      %v476 = vrot.slane %v459, 7
      %v477 = vsel %vm434, %v475, %v476
      %v480 = vunpack.c.l.s4 1983009808
      %v481 = vunpack.c.0.s8 %v480
      %v482 = vlaneseq
      %v483 = vshrl.u32 %v482, 7
      %v484 = vsub.s32 %v481, %v483
      %v485 = vrot.slane %v328, %v484
      %v486 = vcombine.high %v485, %v485
      %v488 = vshrl.u32 %v485, 16
      %v490 = vrot.slane %v488, 6
      %v491 = vshll.u32 %v485, 16
      %v493 = vrot.slane %v491, 7
      %v494 = vor.u32 %v490, %v493
      %v495 = vrot.slane %v494, 2
      %v497 = vshll.u32 %v486, 16
      %v499 = vrot.slane %v497, 7
      %v500 = vsel %vm371, %v495, %v499
      %v501 = vrot.slane %v485, 7
      %v502 = vrot.slane %v501, 2
      %v503 = vrot.slane %v486, 7
      %v504 = vsel %vm434, %v502, %v503
      %v505 = vcombine.low %v323, %v324
      %v506 = vcombine.low %v325, %v326
      %v508 = vunpack.c.l.s4 1983009808
      %v509 = vunpack.c.0.s8 %v508
      %v510 = vlaneseq
      %v511 = vshrl.u32 %v510, 7
      %v512 = vsub.s32 %v509, %v511
      %v513 = vrot.slane %v505, %v512
      %v515 = vunpack.c.l.s4 1983009808
      %v516 = vunpack.c.0.s8 %v515
      %v517 = vlaneseq
      %v518 = vshrl.u32 %v517, 7
      %v519 = vsub.s32 %v516, %v518
      %v520 = vrot.slane %v506, %v519
      %v521 = vcombine.low %v513, %v520
      %v522 = vcombine.low %v385, %v399
      %v523 = vcombine.low %v413, %v427
      %v525 = vunpack.c.l.s4 1983009808
      %v526 = vunpack.c.0.s8 %v525
      %v527 = vlaneseq
      %v528 = vshrl.u32 %v527, 7
      %v529 = vsub.s32 %v526, %v528
      %v530 = vrot.slane %v522, %v529
      %v532 = vunpack.c.l.s4 1983009808
      %v533 = vunpack.c.0.s8 %v532
      %v534 = vlaneseq
      %v535 = vshrl.u32 %v534, 7
      %v536 = vsub.s32 %v533, %v535
      %v537 = vrot.slane %v523, %v536
      %v538 = vcombine.low %v530, %v537
      %539 = vrot.lane.b32.xlu0 %v538, 32
      %v540 = vpop.permute.xlu0 %539
      %v541 = vcombine.low %v438, %v442
      %v542 = vcombine.low %v446, %v450
      %v544 = vunpack.c.l.s4 1983009808
      %v545 = vunpack.c.0.s8 %v544
      %v546 = vlaneseq
      %v547 = vshrl.u32 %v546, 7
      %v548 = vsub.s32 %v545, %v547
      %v549 = vrot.slane %v541, %v548
      %v551 = vunpack.c.l.s4 1983009808
      %v552 = vunpack.c.0.s8 %v551
      %v553 = vlaneseq
      %v554 = vshrl.u32 %v553, 7
      %v555 = vsub.s32 %v552, %v554
      %v556 = vrot.slane %v542, %v555
      %v557 = vcombine.low %v549, %v556
      %558 = vrot.lane.b32.xlu0 %v557, 64
      %v559 = vpop.permute.xlu0 %558
      %v560 = vcombine.low %v324, %v325
      %v561 = vcombine.low %v326, %v327
      %v563 = vunpack.c.l.s4 1983009808
      %v564 = vunpack.c.0.s8 %v563
      %v565 = vlaneseq
      %v566 = vshrl.u32 %v565, 7
      %v567 = vsub.s32 %v564, %v566
      %v568 = vrot.slane %v560, %v567
      %v570 = vunpack.c.l.s4 1983009808
      %v571 = vunpack.c.0.s8 %v570
      %v572 = vlaneseq
      %v573 = vshrl.u32 %v572, 7
      %v574 = vsub.s32 %v571, %v573
      %v575 = vrot.slane %v561, %v574
      %v576 = vcombine.low %v568, %v575
      %577 = vrot.lane.b32.xlu0 %v576, 96
      %v578 = vpop.permute.xlu0 %577
      %v579 = vcombine.low %v399, %v413
      %v580 = vcombine.low %v427, %v473
      %v582 = vunpack.c.l.s4 1983009808
      %v583 = vunpack.c.0.s8 %v582
      %v584 = vlaneseq
      %v585 = vshrl.u32 %v584, 7
      %v586 = vsub.s32 %v583, %v585
      %v587 = vrot.slane %v579, %v586
      %v589 = vunpack.c.l.s4 1983009808
      %v590 = vunpack.c.0.s8 %v589
      %v591 = vlaneseq
      %v592 = vshrl.u32 %v591, 7
      %v593 = vsub.s32 %v590, %v592
      %v594 = vrot.slane %v580, %v593
      %v595 = vcombine.low %v587, %v594
      %v596 = vcombine.low %v442, %v446
      %v597 = vcombine.low %v450, %v477
      %v599 = vunpack.c.l.s4 1983009808
      %v600 = vunpack.c.0.s8 %v599
      %v601 = vlaneseq
      %v602 = vshrl.u32 %v601, 7
      %v603 = vsub.s32 %v600, %v602
      %v604 = vrot.slane %v596, %v603
      %v606 = vunpack.c.l.s4 1983009808
      %v607 = vunpack.c.0.s8 %v606
      %v608 = vlaneseq
      %v609 = vshrl.u32 %v608, 7
      %v610 = vsub.s32 %v607, %v609
      %v611 = vrot.slane %v597, %v610
      %v612 = vcombine.low %v604, %v611
      %613 = vrot.lane.b32.xlu0 %v612, 32
      %v614 = vpop.permute.xlu0 %613
      %v615 = vcombine.low %v327, %v328
      %v617 = vunpack.c.l.s4 1983009808
      %v618 = vunpack.c.0.s8 %v617
      %v619 = vlaneseq
      %v620 = vshrl.u32 %v619, 7
      %v621 = vsub.s32 %v618, %v620
      %v622 = vrot.slane %v615, %v621
      %v623 = vcombine.low %v520, %v622
      %624 = vrot.lane.b32.xlu0 %v623, 64
      %v625 = vpop.permute.xlu0 %624
      %v626 = vcombine.low %v473, %v500
      %v628 = vunpack.c.l.s4 1983009808
      %v629 = vunpack.c.0.s8 %v628
      %v630 = vlaneseq
      %v631 = vshrl.u32 %v630, 7
      %v632 = vsub.s32 %v629, %v631
      %v633 = vrot.slane %v626, %v632
      %v634 = vcombine.low %v537, %v633
      %635 = vrot.lane.b32.xlu0 %v634, 96
      %v636 = vpop.permute.xlu0 %635
      %v637 = vcombine.low %v477, %v504
      %v639 = vunpack.c.l.s4 1983009808
      %v640 = vunpack.c.0.s8 %v639
      %v641 = vlaneseq
      %v642 = vshrl.u32 %v641, 7
      %v643 = vsub.s32 %v640, %v642
      %v644 = vrot.slane %v637, %v643
      %v645 = vcombine.low %v556, %v644
      %vm646 = vcmask 261120
      %v649 = vsel %vm646, %v521, %v540
      %vm650 = vcmask 523264
      %v652 = vsel %vm650, %v649, %v559
      %vm653 = vcmask 785408
      %v655 = vsel %vm653, %v652, %v578
      %v659 = vsel %vm646, %v595, %v614
      %v661 = vsel %vm650, %v659, %v625
      %v663 = vsel %vm653, %v661, %v636
      %v665 = vld [vmem:[%s301] sm:$0xf]
      %v666 = vld [vmem:[%s301 + $0x4] sm:$0xf]
      %v667 = vld [vmem:[%s301 + $0x8] sm:$0xf]
      %v668 = vld [vmem:[%s301 + $0xc] sm:$0xf]
      %v669 = vld [vmem:[%s301 + $0x10] sm:$0xf]
      %v670 = vld [vmem:[%s301 + $0x14] sm:$0xf]
      %v671 = vld [vmem:[%s301 + $0x18] sm:$0xf]
      %v672 = vld [vmem:[%s301 + $0x1c] sm:$0xf]
      %v673 = vld [vmem:[%s301 + $0x20] sm:$0xf]
      %v674 = vld [vmem:[%s301 + $0x24] sm:$0xf]
      %v675 = vld [vmem:[%s301 + $0x28] sm:$0xf]
      %v676 = vld [vmem:[%s301 + $0x2c] sm:$0xf]
      %v677 = vld [vmem:[%s301 + $0x30] sm:$0xf]
      %v678 = vld [vmem:[%s301 + $0x34] sm:$0xf]
      %v679 = vld [vmem:[%s301 + $0x38] sm:$0xf]
      %v680 = vld [vmem:[%s301 + $0x3c] sm:$0xf]
      %v681 = vld [vmem:[%s301 + $0x40] sm:$0xf]
      %v682 = vld [vmem:[%s301 + $0x44] sm:$0xf]
      %v683 = vld [vmem:[%s301 + $0x48] sm:$0xf]
      %v684 = vld [vmem:[%s301 + $0x4c] sm:$0xf]
      %v685 = vld [vmem:[%s301 + $0x50] sm:$0xf]
      %v686 = vld [vmem:[%s301 + $0x54] sm:$0xf]
      %v687 = vld [vmem:[%s301 + $0x58] sm:$0xf]
      %v688 = vld [vmem:[%s301 + $0x5c] sm:$0xf]
      %v689 = vld [vmem:[%s301 + $0x60] sm:$0xf]
      %v690 = vld [vmem:[%s301 + $0x64] sm:$0xf]
      %v691 = vld [vmem:[%s301 + $0x68] sm:$0xf]
      %v692 = vld [vmem:[%s301 + $0x6c] sm:$0xf]
      %v693 = vld [vmem:[%s301 + $0x70] sm:$0xf]
      %v694 = vld [vmem:[%s301 + $0x74] sm:$0xf]
      %v695 = vld [vmem:[%s301 + $0x78] sm:$0xf]
      %v696 = vld [vmem:[%s301 + $0x7c] sm:$0xf]
      %v697 = vld [vmem:[%s301 + $0x80] sm:$0xf]
      %v698 = vld [vmem:[%s301 + $0x84] sm:$0xf]
      %v699 = vld [vmem:[%s301 + $0x88] sm:$0xf]
      %v700 = vld [vmem:[%s301 + $0x8c] sm:$0xf]
      %v737 = vunpack.c.l.b16 %v665
      %v738 = vunpack.c.l.b16 %v666
      %v739 = vunpack.c.l.b16 %v667
      %v740 = vunpack.c.l.b16 %v668
      %v741 = vunpack.c.l.b16 %v669
      %v742 = vunpack.c.l.b16 %v670
      %v743 = vunpack.c.l.b16 %v671
      %v744 = vunpack.c.l.b16 %v672
      %v745 = vunpack.c.l.b16 %v673
      %v746 = vunpack.c.l.b16 %v674
      %v747 = vunpack.c.l.b16 %v675
      %v748 = vunpack.c.l.b16 %v676
      %v749 = vunpack.c.l.b16 %v677
      %v750 = vunpack.c.l.b16 %v678
      %v751 = vunpack.c.l.b16 %v679
      %v752 = vunpack.c.l.b16 %v680
      %v753 = vunpack.c.l.b16 %v681
      %v754 = vunpack.c.l.b16 %v682
      %v755 = vunpack.c.l.b16 %v683
      %v756 = vunpack.c.l.b16 %v684
      %v757 = vunpack.c.l.b16 %v685
      %v758 = vunpack.c.l.b16 %v686
      %v759 = vunpack.c.l.b16 %v687
      %v760 = vunpack.c.l.b16 %v688
      %v761 = vunpack.c.l.b16 %v689
      %v762 = vunpack.c.l.b16 %v690
      %v763 = vunpack.c.l.b16 %v691
      %v764 = vunpack.c.l.b16 %v692
      %v765 = vunpack.c.l.b16 %v693
      %v766 = vunpack.c.l.b16 %v694
      %v767 = vunpack.c.l.b16 %v695
      %v768 = vunpack.c.l.b16 %v696
      %v769 = vunpack.c.l.b16 %v697
      %v770 = vunpack.c.l.b16 %v698
      %v771 = vunpack.c.l.b16 %v699
      %v772 = vunpack.c.l.b16 %v700
      %v773 = vpack.c.b16 %v738, %v737
      %v774 = vpack.c.b16 %v740, %v739
      %v775 = vpack.c.b16 %v742, %v741
      %v776 = vpack.c.b16 %v744, %v743
      %v777 = vpack.c.b16 %v746, %v745
      %v778 = vpack.c.b16 %v748, %v747
      %v779 = vpack.c.b16 %v750, %v749
      %v780 = vpack.c.b16 %v752, %v751
      %v781 = vpack.c.b16 %v754, %v753
      %v782 = vpack.c.b16 %v756, %v755
      %v783 = vpack.c.b16 %v758, %v757
      %v784 = vpack.c.b16 %v760, %v759
      %v785 = vpack.c.b16 %v762, %v761
      %v786 = vpack.c.b16 %v764, %v763
      %v787 = vpack.c.b16 %v766, %v765
      %v788 = vpack.c.b16 %v768, %v767
      %v789 = vpack.c.b16 %v770, %v769
      %v790 = vpack.c.b16 %v772, %v771
      %v810 = vsel %vm646, %v645, 0
      %812 = vmatprep.subr.bf16.mxu0 0
      %813 = vmatpush1.bf16.msra.mxu0 %v780
      %814 = vmatprep.subr.bf16.mxu0 0
      %815 = vmatpush1.bf16.msra.mxu0 %v779
      %816 = vmatprep.subr.bf16.mxu0 0
      %817 = vmatpush1.bf16.msra.mxu0 %v778
      %818 = vmatprep.subr.bf16.mxu0 0
      %819 = vmatpush1.bf16.msra.mxu0 %v777
      %820 = vmatprep.subr.bf16.mxu0 0
      %821 = vmatpush1.bf16.msra.mxu0 %v776
      %822 = vmatprep.subr.bf16.mxu0 0
      %823 = vmatpush1.bf16.msra.mxu0 %v775
      %824 = vmatprep.subr.bf16.mxu0 0
      %825 = vmatpush1.bf16.msra.mxu0 %v774
      %826 = vmatprep.subr.bf16.mxu0 0
      %827 = vmatpush1.bf16.msra.mxu0 %v773
      %828 = vmatprep.subr.bf16.mxu0 0
      %829 = vmatpush2.bf16.msra.mxu0 %v788
      %830 = vmatprep.subr.bf16.mxu0 0
      %831 = vmatpush2.bf16.msra.mxu0 %v787
      %832 = vmatprep.subr.bf16.mxu0 0
      %833 = vmatpush2.bf16.msra.mxu0 %v786
      %834 = vmatprep.subr.bf16.mxu0 0
      %835 = vmatpush2.bf16.msra.mxu0 %v785
      %836 = vmatprep.subr.bf16.mxu0 0
      %837 = vmatpush2.bf16.msra.mxu0 %v784
      %838 = vmatprep.subr.bf16.mxu0 0
      %839 = vmatpush2.bf16.msra.mxu0 %v783
      %840 = vmatprep.subr.bf16.mxu0 0
      %841 = vmatpush2.bf16.msra.mxu0 %v782
      %842 = vmatprep.subr.bf16.mxu0 0
      %843 = vmatpush2.bf16.msra.mxu0 %v781
      %844 = vmatprep.mubr.bf16.mxu0 %v663
      %845 = vmatmul.mubr.bf16.gmra.mxu0 %v655
      %v846 = vpop.f32.mrf.mxu0
      %v847 = vadd.f32 0.0, %v846
      %v848 = vpop.f32.mrf.mxu0
      %v849 = vpop.f32.mrf.mxu0
      %v850 = vadd.f32 0.0, %v849
      %v851 = vpop.f32.mrf.mxu0
      %852 = vdwg.mxu0
      %853 = vmatprep.subr.bf16.mxu0 0
      %854 = vmatpush1.bf16.msra.mxu0 0
      %855 = vmatprep.subr.bf16.mxu0 0
      %856 = vmatpush1.bf16.msra.mxu0 0
      %857 = vmatprep.subr.bf16.mxu0 0
      %858 = vmatpush1.bf16.msra.mxu0 0
      %859 = vmatprep.subr.bf16.mxu0 0
      %860 = vmatpush1.bf16.msra.mxu0 0
      %861 = vmatprep.subr.bf16.mxu0 0
      %862 = vmatpush1.bf16.msra.mxu0 0
      %863 = vmatprep.subr.bf16.mxu0 0
      %864 = vmatpush1.bf16.msra.mxu0 0
      %865 = vmatprep.subr.bf16.mxu0 0
      %866 = vmatpush1.bf16.msra.mxu0 %v790
      %867 = vmatprep.subr.bf16.mxu0 0
      %868 = vmatpush1.bf16.msra.mxu0 %v789
      %869 = vmatprep.subr.bf16.mxu0 0
      %870 = vmatpush2.bf16.msra.mxu0 0
      %871 = vmatprep.subr.bf16.mxu0 0
      %872 = vmatpush2.bf16.msra.mxu0 0
      %873 = vmatprep.subr.bf16.mxu0 0
      %874 = vmatpush2.bf16.msra.mxu0 0
      %875 = vmatprep.subr.bf16.mxu0 0
      %876 = vmatpush2.bf16.msra.mxu0 0
      %877 = vmatprep.subr.bf16.mxu0 0
      %878 = vmatpush2.bf16.msra.mxu0 0
      %879 = vmatprep.subr.bf16.mxu0 0
      %880 = vmatpush2.bf16.msra.mxu0 0
      %881 = vmatprep.subr.bf16.mxu0 0
      %882 = vmatpush2.bf16.msra.mxu0 0
      %883 = vmatprep.subr.bf16.mxu0 0
      %884 = vmatpush2.bf16.msra.mxu0 0
      %885 = vmatprep.mubr.bf16.mxu0 0
      %886 = vmatmul.mubr.bf16.gmra.mxu0 %v810
      %v887 = vpop.f32.mrf.mxu0
      %v888 = vadd.f32 %v847, %v887
      %v889 = vpop.f32.mrf.mxu0
      %v890 = vpop.f32.mrf.mxu0
      %v891 = vadd.f32 %v850, %v890
      %v892 = vpop.f32.mrf.mxu0
      %893 = vdwg.mxu0
      %v894 = vpack.c.bf16 %v891, %v888
      %v895 = vunpack.c.l.bf16 %v894
      %v896 = vunpack.c.h.bf16 %v894
      %v898 = vunpack.c.l.b16 %v894
      %v899 = vunpack.c.h.b16 %v894
      %v900 = vpack.c.b16 %v898, %v898
      %v901 = vpack.c.b16 %v899, %v899
      %904 = vst [vmem:[%s309] sm:$0xf] %v900
      %905 = vst [vmem:[%s309 + $0x4] sm:$0xf] %v901
      %v906 = vadd.f32 %v895, %v896
      %v907 = vrot.slane %v906, 4
      %v908 = vadd.f32 %v906, %v907
      %v909 = vrot.slane %v908, 2
      %v910 = vadd.f32 %v908, %v909
      %v911 = vrot.slane %v910, 1
      %v912 = vadd.f32 %v910, %v911
      %913 = vst [vmem:[%s315] sm:$0x1] %v912
      %v914 = vmul.f32 %v895, %v895
      %v915 = vmul.f32 %v896, %v896
      %v916 = vadd.f32 %v914, %v915
      %v917 = vrot.slane %v916, 4
      %v918 = vadd.f32 %v916, %v917
      %v919 = vrot.slane %v918, 2
      %v920 = vadd.f32 %v918, %v919
      %v921 = vrot.slane %v920, 1
      %v922 = vadd.f32 %v920, %v921
      %923 = vst [vmem:[%s321] sm:$0x1] %v922
      %p924 = scmp.lt.s32.totalorder %s22, 1
      %s925 = scalar_select %p924, %s22, 1
      %p926 = scmp.lt.s32.totalorder %s23, 0
      %s927 = scalar_select %p926, %s23, 0
      %s928 = smul.addr %s925, 2
      %s929 = sadd.s32 %s927, %s928
      %s930 = smul.addr %s929, 4
      %s931 = scalar_lea.vmem %s4, %s930
      %p932 = scmp.lt.s32.totalorder %s22, 1
      %s933 = scalar_select %p932, %s22, 1
      %p934 = scmp.lt.s32.totalorder %s23, 0
      %s935 = scalar_select %p934, %s23, 0
      %s936 = sadd.s32 %s935, %s933
      %s937 = scalar_lea.vmem %s5, %s936
      %p938 = scmp.lt.s32.totalorder %s22, 1
      %s939 = scalar_select %p938, %s22, 1
      %p940 = scmp.lt.s32.totalorder %s23, 0
      %s941 = scalar_select %p940, %s23, 0
      %s942 = sadd.s32 %s941, %s939
      %s943 = scalar_lea.vmem %s6, %s942
      // Predicated region
      $region37: #{generator_forward.6} parent=35 // pred_check
        %p944 = pneg %p144
      $region38: #{generator_forward.6} parent=35 // pred_check_branch
        %946 = sbr.rel (%p944) target = $region40
      $region39: #{generator_forward.6} parent=35 // pred_region
        _
      $region40: #{generator_forward.6} parent=35 // pred_fallthru
        _
      // Predicated region
      $region41: #{generator_forward.6} parent=35 // pred_check
        %p947 = pneg %p172
      $region42: #{generator_forward.6} parent=35 // pred_check_branch
        %949 = sbr.rel (%p947) target = $region44
      $region43: #{generator_forward.6} parent=35 // pred_region
        _
      $region44: #{generator_forward.6} parent=35 // pred_fallthru
        _
      // Predicated region
      $region45: #{generator_forward.6} parent=35 // pred_check
        %p950 = pneg %p200
      $region46: #{generator_forward.6} parent=35 // pred_check_branch
        %952 = sbr.rel (%p950) target = $region48
      $region47: #{generator_forward.6} parent=35 // pred_region
        _
      $region48: #{generator_forward.6} parent=35 // pred_fallthru
        _
    $region36: #{generator_forward.6} parent=5 // pred_fallthru
      _
    %p953 = scmp.le.s32.totalorder 2, %s13
    // Predicated region
    $region49: #{generator_forward.6} parent=5 // pred_check
      %p954 = pneg %p953
    $region50: #{generator_forward.6} parent=5 // pred_check_branch
      %956 = sbr.rel (%p954) target = $region52
    $region51: #{generator_forward.6} parent=5 // pred_region
      %s957 = ssub.s32 %s13, 2
      // Predicated region
      $region53: #{generator_forward.6} parent=51 // pred_check
        %p958 = pneg %p150
      $region54: #{generator_forward.6} parent=51 // pred_check_branch
        %960 = sbr.rel (%p958) target = $region56
      $region55: #{generator_forward.6} parent=51 // pred_region
        %p961 = scmp.lt.s32.totalorder %s24, 1
        %s962 = scalar_select %p961, %s24, 1
        %p963 = scmp.lt.s32.totalorder %s25, 0
        %s964 = scalar_select %p963, %s25, 0
        %s965 = smul.addr %s962, 2
        %s966 = sadd.s32 %s964, %s965
        %s967 = smul.addr %s966, 4
        %s968 = scalar_lea.vmem %s4, %s967
      $region56: #{generator_forward.6} parent=51 // pred_fallthru
        _
      // Predicated region
      $region57: #{generator_forward.6} parent=51 // pred_check
        %p969 = pneg %p178
      $region58: #{generator_forward.6} parent=51 // pred_check_branch
        %971 = sbr.rel (%p969) target = $region60
      $region59: #{generator_forward.6} parent=51 // pred_region
        %p972 = scmp.lt.s32.totalorder %s24, 1
        %s973 = scalar_select %p972, %s24, 1
        %p974 = scmp.lt.s32.totalorder %s25, 0
        %s975 = scalar_select %p974, %s25, 0
        %s976 = sadd.s32 %s975, %s973
        %s977 = scalar_lea.vmem %s5, %s976
      $region60: #{generator_forward.6} parent=51 // pred_fallthru
        _
      // Predicated region
      $region61: #{generator_forward.6} parent=51 // pred_check
        %p978 = pneg %p206
      $region62: #{generator_forward.6} parent=51 // pred_check_branch
        %980 = sbr.rel (%p978) target = $region64
      $region63: #{generator_forward.6} parent=51 // pred_region
        %p981 = scmp.lt.s32.totalorder %s24, 1
        %s982 = scalar_select %p981, %s24, 1
        %p983 = scmp.lt.s32.totalorder %s25, 0
        %s984 = scalar_select %p983, %s25, 0
        %s985 = sadd.s32 %s984, %s982
        %s986 = scalar_lea.vmem %s6, %s985
      $region64: #{generator_forward.6} parent=51 // pred_fallthru
        _
    $region52: #{generator_forward.6} parent=5 // pred_fallthru
      _
  $region6: #{generator_forward.6} parent=0 // loop_footer
    %s17 = sadd.s32 1, %s13
  $region7: #{generator_forward.6} parent=0 // loop_footer_branch
    %12 = sbr.rel target = $region3
  $region8: #{generator_forward.6} parent=0 // loop_exit
    _

// kernel: generator_forward.7
$region0: #{generator_forward.7}
  #allocation0 [shape = 'u32[]', space=smem, size = 0x4, offset = 0x4, fixed_abs, tag = 'smem constant byte address 0x4 - core index']
  #allocation1 [shape = 'u32[144,128]{1,0:T(1,128)}', space=vmem, size = 0x12000, scoped, tag = 'internal scratch']
  %s0 = inlined_call_operand.vmem [shape: bf16[2,10,10,16], index: 0, kind: input, shape index: {}]
  %s1 = inlined_call_operand.vmem [shape: bf16[144,128], index: 1, kind: input, shape index: {}]
  %s2 = inlined_call_operand.vmem [shape: f32[1,16], index: 2, kind: input, shape index: {}]
  %s3 = inlined_call_operand.vmem [shape: f32[1,16], index: 3, kind: input, shape index: {}]
  %s4 = inlined_call_operand.vmem [shape: bf16[2,64,128], index: 4, kind: output, shape index: {0}]
  %s5 = inlined_call_operand.vmem [shape: f32[2,1,128], index: 5, kind: output, shape index: {1}]
  %s6 = inlined_call_operand.vmem [shape: f32[2,1,128], index: 6, kind: output, shape index: {2}]
  %7 = xla_tuple %s4, %s5, %s6
  %s8 = sld [smem:[#allocation0]]
  $region65: #{generator_forward.7} parent=0
    _
  %s10 = ssub.s32 1, %s8
  %s11 = scalar_select 0, %s10, %s8
  loop: start=0, step=1, limit=4
  $region2: #{generator_forward.7} parent=0 // loop_pre_header
    _
  $region3: #{generator_forward.7} parent=0 // loop_header
    %s13 = sphi 0, %s17
    %p14 = scmp.ge.s32.totalorder %s13, 4
    %s20 = sphi 0, %s32
    %s21 = sphi 0, %s28
    %s22 = sphi 0, %s20
    %s23 = sphi 0, %s21
    %s24 = sphi 0, %s22
    %s25 = sphi 0, %s23
    %s35 = sphi 0, %s37
    %s38 = sphi 0, %s35
    %s39 = sphi 0, %s38
    %s55 = sphi 0, %s39
    %s61 = sphi 0, %s63
    %s64 = sphi 0, %s61
    %s65 = sphi 0, %s64
    %s81 = sphi 0, %s65
    %s85 = sphi 0, %s85
    %s87 = sphi 0, %s85
    %s88 = sphi 0, %s87
    %s102 = sphi 0, %s88
    %s106 = sphi 0, %s106
    %s108 = sphi 0, %s106
    %s109 = sphi 0, %s108
    %s123 = sphi 0, %s109
    %s131 = sphi 0, %s133
    %s134 = sphi 0, %s131
    %s135 = sphi 0, %s134
    %s151 = sphi 0, %s135
    %s159 = sphi 0, %s161
    %s162 = sphi 0, %s159
    %s163 = sphi 0, %s162
    %s179 = sphi 0, %s163
    %s187 = sphi 0, %s189
    %s190 = sphi 0, %s187
    %s191 = sphi 0, %s190
    %s207 = sphi 0, %s191
  $region4: #{generator_forward.7} parent=0 // loop_header_branch
    %16 = sbr.rel (%p14) target = $region8
  $region5: #{generator_forward.7} parent=0 // loop_body
    %s18 = ssub.s32 %s13, 1
    %s19 = ssub.s32 %s13, 2
    %s26 = sadd.s32 1, %s21
    %p27 = scmp.ge.s32.totalorder %s26, 1
    %s28 = scalar_select %p27, 0, %s26
    %s29 = sadd.s32 1, %s20
    %s30 = scalar_select %p27, %s29, %s20
    %p31 = scmp.ge.s32.totalorder %s30, 2
    %s32 = scalar_select %p31, 0, %s30
    %s33 = ssub.s32 %s20, %s32
    %p34 = scmp.eq.s32.totalorder %s33, 0
    %s36 = sadd.s32 %s35, 1
    %s37 = scalar_select %p34, %s35, %s36
    %p40 = pneg %p34
    %p41 = scmp.eq.s32.totalorder %s13, 1
    %p42 = por %p40, %p41
    %p43 = scmp.ne.s32.totalorder %s35, %s38
    %p44 = scmp.eq.s32.totalorder %s13, 0
    %p45 = por %p43, %p44
    %p46 = scmp.ne.s32.totalorder %s35, %s38
    %p47 = scmp.eq.s32.totalorder %s18, 1
    %p48 = por %p46, %p47
    %p49 = scmp.ne.s32.totalorder %s38, %s39
    %p50 = scmp.eq.s32.totalorder %s18, 0
    %p51 = por %p49, %p50
    %p52 = scmp.ne.s32.totalorder %s38, %s39
    %p53 = scmp.eq.s32.totalorder %s19, 1
    %p54 = por %p52, %p53
    %p56 = scmp.ne.s32.totalorder %s39, %s55
    %p57 = scmp.eq.s32.totalorder %s19, 0
    %p58 = por %p56, %p57
    %s59 = ssub.s32 %s21, %s28
    %p60 = scmp.eq.s32.totalorder %s59, 0
    %s62 = sadd.s32 %s61, 1
    %s63 = scalar_select %p60, %s61, %s62
    %p66 = pneg %p60
    %p67 = scmp.eq.s32.totalorder %s13, 1
    %p68 = por %p66, %p67
    %p69 = scmp.ne.s32.totalorder %s61, %s64
    %p70 = scmp.eq.s32.totalorder %s13, 0
    %p71 = por %p69, %p70
    %p72 = scmp.ne.s32.totalorder %s61, %s64
    %p73 = scmp.eq.s32.totalorder %s18, 1
    %p74 = por %p72, %p73
    %p75 = scmp.ne.s32.totalorder %s64, %s65
    %p76 = scmp.eq.s32.totalorder %s18, 0
    %p77 = por %p75, %p76
    %p78 = scmp.ne.s32.totalorder %s64, %s65
    %p79 = scmp.eq.s32.totalorder %s19, 1
    %p80 = por %p78, %p79
    %p82 = scmp.ne.s32.totalorder %s65, %s81
    %p83 = scmp.eq.s32.totalorder %s19, 0
    %p84 = por %p82, %p83
    %s86 = sadd.s32 %s85, 1
    %p89 = scmp.eq.s32.totalorder %s13, 1
    %p90 = scmp.ne.s32.totalorder %s85, %s87
    %p91 = scmp.eq.s32.totalorder %s13, 0
    %p92 = por %p90, %p91
    %p93 = scmp.ne.s32.totalorder %s85, %s87
    %p94 = scmp.eq.s32.totalorder %s18, 1
    %p95 = por %p93, %p94
    %p96 = scmp.ne.s32.totalorder %s87, %s88
    %p97 = scmp.eq.s32.totalorder %s18, 0
    %p98 = por %p96, %p97
    %p99 = scmp.ne.s32.totalorder %s87, %s88
    %p100 = scmp.eq.s32.totalorder %s19, 1
    %p101 = por %p99, %p100
    %p103 = scmp.ne.s32.totalorder %s88, %s102
    %p104 = scmp.eq.s32.totalorder %s19, 0
    %p105 = por %p103, %p104
    %s107 = sadd.s32 %s106, 1
    %p110 = scmp.eq.s32.totalorder %s13, 1
    %p111 = scmp.ne.s32.totalorder %s106, %s108
    %p112 = scmp.eq.s32.totalorder %s13, 0
    %p113 = por %p111, %p112
    %p114 = scmp.ne.s32.totalorder %s106, %s108
    %p115 = scmp.eq.s32.totalorder %s18, 1
    %p116 = por %p114, %p115
    %p117 = scmp.ne.s32.totalorder %s108, %s109
    %p118 = scmp.eq.s32.totalorder %s18, 0
    %p119 = por %p117, %p118
    %p120 = scmp.ne.s32.totalorder %s108, %s109
    %p121 = scmp.eq.s32.totalorder %s19, 1
    %p122 = por %p120, %p121
    %p124 = scmp.ne.s32.totalorder %s109, %s123
    %p125 = scmp.eq.s32.totalorder %s19, 0
    %p126 = por %p124, %p125
    %s127 = ssub.s32 %s20, %s32
    %s128 = ssub.s32 %s21, %s28
    %s129 = sor.u32 %s127, %s128
    %p130 = scmp.eq.s32.totalorder %s129, 0
    %s132 = sadd.s32 %s131, 1
    %s133 = scalar_select %p130, %s131, %s132
    %p136 = pneg %p130
    %p137 = scmp.eq.s32.totalorder %s13, 1
    %p138 = por %p136, %p137
    %p139 = scmp.ne.s32.totalorder %s131, %s134
    %p140 = scmp.eq.s32.totalorder %s13, 0
    %p141 = por %p139, %p140
    %p142 = scmp.ne.s32.totalorder %s131, %s134
    %p143 = scmp.eq.s32.totalorder %s18, 1
    %p144 = por %p142, %p143
    %p145 = scmp.ne.s32.totalorder %s134, %s135
    %p146 = scmp.eq.s32.totalorder %s18, 0
    %p147 = por %p145, %p146
    %p148 = scmp.ne.s32.totalorder %s134, %s135
    %p149 = scmp.eq.s32.totalorder %s19, 1
    %p150 = por %p148, %p149
    %p152 = scmp.ne.s32.totalorder %s135, %s151
    %p153 = scmp.eq.s32.totalorder %s19, 0
    %p154 = por %p152, %p153
    %s155 = ssub.s32 %s20, %s32
    %s156 = ssub.s32 %s21, %s28
    %s157 = sor.u32 %s155, %s156
    %p158 = scmp.eq.s32.totalorder %s157, 0
    %s160 = sadd.s32 %s159, 1
    %s161 = scalar_select %p158, %s159, %s160
    %p164 = pneg %p158
    %p165 = scmp.eq.s32.totalorder %s13, 1
    %p166 = por %p164, %p165
    %p167 = scmp.ne.s32.totalorder %s159, %s162
    %p168 = scmp.eq.s32.totalorder %s13, 0
    %p169 = por %p167, %p168
    %p170 = scmp.ne.s32.totalorder %s159, %s162
    %p171 = scmp.eq.s32.totalorder %s18, 1
    %p172 = por %p170, %p171
    %p173 = scmp.ne.s32.totalorder %s162, %s163
    %p174 = scmp.eq.s32.totalorder %s18, 0
    %p175 = por %p173, %p174
    %p176 = scmp.ne.s32.totalorder %s162, %s163
    %p177 = scmp.eq.s32.totalorder %s19, 1
    %p178 = por %p176, %p177
    %p180 = scmp.ne.s32.totalorder %s163, %s179
    %p181 = scmp.eq.s32.totalorder %s19, 0
    %p182 = por %p180, %p181
    %s183 = ssub.s32 %s20, %s32
    %s184 = ssub.s32 %s21, %s28
    %s185 = sor.u32 %s183, %s184
    %p186 = scmp.eq.s32.totalorder %s185, 0
    %s188 = sadd.s32 %s187, 1
    %s189 = scalar_select %p186, %s187, %s188
    %p192 = pneg %p186
    %p193 = scmp.eq.s32.totalorder %s13, 1
    %p194 = por %p192, %p193
    %p195 = scmp.ne.s32.totalorder %s187, %s190
    %p196 = scmp.eq.s32.totalorder %s13, 0
    %p197 = por %p195, %p196
    %p198 = scmp.ne.s32.totalorder %s187, %s190
    %p199 = scmp.eq.s32.totalorder %s18, 1
    %p200 = por %p198, %p199
    %p201 = scmp.ne.s32.totalorder %s190, %s191
    %p202 = scmp.eq.s32.totalorder %s18, 0
    %p203 = por %p201, %p202
    %p204 = scmp.ne.s32.totalorder %s190, %s191
    %p205 = scmp.eq.s32.totalorder %s19, 1
    %p206 = por %p204, %p205
    %p208 = scmp.ne.s32.totalorder %s191, %s207
    %p209 = scmp.eq.s32.totalorder %s19, 0
    %p210 = por %p208, %p209
    %p211 = scmp.le.s32.totalorder 1, %s13
    %p212 = scmp.lt.s32.totalorder %s13, 3
    %p213 = pnand %p211, %p212
    %p214 = pneg %p213
    // Predicated region
    $region9: #{generator_forward.7} parent=5 // pred_check
      _
    $region10: #{generator_forward.7} parent=5 // pred_check_branch
      %216 = sbr.rel (%p213) target = $region12
    $region11: #{generator_forward.7} parent=5 // pred_region
      %s217 = ssub.s32 %s13, 1
      // Predicated region
      $region13: #{generator_forward.7} parent=11 // pred_check
        %p218 = pneg %p77
      $region14: #{generator_forward.7} parent=11 // pred_check_branch
        %220 = sbr.rel (%p218) target = $region16
      $region15: #{generator_forward.7} parent=11 // pred_region
        %p221 = scmp.lt.s32.totalorder %s23, 0
        %s222 = scalar_select %p221, %s23, 0
        %s223 = smul.addr %s222, 4
        %s224 = scalar_lea.vmem %s1, %s223
      $region16: #{generator_forward.7} parent=11 // pred_fallthru
        _
      // Predicated region
      $region17: #{generator_forward.7} parent=11 // pred_check
        %p225 = pneg %p98
      $region18: #{generator_forward.7} parent=11 // pred_check_branch
        %227 = sbr.rel (%p225) target = $region20
      $region19: #{generator_forward.7} parent=11 // pred_region
        _
      $region20: #{generator_forward.7} parent=11 // pred_fallthru
        _
      // Predicated region
      $region21: #{generator_forward.7} parent=11 // pred_check
        %p228 = pneg %p119
      $region22: #{generator_forward.7} parent=11 // pred_check_branch
        %230 = sbr.rel (%p228) target = $region24
      $region23: #{generator_forward.7} parent=11 // pred_region
        _
      $region24: #{generator_forward.7} parent=11 // pred_fallthru
        _
    $region12: #{generator_forward.7} parent=5 // pred_fallthru
      _
    %p231 = scmp.lt.s32.totalorder %s13, 2
    // Predicated region
    $region25: #{generator_forward.7} parent=5 // pred_check
      %p232 = pneg %p231
    $region26: #{generator_forward.7} parent=5 // pred_check_branch
      %234 = sbr.rel (%p232) target = $region28
    $region27: #{generator_forward.7} parent=5 // pred_region
      // Predicated region
      $region29: #{generator_forward.7} parent=27 // pred_check
        %p235 = pneg %p45
      $region30: #{generator_forward.7} parent=27 // pred_check_branch
        %237 = sbr.rel (%p235) target = $region32
      $region31: #{generator_forward.7} parent=27 // pred_region
        %p238 = scmp.lt.s32.totalorder %s20, 1
        %s239 = scalar_select %p238, %s20, 1
        %s240 = smul.addr %s239, 20
        %s241 = smul.addr %s240, 4
        %s242 = scalar_lea.vmem %s0, %s241
      $region32: #{generator_forward.7} parent=27 // pred_fallthru
        _
    $region28: #{generator_forward.7} parent=5 // pred_fallthru
      _
    %p243 = scmp.le.s32.totalorder 1, %s13
    %p244 = scmp.lt.s32.totalorder %s13, 3
    %p245 = pnand %p243, %p244
    %p246 = pneg %p245
    // Predicated region
    $region33: #{generator_forward.7} parent=5 // pred_check
      _
    $region34: #{generator_forward.7} parent=5 // pred_check_branch
      %248 = sbr.rel (%p245) target = $region36
    $region35: #{generator_forward.7} parent=5 // pred_region
      %s249 = ssub.s32 %s13, 1
      %p250 = scmp.lt.s32.totalorder %s22, 1
      %s251 = scalar_select %p250, %s22, 1
      %s252 = smul.addr %s251, 20
      %s253 = smul.addr %s252, 4
      %s254 = scalar_lea.vmem %s0, %s253
      %p255 = pneg %p51
      %p256 = pneg %p48
      %p257 = scmp.lt.s32.totalorder %s23, 0
      %s258 = scalar_select %p257, %s23, 0
      %s259 = smul.addr %s258, 4
      %s260 = scalar_lea.vmem %s1, %s259
      %p261 = pneg %p77
      %p262 = pneg %p74
      %p263 = pneg %p98
      %p264 = pneg %p95
      %p265 = pneg %p119
      %p266 = pneg %p116
      %p267 = pneg %p147
      %p268 = pneg %p144
      %p269 = scmp.lt.s32.totalorder %s22, 1
      %s270 = scalar_select %p269, %s22, 1
      %p271 = scmp.lt.s32.totalorder %s23, 0
      %s272 = scalar_select %p271, %s23, 0
      %s273 = smul.addr %s270, 8
      %s274 = sadd.s32 %s272, %s273
      %s275 = smul.addr %s274, 4
      %s276 = scalar_lea.vmem %s4, %s275
      %p277 = pneg %p175
      %p278 = pneg %p172
      %p279 = scmp.lt.s32.totalorder %s22, 1
      %s280 = scalar_select %p279, %s22, 1
      %p281 = scmp.lt.s32.totalorder %s23, 0
      %s282 = scalar_select %p281, %s23, 0
      %s283 = sadd.s32 %s282, %s280
      %s284 = scalar_lea.vmem %s5, %s283
      %p285 = pneg %p203
      %p286 = pneg %p200
      %p287 = scmp.lt.s32.totalorder %s22, 1
      %s288 = scalar_select %p287, %s22, 1
      %p289 = scmp.lt.s32.totalorder %s23, 0
      %s290 = scalar_select %p289, %s23, 0
      %s291 = sadd.s32 %s290, %s288
      %s292 = scalar_lea.vmem %s6, %s291
      %p293 = scmp.lt.s32.totalorder %s22, 1
      %s294 = scalar_select %p293, %s22, 1
      %s295 = smul.addr %s294, 20
      %s296 = smul.addr %s295, 4
      %s297 = scalar_lea.vmem %s0, %s296
      %p298 = scmp.lt.s32.totalorder %s23, 0
      %s299 = scalar_select %p298, %s23, 0
      %s300 = smul.addr %s299, 4
      %s301 = scalar_lea.vmem %s1, %s300
      %p302 = scmp.lt.s32.totalorder %s22, 1
      %s303 = scalar_select %p302, %s22, 1
      %p304 = scmp.lt.s32.totalorder %s23, 0
      %s305 = scalar_select %p304, %s23, 0
      %s306 = smul.addr %s303, 8
      %s307 = sadd.s32 %s305, %s306
      %s308 = smul.addr %s307, 4
      %s309 = scalar_lea.vmem %s4, %s308
      %p310 = scmp.lt.s32.totalorder %s22, 1
      %s311 = scalar_select %p310, %s22, 1
      %p312 = scmp.lt.s32.totalorder %s23, 0
      %s313 = scalar_select %p312, %s23, 0
      %s314 = sadd.s32 %s313, %s311
      %s315 = scalar_lea.vmem %s5, %s314
      %p316 = scmp.lt.s32.totalorder %s22, 1
      %s317 = scalar_select %p316, %s22, 1
      %p318 = scmp.lt.s32.totalorder %s23, 0
      %s319 = scalar_select %p318, %s23, 0
      %s320 = sadd.s32 %s319, %s317
      %s321 = scalar_lea.vmem %s6, %s320
      %v323 = vld [vmem:[%s297] sm:$0xf]
      %v324 = vld [vmem:[%s297 + $0x4] sm:$0x1]
      %v325 = vld [vmem:[%s297 + $0x8] sm:$0xf]
      %v326 = vld [vmem:[%s297 + $0xc] sm:$0x1]
      %v327 = vld [vmem:[%s297 + $0x10] sm:$0xf]
      %v328 = vld [vmem:[%s297 + $0x14] sm:$0x1]
      %v329 = vld [vmem:[%s297 + $0x18] sm:$0xf]
      %v330 = vld [vmem:[%s297 + $0x1c] sm:$0x1]
      %v331 = vld [vmem:[%s297 + $0x20] sm:$0xf]
      %v332 = vld [vmem:[%s297 + $0x24] sm:$0x1]
      %v333 = vld [vmem:[%s297 + $0x28] sm:$0xf]
      %v334 = vld [vmem:[%s297 + $0x2c] sm:$0x1]
      %v335 = vld [vmem:[%s297 + $0x30] sm:$0xf]
      %v336 = vld [vmem:[%s297 + $0x34] sm:$0x1]
      %v337 = vld [vmem:[%s297 + $0x38] sm:$0xf]
      %v338 = vld [vmem:[%s297 + $0x3c] sm:$0x1]
      %v339 = vld [vmem:[%s297 + $0x40] sm:$0xf]
      %v340 = vld [vmem:[%s297 + $0x44] sm:$0x1]
      %v341 = vld [vmem:[%s297 + $0x48] sm:$0xf]
      %v342 = vld [vmem:[%s297 + $0x4c] sm:$0x1]
      %v343 = vunpack.c.l.bf16 %v323
      %v344 = vunpack.c.l.bf16 %v324
      %v345 = vunpack.c.l.bf16 %v325
      %v346 = vunpack.c.l.bf16 %v326
      %v347 = vunpack.c.l.bf16 %v327
      %v348 = vunpack.c.l.bf16 %v328
      %v349 = vunpack.c.l.bf16 %v329
      %v350 = vunpack.c.l.bf16 %v330
      %v351 = vunpack.c.l.bf16 %v331
      %v352 = vunpack.c.l.bf16 %v332
      %v353 = vunpack.c.l.bf16 %v333
      %v354 = vunpack.c.l.bf16 %v334
      %v355 = vunpack.c.l.bf16 %v335
      %v356 = vunpack.c.l.bf16 %v336
      %v357 = vunpack.c.l.bf16 %v337
      %v358 = vunpack.c.l.bf16 %v338
      %v359 = vunpack.c.l.bf16 %v339
      %v360 = vunpack.c.l.bf16 %v340
      %v361 = vunpack.c.l.bf16 %v341
      %v362 = vunpack.c.l.bf16 %v342
      %v363 = vld [vmem:[%s2] sm:$0x1]
      %v365 = vlaneseq
      %v366 = vshrl.u32 %v365, 7
      %v367 = vsub.s32 0, %v366
      %v368 = vrot.slane %v363, %v367
      %v370 = vmul.f32 %v343, %v368
      %v371 = vmul.f32 %v344, %v368
      %v372 = vmul.f32 %v345, %v368
      %v373 = vmul.f32 %v346, %v368
      %v374 = vmul.f32 %v347, %v368
      %v375 = vmul.f32 %v348, %v368
      %v376 = vmul.f32 %v349, %v368
      %v377 = vmul.f32 %v350, %v368
      %v378 = vmul.f32 %v351, %v368
      %v379 = vmul.f32 %v352, %v368
      %v380 = vmul.f32 %v353, %v368
      %v381 = vmul.f32 %v354, %v368
      %v382 = vmul.f32 %v355, %v368
      %v383 = vmul.f32 %v356, %v368
      %v384 = vmul.f32 %v357, %v368
      %v385 = vmul.f32 %v358, %v368
      %v386 = vmul.f32 %v359, %v368
      %v387 = vmul.f32 %v360, %v368
      %v388 = vmul.f32 %v361, %v368
      %v389 = vmul.f32 %v362, %v368
      %v390 = vld [vmem:[%s3] sm:$0x1]
      %v392 = vlaneseq
      %v393 = vshrl.u32 %v392, 7
      %v394 = vsub.s32 0, %v393
      %v395 = vrot.slane %v390, %v394
      %v397 = vadd.f32 %v370, %v395
      %v398 = vadd.f32 %v371, %v395
      %v399 = vadd.f32 %v372, %v395
      %v400 = vadd.f32 %v373, %v395
      %v401 = vadd.f32 %v374, %v395
      %v402 = vadd.f32 %v375, %v395
      %v403 = vadd.f32 %v376, %v395
      %v404 = vadd.f32 %v377, %v395
      %v405 = vadd.f32 %v378, %v395
      %v406 = vadd.f32 %v379, %v395
      %v407 = vadd.f32 %v380, %v395
      %v408 = vadd.f32 %v381, %v395
      %v409 = vadd.f32 %v382, %v395
      %v410 = vadd.f32 %v383, %v395
      %v411 = vadd.f32 %v384, %v395
      %v412 = vadd.f32 %v385, %v395
      %v413 = vadd.f32 %v386, %v395
      %v414 = vadd.f32 %v387, %v395
      %v415 = vadd.f32 %v388, %v395
      %v416 = vadd.f32 %v389, %v395
      %vm417 = vcmp.gt.f32.partialorder %v397, 0.0
      %vm418 = vcmp.gt.f32.partialorder %v398, 0.0
      %vm419 = vcmp.gt.f32.partialorder %v399, 0.0
      %vm420 = vcmp.gt.f32.partialorder %v400, 0.0
      %vm421 = vcmp.gt.f32.partialorder %v401, 0.0
      %vm422 = vcmp.gt.f32.partialorder %v402, 0.0
      %vm423 = vcmp.gt.f32.partialorder %v403, 0.0
      %vm424 = vcmp.gt.f32.partialorder %v404, 0.0
      %vm425 = vcmp.gt.f32.partialorder %v405, 0.0
      %vm426 = vcmp.gt.f32.partialorder %v406, 0.0
      %vm427 = vcmp.gt.f32.partialorder %v407, 0.0
      %vm428 = vcmp.gt.f32.partialorder %v408, 0.0
      %vm429 = vcmp.gt.f32.partialorder %v409, 0.0
      %vm430 = vcmp.gt.f32.partialorder %v410, 0.0
      %vm431 = vcmp.gt.f32.partialorder %v411, 0.0
      %vm432 = vcmp.gt.f32.partialorder %v412, 0.0
      %vm433 = vcmp.gt.f32.partialorder %v413, 0.0
      %vm434 = vcmp.gt.f32.partialorder %v414, 0.0
      %vm435 = vcmp.gt.f32.partialorder %v415, 0.0
      %vm436 = vcmp.gt.f32.partialorder %v416, 0.0
      %v437 = vmul.f32 %v397, 0.2
      %v438 = vmul.f32 %v398, 0.2
      %v439 = vmul.f32 %v399, 0.2
      %v440 = vmul.f32 %v400, 0.2
      %v441 = vmul.f32 %v401, 0.2
      %v442 = vmul.f32 %v402, 0.2
      %v443 = vmul.f32 %v403, 0.2
      %v444 = vmul.f32 %v404, 0.2
      %v445 = vmul.f32 %v405, 0.2
      %v446 = vmul.f32 %v406, 0.2
      %v447 = vmul.f32 %v407, 0.2
      %v448 = vmul.f32 %v408, 0.2
      %v449 = vmul.f32 %v409, 0.2
      %v450 = vmul.f32 %v410, 0.2
      %v451 = vmul.f32 %v411, 0.2
      %v452 = vmul.f32 %v412, 0.2
      %v453 = vmul.f32 %v413, 0.2
      %v454 = vmul.f32 %v414, 0.2
      %v455 = vmul.f32 %v415, 0.2
      %v456 = vmul.f32 %v416, 0.2
      %v457 = vsel %vm417, %v397, %v437
      %v458 = vsel %vm418, %v398, %v438
      %v459 = vsel %vm419, %v399, %v439
      %v460 = vsel %vm420, %v400, %v440
      %v461 = vsel %vm421, %v401, %v441
      %v462 = vsel %vm422, %v402, %v442
      %v463 = vsel %vm423, %v403, %v443
      %v464 = vsel %vm424, %v404, %v444
      %v465 = vsel %vm425, %v405, %v445
      %v466 = vsel %vm426, %v406, %v446
      %v467 = vsel %vm427, %v407, %v447
      %v468 = vsel %vm428, %v408, %v448
      %v469 = vsel %vm429, %v409, %v449
      %v470 = vsel %vm430, %v410, %v450
      %v471 = vsel %vm431, %v411, %v451
      %v472 = vsel %vm432, %v412, %v452
      %v473 = vsel %vm433, %v413, %v453
      %v474 = vsel %vm434, %v414, %v454
      %v475 = vsel %vm435, %v415, %v455
      %v476 = vsel %vm436, %v416, %v456
      %v477 = vlaneseq
      %v478 = vshrl.u32 %v477, 7
      %v479 = vadd.s32 %v478, 8
      %vm480 = vcmp.ge.s32.totalorder %v478, 1
      %vm481 = vcmp.ge.s32.totalorder %v479, 1
      %vm482 = vmand 0, %vm480
      %vm483 = vmand 0, %vm481
      %vm484 = vmand 1, %vm480
      %vm485 = vmand 1, %vm481
      %vm486 = vcmp.le.s32.totalorder %v478, 8
      %vm487 = vcmp.le.s32.totalorder %v479, 8
      %vm488 = vmand %vm482, %vm486
      %vm489 = vmand %vm483, %vm487
      %vm490 = vmand %vm484, %vm486
      %vm491 = vmand %vm485, %vm487
      %v492 = vsel %vm488, 1, 0
      %v493 = vsel %vm489, 1, 0
      %v494 = vsel %vm490, 1, 0
      %v495 = vsel %vm491, 1, 0
      %vm496 = vcmp.eq.s32.totalorder %v492, 1
      %vm497 = vcmp.eq.s32.totalorder %v493, 1
      %vm498 = vcmp.eq.s32.totalorder %v494, 1
      %vm499 = vcmp.eq.s32.totalorder %v495, 1
      %v500 = vsel %vm496, %v457, 0.0
      %v501 = vsel %vm497, %v458, 0.0
      %v502 = vsel %vm498, %v459, 0.0
      %v503 = vsel %vm499, %v460, 0.0
      %v504 = vsel %vm498, %v461, 0.0
      %v505 = vsel %vm499, %v462, 0.0
      %v506 = vsel %vm498, %v463, 0.0
      %v507 = vsel %vm499, %v464, 0.0
      %v508 = vsel %vm498, %v465, 0.0
      %v509 = vsel %vm499, %v466, 0.0
      %v510 = vsel %vm498, %v467, 0.0
      %v511 = vsel %vm499, %v468, 0.0
      %v512 = vsel %vm498, %v469, 0.0
      %v513 = vsel %vm499, %v470, 0.0
      %v514 = vsel %vm498, %v471, 0.0
      %v515 = vsel %vm499, %v472, 0.0
      %v516 = vsel %vm498, %v473, 0.0
      %v517 = vsel %vm499, %v474, 0.0
      %v518 = vsel %vm496, %v475, 0.0
      %v519 = vsel %vm497, %v476, 0.0
      %v520 = vpack.c.bf16 %v501, %v500
      %v521 = vpack.c.bf16 %v503, %v502
      %v522 = vpack.c.bf16 %v505, %v504
      %v523 = vpack.c.bf16 %v507, %v506
      %v524 = vpack.c.bf16 %v509, %v508
      %v525 = vpack.c.bf16 %v511, %v510
      %v526 = vpack.c.bf16 %v513, %v512
      %v527 = vpack.c.bf16 %v515, %v514
      %v528 = vpack.c.bf16 %v517, %v516
      %v529 = vpack.c.bf16 %v519, %v518
      %v538 = vunpack.c.l.b16 %v520
      %v539 = vunpack.c.h.b16 %v520
      %v540 = vunpack.c.l.b16 %v521
      %v541 = vunpack.c.h.b16 %v521
      %v542 = vunpack.c.l.b16 %v522
      %v543 = vunpack.c.h.b16 %v522
      %v544 = vunpack.c.l.b16 %v523
      %v545 = vunpack.c.h.b16 %v523
      %v546 = vunpack.c.l.b16 %v524
      %v547 = vunpack.c.h.b16 %v524
      %v548 = vunpack.c.l.b16 %v525
      %v549 = vunpack.c.h.b16 %v525
      %v550 = vunpack.c.l.b16 %v526
      %v551 = vunpack.c.h.b16 %v526
      %v552 = vunpack.c.l.b16 %v527
      %v553 = vunpack.c.h.b16 %v527
      %v554 = vpack.c.b16 %v538, %v538
      %v555 = vpack.c.b16 %v539, %v539
      %v556 = vpack.c.b16 %v540, %v540
      %v557 = vpack.c.b16 %v541, %v541
      %v558 = vpack.c.b16 %v542, %v542
      %v559 = vpack.c.b16 %v543, %v543
      %v560 = vpack.c.b16 %v544, %v544
      %v561 = vpack.c.b16 %v545, %v545
      %v562 = vpack.c.b16 %v546, %v546
      %v563 = vpack.c.b16 %v547, %v547
      %v564 = vpack.c.b16 %v548, %v548
      %v565 = vpack.c.b16 %v549, %v549
      %v566 = vpack.c.b16 %v550, %v550
      %v567 = vpack.c.b16 %v551, %v551
      %v568 = vpack.c.b16 %v552, %v552
      %v569 = vpack.c.b16 %v553, %v553
      %vm570 = vsmask.f32 3328
      %vm571 = vsmask.f32 7440
      %vm572 = vmor %vm570, %vm571
      %v574 = vshrl.u32 %v554, 16
      %v576 = vrot.slane %v574, 4
      %v577 = vshll.u32 %v554, 16
      %v579 = vrot.slane %v577, 5
      %v580 = vor.u32 %v576, %v579
      %v581 = vrot.slane %v580, 4
      %v583 = vshll.u32 %v555, 16
      %v585 = vrot.slane %v583, 5
      %v586 = vsel %vm572, %v581, %v585
      %v588 = vshrl.u32 %v556, 16
      %v590 = vrot.slane %v588, 4
      %v591 = vshll.u32 %v556, 16
      %v593 = vrot.slane %v591, 5
      %v594 = vor.u32 %v590, %v593
      %v595 = vrot.slane %v594, 4
      %v597 = vshll.u32 %v557, 16
      %v599 = vrot.slane %v597, 5
      %v600 = vsel %vm572, %v595, %v599
      %v602 = vshrl.u32 %v558, 16
      %v604 = vrot.slane %v602, 4
      %v605 = vshll.u32 %v558, 16
      %v607 = vrot.slane %v605, 5
      %v608 = vor.u32 %v604, %v607
      %v609 = vrot.slane %v608, 4
      %v611 = vshll.u32 %v559, 16
      %v613 = vrot.slane %v611, 5
      %v614 = vsel %vm572, %v609, %v613
      %v616 = vshrl.u32 %v560, 16
      %v618 = vrot.slane %v616, 4
      %v619 = vshll.u32 %v560, 16
      %v621 = vrot.slane %v619, 5
      %v622 = vor.u32 %v618, %v621
      %v623 = vrot.slane %v622, 4
      %v625 = vshll.u32 %v561, 16
      %v627 = vrot.slane %v625, 5
      %v628 = vsel %vm572, %v623, %v627
      %v630 = vshrl.u32 %v562, 16
      %v632 = vrot.slane %v630, 4
      %v633 = vshll.u32 %v562, 16
      %v635 = vrot.slane %v633, 5
      %v636 = vor.u32 %v632, %v635
      %v637 = vrot.slane %v636, 4
      %v639 = vshll.u32 %v563, 16
      %v641 = vrot.slane %v639, 5
      %v642 = vsel %vm572, %v637, %v641
      %v644 = vshrl.u32 %v564, 16
      %v646 = vrot.slane %v644, 4
      %v647 = vshll.u32 %v564, 16
      %v649 = vrot.slane %v647, 5
      %v650 = vor.u32 %v646, %v649
      %v651 = vrot.slane %v650, 4
      %v653 = vshll.u32 %v565, 16
      %v655 = vrot.slane %v653, 5
      %v656 = vsel %vm572, %v651, %v655
      %v658 = vshrl.u32 %v566, 16
      %v660 = vrot.slane %v658, 4
      %v661 = vshll.u32 %v566, 16
      %v663 = vrot.slane %v661, 5
      %v664 = vor.u32 %v660, %v663
      %v665 = vrot.slane %v664, 4
      %v667 = vshll.u32 %v567, 16
      %v669 = vrot.slane %v667, 5
      %v670 = vsel %vm572, %v665, %v669
      %v672 = vshrl.u32 %v568, 16
      %v674 = vrot.slane %v672, 4
      %v675 = vshll.u32 %v568, 16
      %v677 = vrot.slane %v675, 5
      %v678 = vor.u32 %v674, %v677
      %v679 = vrot.slane %v678, 4
      %v681 = vshll.u32 %v569, 16
      %v683 = vrot.slane %v681, 5
      %v684 = vsel %vm572, %v679, %v683
      %vm685 = vcmask 1042432
      %vm686 = vcmask 1046532
      %vm687 = vmor %vm685, %vm686
      %v688 = vrot.slane %v554, 5
      %v689 = vrot.slane %v688, 4
      %v690 = vrot.slane %v555, 5
      %v691 = vsel %vm687, %v689, %v690
      %v692 = vrot.slane %v556, 5
      %v693 = vrot.slane %v692, 4
      %v694 = vrot.slane %v557, 5
      %v695 = vsel %vm687, %v693, %v694
      %v696 = vrot.slane %v558, 5
      %v697 = vrot.slane %v696, 4
      %v698 = vrot.slane %v559, 5
      %v699 = vsel %vm687, %v697, %v698
      %v700 = vrot.slane %v560, 5
      %v701 = vrot.slane %v700, 4
      %v702 = vrot.slane %v561, 5
      %v703 = vsel %vm687, %v701, %v702
      %v704 = vrot.slane %v562, 5
      %v705 = vrot.slane %v704, 4
      %v706 = vrot.slane %v563, 5
      %v707 = vsel %vm687, %v705, %v706
      %v708 = vrot.slane %v564, 5
      %v709 = vrot.slane %v708, 4
      %v710 = vrot.slane %v565, 5
      %v711 = vsel %vm687, %v709, %v710
      %v712 = vrot.slane %v566, 5
      %v713 = vrot.slane %v712, 4
      %v714 = vrot.slane %v567, 5
      %v715 = vsel %vm687, %v713, %v714
      %v716 = vrot.slane %v568, 5
      %v717 = vrot.slane %v716, 4
      %v718 = vrot.slane %v569, 5
      %v719 = vsel %vm687, %v717, %v718
      %v721 = vunpack.c.l.b16 %v528
      %v722 = vunpack.c.h.b16 %v528
      %v723 = vpack.c.b16 %v721, %v721
      %v724 = vpack.c.b16 %v722, %v722
      %v726 = vshrl.u32 %v723, 16
      %v728 = vrot.slane %v726, 4
      %v729 = vshll.u32 %v723, 16
      %v731 = vrot.slane %v729, 5
      %v732 = vor.u32 %v728, %v731
      %v733 = vrot.slane %v732, 4
      %v735 = vshll.u32 %v724, 16
      %v737 = vrot.slane %v735, 5
      %v738 = vsel %vm572, %v733, %v737
      %v739 = vrot.slane %v723, 5
      %v740 = vrot.slane %v739, 4
      %v741 = vrot.slane %v724, 5
      %v742 = vsel %vm687, %v740, %v741
      %v744 = vunpack.c.l.b16 %v529
      %v745 = vunpack.c.h.b16 %v529
      %v746 = vpack.c.b16 %v744, %v744
      %v747 = vpack.c.b16 %v745, %v745
      %v749 = vshrl.u32 %v746, 16
      %v751 = vrot.slane %v749, 4
      %v752 = vshll.u32 %v746, 16
      %v754 = vrot.slane %v752, 5
      %v755 = vor.u32 %v751, %v754
      %v756 = vrot.slane %v755, 4
      %v758 = vshll.u32 %v747, 16
      %v760 = vrot.slane %v758, 5
      %v761 = vsel %vm572, %v756, %v760
      %v762 = vrot.slane %v746, 5
      %v763 = vrot.slane %v762, 4
      %v764 = vrot.slane %v747, 5
      %v765 = vsel %vm687, %v763, %v764
      %v766 = vpack.c.b16 %v540, %v538
      %v767 = vpack.c.b16 %v544, %v542
      %v768 = vpack.c.b16 %v548, %v546
      %v769 = vpack.c.b16 %v552, %v550
      %v770 = vunpack.c.l.b16 %v586
      %v771 = vunpack.c.l.b16 %v600
      %v772 = vunpack.c.l.b16 %v614
      %v773 = vunpack.c.l.b16 %v628
      %v774 = vunpack.c.l.b16 %v642
      %v775 = vunpack.c.l.b16 %v656
      %v776 = vunpack.c.l.b16 %v670
      %v777 = vunpack.c.l.b16 %v684
      %v778 = vpack.c.b16 %v771, %v770
      %v779 = vpack.c.b16 %v773, %v772
      %v780 = vpack.c.b16 %v775, %v774
      %v781 = vpack.c.b16 %v777, %v776
      %782 = vrot.lane.b32.xlu0 %v778, 16
      %v783 = vpop.permute.xlu0 %782
      %784 = vrot.lane.b32.xlu0 %v779, 16
      %v785 = vpop.permute.xlu0 %784
      %786 = vrot.lane.b32.xlu0 %v780, 16
      %v787 = vpop.permute.xlu0 %786
      %788 = vrot.lane.b32.xlu0 %v781, 16
      %v789 = vpop.permute.xlu0 %788
      %v790 = vunpack.c.l.b16 %v691
      %v791 = vunpack.c.l.b16 %v695
      %v792 = vunpack.c.l.b16 %v699
      %v793 = vunpack.c.l.b16 %v703
      %v794 = vunpack.c.l.b16 %v707
      %v795 = vunpack.c.l.b16 %v711
      %v796 = vunpack.c.l.b16 %v715
      %v797 = vunpack.c.l.b16 %v719
      %v798 = vpack.c.b16 %v791, %v790
      %v799 = vpack.c.b16 %v793, %v792
      %v800 = vpack.c.b16 %v795, %v794
      %v801 = vpack.c.b16 %v797, %v796
      %802 = vrot.lane.b32.xlu0 %v798, 32
      %v803 = vpop.permute.xlu0 %802
      %804 = vrot.lane.b32.xlu0 %v799, 32
      %v805 = vpop.permute.xlu0 %804
      %806 = vrot.lane.b32.xlu0 %v800, 32
      %v807 = vpop.permute.xlu0 %806
      %808 = vrot.lane.b32.xlu0 %v801, 32
      %v809 = vpop.permute.xlu0 %808
      %v810 = vpack.c.b16 %v542, %v540
      %v811 = vpack.c.b16 %v546, %v544
      %v812 = vpack.c.b16 %v550, %v548
      %v813 = vpack.c.b16 %v721, %v552
      %814 = vrot.lane.b32.xlu0 %v810, 48
      %v815 = vpop.permute.xlu0 %814
      %816 = vrot.lane.b32.xlu0 %v811, 48
      %v817 = vpop.permute.xlu0 %816
      %818 = vrot.lane.b32.xlu0 %v812, 48
      %v819 = vpop.permute.xlu0 %818
      %820 = vrot.lane.b32.xlu0 %v813, 48
      %v821 = vpop.permute.xlu0 %820
      %v822 = vunpack.c.l.b16 %v738
      %v823 = vpack.c.b16 %v772, %v771
      %v824 = vpack.c.b16 %v774, %v773
      %v825 = vpack.c.b16 %v776, %v775
      %v826 = vpack.c.b16 %v822, %v777
      %827 = vrot.lane.b32.xlu0 %v823, 64
      %v828 = vpop.permute.xlu0 %827
      %829 = vrot.lane.b32.xlu0 %v824, 64
      %v830 = vpop.permute.xlu0 %829
      %831 = vrot.lane.b32.xlu0 %v825, 64
      %v832 = vpop.permute.xlu0 %831
      %833 = vrot.lane.b32.xlu0 %v826, 64
      %v834 = vpop.permute.xlu0 %833
      %v835 = vunpack.c.l.b16 %v742
      %v836 = vpack.c.b16 %v792, %v791
      %v837 = vpack.c.b16 %v794, %v793
      %v838 = vpack.c.b16 %v796, %v795
      %v839 = vpack.c.b16 %v835, %v797
      %840 = vrot.lane.b32.xlu0 %v836, 80
      %v841 = vpop.permute.xlu0 %840
      %842 = vrot.lane.b32.xlu0 %v837, 80
      %v843 = vpop.permute.xlu0 %842
      %844 = vrot.lane.b32.xlu0 %v838, 80
      %v845 = vpop.permute.xlu0 %844
      %846 = vrot.lane.b32.xlu0 %v839, 80
      %v847 = vpop.permute.xlu0 %846
      %v848 = vpack.c.b16 %v744, %v721
      %849 = vrot.lane.b32.xlu0 %v767, 96
      %v850 = vpop.permute.xlu0 %849
      %851 = vrot.lane.b32.xlu0 %v768, 96
      %v852 = vpop.permute.xlu0 %851
      %853 = vrot.lane.b32.xlu0 %v769, 96
      %v854 = vpop.permute.xlu0 %853
      %855 = vrot.lane.b32.xlu0 %v848, 96
      %v856 = vpop.permute.xlu0 %855
      %v857 = vunpack.c.l.b16 %v761
      %v858 = vpack.c.b16 %v857, %v822
      %859 = vrot.lane.b32.xlu0 %v779, 112
      %v860 = vpop.permute.xlu0 %859
      %861 = vrot.lane.b32.xlu0 %v780, 112
      %v862 = vpop.permute.xlu0 %861
      %863 = vrot.lane.b32.xlu0 %v781, 112
      %v864 = vpop.permute.xlu0 %863
      %865 = vrot.lane.b32.xlu0 %v858, 112
      %v866 = vpop.permute.xlu0 %865
      %v867 = vunpack.c.l.b16 %v765
      %v868 = vpack.c.b16 %v867, %v835
      %vm869 = vcmask 130048
      %v872 = vsel %vm869, %v766, %v783
      %v875 = vsel %vm869, %v767, %v785
      %v878 = vsel %vm869, %v768, %v787
      %v881 = vsel %vm869, %v769, %v789
      %vm882 = vcmask 261120
      %v884 = vsel %vm882, %v872, %v803
      %v886 = vsel %vm882, %v875, %v805
      %v888 = vsel %vm882, %v878, %v807
      %v890 = vsel %vm882, %v881, %v809
      %vm891 = vcmask 392192
      %v893 = vsel %vm891, %v884, %v815
      %v895 = vsel %vm891, %v886, %v817
      %v897 = vsel %vm891, %v888, %v819
      %v899 = vsel %vm891, %v890, %v821
      %vm900 = vcmask 523264
      %v902 = vsel %vm900, %v893, %v828
      %v904 = vsel %vm900, %v895, %v830
      %v906 = vsel %vm900, %v897, %v832
      %v908 = vsel %vm900, %v899, %v834
      %vm909 = vcmask 654336
      %v911 = vsel %vm909, %v902, %v841
      %v913 = vsel %vm909, %v904, %v843
      %v915 = vsel %vm909, %v906, %v845
      %v917 = vsel %vm909, %v908, %v847
      %vm918 = vcmask 785408
      %v920 = vsel %vm918, %v911, %v850
      %v922 = vsel %vm918, %v913, %v852
      %v924 = vsel %vm918, %v915, %v854
      %v926 = vsel %vm918, %v917, %v856
      %vm927 = vcmask 916480
      %v929 = vsel %vm927, %v920, %v860
      %v932 = vsel %vm927, %v922, %v862
      %v935 = vsel %vm927, %v924, %v864
      %v938 = vsel %vm927, %v926, %v866
      %v940 = vld [vmem:[%s301] sm:$0xf]
      %v941 = vld [vmem:[%s301 + $0x4] sm:$0xf]
      %v942 = vld [vmem:[%s301 + $0x8] sm:$0xf]
      %v943 = vld [vmem:[%s301 + $0xc] sm:$0xf]
      %v944 = vld [vmem:[%s301 + $0x10] sm:$0xf]
      %v945 = vld [vmem:[%s301 + $0x14] sm:$0xf]
      %v946 = vld [vmem:[%s301 + $0x18] sm:$0xf]
      %v947 = vld [vmem:[%s301 + $0x1c] sm:$0xf]
      %v948 = vld [vmem:[%s301 + $0x20] sm:$0xf]
      %v949 = vld [vmem:[%s301 + $0x24] sm:$0xf]
      %v950 = vld [vmem:[%s301 + $0x28] sm:$0xf]
      %v951 = vld [vmem:[%s301 + $0x2c] sm:$0xf]
      %v952 = vld [vmem:[%s301 + $0x30] sm:$0xf]
      %v953 = vld [vmem:[%s301 + $0x34] sm:$0xf]
      %v954 = vld [vmem:[%s301 + $0x38] sm:$0xf]
      %v955 = vld [vmem:[%s301 + $0x3c] sm:$0xf]
      %v956 = vld [vmem:[%s301 + $0x40] sm:$0xf]
      %v957 = vld [vmem:[%s301 + $0x44] sm:$0xf]
      %v976 = vunpack.c.l.b16 %v940
      %v977 = vunpack.c.l.b16 %v941
      %v978 = vunpack.c.l.b16 %v942
      %v979 = vunpack.c.l.b16 %v943
      %v980 = vunpack.c.l.b16 %v944
      %v981 = vunpack.c.l.b16 %v945
      %v982 = vunpack.c.l.b16 %v946
      %v983 = vunpack.c.l.b16 %v947
      %v984 = vunpack.c.l.b16 %v948
      %v985 = vunpack.c.l.b16 %v949
      %v986 = vunpack.c.l.b16 %v950
      %v987 = vunpack.c.l.b16 %v951
      %v988 = vunpack.c.l.b16 %v952
      %v989 = vunpack.c.l.b16 %v953
      %v990 = vunpack.c.l.b16 %v954
      %v991 = vunpack.c.l.b16 %v955
      %v992 = vunpack.c.l.b16 %v956
      %v993 = vunpack.c.l.b16 %v957
      %v994 = vpack.c.b16 %v977, %v976
      %v995 = vpack.c.b16 %v979, %v978
      %v996 = vpack.c.b16 %v981, %v980
      %v997 = vpack.c.b16 %v983, %v982
      %v998 = vpack.c.b16 %v985, %v984
      %v999 = vpack.c.b16 %v987, %v986
      %v1000 = vpack.c.b16 %v989, %v988
      %v1001 = vpack.c.b16 %v991, %v990
      %v1002 = vpack.c.b16 %v993, %v992
      %v1013 = vsel %vm869, %v799, 0
      %v1016 = vsel %vm869, %v800, 0
      %v1019 = vsel %vm869, %v801, 0
      %v1022 = vsel %vm869, %v868, 0
      %1024 = vmatprep.subr.bf16.mxu0 0
      %1025 = vmatpush1.bf16.msra.mxu0 %v1001
      %1026 = vmatprep.subr.bf16.mxu0 0
      %1027 = vmatpush1.bf16.msra.mxu0 %v1000
      %1028 = vmatprep.subr.bf16.mxu0 0
      %1029 = vmatpush1.bf16.msra.mxu0 %v999
      %1030 = vmatprep.subr.bf16.mxu0 0
      %1031 = vmatpush1.bf16.msra.mxu0 %v998
      %1032 = vmatprep.subr.bf16.mxu0 0
      %1033 = vmatpush1.bf16.msra.mxu0 %v997
      %1034 = vmatprep.subr.bf16.mxu0 0
      %1035 = vmatpush1.bf16.msra.mxu0 %v996
      %1036 = vmatprep.subr.bf16.mxu0 0
      %1037 = vmatpush1.bf16.msra.mxu0 %v995
      %1038 = vmatprep.subr.bf16.mxu0 0
      %1039 = vmatpush1.bf16.msra.mxu0 %v994
      %1040 = vmatprep.subr.bf16.mxu0 0
      %1041 = vmatpush2.bf16.msra.mxu0 0
      %1042 = vmatprep.subr.bf16.mxu0 0
      %1043 = vmatpush2.bf16.msra.mxu0 0
      %1044 = vmatprep.subr.bf16.mxu0 0
      %1045 = vmatpush2.bf16.msra.mxu0 0
      %1046 = vmatprep.subr.bf16.mxu0 0
      %1047 = vmatpush2.bf16.msra.mxu0 0
      %1048 = vmatprep.subr.bf16.mxu0 0
      %1049 = vmatpush2.bf16.msra.mxu0 0
      %1050 = vmatprep.subr.bf16.mxu0 0
      %1051 = vmatpush2.bf16.msra.mxu0 0
      %1052 = vmatprep.subr.bf16.mxu0 0
      %1053 = vmatpush2.bf16.msra.mxu0 0
      %1054 = vmatprep.subr.bf16.mxu0 0
      %1055 = vmatpush2.bf16.msra.mxu0 %v1002
      %1056 = vmatprep.mubr.bf16.mxu0 %v1013
      %1057 = vmatmul.mubr.bf16.gmra.mxu0 %v929
      %v1058 = vpop.f32.mrf.mxu0
      %v1059 = vadd.f32 0.0, %v1058
      %v1060 = vpop.f32.mrf.mxu0
      %v1061 = vpop.f32.mrf.mxu0
      %v1062 = vadd.f32 0.0, %v1061
      %v1063 = vpop.f32.mrf.mxu0
      %1064 = vmatprep.mubr.bf16.mxu0 %v1016
      %1065 = vmatmul.mubr.bf16.gmra.mxu0 %v932
      %v1066 = vpop.f32.mrf.mxu0
      %v1067 = vadd.f32 0.0, %v1066
      %v1068 = vpop.f32.mrf.mxu0
      %v1069 = vpop.f32.mrf.mxu0
      %v1070 = vadd.f32 0.0, %v1069
      %v1071 = vpop.f32.mrf.mxu0
      %1072 = vmatprep.mubr.bf16.mxu0 %v1019
      %1073 = vmatmul.mubr.bf16.gmra.mxu0 %v935
      %v1074 = vpop.f32.mrf.mxu0
      %v1075 = vadd.f32 0.0, %v1074
      %v1076 = vpop.f32.mrf.mxu0
      %v1077 = vpop.f32.mrf.mxu0
      %v1078 = vadd.f32 0.0, %v1077
      %v1079 = vpop.f32.mrf.mxu0
      %1080 = vmatprep.mubr.bf16.mxu0 %v1022
      %1081 = vmatmul.mubr.bf16.gmra.mxu0 %v938
      %v1082 = vpop.f32.mrf.mxu0
      %v1083 = vadd.f32 0.0, %v1082
      %v1084 = vpop.f32.mrf.mxu0
      %v1085 = vpop.f32.mrf.mxu0
      %v1086 = vadd.f32 0.0, %v1085
      %v1087 = vpop.f32.mrf.mxu0
      %1088 = vdwg.mxu0
      %v1089 = vpack.c.bf16 %v1062, %v1059
      %v1090 = vpack.c.bf16 %v1070, %v1067
      %v1091 = vpack.c.bf16 %v1078, %v1075
      %v1092 = vpack.c.bf16 %v1086, %v1083
      %v1093 = vunpack.c.l.bf16 %v1089
      %v1094 = vunpack.c.h.bf16 %v1089
      %v1095 = vunpack.c.l.bf16 %v1090
      %v1096 = vunpack.c.h.bf16 %v1090
      %v1097 = vunpack.c.l.bf16 %v1091
      %v1098 = vunpack.c.h.bf16 %v1091
      %v1099 = vunpack.c.l.bf16 %v1092
      %v1100 = vunpack.c.h.bf16 %v1092
      %v1105 = vunpack.c.l.b16 %v1089
      %v1106 = vunpack.c.h.b16 %v1089
      %v1107 = vunpack.c.l.b16 %v1090
      %v1108 = vunpack.c.h.b16 %v1090
      %v1109 = vunpack.c.l.b16 %v1091
      %v1110 = vunpack.c.h.b16 %v1091
      %v1111 = vunpack.c.l.b16 %v1092
      %v1112 = vunpack.c.h.b16 %v1092
      %v1113 = vpack.c.b16 %v1105, %v1105
      %v1114 = vpack.c.b16 %v1106, %v1106
      %v1115 = vpack.c.b16 %v1107, %v1107
      %v1116 = vpack.c.b16 %v1108, %v1108
      %v1117 = vpack.c.b16 %v1109, %v1109
      %v1118 = vpack.c.b16 %v1110, %v1110
      %v1119 = vpack.c.b16 %v1111, %v1111
      %v1120 = vpack.c.b16 %v1112, %v1112
      %1129 = vst [vmem:[%s309] sm:$0xf] %v1113
      %1130 = vst [vmem:[%s309 + $0x4] sm:$0xf] %v1114
      %1131 = vst [vmem:[%s309 + $0x8] sm:$0xf] %v1115
      %1132 = vst [vmem:[%s309 + $0xc] sm:$0xf] %v1116
      %1133 = vst [vmem:[%s309 + $0x10] sm:$0xf] %v1117
      %1134 = vst [vmem:[%s309 + $0x14] sm:$0xf] %v1118
      %1135 = vst [vmem:[%s309 + $0x18] sm:$0xf] %v1119
      %1136 = vst [vmem:[%s309 + $0x1c] sm:$0xf] %v1120
      %v1137 = vadd.f32 %v1093, %v1094
      %v1138 = vadd.f32 %v1137, %v1095
      %v1139 = vadd.f32 %v1138, %v1096
      %v1140 = vadd.f32 %v1139, %v1097
      %v1141 = vadd.f32 %v1140, %v1098
      %v1142 = vadd.f32 %v1141, %v1099
      %v1143 = vadd.f32 %v1142, %v1100
      %v1144 = vrot.slane %v1143, 4
      %v1145 = vadd.f32 %v1143, %v1144
      %v1146 = vrot.slane %v1145, 2
      %v1147 = vadd.f32 %v1145, %v1146
      %v1148 = vrot.slane %v1147, 1
      %v1149 = vadd.f32 %v1147, %v1148
      %1150 = vst [vmem:[%s315] sm:$0x1] %v1149
      %v1151 = vmul.f32 %v1093, %v1093
      %v1152 = vmul.f32 %v1094, %v1094
      %v1153 = vmul.f32 %v1095, %v1095
      %v1154 = vmul.f32 %v1096, %v1096
      %v1155 = vmul.f32 %v1097, %v1097
      %v1156 = vmul.f32 %v1098, %v1098
      %v1157 = vmul.f32 %v1099, %v1099
      %v1158 = vmul.f32 %v1100, %v1100
      %v1159 = vadd.f32 %v1151, %v1152
      %v1160 = vadd.f32 %v1159, %v1153
      %v1161 = vadd.f32 %v1160, %v1154
      %v1162 = vadd.f32 %v1161, %v1155
      %v1163 = vadd.f32 %v1162, %v1156
      %v1164 = vadd.f32 %v1163, %v1157
      %v1165 = vadd.f32 %v1164, %v1158
      %v1166 = vrot.slane %v1165, 4
      %v1167 = vadd.f32 %v1165, %v1166
      %v1168 = vrot.slane %v1167, 2
      %v1169 = vadd.f32 %v1167, %v1168
      %v1170 = vrot.slane %v1169, 1
      %v1171 = vadd.f32 %v1169, %v1170
      %1172 = vst [vmem:[%s321] sm:$0x1] %v1171
      %p1173 = scmp.lt.s32.totalorder %s22, 1
      %s1174 = scalar_select %p1173, %s22, 1
      %p1175 = scmp.lt.s32.totalorder %s23, 0
      %s1176 = scalar_select %p1175, %s23, 0
      %s1177 = smul.addr %s1174, 8
      %s1178 = sadd.s32 %s1176, %s1177
      %s1179 = smul.addr %s1178, 4
      %s1180 = scalar_lea.vmem %s4, %s1179
      %p1181 = scmp.lt.s32.totalorder %s22, 1
      %s1182 = scalar_select %p1181, %s22, 1
      %p1183 = scmp.lt.s32.totalorder %s23, 0
      %s1184 = scalar_select %p1183, %s23, 0
      %s1185 = sadd.s32 %s1184, %s1182
      %s1186 = scalar_lea.vmem %s5, %s1185
      %p1187 = scmp.lt.s32.totalorder %s22, 1
      %s1188 = scalar_select %p1187, %s22, 1
      %p1189 = scmp.lt.s32.totalorder %s23, 0
      %s1190 = scalar_select %p1189, %s23, 0
      %s1191 = sadd.s32 %s1190, %s1188
      %s1192 = scalar_lea.vmem %s6, %s1191
      // Predicated region
      $region37: #{generator_forward.7} parent=35 // pred_check
        %p1193 = pneg %p144
      $region38: #{generator_forward.7} parent=35 // pred_check_branch
        %1195 = sbr.rel (%p1193) target = $region40
      $region39: #{generator_forward.7} parent=35 // pred_region
        _
      $region40: #{generator_forward.7} parent=35 // pred_fallthru
        _
      // Predicated region
      $region41: #{generator_forward.7} parent=35 // pred_check
        %p1196 = pneg %p172
      $region42: #{generator_forward.7} parent=35 // pred_check_branch
        %1198 = sbr.rel (%p1196) target = $region44
      $region43: #{generator_forward.7} parent=35 // pred_region
        _
      $region44: #{generator_forward.7} parent=35 // pred_fallthru
        _
      // Predicated region
      $region45: #{generator_forward.7} parent=35 // pred_check
        %p1199 = pneg %p200
      $region46: #{generator_forward.7} parent=35 // pred_check_branch
        %1201 = sbr.rel (%p1199) target = $region48
      $region47: #{generator_forward.7} parent=35 // pred_region
        _
      $region48: #{generator_forward.7} parent=35 // pred_fallthru
        _
    $region36: #{generator_forward.7} parent=5 // pred_fallthru
      _
    %p1202 = scmp.le.s32.totalorder 2, %s13
    // Predicated region
    $region49: #{generator_forward.7} parent=5 // pred_check
      %p1203 = pneg %p1202
    $region50: #{generator_forward.7} parent=5 // pred_check_branch
      %1205 = sbr.rel (%p1203) target = $region52
    $region51: #{generator_forward.7} parent=5 // pred_region
      %s1206 = ssub.s32 %s13, 2
      // Predicated region
      $region53: #{generator_forward.7} parent=51 // pred_check
        %p1207 = pneg %p150
      $region54: #{generator_forward.7} parent=51 // pred_check_branch
        %1209 = sbr.rel (%p1207) target = $region56
      $region55: #{generator_forward.7} parent=51 // pred_region
        %p1210 = scmp.lt.s32.totalorder %s24, 1
        %s1211 = scalar_select %p1210, %s24, 1
        %p1212 = scmp.lt.s32.totalorder %s25, 0
        %s1213 = scalar_select %p1212, %s25, 0
        %s1214 = smul.addr %s1211, 8
        %s1215 = sadd.s32 %s1213, %s1214
        %s1216 = smul.addr %s1215, 4
        %s1217 = scalar_lea.vmem %s4, %s1216
      $region56: #{generator_forward.7} parent=51 // pred_fallthru
        _
      // Predicated region
      $region57: #{generator_forward.7} parent=51 // pred_check
        %p1218 = pneg %p178
      $region58: #{generator_forward.7} parent=51 // pred_check_branch
        %1220 = sbr.rel (%p1218) target = $region60
      $region59: #{generator_forward.7} parent=51 // pred_region
        %p1221 = scmp.lt.s32.totalorder %s24, 1
        %s1222 = scalar_select %p1221, %s24, 1
        %p1223 = scmp.lt.s32.totalorder %s25, 0
        %s1224 = scalar_select %p1223, %s25, 0
        %s1225 = sadd.s32 %s1224, %s1222
        %s1226 = scalar_lea.vmem %s5, %s1225
      $region60: #{generator_forward.7} parent=51 // pred_fallthru
        _
      // Predicated region
      $region61: #{generator_forward.7} parent=51 // pred_check
        %p1227 = pneg %p206
      $region62: #{generator_forward.7} parent=51 // pred_check_branch
        %1229 = sbr.rel (%p1227) target = $region64
      $region63: #{generator_forward.7} parent=51 // pred_region
        %p1230 = scmp.lt.s32.totalorder %s24, 1
        %s1231 = scalar_select %p1230, %s24, 1
        %p1232 = scmp.lt.s32.totalorder %s25, 0
        %s1233 = scalar_select %p1232, %s25, 0
        %s1234 = sadd.s32 %s1233, %s1231
        %s1235 = scalar_lea.vmem %s6, %s1234
      $region64: #{generator_forward.7} parent=51 // pred_fallthru
        _
    $region52: #{generator_forward.7} parent=5 // pred_fallthru
      _
  $region6: #{generator_forward.7} parent=0 // loop_footer
    %s17 = sadd.s32 1, %s13
  $region7: #{generator_forward.7} parent=0 // loop_footer_branch
    %12 = sbr.rel target = $region3
  $region8: #{generator_forward.7} parent=0 // loop_exit
    _

// kernel: generator_forward.8
$region0: #{generator_forward.8}
  #allocation0 [shape = 'u32[]', space=smem, size = 0x4, offset = 0x4, fixed_abs, tag = 'smem constant byte address 0x4 - core index']
  #allocation1 [shape = 'u32[144,128]{1,0:T(1,128)}', space=vmem, size = 0x12000, scoped, tag = 'internal scratch']
  %s0 = inlined_call_operand.vmem [shape: bf16[2,18,18,8], index: 0, kind: input, shape index: {}]
  %s1 = inlined_call_operand.vmem [shape: bf16[72,128], index: 1, kind: input, shape index: {}]
  %s2 = inlined_call_operand.vmem [shape: f32[1,8], index: 2, kind: input, shape index: {}]
  %s3 = inlined_call_operand.vmem [shape: f32[1,8], index: 3, kind: input, shape index: {}]
  %s4 = inlined_call_operand.vmem [shape: bf16[2,256,128], index: 4, kind: output, shape index: {0}]
  %s5 = inlined_call_operand.vmem [shape: f32[2,1,128], index: 5, kind: output, shape index: {1}]
  %s6 = inlined_call_operand.vmem [shape: f32[2,1,128], index: 6, kind: output, shape index: {2}]
  %7 = xla_tuple %s4, %s5, %s6
  %s8 = sld [smem:[#allocation0]]
  $region65: #{generator_forward.8} parent=0
    _
  %s10 = ssub.s32 1, %s8
  %s11 = scalar_select 0, %s10, %s8
  loop: start=0, step=1, limit=4
  $region2: #{generator_forward.8} parent=0 // loop_pre_header
    _
  $region3: #{generator_forward.8} parent=0 // loop_header
    %s13 = sphi 0, %s17
    %p14 = scmp.ge.s32.totalorder %s13, 4
    %s20 = sphi 0, %s32
    %s21 = sphi 0, %s28
    %s22 = sphi 0, %s20
    %s23 = sphi 0, %s21
    %s24 = sphi 0, %s22
    %s25 = sphi 0, %s23
    %s35 = sphi 0, %s37
    %s38 = sphi 0, %s35
    %s39 = sphi 0, %s38
    %s55 = sphi 0, %s39
    %s61 = sphi 0, %s63
    %s64 = sphi 0, %s61
    %s65 = sphi 0, %s64
    %s81 = sphi 0, %s65
    %s85 = sphi 0, %s85
    %s87 = sphi 0, %s85
    %s88 = sphi 0, %s87
    %s102 = sphi 0, %s88
    %s106 = sphi 0, %s106
    %s108 = sphi 0, %s106
    %s109 = sphi 0, %s108
    %s123 = sphi 0, %s109
    %s131 = sphi 0, %s133
    %s134 = sphi 0, %s131
    %s135 = sphi 0, %s134
    %s151 = sphi 0, %s135
    %s159 = sphi 0, %s161
    %s162 = sphi 0, %s159
    %s163 = sphi 0, %s162
    %s179 = sphi 0, %s163
    %s187 = sphi 0, %s189
    %s190 = sphi 0, %s187
    %s191 = sphi 0, %s190
    %s207 = sphi 0, %s191
  $region4: #{generator_forward.8} parent=0 // loop_header_branch
    %16 = sbr.rel (%p14) target = $region8
  $region5: #{generator_forward.8} parent=0 // loop_body
    %s18 = ssub.s32 %s13, 1
    %s19 = ssub.s32 %s13, 2
    %s26 = sadd.s32 1, %s21
    %p27 = scmp.ge.s32.totalorder %s26, 1
    %s28 = scalar_select %p27, 0, %s26
    %s29 = sadd.s32 1, %s20
    %s30 = scalar_select %p27, %s29, %s20
    %p31 = scmp.ge.s32.totalorder %s30, 2
    %s32 = scalar_select %p31, 0, %s30
    %s33 = ssub.s32 %s20, %s32
    %p34 = scmp.eq.s32.totalorder %s33, 0
    %s36 = sadd.s32 %s35, 1
    %s37 = scalar_select %p34, %s35, %s36
    %p40 = pneg %p34
    %p41 = scmp.eq.s32.totalorder %s13, 1
    %p42 = por %p40, %p41
    %p43 = scmp.ne.s32.totalorder %s35, %s38
    %p44 = scmp.eq.s32.totalorder %s13, 0
    %p45 = por %p43, %p44
    %p46 = scmp.ne.s32.totalorder %s35, %s38
    %p47 = scmp.eq.s32.totalorder %s18, 1
    %p48 = por %p46, %p47
    %p49 = scmp.ne.s32.totalorder %s38, %s39
    %p50 = scmp.eq.s32.totalorder %s18, 0
    %p51 = por %p49, %p50
    %p52 = scmp.ne.s32.totalorder %s38, %s39
    %p53 = scmp.eq.s32.totalorder %s19, 1
    %p54 = por %p52, %p53
    %p56 = scmp.ne.s32.totalorder %s39, %s55
    %p57 = scmp.eq.s32.totalorder %s19, 0
    %p58 = por %p56, %p57
    %s59 = ssub.s32 %s21, %s28
    %p60 = scmp.eq.s32.totalorder %s59, 0
    %s62 = sadd.s32 %s61, 1
    %s63 = scalar_select %p60, %s61, %s62
    %p66 = pneg %p60
    %p67 = scmp.eq.s32.totalorder %s13, 1
    %p68 = por %p66, %p67
    %p69 = scmp.ne.s32.totalorder %s61, %s64
    %p70 = scmp.eq.s32.totalorder %s13, 0
    %p71 = por %p69, %p70
    %p72 = scmp.ne.s32.totalorder %s61, %s64
    %p73 = scmp.eq.s32.totalorder %s18, 1
    %p74 = por %p72, %p73
    %p75 = scmp.ne.s32.totalorder %s64, %s65
    %p76 = scmp.eq.s32.totalorder %s18, 0
    %p77 = por %p75, %p76
    %p78 = scmp.ne.s32.totalorder %s64, %s65
    %p79 = scmp.eq.s32.totalorder %s19, 1
    %p80 = por %p78, %p79
    %p82 = scmp.ne.s32.totalorder %s65, %s81
    %p83 = scmp.eq.s32.totalorder %s19, 0
    %p84 = por %p82, %p83
    %s86 = sadd.s32 %s85, 1
    %p89 = scmp.eq.s32.totalorder %s13, 1
    %p90 = scmp.ne.s32.totalorder %s85, %s87
    %p91 = scmp.eq.s32.totalorder %s13, 0
    %p92 = por %p90, %p91
    %p93 = scmp.ne.s32.totalorder %s85, %s87
    %p94 = scmp.eq.s32.totalorder %s18, 1
    %p95 = por %p93, %p94
    %p96 = scmp.ne.s32.totalorder %s87, %s88
    %p97 = scmp.eq.s32.totalorder %s18, 0
    %p98 = por %p96, %p97
    %p99 = scmp.ne.s32.totalorder %s87, %s88
    %p100 = scmp.eq.s32.totalorder %s19, 1
    %p101 = por %p99, %p100
    %p103 = scmp.ne.s32.totalorder %s88, %s102
    %p104 = scmp.eq.s32.totalorder %s19, 0
    %p105 = por %p103, %p104
    %s107 = sadd.s32 %s106, 1
    %p110 = scmp.eq.s32.totalorder %s13, 1
    %p111 = scmp.ne.s32.totalorder %s106, %s108
    %p112 = scmp.eq.s32.totalorder %s13, 0
    %p113 = por %p111, %p112
    %p114 = scmp.ne.s32.totalorder %s106, %s108
    %p115 = scmp.eq.s32.totalorder %s18, 1
    %p116 = por %p114, %p115
    %p117 = scmp.ne.s32.totalorder %s108, %s109
    %p118 = scmp.eq.s32.totalorder %s18, 0
    %p119 = por %p117, %p118
    %p120 = scmp.ne.s32.totalorder %s108, %s109
    %p121 = scmp.eq.s32.totalorder %s19, 1
    %p122 = por %p120, %p121
    %p124 = scmp.ne.s32.totalorder %s109, %s123
    %p125 = scmp.eq.s32.totalorder %s19, 0
    %p126 = por %p124, %p125
    %s127 = ssub.s32 %s20, %s32
    %s128 = ssub.s32 %s21, %s28
    %s129 = sor.u32 %s127, %s128
    %p130 = scmp.eq.s32.totalorder %s129, 0
    %s132 = sadd.s32 %s131, 1
    %s133 = scalar_select %p130, %s131, %s132
    %p136 = pneg %p130
    %p137 = scmp.eq.s32.totalorder %s13, 1
    %p138 = por %p136, %p137
    %p139 = scmp.ne.s32.totalorder %s131, %s134
    %p140 = scmp.eq.s32.totalorder %s13, 0
    %p141 = por %p139, %p140
    %p142 = scmp.ne.s32.totalorder %s131, %s134
    %p143 = scmp.eq.s32.totalorder %s18, 1
    %p144 = por %p142, %p143
    %p145 = scmp.ne.s32.totalorder %s134, %s135
    %p146 = scmp.eq.s32.totalorder %s18, 0
    %p147 = por %p145, %p146
    %p148 = scmp.ne.s32.totalorder %s134, %s135
    %p149 = scmp.eq.s32.totalorder %s19, 1
    %p150 = por %p148, %p149
    %p152 = scmp.ne.s32.totalorder %s135, %s151
    %p153 = scmp.eq.s32.totalorder %s19, 0
    %p154 = por %p152, %p153
    %s155 = ssub.s32 %s20, %s32
    %s156 = ssub.s32 %s21, %s28
    %s157 = sor.u32 %s155, %s156
    %p158 = scmp.eq.s32.totalorder %s157, 0
    %s160 = sadd.s32 %s159, 1
    %s161 = scalar_select %p158, %s159, %s160
    %p164 = pneg %p158
    %p165 = scmp.eq.s32.totalorder %s13, 1
    %p166 = por %p164, %p165
    %p167 = scmp.ne.s32.totalorder %s159, %s162
    %p168 = scmp.eq.s32.totalorder %s13, 0
    %p169 = por %p167, %p168
    %p170 = scmp.ne.s32.totalorder %s159, %s162
    %p171 = scmp.eq.s32.totalorder %s18, 1
    %p172 = por %p170, %p171
    %p173 = scmp.ne.s32.totalorder %s162, %s163
    %p174 = scmp.eq.s32.totalorder %s18, 0
    %p175 = por %p173, %p174
    %p176 = scmp.ne.s32.totalorder %s162, %s163
    %p177 = scmp.eq.s32.totalorder %s19, 1
    %p178 = por %p176, %p177
    %p180 = scmp.ne.s32.totalorder %s163, %s179
    %p181 = scmp.eq.s32.totalorder %s19, 0
    %p182 = por %p180, %p181
    %s183 = ssub.s32 %s20, %s32
    %s184 = ssub.s32 %s21, %s28
    %s185 = sor.u32 %s183, %s184
    %p186 = scmp.eq.s32.totalorder %s185, 0
    %s188 = sadd.s32 %s187, 1
    %s189 = scalar_select %p186, %s187, %s188
    %p192 = pneg %p186
    %p193 = scmp.eq.s32.totalorder %s13, 1
    %p194 = por %p192, %p193
    %p195 = scmp.ne.s32.totalorder %s187, %s190
    %p196 = scmp.eq.s32.totalorder %s13, 0
    %p197 = por %p195, %p196
    %p198 = scmp.ne.s32.totalorder %s187, %s190
    %p199 = scmp.eq.s32.totalorder %s18, 1
    %p200 = por %p198, %p199
    %p201 = scmp.ne.s32.totalorder %s190, %s191
    %p202 = scmp.eq.s32.totalorder %s18, 0
    %p203 = por %p201, %p202
    %p204 = scmp.ne.s32.totalorder %s190, %s191
    %p205 = scmp.eq.s32.totalorder %s19, 1
    %p206 = por %p204, %p205
    %p208 = scmp.ne.s32.totalorder %s191, %s207
    %p209 = scmp.eq.s32.totalorder %s19, 0
    %p210 = por %p208, %p209
    %p211 = scmp.le.s32.totalorder 1, %s13
    %p212 = scmp.lt.s32.totalorder %s13, 3
    %p213 = pnand %p211, %p212
    %p214 = pneg %p213
    // Predicated region
    $region9: #{generator_forward.8} parent=5 // pred_check
      _
    $region10: #{generator_forward.8} parent=5 // pred_check_branch
      %216 = sbr.rel (%p213) target = $region12
    $region11: #{generator_forward.8} parent=5 // pred_region
      %s217 = ssub.s32 %s13, 1
      // Predicated region
      $region13: #{generator_forward.8} parent=11 // pred_check
        %p218 = pneg %p77
      $region14: #{generator_forward.8} parent=11 // pred_check_branch
        %220 = sbr.rel (%p218) target = $region16
      $region15: #{generator_forward.8} parent=11 // pred_region
        %p221 = scmp.lt.s32.totalorder %s23, 0
        %s222 = scalar_select %p221, %s23, 0
        %s223 = smul.addr %s222, 4
        %s224 = scalar_lea.vmem %s1, %s223
      $region16: #{generator_forward.8} parent=11 // pred_fallthru
        _
      // Predicated region
      $region17: #{generator_forward.8} parent=11 // pred_check
        %p225 = pneg %p98
      $region18: #{generator_forward.8} parent=11 // pred_check_branch
        %227 = sbr.rel (%p225) target = $region20
      $region19: #{generator_forward.8} parent=11 // pred_region
        _
      $region20: #{generator_forward.8} parent=11 // pred_fallthru
        _
      // Predicated region
      $region21: #{generator_forward.8} parent=11 // pred_check
        %p228 = pneg %p119
      $region22: #{generator_forward.8} parent=11 // pred_check_branch
        %230 = sbr.rel (%p228) target = $region24
      $region23: #{generator_forward.8} parent=11 // pred_region
        _
      $region24: #{generator_forward.8} parent=11 // pred_fallthru
        _
    $region12: #{generator_forward.8} parent=5 // pred_fallthru
      _
    %p231 = scmp.lt.s32.totalorder %s13, 2
    // Predicated region
    $region25: #{generator_forward.8} parent=5 // pred_check
      %p232 = pneg %p231
    $region26: #{generator_forward.8} parent=5 // pred_check_branch
      %234 = sbr.rel (%p232) target = $region28
    $region27: #{generator_forward.8} parent=5 // pred_region
      // Predicated region
      $region29: #{generator_forward.8} parent=27 // pred_check
        %p235 = pneg %p45
      $region30: #{generator_forward.8} parent=27 // pred_check_branch
        %237 = sbr.rel (%p235) target = $region32
      $region31: #{generator_forward.8} parent=27 // pred_region
        %p238 = scmp.lt.s32.totalorder %s20, 1
        %s239 = scalar_select %p238, %s20, 1
        %s240 = smul.addr %s239, 54
        %s241 = smul.addr %s240, 4
        %s242 = scalar_lea.vmem %s0, %s241
      $region32: #{generator_forward.8} parent=27 // pred_fallthru
        _
    $region28: #{generator_forward.8} parent=5 // pred_fallthru
      _
    %p243 = scmp.le.s32.totalorder 1, %s13
    %p244 = scmp.lt.s32.totalorder %s13, 3
    %p245 = pnand %p243, %p244
    %p246 = pneg %p245
    // Predicated region
    $region33: #{generator_forward.8} parent=5 // pred_check
      _
    $region34: #{generator_forward.8} parent=5 // pred_check_branch
      %248 = sbr.rel (%p245) target = $region36
    $region35: #{generator_forward.8} parent=5 // pred_region
      %s249 = ssub.s32 %s13, 1
      %p250 = scmp.lt.s32.totalorder %s22, 1
      %s251 = scalar_select %p250, %s22, 1
      %s252 = smul.addr %s251, 54
      %s253 = smul.addr %s252, 4
      %s254 = scalar_lea.vmem %s0, %s253
      %p255 = pneg %p51
      %p256 = pneg %p48
      %p257 = scmp.lt.s32.totalorder %s23, 0
      %s258 = scalar_select %p257, %s23, 0
      %s259 = smul.addr %s258, 4
      %s260 = scalar_lea.vmem %s1, %s259
      %p261 = pneg %p77
      %p262 = pneg %p74
      %p263 = pneg %p98
      %p264 = pneg %p95
      %p265 = pneg %p119
      %p266 = pneg %p116
      %p267 = pneg %p147
      %p268 = pneg %p144
      %p269 = scmp.lt.s32.totalorder %s22, 1
      %s270 = scalar_select %p269, %s22, 1
      %p271 = scmp.lt.s32.totalorder %s23, 0
      %s272 = scalar_select %p271, %s23, 0
      %s273 = smul.addr %s270, 32
      %s274 = sadd.s32 %s272, %s273
      %s275 = smul.addr %s274, 4
      %s276 = scalar_lea.vmem %s4, %s275
      %p277 = pneg %p175
      %p278 = pneg %p172
      %p279 = scmp.lt.s32.totalorder %s22, 1
      %s280 = scalar_select %p279, %s22, 1
      %p281 = scmp.lt.s32.totalorder %s23, 0
      %s282 = scalar_select %p281, %s23, 0
      %s283 = sadd.s32 %s282, %s280
      %s284 = scalar_lea.vmem %s5, %s283
      %p285 = pneg %p203
      %p286 = pneg %p200
      %p287 = scmp.lt.s32.totalorder %s22, 1
      %s288 = scalar_select %p287, %s22, 1
      %p289 = scmp.lt.s32.totalorder %s23, 0
      %s290 = scalar_select %p289, %s23, 0
      %s291 = sadd.s32 %s290, %s288
      %s292 = scalar_lea.vmem %s6, %s291
      %p293 = scmp.lt.s32.totalorder %s22, 1
      %s294 = scalar_select %p293, %s22, 1
      %s295 = smul.addr %s294, 54
      %s296 = smul.addr %s295, 4
      %s297 = scalar_lea.vmem %s0, %s296
      %p298 = scmp.lt.s32.totalorder %s23, 0
      %s299 = scalar_select %p298, %s23, 0
      %s300 = smul.addr %s299, 4
      %s301 = scalar_lea.vmem %s1, %s300
      %p302 = scmp.lt.s32.totalorder %s22, 1
      %s303 = scalar_select %p302, %s22, 1
      %p304 = scmp.lt.s32.totalorder %s23, 0
      %s305 = scalar_select %p304, %s23, 0
      %s306 = smul.addr %s303, 32
      %s307 = sadd.s32 %s305, %s306
      %s308 = smul.addr %s307, 4
      %s309 = scalar_lea.vmem %s4, %s308
      %p310 = scmp.lt.s32.totalorder %s22, 1
      %s311 = scalar_select %p310, %s22, 1
      %p312 = scmp.lt.s32.totalorder %s23, 0
      %s313 = scalar_select %p312, %s23, 0
      %s314 = sadd.s32 %s313, %s311
      %s315 = scalar_lea.vmem %s5, %s314
      %p316 = scmp.lt.s32.totalorder %s22, 1
      %s317 = scalar_select %p316, %s22, 1
      %p318 = scmp.lt.s32.totalorder %s23, 0
      %s319 = scalar_select %p318, %s23, 0
      %s320 = sadd.s32 %s319, %s317
      %s321 = scalar_lea.vmem %s6, %s320
      %v323 = vld [vmem:[%s297] sm:$0xf]
      %v324 = vld [vmem:[%s297 + $0x4] sm:$0xf]
      %v325 = vld [vmem:[%s297 + $0x8] sm:$0x1]
      %v326 = vld [vmem:[%s297 + $0xc] sm:$0xf]
      %v327 = vld [vmem:[%s297 + $0x10] sm:$0xf]
      %v328 = vld [vmem:[%s297 + $0x14] sm:$0x1]
      %v329 = vld [vmem:[%s297 + $0x18] sm:$0xf]
      %v330 = vld [vmem:[%s297 + $0x1c] sm:$0xf]
      %v331 = vld [vmem:[%s297 + $0x20] sm:$0x1]
      %v332 = vld [vmem:[%s297 + $0x24] sm:$0xf]
      %v333 = vld [vmem:[%s297 + $0x28] sm:$0xf]
      %v334 = vld [vmem:[%s297 + $0x2c] sm:$0x1]
      %v335 = vld [vmem:[%s297 + $0x30] sm:$0xf]
      %v336 = vld [vmem:[%s297 + $0x34] sm:$0xf]
      %v337 = vld [vmem:[%s297 + $0x38] sm:$0x1]
      %v338 = vld [vmem:[%s297 + $0x3c] sm:$0xf]
      %v339 = vld [vmem:[%s297 + $0x40] sm:$0xf]
      %v340 = vld [vmem:[%s297 + $0x44] sm:$0x1]
      %v341 = vld [vmem:[%s297 + $0x48] sm:$0xf]
      %v342 = vld [vmem:[%s297 + $0x4c] sm:$0xf]
      %v343 = vld [vmem:[%s297 + $0x50] sm:$0x1]
      %v344 = vld [vmem:[%s297 + $0x54] sm:$0xf]
      %v345 = vld [vmem:[%s297 + $0x58] sm:$0xf]
      %v346 = vld [vmem:[%s297 + $0x5c] sm:$0x1]
      %v347 = vld [vmem:[%s297 + $0x60] sm:$0xf]
      %v348 = vld [vmem:[%s297 + $0x64] sm:$0xf]
      %v349 = vld [vmem:[%s297 + $0x68] sm:$0x1]
      %v350 = vld [vmem:[%s297 + $0x6c] sm:$0xf]
      %v351 = vld [vmem:[%s297 + $0x70] sm:$0xf]
      %v352 = vld [vmem:[%s297 + $0x74] sm:$0x1]
      %v353 = vld [vmem:[%s297 + $0x78] sm:$0xf]
      %v354 = vld [vmem:[%s297 + $0x7c] sm:$0xf]
      %v355 = vld [vmem:[%s297 + $0x80] sm:$0x1]
      %v356 = vld [vmem:[%s297 + $0x84] sm:$0xf]
      %v357 = vld [vmem:[%s297 + $0x88] sm:$0xf]
      %v358 = vld [vmem:[%s297 + $0x8c] sm:$0x1]
      %v359 = vld [vmem:[%s297 + $0x90] sm:$0xf]
      %v360 = vld [vmem:[%s297 + $0x94] sm:$0xf]
      %v361 = vld [vmem:[%s297 + $0x98] sm:$0x1]
      %v362 = vld [vmem:[%s297 + $0x9c] sm:$0xf]
      %v363 = vld [vmem:[%s297 + $0xa0] sm:$0xf]
      %v364 = vld [vmem:[%s297 + $0xa4] sm:$0x1]
      %v365 = vld [vmem:[%s297 + $0xa8] sm:$0xf]
      %v366 = vld [vmem:[%s297 + $0xac] sm:$0xf]
      %v367 = vld [vmem:[%s297 + $0xb0] sm:$0x1]
      %v368 = vld [vmem:[%s297 + $0xb4] sm:$0xf]
      %v369 = vld [vmem:[%s297 + $0xb8] sm:$0xf]
      %v370 = vld [vmem:[%s297 + $0xbc] sm:$0x1]
      %v371 = vld [vmem:[%s297 + $0xc0] sm:$0xf]
      %v372 = vld [vmem:[%s297 + $0xc4] sm:$0xf]
      %v373 = vld [vmem:[%s297 + $0xc8] sm:$0x1]
      %v374 = vld [vmem:[%s297 + $0xcc] sm:$0xf]
      %v375 = vld [vmem:[%s297 + $0xd0] sm:$0xf]
      %v376 = vld [vmem:[%s297 + $0xd4] sm:$0x1]
      %v377 = vunpack.c.l.bf16 %v323
      %v378 = vunpack.c.l.bf16 %v324
      %v379 = vunpack.c.l.bf16 %v325
      %v380 = vunpack.c.l.bf16 %v326
      %v381 = vunpack.c.l.bf16 %v327
      %v382 = vunpack.c.l.bf16 %v328
      %v383 = vunpack.c.l.bf16 %v329
      %v384 = vunpack.c.l.bf16 %v330
      %v385 = vunpack.c.l.bf16 %v331
      %v386 = vunpack.c.l.bf16 %v332
      %v387 = vunpack.c.l.bf16 %v333
      %v388 = vunpack.c.l.bf16 %v334
      %v389 = vunpack.c.l.bf16 %v335
      %v390 = vunpack.c.l.bf16 %v336
      %v391 = vunpack.c.l.bf16 %v337
      %v392 = vunpack.c.l.bf16 %v338
      %v393 = vunpack.c.l.bf16 %v339
      %v394 = vunpack.c.l.bf16 %v340
      %v395 = vunpack.c.l.bf16 %v341
      %v396 = vunpack.c.l.bf16 %v342
      %v397 = vunpack.c.l.bf16 %v343
      %v398 = vunpack.c.l.bf16 %v344
      %v399 = vunpack.c.l.bf16 %v345
      %v400 = vunpack.c.l.bf16 %v346
      %v401 = vunpack.c.l.bf16 %v347
      %v402 = vunpack.c.l.bf16 %v348
      %v403 = vunpack.c.l.bf16 %v349
      %v404 = vunpack.c.l.bf16 %v350
      %v405 = vunpack.c.l.bf16 %v351
      %v406 = vunpack.c.l.bf16 %v352
      %v407 = vunpack.c.l.bf16 %v353
      %v408 = vunpack.c.l.bf16 %v354
      %v409 = vunpack.c.l.bf16 %v355
      %v410 = vunpack.c.l.bf16 %v356
      %v411 = vunpack.c.l.bf16 %v357
      %v412 = vunpack.c.l.bf16 %v358
      %v413 = vunpack.c.l.bf16 %v359
      %v414 = vunpack.c.l.bf16 %v360
      %v415 = vunpack.c.l.bf16 %v361
      %v416 = vunpack.c.l.bf16 %v362
      %v417 = vunpack.c.l.bf16 %v363
      %v418 = vunpack.c.l.bf16 %v364
      %v419 = vunpack.c.l.bf16 %v365
      %v420 = vunpack.c.l.bf16 %v366
      %v421 = vunpack.c.l.bf16 %v367
      %v422 = vunpack.c.l.bf16 %v368
      %v423 = vunpack.c.l.bf16 %v369
      %v424 = vunpack.c.l.bf16 %v370
      %v425 = vunpack.c.l.bf16 %v371
      %v426 = vunpack.c.l.bf16 %v372
      %v427 = vunpack.c.l.bf16 %v373
      %v428 = vunpack.c.l.bf16 %v374
      %v429 = vunpack.c.l.bf16 %v375
      %v430 = vunpack.c.l.bf16 %v376
      %v431 = vld [vmem:[%s2] sm:$0x1]
      %v433 = vlaneseq
      %v434 = vshrl.u32 %v433, 7
      %v435 = vsub.s32 0, %v434
      %v436 = vrot.slane %v431, %v435
      %v438 = vmul.f32 %v377, %v436
      %v439 = vmul.f32 %v378, %v436
      %v440 = vmul.f32 %v379, %v436
      %v441 = vmul.f32 %v380, %v436
      %v442 = vmul.f32 %v381, %v436
      %v443 = vmul.f32 %v382, %v436
      %v444 = vmul.f32 %v383, %v436
      %v445 = vmul.f32 %v384, %v436
      %v446 = vmul.f32 %v385, %v436
      %v447 = vmul.f32 %v386, %v436
      %v448 = vmul.f32 %v387, %v436
      %v449 = vmul.f32 %v388, %v436
      %v450 = vmul.f32 %v389, %v436
      %v451 = vmul.f32 %v390, %v436
      %v452 = vmul.f32 %v391, %v436
      %v453 = vmul.f32 %v392, %v436
      %v454 = vmul.f32 %v393, %v436
      %v455 = vmul.f32 %v394, %v436
      %v456 = vmul.f32 %v395, %v436
      %v457 = vmul.f32 %v396, %v436
      %v458 = vmul.f32 %v397, %v436
      %v459 = vmul.f32 %v398, %v436
      %v460 = vmul.f32 %v399, %v436
      %v461 = vmul.f32 %v400, %v436
      %v462 = vmul.f32 %v401, %v436
      %v463 = vmul.f32 %v402, %v436
      %v464 = vmul.f32 %v403, %v436
      %v465 = vmul.f32 %v404, %v436
      %v466 = vmul.f32 %v405, %v436
      %v467 = vmul.f32 %v406, %v436
      %v468 = vmul.f32 %v407, %v436
      %v469 = vmul.f32 %v408, %v436
      %v470 = vmul.f32 %v409, %v436
      %v471 = vmul.f32 %v410, %v436
      %v472 = vmul.f32 %v411, %v436
      %v473 = vmul.f32 %v412, %v436
      %v474 = vmul.f32 %v413, %v436
      %v475 = vmul.f32 %v414, %v436
      %v476 = vmul.f32 %v415, %v436
      %v477 = vmul.f32 %v416, %v436
      %v478 = vmul.f32 %v417, %v436
      %v479 = vmul.f32 %v418, %v436
      %v480 = vmul.f32 %v419, %v436
      %v481 = vmul.f32 %v420, %v436
      %v482 = vmul.f32 %v421, %v436
      %v483 = vmul.f32 %v422, %v436
      %v484 = vmul.f32 %v423, %v436
      %v485 = vmul.f32 %v424, %v436
      %v486 = vmul.f32 %v425, %v436
      %v487 = vmul.f32 %v426, %v436
      %v488 = vmul.f32 %v427, %v436
      %v489 = vmul.f32 %v428, %v436
      %v490 = vmul.f32 %v429, %v436
      %v491 = vmul.f32 %v430, %v436
      %v492 = vld [vmem:[%s3] sm:$0x1]
      %v494 = vlaneseq
      %v495 = vshrl.u32 %v494, 7
      %v496 = vsub.s32 0, %v495
      %v497 = vrot.slane %v492, %v496
      %v499 = vadd.f32 %v438, %v497
      %v500 = vadd.f32 %v439, %v497
      %v501 = vadd.f32 %v440, %v497
      %v502 = vadd.f32 %v441, %v497
      %v503 = vadd.f32 %v442, %v497
      %v504 = vadd.f32 %v443, %v497
      %v505 = vadd.f32 %v444, %v497
      %v506 = vadd.f32 %v445, %v497
      %v507 = vadd.f32 %v446, %v497
      %v508 = vadd.f32 %v447, %v497
      %v509 = vadd.f32 %v448, %v497
      %v510 = vadd.f32 %v449, %v497
      %v511 = vadd.f32 %v450, %v497
      %v512 = vadd.f32 %v451, %v497
      %v513 = vadd.f32 %v452, %v497
      %v514 = vadd.f32 %v453, %v497
      %v515 = vadd.f32 %v454, %v497
      %v516 = vadd.f32 %v455, %v497
      %v517 = vadd.f32 %v456, %v497
      %v518 = vadd.f32 %v457, %v497
      %v519 = vadd.f32 %v458, %v497
      %v520 = vadd.f32 %v459, %v497
      %v521 = vadd.f32 %v460, %v497
      %v522 = vadd.f32 %v461, %v497
      %v523 = vadd.f32 %v462, %v497
      %v524 = vadd.f32 %v463, %v497
      %v525 = vadd.f32 %v464, %v497
      %v526 = vadd.f32 %v465, %v497
      %v527 = vadd.f32 %v466, %v497
      %v528 = vadd.f32 %v467, %v497
      %v529 = vadd.f32 %v468, %v497
      %v530 = vadd.f32 %v469, %v497
      %v531 = vadd.f32 %v470, %v497
      %v532 = vadd.f32 %v471, %v497
      %v533 = vadd.f32 %v472, %v497
      %v534 = vadd.f32 %v473, %v497
      %v535 = vadd.f32 %v474, %v497
      %v536 = vadd.f32 %v475, %v497
      %v537 = vadd.f32 %v476, %v497
      %v538 = vadd.f32 %v477, %v497
      %v539 = vadd.f32 %v478, %v497
      %v540 = vadd.f32 %v479, %v497
      %v541 = vadd.f32 %v480, %v497
      %v542 = vadd.f32 %v481, %v497
      %v543 = vadd.f32 %v482, %v497
      %v544 = vadd.f32 %v483, %v497
      %v545 = vadd.f32 %v484, %v497
      %v546 = vadd.f32 %v485, %v497
      %v547 = vadd.f32 %v486, %v497
      %v548 = vadd.f32 %v487, %v497
      %v549 = vadd.f32 %v488, %v497
      %v550 = vadd.f32 %v489, %v497
      %v551 = vadd.f32 %v490, %v497
      %v552 = vadd.f32 %v491, %v497
      %vm553 = vcmp.gt.f32.partialorder %v499, 0.0
      %vm554 = vcmp.gt.f32.partialorder %v500, 0.0
      %vm555 = vcmp.gt.f32.partialorder %v501, 0.0
      %vm556 = vcmp.gt.f32.partialorder %v502, 0.0
      %vm557 = vcmp.gt.f32.partialorder %v503, 0.0
      %vm558 = vcmp.gt.f32.partialorder %v504, 0.0
      %vm559 = vcmp.gt.f32.partialorder %v505, 0.0
      %vm560 = vcmp.gt.f32.partialorder %v506, 0.0
      %vm561 = vcmp.gt.f32.partialorder %v507, 0.0
      %vm562 = vcmp.gt.f32.partialorder %v508, 0.0
      %vm563 = vcmp.gt.f32.partialorder %v509, 0.0
      %vm564 = vcmp.gt.f32.partialorder %v510, 0.0
      %vm565 = vcmp.gt.f32.partialorder %v511, 0.0
      %vm566 = vcmp.gt.f32.partialorder %v512, 0.0
      %vm567 = vcmp.gt.f32.partialorder %v513, 0.0
      %vm568 = vcmp.gt.f32.partialorder %v514, 0.0
      %vm569 = vcmp.gt.f32.partialorder %v515, 0.0
      %vm570 = vcmp.gt.f32.partialorder %v516, 0.0
      %vm571 = vcmp.gt.f32.partialorder %v517, 0.0
      %vm572 = vcmp.gt.f32.partialorder %v518, 0.0
      %vm573 = vcmp.gt.f32.partialorder %v519, 0.0
      %vm574 = vcmp.gt.f32.partialorder %v520, 0.0
      %vm575 = vcmp.gt.f32.partialorder %v521, 0.0
      %vm576 = vcmp.gt.f32.partialorder %v522, 0.0
      %vm577 = vcmp.gt.f32.partialorder %v523, 0.0
      %vm578 = vcmp.gt.f32.partialorder %v524, 0.0
      %vm579 = vcmp.gt.f32.partialorder %v525, 0.0
      %vm580 = vcmp.gt.f32.partialorder %v526, 0.0
      %vm581 = vcmp.gt.f32.partialorder %v527, 0.0
      %vm582 = vcmp.gt.f32.partialorder %v528, 0.0
      %vm583 = vcmp.gt.f32.partialorder %v529, 0.0
      %vm584 = vcmp.gt.f32.partialorder %v530, 0.0
      %vm585 = vcmp.gt.f32.partialorder %v531, 0.0
      %vm586 = vcmp.gt.f32.partialorder %v532, 0.0
      %vm587 = vcmp.gt.f32.partialorder %v533, 0.0
      %vm588 = vcmp.gt.f32.partialorder %v534, 0.0
      %vm589 = vcmp.gt.f32.partialorder %v535, 0.0
      %vm590 = vcmp.gt.f32.partialorder %v536, 0.0
      %vm591 = vcmp.gt.f32.partialorder %v537, 0.0
      %vm592 = vcmp.gt.f32.partialorder %v538, 0.0
      %vm593 = vcmp.gt.f32.partialorder %v539, 0.0
      %vm594 = vcmp.gt.f32.partialorder %v540, 0.0
      %vm595 = vcmp.gt.f32.partialorder %v541, 0.0
      %vm596 = vcmp.gt.f32.partialorder %v542, 0.0
      %vm597 = vcmp.gt.f32.partialorder %v543, 0.0
      %vm598 = vcmp.gt.f32.partialorder %v544, 0.0
      %vm599 = vcmp.gt.f32.partialorder %v545, 0.0
      %vm600 = vcmp.gt.f32.partialorder %v546, 0.0
      %vm601 = vcmp.gt.f32.partialorder %v547, 0.0
      %vm602 = vcmp.gt.f32.partialorder %v548, 0.0
      %vm603 = vcmp.gt.f32.partialorder %v549, 0.0
      %vm604 = vcmp.gt.f32.partialorder %v550, 0.0
      %vm605 = vcmp.gt.f32.partialorder %v551, 0.0
      %vm606 = vcmp.gt.f32.partialorder %v552, 0.0
      %v607 = vmul.f32 %v499, 0.2
      %v608 = vmul.f32 %v500, 0.2
      %v609 = vmul.f32 %v501, 0.2
      %v610 = vmul.f32 %v502, 0.2
      %v611 = vmul.f32 %v503, 0.2
      %v612 = vmul.f32 %v504, 0.2
      %v613 = vmul.f32 %v505, 0.2
      %v614 = vmul.f32 %v506, 0.2
      %v615 = vmul.f32 %v507, 0.2
      %v616 = vmul.f32 %v508, 0.2
      %v617 = vmul.f32 %v509, 0.2
      %v618 = vmul.f32 %v510, 0.2
      %v619 = vmul.f32 %v511, 0.2
      %v620 = vmul.f32 %v512, 0.2
      %v621 = vmul.f32 %v513, 0.2
      %v622 = vmul.f32 %v514, 0.2
      %v623 = vmul.f32 %v515, 0.2
      %v624 = vmul.f32 %v516, 0.2
      %v625 = vmul.f32 %v517, 0.2
      %v626 = vmul.f32 %v518, 0.2
      %v627 = vmul.f32 %v519, 0.2
      %v628 = vmul.f32 %v520, 0.2
      %v629 = vmul.f32 %v521, 0.2
      %v630 = vmul.f32 %v522, 0.2
      %v631 = vmul.f32 %v523, 0.2
      %v632 = vmul.f32 %v524, 0.2
      %v633 = vmul.f32 %v525, 0.2
      %v634 = vmul.f32 %v526, 0.2
      %v635 = vmul.f32 %v527, 0.2
      %v636 = vmul.f32 %v528, 0.2
      %v637 = vmul.f32 %v529, 0.2
      %v638 = vmul.f32 %v530, 0.2
      %v639 = vmul.f32 %v531, 0.2
      %v640 = vmul.f32 %v532, 0.2
      %v641 = vmul.f32 %v533, 0.2
      %v642 = vmul.f32 %v534, 0.2
      %v643 = vmul.f32 %v535, 0.2
      %v644 = vmul.f32 %v536, 0.2
      %v645 = vmul.f32 %v537, 0.2
      %v646 = vmul.f32 %v538, 0.2
      %v647 = vmul.f32 %v539, 0.2
      %v648 = vmul.f32 %v540, 0.2
      %v649 = vmul.f32 %v541, 0.2
      %v650 = vmul.f32 %v542, 0.2
      %v651 = vmul.f32 %v543, 0.2
      %v652 = vmul.f32 %v544, 0.2
      %v653 = vmul.f32 %v545, 0.2
      %v654 = vmul.f32 %v546, 0.2
      %v655 = vmul.f32 %v547, 0.2
      %v656 = vmul.f32 %v548, 0.2
      %v657 = vmul.f32 %v549, 0.2
      %v658 = vmul.f32 %v550, 0.2
      %v659 = vmul.f32 %v551, 0.2
      %v660 = vmul.f32 %v552, 0.2
      %v661 = vsel %vm553, %v499, %v607
      %v662 = vsel %vm554, %v500, %v608
      %v663 = vsel %vm555, %v501, %v609
      %v664 = vsel %vm556, %v502, %v610
      %v665 = vsel %vm557, %v503, %v611
      %v666 = vsel %vm558, %v504, %v612
      %v667 = vsel %vm559, %v505, %v613
      %v668 = vsel %vm560, %v506, %v614
      %v669 = vsel %vm561, %v507, %v615
      %v670 = vsel %vm562, %v508, %v616
      %v671 = vsel %vm563, %v509, %v617
      %v672 = vsel %vm564, %v510, %v618
      %v673 = vsel %vm565, %v511, %v619
      %v674 = vsel %vm566, %v512, %v620
      %v675 = vsel %vm567, %v513, %v621
      %v676 = vsel %vm568, %v514, %v622
      %v677 = vsel %vm569, %v515, %v623
      %v678 = vsel %vm570, %v516, %v624
      %v679 = vsel %vm571, %v517, %v625
      %v680 = vsel %vm572, %v518, %v626
      %v681 = vsel %vm573, %v519, %v627
      %v682 = vsel %vm574, %v520, %v628
      %v683 = vsel %vm575, %v521, %v629
      %v684 = vsel %vm576, %v522, %v630
      %v685 = vsel %vm577, %v523, %v631
      %v686 = vsel %vm578, %v524, %v632
      %v687 = vsel %vm579, %v525, %v633
      %v688 = vsel %vm580, %v526, %v634
      %v689 = vsel %vm581, %v527, %v635
      %v690 = vsel %vm582, %v528, %v636
      %v691 = vsel %vm583, %v529, %v637
      %v692 = vsel %vm584, %v530, %v638
      %v693 = vsel %vm585, %v531, %v639
      %v694 = vsel %vm586, %v532, %v640
      %v695 = vsel %vm587, %v533, %v641
      %v696 = vsel %vm588, %v534, %v642
      %v697 = vsel %vm589, %v535, %v643
      %v698 = vsel %vm590, %v536, %v644
      %v699 = vsel %vm591, %v537, %v645
      %v700 = vsel %vm592, %v538, %v646
      %v701 = vsel %vm593, %v539, %v647
      %v702 = vsel %vm594, %v540, %v648
      %v703 = vsel %vm595, %v541, %v649
      %v704 = vsel %vm596, %v542, %v650
      %v705 = vsel %vm597, %v543, %v651
      %v706 = vsel %vm598, %v544, %v652
      %v707 = vsel %vm599, %v545, %v653
      %v708 = vsel %vm600, %v546, %v654
      %v709 = vsel %vm601, %v547, %v655
      %v710 = vsel %vm602, %v548, %v656
      %v711 = vsel %vm603, %v549, %v657
      %v712 = vsel %vm604, %v550, %v658
      %v713 = vsel %vm605, %v551, %v659
      %v714 = vsel %vm606, %v552, %v660
      %v715 = vlaneseq
      %v716 = vshrl.u32 %v715, 7
      %v717 = vadd.s32 %v716, 8
      %v718 = vadd.s32 %v716, 16
      %vm719 = vcmp.ge.s32.totalorder %v716, 1
      %vm720 = vcmp.ge.s32.totalorder %v717, 1
      %vm721 = vcmp.ge.s32.totalorder %v718, 1
      %vm722 = vmand 0, %vm719
      %vm723 = vmand 0, %vm720
      %vm724 = vmand 0, %vm721
      %vm725 = vmand 1, %vm719
      %vm726 = vmand 1, %vm720
      %vm727 = vmand 1, %vm721
      %vm728 = vcmp.le.s32.totalorder %v716, 16
      %vm729 = vcmp.le.s32.totalorder %v717, 16
      %vm730 = vcmp.le.s32.totalorder %v718, 16
      %vm731 = vmand %vm722, %vm728
      %vm732 = vmand %vm723, %vm729
      %vm733 = vmand %vm724, %vm730
      %vm734 = vmand %vm725, %vm728
      %vm735 = vmand %vm726, %vm729
      %vm736 = vmand %vm727, %vm730
      %v737 = vsel %vm731, 1, 0
      %v738 = vsel %vm732, 1, 0
      %v739 = vsel %vm733, 1, 0
      %v740 = vsel %vm734, 1, 0
      %v741 = vsel %vm735, 1, 0
      %v742 = vsel %vm736, 1, 0
      %vm743 = vcmp.eq.s32.totalorder %v737, 1
      %vm744 = vcmp.eq.s32.totalorder %v738, 1
      %vm745 = vcmp.eq.s32.totalorder %v739, 1
      %vm746 = vcmp.eq.s32.totalorder %v740, 1
      %vm747 = vcmp.eq.s32.totalorder %v741, 1
      %vm748 = vcmp.eq.s32.totalorder %v742, 1
      %v749 = vsel %vm743, %v661, 0.0
      %v750 = vsel %vm744, %v662, 0.0
      %v751 = vsel %vm745, %v663, 0.0
      %v752 = vsel %vm746, %v664, 0.0
      %v753 = vsel %vm747, %v665, 0.0
      %v754 = vsel %vm748, %v666, 0.0
      %v755 = vsel %vm746, %v667, 0.0
      %v756 = vsel %vm747, %v668, 0.0
      %v757 = vsel %vm748, %v669, 0.0
      %v758 = vsel %vm746, %v670, 0.0
      %v759 = vsel %vm747, %v671, 0.0
      %v760 = vsel %vm748, %v672, 0.0
      %v761 = vsel %vm746, %v673, 0.0
      %v762 = vsel %vm747, %v674, 0.0
      %v763 = vsel %vm748, %v675, 0.0
      %v764 = vsel %vm746, %v676, 0.0
      %v765 = vsel %vm747, %v677, 0.0
      %v766 = vsel %vm748, %v678, 0.0
      %v767 = vsel %vm746, %v679, 0.0
      %v768 = vsel %vm747, %v680, 0.0
      %v769 = vsel %vm748, %v681, 0.0
      %v770 = vsel %vm746, %v682, 0.0
      %v771 = vsel %vm747, %v683, 0.0
      %v772 = vsel %vm748, %v684, 0.0
      %v773 = vsel %vm746, %v685, 0.0
      %v774 = vsel %vm747, %v686, 0.0
      %v775 = vsel %vm748, %v687, 0.0
      %v776 = vsel %vm746, %v688, 0.0
      %v777 = vsel %vm747, %v689, 0.0
      %v778 = vsel %vm748, %v690, 0.0
      %v779 = vsel %vm746, %v691, 0.0
      %v780 = vsel %vm747, %v692, 0.0
      %v781 = vsel %vm748, %v693, 0.0
      %v782 = vsel %vm746, %v694, 0.0
      %v783 = vsel %vm747, %v695, 0.0
      %v784 = vsel %vm748, %v696, 0.0
      %v785 = vsel %vm746, %v697, 0.0
      %v786 = vsel %vm747, %v698, 0.0
      %v787 = vsel %vm748, %v699, 0.0
      %v788 = vsel %vm746, %v700, 0.0
      %v789 = vsel %vm747, %v701, 0.0
      %v790 = vsel %vm748, %v702, 0.0
      %v791 = vsel %vm746, %v703, 0.0
      %v792 = vsel %vm747, %v704, 0.0
      %v793 = vsel %vm748, %v705, 0.0
      %v794 = vsel %vm746, %v706, 0.0
      %v795 = vsel %vm747, %v707, 0.0
      %v796 = vsel %vm748, %v708, 0.0
      %v797 = vsel %vm746, %v709, 0.0
      %v798 = vsel %vm747, %v710, 0.0
      %v799 = vsel %vm748, %v711, 0.0
      %v800 = vsel %vm743, %v712, 0.0
      %v801 = vsel %vm744, %v713, 0.0
      %v802 = vsel %vm745, %v714, 0.0
      %v803 = vpack.c.bf16 %v750, %v749
      %v804 = vpack.c.bf16 %v751, %v751
      %v805 = vpack.c.bf16 %v753, %v752
      %v806 = vpack.c.bf16 %v754, %v754
      %v807 = vpack.c.bf16 %v756, %v755
      %v808 = vpack.c.bf16 %v757, %v757
      %v809 = vpack.c.bf16 %v759, %v758
      %v810 = vpack.c.bf16 %v760, %v760
      %v811 = vpack.c.bf16 %v762, %v761
      %v812 = vpack.c.bf16 %v763, %v763
      %v813 = vpack.c.bf16 %v765, %v764
      %v814 = vpack.c.bf16 %v766, %v766
      %v815 = vpack.c.bf16 %v768, %v767
      %v816 = vpack.c.bf16 %v769, %v769
      %v817 = vpack.c.bf16 %v771, %v770
      %v818 = vpack.c.bf16 %v772, %v772
      %v819 = vpack.c.bf16 %v774, %v773
      %v820 = vpack.c.bf16 %v775, %v775
      %v821 = vpack.c.bf16 %v777, %v776
      %v822 = vpack.c.bf16 %v778, %v778
      %v823 = vpack.c.bf16 %v780, %v779
      %v824 = vpack.c.bf16 %v781, %v781
      %v825 = vpack.c.bf16 %v783, %v782
      %v826 = vpack.c.bf16 %v784, %v784
      %v827 = vpack.c.bf16 %v786, %v785
      %v828 = vpack.c.bf16 %v787, %v787
      %v829 = vpack.c.bf16 %v789, %v788
      %v830 = vpack.c.bf16 %v790, %v790
      %v831 = vpack.c.bf16 %v792, %v791
      %v832 = vpack.c.bf16 %v793, %v793
      %v833 = vpack.c.bf16 %v795, %v794
      %v834 = vpack.c.bf16 %v796, %v796
      %v835 = vpack.c.bf16 %v798, %v797
      %v836 = vpack.c.bf16 %v799, %v799
      %v837 = vpack.c.bf16 %v801, %v800
      %v838 = vpack.c.bf16 %v802, %v802
      %vm839 = vsmask.f32 7424
      %v841 = vshrl.u32 %v803, 16
      %v843 = vshll.u32 %v803, 16
      %v845 = vrot.slane %v843, 1
      %v846 = vor.u32 %v841, %v845
      %v848 = vshll.u32 %v804, 16
      %v850 = vrot.slane %v848, 1
      %v851 = vsel %vm839, %v846, %v850
      %v853 = vshrl.u32 %v805, 16
      %v855 = vshll.u32 %v805, 16
      %v857 = vrot.slane %v855, 1
      %v858 = vor.u32 %v853, %v857
      %v860 = vshll.u32 %v806, 16
      %v862 = vrot.slane %v860, 1
      %v863 = vsel %vm839, %v858, %v862
      %v865 = vshrl.u32 %v807, 16
      %v867 = vshll.u32 %v807, 16
      %v869 = vrot.slane %v867, 1
      %v870 = vor.u32 %v865, %v869
      %v872 = vshll.u32 %v808, 16
      %v874 = vrot.slane %v872, 1
      %v875 = vsel %vm839, %v870, %v874
      %v877 = vshrl.u32 %v809, 16
      %v879 = vshll.u32 %v809, 16
      %v881 = vrot.slane %v879, 1
      %v882 = vor.u32 %v877, %v881
      %v884 = vshll.u32 %v810, 16
      %v886 = vrot.slane %v884, 1
      %v887 = vsel %vm839, %v882, %v886
      %v889 = vshrl.u32 %v811, 16
      %v891 = vshll.u32 %v811, 16
      %v893 = vrot.slane %v891, 1
      %v894 = vor.u32 %v889, %v893
      %v896 = vshll.u32 %v812, 16
      %v898 = vrot.slane %v896, 1
      %v899 = vsel %vm839, %v894, %v898
      %v901 = vshrl.u32 %v813, 16
      %v903 = vshll.u32 %v813, 16
      %v905 = vrot.slane %v903, 1
      %v906 = vor.u32 %v901, %v905
      %v908 = vshll.u32 %v814, 16
      %v910 = vrot.slane %v908, 1
      %v911 = vsel %vm839, %v906, %v910
      %v913 = vshrl.u32 %v815, 16
      %v915 = vshll.u32 %v815, 16
      %v917 = vrot.slane %v915, 1
      %v918 = vor.u32 %v913, %v917
      %v920 = vshll.u32 %v816, 16
      %v922 = vrot.slane %v920, 1
      %v923 = vsel %vm839, %v918, %v922
      %v925 = vshrl.u32 %v817, 16
      %v927 = vshll.u32 %v817, 16
      %v929 = vrot.slane %v927, 1
      %v930 = vor.u32 %v925, %v929
      %v932 = vshll.u32 %v818, 16
      %v934 = vrot.slane %v932, 1
      %v935 = vsel %vm839, %v930, %v934
      %v937 = vshrl.u32 %v819, 16
      %v939 = vshll.u32 %v819, 16
      %v941 = vrot.slane %v939, 1
      %v942 = vor.u32 %v937, %v941
      %v944 = vshll.u32 %v820, 16
      %v946 = vrot.slane %v944, 1
      %v947 = vsel %vm839, %v942, %v946
      %v949 = vshrl.u32 %v821, 16
      %v951 = vshll.u32 %v821, 16
      %v953 = vrot.slane %v951, 1
      %v954 = vor.u32 %v949, %v953
      %v956 = vshll.u32 %v822, 16
      %v958 = vrot.slane %v956, 1
      %v959 = vsel %vm839, %v954, %v958
      %v961 = vshrl.u32 %v823, 16
      %v963 = vshll.u32 %v823, 16
      %v965 = vrot.slane %v963, 1
      %v966 = vor.u32 %v961, %v965
      %v968 = vshll.u32 %v824, 16
      %v970 = vrot.slane %v968, 1
      %v971 = vsel %vm839, %v966, %v970
      %v973 = vshrl.u32 %v825, 16
      %v975 = vshll.u32 %v825, 16
      %v977 = vrot.slane %v975, 1
      %v978 = vor.u32 %v973, %v977
      %v980 = vshll.u32 %v826, 16
      %v982 = vrot.slane %v980, 1
      %v983 = vsel %vm839, %v978, %v982
      %v985 = vshrl.u32 %v827, 16
      %v987 = vshll.u32 %v827, 16
      %v989 = vrot.slane %v987, 1
      %v990 = vor.u32 %v985, %v989
      %v992 = vshll.u32 %v828, 16
      %v994 = vrot.slane %v992, 1
      %v995 = vsel %vm839, %v990, %v994
      %v997 = vshrl.u32 %v829, 16
      %v999 = vshll.u32 %v829, 16
      %v1001 = vrot.slane %v999, 1
      %v1002 = vor.u32 %v997, %v1001
      %v1004 = vshll.u32 %v830, 16
      %v1006 = vrot.slane %v1004, 1
      %v1007 = vsel %vm839, %v1002, %v1006
      %v1009 = vshrl.u32 %v831, 16
      %v1011 = vshll.u32 %v831, 16
      %v1013 = vrot.slane %v1011, 1
      %v1014 = vor.u32 %v1009, %v1013
      %v1016 = vshll.u32 %v832, 16
      %v1018 = vrot.slane %v1016, 1
      %v1019 = vsel %vm839, %v1014, %v1018
      %v1021 = vshrl.u32 %v833, 16
      %v1023 = vshll.u32 %v833, 16
      %v1025 = vrot.slane %v1023, 1
      %v1026 = vor.u32 %v1021, %v1025
      %v1028 = vshll.u32 %v834, 16
      %v1030 = vrot.slane %v1028, 1
      %v1031 = vsel %vm839, %v1026, %v1030
      %vm1064 = vcmask 1046528
      %v1065 = vrot.slane %v803, 1
      %v1066 = vrot.slane %v804, 1
      %v1067 = vsel %vm1064, %v1065, %v1066
      %v1068 = vrot.slane %v805, 1
      %v1069 = vrot.slane %v806, 1
      %v1070 = vsel %vm1064, %v1068, %v1069
      %v1071 = vrot.slane %v807, 1
      %v1072 = vrot.slane %v808, 1
      %v1073 = vsel %vm1064, %v1071, %v1072
      %v1074 = vrot.slane %v809, 1
      %v1075 = vrot.slane %v810, 1
      %v1076 = vsel %vm1064, %v1074, %v1075
      %v1077 = vrot.slane %v811, 1
      %v1078 = vrot.slane %v812, 1
      %v1079 = vsel %vm1064, %v1077, %v1078
      %v1080 = vrot.slane %v813, 1
      %v1081 = vrot.slane %v814, 1
      %v1082 = vsel %vm1064, %v1080, %v1081
      %v1083 = vrot.slane %v815, 1
      %v1084 = vrot.slane %v816, 1
      %v1085 = vsel %vm1064, %v1083, %v1084
      %v1086 = vrot.slane %v817, 1
      %v1087 = vrot.slane %v818, 1
      %v1088 = vsel %vm1064, %v1086, %v1087
      %v1089 = vrot.slane %v819, 1
      %v1090 = vrot.slane %v820, 1
      %v1091 = vsel %vm1064, %v1089, %v1090
      %v1092 = vrot.slane %v821, 1
      %v1093 = vrot.slane %v822, 1
      %v1094 = vsel %vm1064, %v1092, %v1093
      %v1095 = vrot.slane %v823, 1
      %v1096 = vrot.slane %v824, 1
      %v1097 = vsel %vm1064, %v1095, %v1096
      %v1098 = vrot.slane %v825, 1
      %v1099 = vrot.slane %v826, 1
      %v1100 = vsel %vm1064, %v1098, %v1099
      %v1101 = vrot.slane %v827, 1
      %v1102 = vrot.slane %v828, 1
      %v1103 = vsel %vm1064, %v1101, %v1102
      %v1104 = vrot.slane %v829, 1
      %v1105 = vrot.slane %v830, 1
      %v1106 = vsel %vm1064, %v1104, %v1105
      %v1107 = vrot.slane %v831, 1
      %v1108 = vrot.slane %v832, 1
      %v1109 = vsel %vm1064, %v1107, %v1108
      %v1110 = vrot.slane %v833, 1
      %v1111 = vrot.slane %v834, 1
      %v1112 = vsel %vm1064, %v1110, %v1111
      %v1114 = vshrl.u32 %v835, 16
      %v1116 = vshll.u32 %v835, 16
      %v1118 = vrot.slane %v1116, 1
      %v1119 = vor.u32 %v1114, %v1118
      %v1121 = vshll.u32 %v836, 16
      %v1123 = vrot.slane %v1121, 1
      %v1124 = vsel %vm839, %v1119, %v1123
      %v1127 = vrot.slane %v835, 1
      %v1128 = vrot.slane %v836, 1
      %v1129 = vsel %vm1064, %v1127, %v1128
      %v1131 = vshrl.u32 %v837, 16
      %v1133 = vshll.u32 %v837, 16
      %v1135 = vrot.slane %v1133, 1
      %v1136 = vor.u32 %v1131, %v1135
      %v1138 = vshll.u32 %v838, 16
      %v1140 = vrot.slane %v1138, 1
      %v1141 = vsel %vm839, %v1136, %v1140
      %v1144 = vrot.slane %v837, 1
      %v1145 = vrot.slane %v838, 1
      %v1146 = vsel %vm1064, %v1144, %v1145
      %1147 = vrot.lane.b32.xlu0 %v851, 8
      %v1148 = vpop.permute.xlu0 %1147
      %1149 = vrot.lane.b32.xlu0 %v863, 8
      %v1150 = vpop.permute.xlu0 %1149
      %1151 = vrot.lane.b32.xlu0 %v875, 8
      %v1152 = vpop.permute.xlu0 %1151
      %1153 = vrot.lane.b32.xlu0 %v887, 8
      %v1154 = vpop.permute.xlu0 %1153
      %1155 = vrot.lane.b32.xlu0 %v899, 8
      %v1156 = vpop.permute.xlu0 %1155
      %1157 = vrot.lane.b32.xlu0 %v911, 8
      %v1158 = vpop.permute.xlu0 %1157
      %1159 = vrot.lane.b32.xlu0 %v923, 8
      %v1160 = vpop.permute.xlu0 %1159
      %1161 = vrot.lane.b32.xlu0 %v935, 8
      %v1162 = vpop.permute.xlu0 %1161
      %1163 = vrot.lane.b32.xlu0 %v947, 8
      %v1164 = vpop.permute.xlu0 %1163
      %1165 = vrot.lane.b32.xlu0 %v959, 8
      %v1166 = vpop.permute.xlu0 %1165
      %1167 = vrot.lane.b32.xlu0 %v971, 8
      %v1168 = vpop.permute.xlu0 %1167
      %1169 = vrot.lane.b32.xlu0 %v983, 8
      %v1170 = vpop.permute.xlu0 %1169
      %1171 = vrot.lane.b32.xlu0 %v995, 8
      %v1172 = vpop.permute.xlu0 %1171
      %1173 = vrot.lane.b32.xlu0 %v1007, 8
      %v1174 = vpop.permute.xlu0 %1173
      %1175 = vrot.lane.b32.xlu0 %v1019, 8
      %v1176 = vpop.permute.xlu0 %1175
      %1177 = vrot.lane.b32.xlu0 %v1031, 8
      %v1178 = vpop.permute.xlu0 %1177
      %1179 = vrot.lane.b32.xlu0 %v1067, 16
      %v1180 = vpop.permute.xlu0 %1179
      %1181 = vrot.lane.b32.xlu0 %v1070, 16
      %v1182 = vpop.permute.xlu0 %1181
      %1183 = vrot.lane.b32.xlu0 %v1073, 16
      %v1184 = vpop.permute.xlu0 %1183
      %1185 = vrot.lane.b32.xlu0 %v1076, 16
      %v1186 = vpop.permute.xlu0 %1185
      %1187 = vrot.lane.b32.xlu0 %v1079, 16
      %v1188 = vpop.permute.xlu0 %1187
      %1189 = vrot.lane.b32.xlu0 %v1082, 16
      %v1190 = vpop.permute.xlu0 %1189
      %1191 = vrot.lane.b32.xlu0 %v1085, 16
      %v1192 = vpop.permute.xlu0 %1191
      %1193 = vrot.lane.b32.xlu0 %v1088, 16
      %v1194 = vpop.permute.xlu0 %1193
      %1195 = vrot.lane.b32.xlu0 %v1091, 16
      %v1196 = vpop.permute.xlu0 %1195
      %1197 = vrot.lane.b32.xlu0 %v1094, 16
      %v1198 = vpop.permute.xlu0 %1197
      %1199 = vrot.lane.b32.xlu0 %v1097, 16
      %v1200 = vpop.permute.xlu0 %1199
      %1201 = vrot.lane.b32.xlu0 %v1100, 16
      %v1202 = vpop.permute.xlu0 %1201
      %1203 = vrot.lane.b32.xlu0 %v1103, 16
      %v1204 = vpop.permute.xlu0 %1203
      %1205 = vrot.lane.b32.xlu0 %v1106, 16
      %v1206 = vpop.permute.xlu0 %1205
      %1207 = vrot.lane.b32.xlu0 %v1109, 16
      %v1208 = vpop.permute.xlu0 %1207
      %1209 = vrot.lane.b32.xlu0 %v1112, 16
      %v1210 = vpop.permute.xlu0 %1209
      %1211 = vrot.lane.b32.xlu0 %v805, 24
      %v1212 = vpop.permute.xlu0 %1211
      %1213 = vrot.lane.b32.xlu0 %v807, 24
      %v1214 = vpop.permute.xlu0 %1213
      %1215 = vrot.lane.b32.xlu0 %v809, 24
      %v1216 = vpop.permute.xlu0 %1215
      %1217 = vrot.lane.b32.xlu0 %v811, 24
      %v1218 = vpop.permute.xlu0 %1217
      %1219 = vrot.lane.b32.xlu0 %v813, 24
      %v1220 = vpop.permute.xlu0 %1219
      %1221 = vrot.lane.b32.xlu0 %v815, 24
      %v1222 = vpop.permute.xlu0 %1221
      %1223 = vrot.lane.b32.xlu0 %v817, 24
      %v1224 = vpop.permute.xlu0 %1223
      %1225 = vrot.lane.b32.xlu0 %v819, 24
      %v1226 = vpop.permute.xlu0 %1225
      %1227 = vrot.lane.b32.xlu0 %v821, 24
      %v1228 = vpop.permute.xlu0 %1227
      %1229 = vrot.lane.b32.xlu0 %v823, 24
      %v1230 = vpop.permute.xlu0 %1229
      %1231 = vrot.lane.b32.xlu0 %v825, 24
      %v1232 = vpop.permute.xlu0 %1231
      %1233 = vrot.lane.b32.xlu0 %v827, 24
      %v1234 = vpop.permute.xlu0 %1233
      %1235 = vrot.lane.b32.xlu0 %v829, 24
      %v1236 = vpop.permute.xlu0 %1235
      %1237 = vrot.lane.b32.xlu0 %v831, 24
      %v1238 = vpop.permute.xlu0 %1237
      %1239 = vrot.lane.b32.xlu0 %v833, 24
      %v1240 = vpop.permute.xlu0 %1239
      %1241 = vrot.lane.b32.xlu0 %v835, 24
      %v1242 = vpop.permute.xlu0 %1241
      %1243 = vrot.lane.b32.xlu0 %v863, 32
      %v1244 = vpop.permute.xlu0 %1243
      %1245 = vrot.lane.b32.xlu0 %v875, 32
      %v1246 = vpop.permute.xlu0 %1245
      %1247 = vrot.lane.b32.xlu0 %v887, 32
      %v1248 = vpop.permute.xlu0 %1247
      %1249 = vrot.lane.b32.xlu0 %v899, 32
      %v1250 = vpop.permute.xlu0 %1249
      %1251 = vrot.lane.b32.xlu0 %v911, 32
      %v1252 = vpop.permute.xlu0 %1251
      %1253 = vrot.lane.b32.xlu0 %v923, 32
      %v1254 = vpop.permute.xlu0 %1253
      %1255 = vrot.lane.b32.xlu0 %v935, 32
      %v1256 = vpop.permute.xlu0 %1255
      %1257 = vrot.lane.b32.xlu0 %v947, 32
      %v1258 = vpop.permute.xlu0 %1257
      %1259 = vrot.lane.b32.xlu0 %v959, 32
      %v1260 = vpop.permute.xlu0 %1259
      %1261 = vrot.lane.b32.xlu0 %v971, 32
      %v1262 = vpop.permute.xlu0 %1261
      %1263 = vrot.lane.b32.xlu0 %v983, 32
      %v1264 = vpop.permute.xlu0 %1263
      %1265 = vrot.lane.b32.xlu0 %v995, 32
      %v1266 = vpop.permute.xlu0 %1265
      %1267 = vrot.lane.b32.xlu0 %v1007, 32
      %v1268 = vpop.permute.xlu0 %1267
      %1269 = vrot.lane.b32.xlu0 %v1019, 32
      %v1270 = vpop.permute.xlu0 %1269
      %1271 = vrot.lane.b32.xlu0 %v1031, 32
      %v1272 = vpop.permute.xlu0 %1271
      %1273 = vrot.lane.b32.xlu0 %v1124, 32
      %v1274 = vpop.permute.xlu0 %1273
      %1275 = vrot.lane.b32.xlu0 %v1070, 40
      %v1276 = vpop.permute.xlu0 %1275
      %1277 = vrot.lane.b32.xlu0 %v1073, 40
      %v1278 = vpop.permute.xlu0 %1277
      %1279 = vrot.lane.b32.xlu0 %v1076, 40
      %v1280 = vpop.permute.xlu0 %1279
      %1281 = vrot.lane.b32.xlu0 %v1079, 40
      %v1282 = vpop.permute.xlu0 %1281
      %1283 = vrot.lane.b32.xlu0 %v1082, 40
      %v1284 = vpop.permute.xlu0 %1283
      %1285 = vrot.lane.b32.xlu0 %v1085, 40
      %v1286 = vpop.permute.xlu0 %1285
      %1287 = vrot.lane.b32.xlu0 %v1088, 40
      %v1288 = vpop.permute.xlu0 %1287
      %1289 = vrot.lane.b32.xlu0 %v1091, 40
      %v1290 = vpop.permute.xlu0 %1289
      %1291 = vrot.lane.b32.xlu0 %v1094, 40
      %v1292 = vpop.permute.xlu0 %1291
      %1293 = vrot.lane.b32.xlu0 %v1097, 40
      %v1294 = vpop.permute.xlu0 %1293
      %1295 = vrot.lane.b32.xlu0 %v1100, 40
      %v1296 = vpop.permute.xlu0 %1295
      %1297 = vrot.lane.b32.xlu0 %v1103, 40
      %v1298 = vpop.permute.xlu0 %1297
      %1299 = vrot.lane.b32.xlu0 %v1106, 40
      %v1300 = vpop.permute.xlu0 %1299
      %1301 = vrot.lane.b32.xlu0 %v1109, 40
      %v1302 = vpop.permute.xlu0 %1301
      %1303 = vrot.lane.b32.xlu0 %v1112, 40
      %v1304 = vpop.permute.xlu0 %1303
      %1305 = vrot.lane.b32.xlu0 %v1129, 40
      %v1306 = vpop.permute.xlu0 %1305
      %1307 = vrot.lane.b32.xlu0 %v807, 48
      %v1308 = vpop.permute.xlu0 %1307
      %1309 = vrot.lane.b32.xlu0 %v809, 48
      %v1310 = vpop.permute.xlu0 %1309
      %1311 = vrot.lane.b32.xlu0 %v811, 48
      %v1312 = vpop.permute.xlu0 %1311
      %1313 = vrot.lane.b32.xlu0 %v813, 48
      %v1314 = vpop.permute.xlu0 %1313
      %1315 = vrot.lane.b32.xlu0 %v815, 48
      %v1316 = vpop.permute.xlu0 %1315
      %1317 = vrot.lane.b32.xlu0 %v817, 48
      %v1318 = vpop.permute.xlu0 %1317
      %1319 = vrot.lane.b32.xlu0 %v819, 48
      %v1320 = vpop.permute.xlu0 %1319
      %1321 = vrot.lane.b32.xlu0 %v821, 48
      %v1322 = vpop.permute.xlu0 %1321
      %1323 = vrot.lane.b32.xlu0 %v823, 48
      %v1324 = vpop.permute.xlu0 %1323
      %1325 = vrot.lane.b32.xlu0 %v825, 48
      %v1326 = vpop.permute.xlu0 %1325
      %1327 = vrot.lane.b32.xlu0 %v827, 48
      %v1328 = vpop.permute.xlu0 %1327
      %1329 = vrot.lane.b32.xlu0 %v829, 48
      %v1330 = vpop.permute.xlu0 %1329
      %1331 = vrot.lane.b32.xlu0 %v831, 48
      %v1332 = vpop.permute.xlu0 %1331
      %1333 = vrot.lane.b32.xlu0 %v833, 48
      %v1334 = vpop.permute.xlu0 %1333
      %1335 = vrot.lane.b32.xlu0 %v835, 48
      %v1336 = vpop.permute.xlu0 %1335
      %1337 = vrot.lane.b32.xlu0 %v837, 48
      %v1338 = vpop.permute.xlu0 %1337
      %1339 = vrot.lane.b32.xlu0 %v875, 56
      %v1340 = vpop.permute.xlu0 %1339
      %1341 = vrot.lane.b32.xlu0 %v887, 56
      %v1342 = vpop.permute.xlu0 %1341
      %1343 = vrot.lane.b32.xlu0 %v899, 56
      %v1344 = vpop.permute.xlu0 %1343
      %1345 = vrot.lane.b32.xlu0 %v911, 56
      %v1346 = vpop.permute.xlu0 %1345
      %1347 = vrot.lane.b32.xlu0 %v923, 56
      %v1348 = vpop.permute.xlu0 %1347
      %1349 = vrot.lane.b32.xlu0 %v935, 56
      %v1350 = vpop.permute.xlu0 %1349
      %1351 = vrot.lane.b32.xlu0 %v947, 56
      %v1352 = vpop.permute.xlu0 %1351
      %1353 = vrot.lane.b32.xlu0 %v959, 56
      %v1354 = vpop.permute.xlu0 %1353
      %1355 = vrot.lane.b32.xlu0 %v971, 56
      %v1356 = vpop.permute.xlu0 %1355
      %1357 = vrot.lane.b32.xlu0 %v983, 56
      %v1358 = vpop.permute.xlu0 %1357
      %1359 = vrot.lane.b32.xlu0 %v995, 56
      %v1360 = vpop.permute.xlu0 %1359
      %1361 = vrot.lane.b32.xlu0 %v1007, 56
      %v1362 = vpop.permute.xlu0 %1361
      %1363 = vrot.lane.b32.xlu0 %v1019, 56
      %v1364 = vpop.permute.xlu0 %1363
      %1365 = vrot.lane.b32.xlu0 %v1031, 56
      %v1366 = vpop.permute.xlu0 %1365
      %1367 = vrot.lane.b32.xlu0 %v1124, 56
      %v1368 = vpop.permute.xlu0 %1367
      %1369 = vrot.lane.b32.xlu0 %v1141, 56
      %v1370 = vpop.permute.xlu0 %1369
      %1371 = vrot.lane.b32.xlu0 %v1073, 64
      %v1372 = vpop.permute.xlu0 %1371
      %1373 = vrot.lane.b32.xlu0 %v1076, 64
      %v1374 = vpop.permute.xlu0 %1373
      %1375 = vrot.lane.b32.xlu0 %v1079, 64
      %v1376 = vpop.permute.xlu0 %1375
      %1377 = vrot.lane.b32.xlu0 %v1082, 64
      %v1378 = vpop.permute.xlu0 %1377
      %1379 = vrot.lane.b32.xlu0 %v1085, 64
      %v1380 = vpop.permute.xlu0 %1379
      %1381 = vrot.lane.b32.xlu0 %v1088, 64
      %v1382 = vpop.permute.xlu0 %1381
      %1383 = vrot.lane.b32.xlu0 %v1091, 64
      %v1384 = vpop.permute.xlu0 %1383
      %1385 = vrot.lane.b32.xlu0 %v1094, 64
      %v1386 = vpop.permute.xlu0 %1385
      %1387 = vrot.lane.b32.xlu0 %v1097, 64
      %v1388 = vpop.permute.xlu0 %1387
      %1389 = vrot.lane.b32.xlu0 %v1100, 64
      %v1390 = vpop.permute.xlu0 %1389
      %1391 = vrot.lane.b32.xlu0 %v1103, 64
      %v1392 = vpop.permute.xlu0 %1391
      %1393 = vrot.lane.b32.xlu0 %v1106, 64
      %v1394 = vpop.permute.xlu0 %1393
      %1395 = vrot.lane.b32.xlu0 %v1109, 64
      %v1396 = vpop.permute.xlu0 %1395
      %1397 = vrot.lane.b32.xlu0 %v1112, 64
      %v1398 = vpop.permute.xlu0 %1397
      %1399 = vrot.lane.b32.xlu0 %v1129, 64
      %v1400 = vpop.permute.xlu0 %1399
      %1401 = vrot.lane.b32.xlu0 %v1146, 64
      %v1402 = vpop.permute.xlu0 %1401
      %vm1403 = vcmask 64512
      %v1405 = vsel %vm1403, %v803, %v1148
      %v1407 = vsel %vm1403, %v805, %v1150
      %v1409 = vsel %vm1403, %v807, %v1152
      %v1411 = vsel %vm1403, %v809, %v1154
      %v1413 = vsel %vm1403, %v811, %v1156
      %v1415 = vsel %vm1403, %v813, %v1158
      %v1417 = vsel %vm1403, %v815, %v1160
      %v1419 = vsel %vm1403, %v817, %v1162
      %v1421 = vsel %vm1403, %v819, %v1164
      %v1423 = vsel %vm1403, %v821, %v1166
      %v1425 = vsel %vm1403, %v823, %v1168
      %v1427 = vsel %vm1403, %v825, %v1170
      %v1429 = vsel %vm1403, %v827, %v1172
      %v1431 = vsel %vm1403, %v829, %v1174
      %v1433 = vsel %vm1403, %v831, %v1176
      %v1435 = vsel %vm1403, %v833, %v1178
      %vm1436 = vcmask 130048
      %v1438 = vsel %vm1436, %v1405, %v1180
      %v1440 = vsel %vm1436, %v1407, %v1182
      %v1442 = vsel %vm1436, %v1409, %v1184
      %v1444 = vsel %vm1436, %v1411, %v1186
      %v1446 = vsel %vm1436, %v1413, %v1188
      %v1448 = vsel %vm1436, %v1415, %v1190
      %v1450 = vsel %vm1436, %v1417, %v1192
      %v1452 = vsel %vm1436, %v1419, %v1194
      %v1454 = vsel %vm1436, %v1421, %v1196
      %v1456 = vsel %vm1436, %v1423, %v1198
      %v1458 = vsel %vm1436, %v1425, %v1200
      %v1460 = vsel %vm1436, %v1427, %v1202
      %v1462 = vsel %vm1436, %v1429, %v1204
      %v1464 = vsel %vm1436, %v1431, %v1206
      %v1466 = vsel %vm1436, %v1433, %v1208
      %v1468 = vsel %vm1436, %v1435, %v1210
      %vm1469 = vcmask 195584
      %v1471 = vsel %vm1469, %v1438, %v1212
      %v1473 = vsel %vm1469, %v1440, %v1214
      %v1475 = vsel %vm1469, %v1442, %v1216
      %v1477 = vsel %vm1469, %v1444, %v1218
      %v1479 = vsel %vm1469, %v1446, %v1220
      %v1481 = vsel %vm1469, %v1448, %v1222
      %v1483 = vsel %vm1469, %v1450, %v1224
      %v1485 = vsel %vm1469, %v1452, %v1226
      %v1487 = vsel %vm1469, %v1454, %v1228
      %v1489 = vsel %vm1469, %v1456, %v1230
      %v1491 = vsel %vm1469, %v1458, %v1232
      %v1493 = vsel %vm1469, %v1460, %v1234
      %v1495 = vsel %vm1469, %v1462, %v1236
      %v1497 = vsel %vm1469, %v1464, %v1238
      %v1499 = vsel %vm1469, %v1466, %v1240
      %v1501 = vsel %vm1469, %v1468, %v1242
      %vm1502 = vcmask 261120
      %v1504 = vsel %vm1502, %v1471, %v1244
      %v1506 = vsel %vm1502, %v1473, %v1246
      %v1508 = vsel %vm1502, %v1475, %v1248
      %v1510 = vsel %vm1502, %v1477, %v1250
      %v1512 = vsel %vm1502, %v1479, %v1252
      %v1514 = vsel %vm1502, %v1481, %v1254
      %v1516 = vsel %vm1502, %v1483, %v1256
      %v1518 = vsel %vm1502, %v1485, %v1258
      %v1520 = vsel %vm1502, %v1487, %v1260
      %v1522 = vsel %vm1502, %v1489, %v1262
      %v1524 = vsel %vm1502, %v1491, %v1264
      %v1526 = vsel %vm1502, %v1493, %v1266
      %v1528 = vsel %vm1502, %v1495, %v1268
      %v1530 = vsel %vm1502, %v1497, %v1270
      %v1532 = vsel %vm1502, %v1499, %v1272
      %v1534 = vsel %vm1502, %v1501, %v1274
      %vm1535 = vcmask 326656
      %v1537 = vsel %vm1535, %v1504, %v1276
      %v1539 = vsel %vm1535, %v1506, %v1278
      %v1541 = vsel %vm1535, %v1508, %v1280
      %v1543 = vsel %vm1535, %v1510, %v1282
      %v1545 = vsel %vm1535, %v1512, %v1284
      %v1547 = vsel %vm1535, %v1514, %v1286
      %v1549 = vsel %vm1535, %v1516, %v1288
      %v1551 = vsel %vm1535, %v1518, %v1290
      %v1553 = vsel %vm1535, %v1520, %v1292
      %v1555 = vsel %vm1535, %v1522, %v1294
      %v1557 = vsel %vm1535, %v1524, %v1296
      %v1559 = vsel %vm1535, %v1526, %v1298
      %v1561 = vsel %vm1535, %v1528, %v1300
      %v1563 = vsel %vm1535, %v1530, %v1302
      %v1565 = vsel %vm1535, %v1532, %v1304
      %v1567 = vsel %vm1535, %v1534, %v1306
      %vm1568 = vcmask 392192
      %v1570 = vsel %vm1568, %v1537, %v1308
      %v1572 = vsel %vm1568, %v1539, %v1310
      %v1574 = vsel %vm1568, %v1541, %v1312
      %v1576 = vsel %vm1568, %v1543, %v1314
      %v1578 = vsel %vm1568, %v1545, %v1316
      %v1580 = vsel %vm1568, %v1547, %v1318
      %v1582 = vsel %vm1568, %v1549, %v1320
      %v1584 = vsel %vm1568, %v1551, %v1322
      %v1586 = vsel %vm1568, %v1553, %v1324
      %v1588 = vsel %vm1568, %v1555, %v1326
      %v1590 = vsel %vm1568, %v1557, %v1328
      %v1592 = vsel %vm1568, %v1559, %v1330
      %v1594 = vsel %vm1568, %v1561, %v1332
      %v1596 = vsel %vm1568, %v1563, %v1334
      %v1598 = vsel %vm1568, %v1565, %v1336
      %v1600 = vsel %vm1568, %v1567, %v1338
      %vm1601 = vcmask 457728
      %v1603 = vsel %vm1601, %v1570, %v1340
      %v1605 = vsel %vm1601, %v1572, %v1342
      %v1607 = vsel %vm1601, %v1574, %v1344
      %v1609 = vsel %vm1601, %v1576, %v1346
      %v1611 = vsel %vm1601, %v1578, %v1348
      %v1613 = vsel %vm1601, %v1580, %v1350
      %v1615 = vsel %vm1601, %v1582, %v1352
      %v1617 = vsel %vm1601, %v1584, %v1354
      %v1619 = vsel %vm1601, %v1586, %v1356
      %v1621 = vsel %vm1601, %v1588, %v1358
      %v1623 = vsel %vm1601, %v1590, %v1360
      %v1625 = vsel %vm1601, %v1592, %v1362
      %v1627 = vsel %vm1601, %v1594, %v1364
      %v1629 = vsel %vm1601, %v1596, %v1366
      %v1631 = vsel %vm1601, %v1598, %v1368
      %v1633 = vsel %vm1601, %v1600, %v1370
      %vm1634 = vcmask 523264
      %v1636 = vsel %vm1634, %v1603, %v1372
      %v1638 = vsel %vm1634, %v1605, %v1374
      %v1640 = vsel %vm1634, %v1607, %v1376
      %v1642 = vsel %vm1634, %v1609, %v1378
      %v1644 = vsel %vm1634, %v1611, %v1380
      %v1646 = vsel %vm1634, %v1613, %v1382
      %v1648 = vsel %vm1634, %v1615, %v1384
      %v1650 = vsel %vm1634, %v1617, %v1386
      %v1652 = vsel %vm1634, %v1619, %v1388
      %v1654 = vsel %vm1634, %v1621, %v1390
      %v1656 = vsel %vm1634, %v1623, %v1392
      %v1658 = vsel %vm1634, %v1625, %v1394
      %v1660 = vsel %vm1634, %v1627, %v1396
      %v1662 = vsel %vm1634, %v1629, %v1398
      %v1664 = vsel %vm1634, %v1631, %v1400
      %v1666 = vsel %vm1634, %v1633, %v1402
      %v1667 = vld [vmem:[%s301] sm:$0xf]
      %v1668 = vld [vmem:[%s301 + $0x4] sm:$0xf]
      %v1669 = vld [vmem:[%s301 + $0x8] sm:$0xf]
      %v1670 = vld [vmem:[%s301 + $0xc] sm:$0xf]
      %v1671 = vld [vmem:[%s301 + $0x10] sm:$0xf]
      %v1672 = vld [vmem:[%s301 + $0x14] sm:$0xf]
      %v1673 = vld [vmem:[%s301 + $0x18] sm:$0xf]
      %v1674 = vld [vmem:[%s301 + $0x1c] sm:$0xf]
      %v1675 = vld [vmem:[%s301 + $0x20] sm:$0xf]
      %v1685 = vunpack.c.l.b16 %v1667
      %v1686 = vunpack.c.l.b16 %v1668
      %v1687 = vunpack.c.l.b16 %v1669
      %v1688 = vunpack.c.l.b16 %v1670
      %v1689 = vunpack.c.l.b16 %v1671
      %v1690 = vunpack.c.l.b16 %v1672
      %v1691 = vunpack.c.l.b16 %v1673
      %v1692 = vunpack.c.l.b16 %v1674
      %v1693 = vunpack.c.l.b16 %v1675
      %v1694 = vpack.c.b16 %v1686, %v1685
      %v1695 = vpack.c.b16 %v1688, %v1687
      %v1696 = vpack.c.b16 %v1690, %v1689
      %v1697 = vpack.c.b16 %v1692, %v1691
      %v1698 = vpack.c.b16 %v1693, %v1693
      %vm1703 = vcmask 588800
      %v1704 = vsel %vm1703, %v1636, 0
      %v1706 = vsel %vm1703, %v1638, 0
      %v1708 = vsel %vm1703, %v1640, 0
      %v1710 = vsel %vm1703, %v1642, 0
      %v1712 = vsel %vm1703, %v1644, 0
      %v1714 = vsel %vm1703, %v1646, 0
      %v1716 = vsel %vm1703, %v1648, 0
      %v1718 = vsel %vm1703, %v1650, 0
      %v1720 = vsel %vm1703, %v1652, 0
      %v1722 = vsel %vm1703, %v1654, 0
      %v1724 = vsel %vm1703, %v1656, 0
      %v1726 = vsel %vm1703, %v1658, 0
      %v1728 = vsel %vm1703, %v1660, 0
      %v1730 = vsel %vm1703, %v1662, 0
      %v1732 = vsel %vm1703, %v1664, 0
      %v1734 = vsel %vm1703, %v1666, 0
      %vm1736 = vcmask 1043456
      %v1738 = vsel %vm1736, %v1698, 0
      %1740 = vmatprep.subr.bf16.mxu0 0
      %1741 = vmatpush1.bf16.msra.mxu0 0
      %1742 = vmatprep.subr.bf16.mxu0 0
      %1743 = vmatpush1.bf16.msra.mxu0 0
      %1744 = vmatprep.subr.bf16.mxu0 0
      %1745 = vmatpush1.bf16.msra.mxu0 0
      %1746 = vmatprep.subr.bf16.mxu0 0
      %1747 = vmatpush1.bf16.msra.mxu0 %v1738
      %1748 = vmatprep.subr.bf16.mxu0 0
      %1749 = vmatpush1.bf16.msra.mxu0 %v1697
      %1750 = vmatprep.subr.bf16.mxu0 0
      %1751 = vmatpush1.bf16.msra.mxu0 %v1696
      %1752 = vmatprep.subr.bf16.mxu0 0
      %1753 = vmatpush1.bf16.msra.mxu0 %v1695
      %1754 = vmatprep.subr.bf16.mxu0 0
      %1755 = vmatpush1.bf16.msra.mxu0 %v1694
      %1756 = vmatprep.subr.bf16.mxu0 0
      %1757 = vmatpush2.bf16.msra.mxu0 0
      %1758 = vmatprep.subr.bf16.mxu0 0
      %1759 = vmatpush2.bf16.msra.mxu0 0
      %1760 = vmatprep.subr.bf16.mxu0 0
      %1761 = vmatpush2.bf16.msra.mxu0 0
      %1762 = vmatprep.subr.bf16.mxu0 0
      %1763 = vmatpush2.bf16.msra.mxu0 0
      %1764 = vmatprep.subr.bf16.mxu0 0
      %1765 = vmatpush2.bf16.msra.mxu0 0
      %1766 = vmatprep.subr.bf16.mxu0 0
      %1767 = vmatpush2.bf16.msra.mxu0 0
      %1768 = vmatprep.subr.bf16.mxu0 0
      %1769 = vmatpush2.bf16.msra.mxu0 0
      %1770 = vmatprep.subr.bf16.mxu0 0
      %1771 = vmatpush2.bf16.msra.mxu0 0
      %1772 = vmatprep.mubr.bf16.mxu0 0
      %1773 = vmatmul.mubr.bf16.gmra.mxu0 %v1704
      %v1774 = vpop.f32.mrf.mxu0
      %v1775 = vadd.f32 0.0, %v1774
      %v1776 = vpop.f32.mrf.mxu0
      %v1777 = vpop.f32.mrf.mxu0
      %v1778 = vadd.f32 0.0, %v1777
      %v1779 = vpop.f32.mrf.mxu0
      %1780 = vmatprep.mubr.bf16.mxu0 0
      %1781 = vmatmul.mubr.bf16.gmra.mxu0 %v1706
      %v1782 = vpop.f32.mrf.mxu0
      %v1783 = vadd.f32 0.0, %v1782
      %v1784 = vpop.f32.mrf.mxu0
      %v1785 = vpop.f32.mrf.mxu0
      %v1786 = vadd.f32 0.0, %v1785
      %v1787 = vpop.f32.mrf.mxu0
      %1788 = vmatprep.mubr.bf16.mxu0 0
      %1789 = vmatmul.mubr.bf16.gmra.mxu0 %v1708
      %v1790 = vpop.f32.mrf.mxu0
      %v1791 = vadd.f32 0.0, %v1790
      %v1792 = vpop.f32.mrf.mxu0
      %v1793 = vpop.f32.mrf.mxu0
      %v1794 = vadd.f32 0.0, %v1793
      %v1795 = vpop.f32.mrf.mxu0
      %1796 = vmatprep.mubr.bf16.mxu0 0
      %1797 = vmatmul.mubr.bf16.gmra.mxu0 %v1710
      %v1798 = vpop.f32.mrf.mxu0
      %v1799 = vadd.f32 0.0, %v1798
      %v1800 = vpop.f32.mrf.mxu0
      %v1801 = vpop.f32.mrf.mxu0
      %v1802 = vadd.f32 0.0, %v1801
      %v1803 = vpop.f32.mrf.mxu0
      %1804 = vmatprep.mubr.bf16.mxu0 0
      %1805 = vmatmul.mubr.bf16.gmra.mxu0 %v1712
      %v1806 = vpop.f32.mrf.mxu0
      %v1807 = vadd.f32 0.0, %v1806
      %v1808 = vpop.f32.mrf.mxu0
      %v1809 = vpop.f32.mrf.mxu0
      %v1810 = vadd.f32 0.0, %v1809
      %v1811 = vpop.f32.mrf.mxu0
      %1812 = vmatprep.mubr.bf16.mxu0 0
      %1813 = vmatmul.mubr.bf16.gmra.mxu0 %v1714
      %v1814 = vpop.f32.mrf.mxu0
      %v1815 = vadd.f32 0.0, %v1814
      %v1816 = vpop.f32.mrf.mxu0
      %v1817 = vpop.f32.mrf.mxu0
      %v1818 = vadd.f32 0.0, %v1817
      %v1819 = vpop.f32.mrf.mxu0
      %1820 = vmatprep.mubr.bf16.mxu0 0
      %1821 = vmatmul.mubr.bf16.gmra.mxu0 %v1716
      %v1822 = vpop.f32.mrf.mxu0
      %v1823 = vadd.f32 0.0, %v1822
      %v1824 = vpop.f32.mrf.mxu0
      %v1825 = vpop.f32.mrf.mxu0
      %v1826 = vadd.f32 0.0, %v1825
      %v1827 = vpop.f32.mrf.mxu0
      %1828 = vmatprep.mubr.bf16.mxu0 0
      %1829 = vmatmul.mubr.bf16.gmra.mxu0 %v1718
      %v1830 = vpop.f32.mrf.mxu0
      %v1831 = vadd.f32 0.0, %v1830
      %v1832 = vpop.f32.mrf.mxu0
      %v1833 = vpop.f32.mrf.mxu0
      %v1834 = vadd.f32 0.0, %v1833
      %v1835 = vpop.f32.mrf.mxu0
      %1836 = vmatprep.mubr.bf16.mxu0 0
      %1837 = vmatmul.mubr.bf16.gmra.mxu0 %v1720
      %v1838 = vpop.f32.mrf.mxu0
      %v1839 = vadd.f32 0.0, %v1838
      %v1840 = vpop.f32.mrf.mxu0
      %v1841 = vpop.f32.mrf.mxu0
      %v1842 = vadd.f32 0.0, %v1841
      %v1843 = vpop.f32.mrf.mxu0
      %1844 = vmatprep.mubr.bf16.mxu0 0
      %1845 = vmatmul.mubr.bf16.gmra.mxu0 %v1722
      %v1846 = vpop.f32.mrf.mxu0
      %v1847 = vadd.f32 0.0, %v1846
      %v1848 = vpop.f32.mrf.mxu0
      %v1849 = vpop.f32.mrf.mxu0
      %v1850 = vadd.f32 0.0, %v1849
      %v1851 = vpop.f32.mrf.mxu0
      %1852 = vmatprep.mubr.bf16.mxu0 0
      %1853 = vmatmul.mubr.bf16.gmra.mxu0 %v1724
      %v1854 = vpop.f32.mrf.mxu0
      %v1855 = vadd.f32 0.0, %v1854
      %v1856 = vpop.f32.mrf.mxu0
      %v1857 = vpop.f32.mrf.mxu0
      %v1858 = vadd.f32 0.0, %v1857
      %v1859 = vpop.f32.mrf.mxu0
      %1860 = vmatprep.mubr.bf16.mxu0 0
      %1861 = vmatmul.mubr.bf16.gmra.mxu0 %v1726
      %v1862 = vpop.f32.mrf.mxu0
      %v1863 = vadd.f32 0.0, %v1862
      %v1864 = vpop.f32.mrf.mxu0
      %v1865 = vpop.f32.mrf.mxu0
      %v1866 = vadd.f32 0.0, %v1865
      %v1867 = vpop.f32.mrf.mxu0
      %1868 = vmatprep.mubr.bf16.mxu0 0
      %1869 = vmatmul.mubr.bf16.gmra.mxu0 %v1728
      %v1870 = vpop.f32.mrf.mxu0
      %v1871 = vadd.f32 0.0, %v1870
      %v1872 = vpop.f32.mrf.mxu0
      %v1873 = vpop.f32.mrf.mxu0
      %v1874 = vadd.f32 0.0, %v1873
      %v1875 = vpop.f32.mrf.mxu0
      %1876 = vmatprep.mubr.bf16.mxu0 0
      %1877 = vmatmul.mubr.bf16.gmra.mxu0 %v1730
      %v1878 = vpop.f32.mrf.mxu0
      %v1879 = vadd.f32 0.0, %v1878
      %v1880 = vpop.f32.mrf.mxu0
      %v1881 = vpop.f32.mrf.mxu0
      %v1882 = vadd.f32 0.0, %v1881
      %v1883 = vpop.f32.mrf.mxu0
      %1884 = vmatprep.mubr.bf16.mxu0 0
      %1885 = vmatmul.mubr.bf16.gmra.mxu0 %v1732
      %v1886 = vpop.f32.mrf.mxu0
      %v1887 = vadd.f32 0.0, %v1886
      %v1888 = vpop.f32.mrf.mxu0
      %v1889 = vpop.f32.mrf.mxu0
      %v1890 = vadd.f32 0.0, %v1889
      %v1891 = vpop.f32.mrf.mxu0
      %1892 = vmatprep.mubr.bf16.mxu0 0
      %1893 = vmatmul.mubr.bf16.gmra.mxu0 %v1734
      %v1894 = vpop.f32.mrf.mxu0
      %v1895 = vadd.f32 0.0, %v1894
      %v1896 = vpop.f32.mrf.mxu0
      %v1897 = vpop.f32.mrf.mxu0
      %v1898 = vadd.f32 0.0, %v1897
      %v1899 = vpop.f32.mrf.mxu0
      %1900 = vdwg.mxu0
      %v1901 = vpack.c.bf16 %v1778, %v1775
      %v1902 = vpack.c.bf16 %v1786, %v1783
      %v1903 = vpack.c.bf16 %v1794, %v1791
      %v1904 = vpack.c.bf16 %v1802, %v1799
      %v1905 = vpack.c.bf16 %v1810, %v1807
      %v1906 = vpack.c.bf16 %v1818, %v1815
      %v1907 = vpack.c.bf16 %v1826, %v1823
      %v1908 = vpack.c.bf16 %v1834, %v1831
      %v1909 = vpack.c.bf16 %v1842, %v1839
      %v1910 = vpack.c.bf16 %v1850, %v1847
      %v1911 = vpack.c.bf16 %v1858, %v1855
      %v1912 = vpack.c.bf16 %v1866, %v1863
      %v1913 = vpack.c.bf16 %v1874, %v1871
      %v1914 = vpack.c.bf16 %v1882, %v1879
      %v1915 = vpack.c.bf16 %v1890, %v1887
      %v1916 = vpack.c.bf16 %v1898, %v1895
      %v1917 = vunpack.c.l.bf16 %v1901
      %v1918 = vunpack.c.h.bf16 %v1901
      %v1919 = vunpack.c.l.bf16 %v1902
      %v1920 = vunpack.c.h.bf16 %v1902
      %v1921 = vunpack.c.l.bf16 %v1903
      %v1922 = vunpack.c.h.bf16 %v1903
      %v1923 = vunpack.c.l.bf16 %v1904
      %v1924 = vunpack.c.h.bf16 %v1904
      %v1925 = vunpack.c.l.bf16 %v1905
      %v1926 = vunpack.c.h.bf16 %v1905
      %v1927 = vunpack.c.l.bf16 %v1906
      %v1928 = vunpack.c.h.bf16 %v1906
      %v1929 = vunpack.c.l.bf16 %v1907
      %v1930 = vunpack.c.h.bf16 %v1907
      %v1931 = vunpack.c.l.bf16 %v1908
      %v1932 = vunpack.c.h.bf16 %v1908
      %v1933 = vunpack.c.l.bf16 %v1909
      %v1934 = vunpack.c.h.bf16 %v1909
      %v1935 = vunpack.c.l.bf16 %v1910
      %v1936 = vunpack.c.h.bf16 %v1910
      %v1937 = vunpack.c.l.bf16 %v1911
      %v1938 = vunpack.c.h.bf16 %v1911
      %v1939 = vunpack.c.l.bf16 %v1912
      %v1940 = vunpack.c.h.bf16 %v1912
      %v1941 = vunpack.c.l.bf16 %v1913
      %v1942 = vunpack.c.h.bf16 %v1913
      %v1943 = vunpack.c.l.bf16 %v1914
      %v1944 = vunpack.c.h.bf16 %v1914
      %v1945 = vunpack.c.l.bf16 %v1915
      %v1946 = vunpack.c.h.bf16 %v1915
      %v1947 = vunpack.c.l.bf16 %v1916
      %v1948 = vunpack.c.h.bf16 %v1916
      %v1965 = vunpack.c.l.b16 %v1901
      %v1966 = vunpack.c.h.b16 %v1901
      %v1967 = vunpack.c.l.b16 %v1902
      %v1968 = vunpack.c.h.b16 %v1902
      %v1969 = vunpack.c.l.b16 %v1903
      %v1970 = vunpack.c.h.b16 %v1903
      %v1971 = vunpack.c.l.b16 %v1904
      %v1972 = vunpack.c.h.b16 %v1904
      %v1973 = vunpack.c.l.b16 %v1905
      %v1974 = vunpack.c.h.b16 %v1905
      %v1975 = vunpack.c.l.b16 %v1906
      %v1976 = vunpack.c.h.b16 %v1906
      %v1977 = vunpack.c.l.b16 %v1907
      %v1978 = vunpack.c.h.b16 %v1907
      %v1979 = vunpack.c.l.b16 %v1908
      %v1980 = vunpack.c.h.b16 %v1908
      %v1981 = vunpack.c.l.b16 %v1909
      %v1982 = vunpack.c.h.b16 %v1909
      %v1983 = vunpack.c.l.b16 %v1910
      %v1984 = vunpack.c.h.b16 %v1910
      %v1985 = vunpack.c.l.b16 %v1911
      %v1986 = vunpack.c.h.b16 %v1911
      %v1987 = vunpack.c.l.b16 %v1912
      %v1988 = vunpack.c.h.b16 %v1912
      %v1989 = vunpack.c.l.b16 %v1913
      %v1990 = vunpack.c.h.b16 %v1913
      %v1991 = vunpack.c.l.b16 %v1914
      %v1992 = vunpack.c.h.b16 %v1914
      %v1993 = vunpack.c.l.b16 %v1915
      %v1994 = vunpack.c.h.b16 %v1915
      %v1995 = vunpack.c.l.b16 %v1916
      %v1996 = vunpack.c.h.b16 %v1916
      %v1997 = vpack.c.b16 %v1965, %v1965
      %v1998 = vpack.c.b16 %v1966, %v1966
      %v1999 = vpack.c.b16 %v1967, %v1967
      %v2000 = vpack.c.b16 %v1968, %v1968
      %v2001 = vpack.c.b16 %v1969, %v1969
      %v2002 = vpack.c.b16 %v1970, %v1970
      %v2003 = vpack.c.b16 %v1971, %v1971
      %v2004 = vpack.c.b16 %v1972, %v1972
      %v2005 = vpack.c.b16 %v1973, %v1973
      %v2006 = vpack.c.b16 %v1974, %v1974
      %v2007 = vpack.c.b16 %v1975, %v1975
      %v2008 = vpack.c.b16 %v1976, %v1976
      %v2009 = vpack.c.b16 %v1977, %v1977
      %v2010 = vpack.c.b16 %v1978, %v1978
      %v2011 = vpack.c.b16 %v1979, %v1979
      %v2012 = vpack.c.b16 %v1980, %v1980
      %v2013 = vpack.c.b16 %v1981, %v1981
      %v2014 = vpack.c.b16 %v1982, %v1982
      %v2015 = vpack.c.b16 %v1983, %v1983
      %v2016 = vpack.c.b16 %v1984, %v1984
      %v2017 = vpack.c.b16 %v1985, %v1985
      %v2018 = vpack.c.b16 %v1986, %v1986
      %v2019 = vpack.c.b16 %v1987, %v1987
      %v2020 = vpack.c.b16 %v1988, %v1988
      %v2021 = vpack.c.b16 %v1989, %v1989
      %v2022 = vpack.c.b16 %v1990, %v1990
      %v2023 = vpack.c.b16 %v1991, %v1991
      %v2024 = vpack.c.b16 %v1992, %v1992
      %v2025 = vpack.c.b16 %v1993, %v1993
      %v2026 = vpack.c.b16 %v1994, %v1994
      %v2027 = vpack.c.b16 %v1995, %v1995
      %v2028 = vpack.c.b16 %v1996, %v1996
      %2061 = vst [vmem:[%s309] sm:$0xf] %v1997
      %2062 = vst [vmem:[%s309 + $0x4] sm:$0xf] %v1998
      %2063 = vst [vmem:[%s309 + $0x8] sm:$0xf] %v1999
      %2064 = vst [vmem:[%s309 + $0xc] sm:$0xf] %v2000
      %2065 = vst [vmem:[%s309 + $0x10] sm:$0xf] %v2001
      %2066 = vst [vmem:[%s309 + $0x14] sm:$0xf] %v2002
      %2067 = vst [vmem:[%s309 + $0x18] sm:$0xf] %v2003
      %2068 = vst [vmem:[%s309 + $0x1c] sm:$0xf] %v2004
      %2069 = vst [vmem:[%s309 + $0x20] sm:$0xf] %v2005
      %2070 = vst [vmem:[%s309 + $0x24] sm:$0xf] %v2006
      %2071 = vst [vmem:[%s309 + $0x28] sm:$0xf] %v2007
      %2072 = vst [vmem:[%s309 + $0x2c] sm:$0xf] %v2008
      %2073 = vst [vmem:[%s309 + $0x30] sm:$0xf] %v2009
      %2074 = vst [vmem:[%s309 + $0x34] sm:$0xf] %v2010
      %2075 = vst [vmem:[%s309 + $0x38] sm:$0xf] %v2011
      %2076 = vst [vmem:[%s309 + $0x3c] sm:$0xf] %v2012
      %2077 = vst [vmem:[%s309 + $0x40] sm:$0xf] %v2013
      %2078 = vst [vmem:[%s309 + $0x44] sm:$0xf] %v2014
      %2079 = vst [vmem:[%s309 + $0x48] sm:$0xf] %v2015
      %2080 = vst [vmem:[%s309 + $0x4c] sm:$0xf] %v2016
      %2081 = vst [vmem:[%s309 + $0x50] sm:$0xf] %v2017
      %2082 = vst [vmem:[%s309 + $0x54] sm:$0xf] %v2018
      %2083 = vst [vmem:[%s309 + $0x58] sm:$0xf] %v2019
      %2084 = vst [vmem:[%s309 + $0x5c] sm:$0xf] %v2020
      %2085 = vst [vmem:[%s309 + $0x60] sm:$0xf] %v2021
      %2086 = vst [vmem:[%s309 + $0x64] sm:$0xf] %v2022
      %2087 = vst [vmem:[%s309 + $0x68] sm:$0xf] %v2023
      %2088 = vst [vmem:[%s309 + $0x6c] sm:$0xf] %v2024
      %2089 = vst [vmem:[%s309 + $0x70] sm:$0xf] %v2025
      %2090 = vst [vmem:[%s309 + $0x74] sm:$0xf] %v2026
      %2091 = vst [vmem:[%s309 + $0x78] sm:$0xf] %v2027
      %2092 = vst [vmem:[%s309 + $0x7c] sm:$0xf] %v2028
      %v2093 = vadd.f32 %v1917, %v1918
      %v2094 = vadd.f32 %v2093, %v1919
      %v2095 = vadd.f32 %v2094, %v1920
      %v2096 = vadd.f32 %v2095, %v1921
      %v2097 = vadd.f32 %v2096, %v1922
      %v2098 = vadd.f32 %v2097, %v1923
      %v2099 = vadd.f32 %v2098, %v1924
      %v2100 = vadd.f32 %v2099, %v1925
      %v2101 = vadd.f32 %v2100, %v1926
      %v2102 = vadd.f32 %v2101, %v1927
      %v2103 = vadd.f32 %v2102, %v1928
      %v2104 = vadd.f32 %v2103, %v1929
      %v2105 = vadd.f32 %v2104, %v1930
      %v2106 = vadd.f32 %v2105, %v1931
      %v2107 = vadd.f32 %v2106, %v1932
      %v2108 = vadd.f32 %v2107, %v1933
      %v2109 = vadd.f32 %v2108, %v1934
      %v2110 = vadd.f32 %v2109, %v1935
      %v2111 = vadd.f32 %v2110, %v1936
      %v2112 = vadd.f32 %v2111, %v1937
      %v2113 = vadd.f32 %v2112, %v1938
      %v2114 = vadd.f32 %v2113, %v1939
      %v2115 = vadd.f32 %v2114, %v1940
      %v2116 = vadd.f32 %v2115, %v1941
      %v2117 = vadd.f32 %v2116, %v1942
      %v2118 = vadd.f32 %v2117, %v1943
      %v2119 = vadd.f32 %v2118, %v1944
      %v2120 = vadd.f32 %v2119, %v1945
      %v2121 = vadd.f32 %v2120, %v1946
      %v2122 = vadd.f32 %v2121, %v1947
      %v2123 = vadd.f32 %v2122, %v1948
      %v2124 = vrot.slane %v2123, 4
      %v2125 = vadd.f32 %v2123, %v2124
      %v2126 = vrot.slane %v2125, 2
      %v2127 = vadd.f32 %v2125, %v2126
      %v2128 = vrot.slane %v2127, 1
      %v2129 = vadd.f32 %v2127, %v2128
      %2130 = vst [vmem:[%s315] sm:$0x1] %v2129
      %v2131 = vmul.f32 %v1917, %v1917
      %v2132 = vmul.f32 %v1918, %v1918
      %v2133 = vmul.f32 %v1919, %v1919
      %v2134 = vmul.f32 %v1920, %v1920
      %v2135 = vmul.f32 %v1921, %v1921
      %v2136 = vmul.f32 %v1922, %v1922
      %v2137 = vmul.f32 %v1923, %v1923
      %v2138 = vmul.f32 %v1924, %v1924
      %v2139 = vmul.f32 %v1925, %v1925
      %v2140 = vmul.f32 %v1926, %v1926
      %v2141 = vmul.f32 %v1927, %v1927
      %v2142 = vmul.f32 %v1928, %v1928
      %v2143 = vmul.f32 %v1929, %v1929
      %v2144 = vmul.f32 %v1930, %v1930
      %v2145 = vmul.f32 %v1931, %v1931
      %v2146 = vmul.f32 %v1932, %v1932
      %v2147 = vmul.f32 %v1933, %v1933
      %v2148 = vmul.f32 %v1934, %v1934
      %v2149 = vmul.f32 %v1935, %v1935
      %v2150 = vmul.f32 %v1936, %v1936
      %v2151 = vmul.f32 %v1937, %v1937
      %v2152 = vmul.f32 %v1938, %v1938
      %v2153 = vmul.f32 %v1939, %v1939
      %v2154 = vmul.f32 %v1940, %v1940
      %v2155 = vmul.f32 %v1941, %v1941
      %v2156 = vmul.f32 %v1942, %v1942
      %v2157 = vmul.f32 %v1943, %v1943
      %v2158 = vmul.f32 %v1944, %v1944
      %v2159 = vmul.f32 %v1945, %v1945
      %v2160 = vmul.f32 %v1946, %v1946
      %v2161 = vmul.f32 %v1947, %v1947
      %v2162 = vmul.f32 %v1948, %v1948
      %v2163 = vadd.f32 %v2131, %v2132
      %v2164 = vadd.f32 %v2163, %v2133
      %v2165 = vadd.f32 %v2164, %v2134
      %v2166 = vadd.f32 %v2165, %v2135
      %v2167 = vadd.f32 %v2166, %v2136
      %v2168 = vadd.f32 %v2167, %v2137
      %v2169 = vadd.f32 %v2168, %v2138
      %v2170 = vadd.f32 %v2169, %v2139
      %v2171 = vadd.f32 %v2170, %v2140
      %v2172 = vadd.f32 %v2171, %v2141
      %v2173 = vadd.f32 %v2172, %v2142
      %v2174 = vadd.f32 %v2173, %v2143
      %v2175 = vadd.f32 %v2174, %v2144
      %v2176 = vadd.f32 %v2175, %v2145
      %v2177 = vadd.f32 %v2176, %v2146
      %v2178 = vadd.f32 %v2177, %v2147
      %v2179 = vadd.f32 %v2178, %v2148
      %v2180 = vadd.f32 %v2179, %v2149
      %v2181 = vadd.f32 %v2180, %v2150
      %v2182 = vadd.f32 %v2181, %v2151
      %v2183 = vadd.f32 %v2182, %v2152
      %v2184 = vadd.f32 %v2183, %v2153
      %v2185 = vadd.f32 %v2184, %v2154
      %v2186 = vadd.f32 %v2185, %v2155
      %v2187 = vadd.f32 %v2186, %v2156
      %v2188 = vadd.f32 %v2187, %v2157
      %v2189 = vadd.f32 %v2188, %v2158
      %v2190 = vadd.f32 %v2189, %v2159
      %v2191 = vadd.f32 %v2190, %v2160
      %v2192 = vadd.f32 %v2191, %v2161
      %v2193 = vadd.f32 %v2192, %v2162
      %v2194 = vrot.slane %v2193, 4
      %v2195 = vadd.f32 %v2193, %v2194
      %v2196 = vrot.slane %v2195, 2
      %v2197 = vadd.f32 %v2195, %v2196
      %v2198 = vrot.slane %v2197, 1
      %v2199 = vadd.f32 %v2197, %v2198
      %2200 = vst [vmem:[%s321] sm:$0x1] %v2199
      %p2201 = scmp.lt.s32.totalorder %s22, 1
      %s2202 = scalar_select %p2201, %s22, 1
      %p2203 = scmp.lt.s32.totalorder %s23, 0
      %s2204 = scalar_select %p2203, %s23, 0
      %s2205 = smul.addr %s2202, 32
      %s2206 = sadd.s32 %s2204, %s2205
      %s2207 = smul.addr %s2206, 4
      %s2208 = scalar_lea.vmem %s4, %s2207
      %p2209 = scmp.lt.s32.totalorder %s22, 1
      %s2210 = scalar_select %p2209, %s22, 1
      %p2211 = scmp.lt.s32.totalorder %s23, 0
      %s2212 = scalar_select %p2211, %s23, 0
      %s2213 = sadd.s32 %s2212, %s2210
      %s2214 = scalar_lea.vmem %s5, %s2213
      %p2215 = scmp.lt.s32.totalorder %s22, 1
      %s2216 = scalar_select %p2215, %s22, 1
      %p2217 = scmp.lt.s32.totalorder %s23, 0
      %s2218 = scalar_select %p2217, %s23, 0
      %s2219 = sadd.s32 %s2218, %s2216
      %s2220 = scalar_lea.vmem %s6, %s2219
      // Predicated region
      $region37: #{generator_forward.8} parent=35 // pred_check
        %p2221 = pneg %p144
      $region38: #{generator_forward.8} parent=35 // pred_check_branch
        %2223 = sbr.rel (%p2221) target = $region40
      $region39: #{generator_forward.8} parent=35 // pred_region
        _
      $region40: #{generator_forward.8} parent=35 // pred_fallthru
        _
      // Predicated region
      $region41: #{generator_forward.8} parent=35 // pred_check
        %p2224 = pneg %p172
      $region42: #{generator_forward.8} parent=35 // pred_check_branch
        %2226 = sbr.rel (%p2224) target = $region44
      $region43: #{generator_forward.8} parent=35 // pred_region
        _
      $region44: #{generator_forward.8} parent=35 // pred_fallthru
        _
      // Predicated region
      $region45: #{generator_forward.8} parent=35 // pred_check
        %p2227 = pneg %p200
      $region46: #{generator_forward.8} parent=35 // pred_check_branch
        %2229 = sbr.rel (%p2227) target = $region48
      $region47: #{generator_forward.8} parent=35 // pred_region
        _
      $region48: #{generator_forward.8} parent=35 // pred_fallthru
        _
    $region36: #{generator_forward.8} parent=5 // pred_fallthru
      _
    %p2230 = scmp.le.s32.totalorder 2, %s13
    // Predicated region
    $region49: #{generator_forward.8} parent=5 // pred_check
      %p2231 = pneg %p2230
    $region50: #{generator_forward.8} parent=5 // pred_check_branch
      %2233 = sbr.rel (%p2231) target = $region52
    $region51: #{generator_forward.8} parent=5 // pred_region
      %s2234 = ssub.s32 %s13, 2
      // Predicated region
      $region53: #{generator_forward.8} parent=51 // pred_check
        %p2235 = pneg %p150
      $region54: #{generator_forward.8} parent=51 // pred_check_branch
        %2237 = sbr.rel (%p2235) target = $region56
      $region55: #{generator_forward.8} parent=51 // pred_region
        %p2238 = scmp.lt.s32.totalorder %s24, 1
        %s2239 = scalar_select %p2238, %s24, 1
        %p2240 = scmp.lt.s32.totalorder %s25, 0
        %s2241 = scalar_select %p2240, %s25, 0
        %s2242 = smul.addr %s2239, 32
        %s2243 = sadd.s32 %s2241, %s2242
        %s2244 = smul.addr %s2243, 4
        %s2245 = scalar_lea.vmem %s4, %s2244
      $region56: #{generator_forward.8} parent=51 // pred_fallthru
        _
      // Predicated region
      $region57: #{generator_forward.8} parent=51 // pred_check
        %p2246 = pneg %p178
      $region58: #{generator_forward.8} parent=51 // pred_check_branch
        %2248 = sbr.rel (%p2246) target = $region60
      $region59: #{generator_forward.8} parent=51 // pred_region
        %p2249 = scmp.lt.s32.totalorder %s24, 1
        %s2250 = scalar_select %p2249, %s24, 1
        %p2251 = scmp.lt.s32.totalorder %s25, 0
        %s2252 = scalar_select %p2251, %s25, 0
        %s2253 = sadd.s32 %s2252, %s2250
        %s2254 = scalar_lea.vmem %s5, %s2253
      $region60: #{generator_forward.8} parent=51 // pred_fallthru
        _
      // Predicated region
      $region61: #{generator_forward.8} parent=51 // pred_check
        %p2255 = pneg %p206
      $region62: #{generator_forward.8} parent=51 // pred_check_branch
        %2257 = sbr.rel (%p2255) target = $region64
      $region63: #{generator_forward.8} parent=51 // pred_region
        %p2258 = scmp.lt.s32.totalorder %s24, 1
        %s2259 = scalar_select %p2258, %s24, 1
        %p2260 = scmp.lt.s32.totalorder %s25, 0
        %s2261 = scalar_select %p2260, %s25, 0
        %s2262 = sadd.s32 %s2261, %s2259
        %s2263 = scalar_lea.vmem %s6, %s2262
      $region64: #{generator_forward.8} parent=51 // pred_fallthru
        _
    $region52: #{generator_forward.8} parent=5 // pred_fallthru
      _
  $region6: #{generator_forward.8} parent=0 // loop_footer
    %s17 = sadd.s32 1, %s13
  $region7: #{generator_forward.8} parent=0 // loop_footer_branch
    %12 = sbr.rel target = $region3
  $region8: #{generator_forward.8} parent=0 // loop_exit
    _

// kernel: generator_forward.9
$region0: #{generator_forward.9}
  #allocation0 [shape = 'u32[]', space=smem, size = 0x4, offset = 0x4, fixed_abs, tag = 'smem constant byte address 0x4 - core index']
  #allocation1 [shape = 'u32[144,128]{1,0:T(1,128)}', space=vmem, size = 0x12000, scoped, tag = 'internal scratch']
  %s0 = inlined_call_operand.vmem [shape: bf16[2,34,34,4], index: 0, kind: input, shape index: {}]
  %s1 = inlined_call_operand.vmem [shape: bf16[36,128], index: 1, kind: input, shape index: {}]
  %s2 = inlined_call_operand.vmem [shape: f32[1,4], index: 2, kind: input, shape index: {}]
  %s3 = inlined_call_operand.vmem [shape: f32[1,4], index: 3, kind: input, shape index: {}]
  %s4 = inlined_call_operand.vmem [shape: f32[2,1024,128], index: 4, kind: output, shape index: {}]
  %s5 = sld [smem:[#allocation0]]
  $region49: #{generator_forward.9} parent=0
    _
  %s7 = ssub.s32 1, %s5
  %s8 = scalar_select 0, %s7, %s5
  loop: start=0, step=1, limit=4
  $region2: #{generator_forward.9} parent=0 // loop_pre_header
    _
  $region3: #{generator_forward.9} parent=0 // loop_header
    %s10 = sphi 0, %s14
    %p11 = scmp.ge.s32.totalorder %s10, 4
    %s17 = sphi 0, %s29
    %s18 = sphi 0, %s25
    %s19 = sphi 0, %s17
    %s20 = sphi 0, %s18
    %s21 = sphi 0, %s19
    %s22 = sphi 0, %s20
    %s32 = sphi 0, %s34
    %s35 = sphi 0, %s32
    %s36 = sphi 0, %s35
    %s52 = sphi 0, %s36
    %s58 = sphi 0, %s60
    %s61 = sphi 0, %s58
    %s62 = sphi 0, %s61
    %s78 = sphi 0, %s62
    %s82 = sphi 0, %s82
    %s84 = sphi 0, %s82
    %s85 = sphi 0, %s84
    %s99 = sphi 0, %s85
    %s103 = sphi 0, %s103
    %s105 = sphi 0, %s103
    %s106 = sphi 0, %s105
    %s120 = sphi 0, %s106
    %s128 = sphi 0, %s130
    %s131 = sphi 0, %s128
    %s132 = sphi 0, %s131
    %s148 = sphi 0, %s132
  $region4: #{generator_forward.9} parent=0 // loop_header_branch
    %13 = sbr.rel (%p11) target = $region8
  $region5: #{generator_forward.9} parent=0 // loop_body
    %s15 = ssub.s32 %s10, 1
    %s16 = ssub.s32 %s10, 2
    %s23 = sadd.s32 1, %s18
    %p24 = scmp.ge.s32.totalorder %s23, 1
    %s25 = scalar_select %p24, 0, %s23
    %s26 = sadd.s32 1, %s17
    %s27 = scalar_select %p24, %s26, %s17
    %p28 = scmp.ge.s32.totalorder %s27, 2
    %s29 = scalar_select %p28, 0, %s27
    %s30 = ssub.s32 %s17, %s29
    %p31 = scmp.eq.s32.totalorder %s30, 0
    %s33 = sadd.s32 %s32, 1
    %s34 = scalar_select %p31, %s32, %s33
    %p37 = pneg %p31
    %p38 = scmp.eq.s32.totalorder %s10, 1
    %p39 = por %p37, %p38
    %p40 = scmp.ne.s32.totalorder %s32, %s35
    %p41 = scmp.eq.s32.totalorder %s10, 0
    %p42 = por %p40, %p41
    %p43 = scmp.ne.s32.totalorder %s32, %s35
    %p44 = scmp.eq.s32.totalorder %s15, 1
    %p45 = por %p43, %p44
    %p46 = scmp.ne.s32.totalorder %s35, %s36
    %p47 = scmp.eq.s32.totalorder %s15, 0
    %p48 = por %p46, %p47
    %p49 = scmp.ne.s32.totalorder %s35, %s36
    %p50 = scmp.eq.s32.totalorder %s16, 1
    %p51 = por %p49, %p50
    %p53 = scmp.ne.s32.totalorder %s36, %s52
    %p54 = scmp.eq.s32.totalorder %s16, 0
    %p55 = por %p53, %p54
    %s56 = ssub.s32 %s18, %s25
    %p57 = scmp.eq.s32.totalorder %s56, 0
    %s59 = sadd.s32 %s58, 1
    %s60 = scalar_select %p57, %s58, %s59
    %p63 = pneg %p57
    %p64 = scmp.eq.s32.totalorder %s10, 1
    %p65 = por %p63, %p64
    %p66 = scmp.ne.s32.totalorder %s58, %s61
    %p67 = scmp.eq.s32.totalorder %s10, 0
    %p68 = por %p66, %p67
    %p69 = scmp.ne.s32.totalorder %s58, %s61
    %p70 = scmp.eq.s32.totalorder %s15, 1
    %p71 = por %p69, %p70
    %p72 = scmp.ne.s32.totalorder %s61, %s62
    %p73 = scmp.eq.s32.totalorder %s15, 0
    %p74 = por %p72, %p73
    %p75 = scmp.ne.s32.totalorder %s61, %s62
    %p76 = scmp.eq.s32.totalorder %s16, 1
    %p77 = por %p75, %p76
    %p79 = scmp.ne.s32.totalorder %s62, %s78
    %p80 = scmp.eq.s32.totalorder %s16, 0
    %p81 = por %p79, %p80
    %s83 = sadd.s32 %s82, 1
    %p86 = scmp.eq.s32.totalorder %s10, 1
    %p87 = scmp.ne.s32.totalorder %s82, %s84
    %p88 = scmp.eq.s32.totalorder %s10, 0
    %p89 = por %p87, %p88
    %p90 = scmp.ne.s32.totalorder %s82, %s84
    %p91 = scmp.eq.s32.totalorder %s15, 1
    %p92 = por %p90, %p91
    %p93 = scmp.ne.s32.totalorder %s84, %s85
    %p94 = scmp.eq.s32.totalorder %s15, 0
    %p95 = por %p93, %p94
    %p96 = scmp.ne.s32.totalorder %s84, %s85
    %p97 = scmp.eq.s32.totalorder %s16, 1
    %p98 = por %p96, %p97
    %p100 = scmp.ne.s32.totalorder %s85, %s99
    %p101 = scmp.eq.s32.totalorder %s16, 0
    %p102 = por %p100, %p101
    %s104 = sadd.s32 %s103, 1
    %p107 = scmp.eq.s32.totalorder %s10, 1
    %p108 = scmp.ne.s32.totalorder %s103, %s105
    %p109 = scmp.eq.s32.totalorder %s10, 0
    %p110 = por %p108, %p109
    %p111 = scmp.ne.s32.totalorder %s103, %s105
    %p112 = scmp.eq.s32.totalorder %s15, 1
    %p113 = por %p111, %p112
    %p114 = scmp.ne.s32.totalorder %s105, %s106
    %p115 = scmp.eq.s32.totalorder %s15, 0
    %p116 = por %p114, %p115
    %p117 = scmp.ne.s32.totalorder %s105, %s106
    %p118 = scmp.eq.s32.totalorder %s16, 1
    %p119 = por %p117, %p118
    %p121 = scmp.ne.s32.totalorder %s106, %s120
    %p122 = scmp.eq.s32.totalorder %s16, 0
    %p123 = por %p121, %p122
    %s124 = ssub.s32 %s17, %s29
    %s125 = ssub.s32 %s18, %s25
    %s126 = sor.u32 %s124, %s125
    %p127 = scmp.eq.s32.totalorder %s126, 0
    %s129 = sadd.s32 %s128, 1
    %s130 = scalar_select %p127, %s128, %s129
    %p133 = pneg %p127
    %p134 = scmp.eq.s32.totalorder %s10, 1
    %p135 = por %p133, %p134
    %p136 = scmp.ne.s32.totalorder %s128, %s131
    %p137 = scmp.eq.s32.totalorder %s10, 0
    %p138 = por %p136, %p137
    %p139 = scmp.ne.s32.totalorder %s128, %s131
    %p140 = scmp.eq.s32.totalorder %s15, 1
    %p141 = por %p139, %p140
    %p142 = scmp.ne.s32.totalorder %s131, %s132
    %p143 = scmp.eq.s32.totalorder %s15, 0
    %p144 = por %p142, %p143
    %p145 = scmp.ne.s32.totalorder %s131, %s132
    %p146 = scmp.eq.s32.totalorder %s16, 1
    %p147 = por %p145, %p146
    %p149 = scmp.ne.s32.totalorder %s132, %s148
    %p150 = scmp.eq.s32.totalorder %s16, 0
    %p151 = por %p149, %p150
    %p152 = scmp.le.s32.totalorder 1, %s10
    %p153 = scmp.lt.s32.totalorder %s10, 3
    %p154 = pnand %p152, %p153
    %p155 = pneg %p154
    // Predicated region
    $region9: #{generator_forward.9} parent=5 // pred_check
      _
    $region10: #{generator_forward.9} parent=5 // pred_check_branch
      %157 = sbr.rel (%p154) target = $region12
    $region11: #{generator_forward.9} parent=5 // pred_region
      %s158 = ssub.s32 %s10, 1
      // Predicated region
      $region13: #{generator_forward.9} parent=11 // pred_check
        %p159 = pneg %p74
      $region14: #{generator_forward.9} parent=11 // pred_check_branch
        %161 = sbr.rel (%p159) target = $region16
      $region15: #{generator_forward.9} parent=11 // pred_region
        %p162 = scmp.lt.s32.totalorder %s20, 0
        %s163 = scalar_select %p162, %s20, 0
        %s164 = smul.addr %s163, 4
        %s165 = scalar_lea.vmem %s1, %s164
      $region16: #{generator_forward.9} parent=11 // pred_fallthru
        _
      // Predicated region
      $region17: #{generator_forward.9} parent=11 // pred_check
        %p166 = pneg %p95
      $region18: #{generator_forward.9} parent=11 // pred_check_branch
        %168 = sbr.rel (%p166) target = $region20
      $region19: #{generator_forward.9} parent=11 // pred_region
        _
      $region20: #{generator_forward.9} parent=11 // pred_fallthru
        _
      // Predicated region
      $region21: #{generator_forward.9} parent=11 // pred_check
        %p169 = pneg %p116
      $region22: #{generator_forward.9} parent=11 // pred_check_branch
        %171 = sbr.rel (%p169) target = $region24
      $region23: #{generator_forward.9} parent=11 // pred_region
        _
      $region24: #{generator_forward.9} parent=11 // pred_fallthru
        _
    $region12: #{generator_forward.9} parent=5 // pred_fallthru
      _
    %p172 = scmp.lt.s32.totalorder %s10, 2
    // Predicated region
    $region25: #{generator_forward.9} parent=5 // pred_check
      %p173 = pneg %p172
    $region26: #{generator_forward.9} parent=5 // pred_check_branch
      %175 = sbr.rel (%p173) target = $region28
    $region27: #{generator_forward.9} parent=5 // pred_region
      // Predicated region
      $region29: #{generator_forward.9} parent=27 // pred_check
        %p176 = pneg %p42
      $region30: #{generator_forward.9} parent=27 // pred_check_branch
        %178 = sbr.rel (%p176) target = $region32
      $region31: #{generator_forward.9} parent=27 // pred_region
        %p179 = scmp.lt.s32.totalorder %s17, 1
        %s180 = scalar_select %p179, %s17, 1
        %s181 = smul.addr %s180, 170
        %s182 = smul.addr %s181, 4
        %s183 = scalar_lea.vmem %s0, %s182
      $region32: #{generator_forward.9} parent=27 // pred_fallthru
        _
    $region28: #{generator_forward.9} parent=5 // pred_fallthru
      _
    %p184 = scmp.le.s32.totalorder 1, %s10
    %p185 = scmp.lt.s32.totalorder %s10, 3
    %p186 = pnand %p184, %p185
    %p187 = pneg %p186
    // Predicated region
    $region33: #{generator_forward.9} parent=5 // pred_check
      _
    $region34: #{generator_forward.9} parent=5 // pred_check_branch
      %189 = sbr.rel (%p186) target = $region36
    $region35: #{generator_forward.9} parent=5 // pred_region
      %s190 = ssub.s32 %s10, 1
      %p191 = scmp.lt.s32.totalorder %s19, 1
      %s192 = scalar_select %p191, %s19, 1
      %s193 = smul.addr %s192, 170
      %s194 = smul.addr %s193, 4
      %s195 = scalar_lea.vmem %s0, %s194
      %p196 = pneg %p48
      %p197 = pneg %p45
      %p198 = scmp.lt.s32.totalorder %s20, 0
      %s199 = scalar_select %p198, %s20, 0
      %s200 = smul.addr %s199, 4
      %s201 = scalar_lea.vmem %s1, %s200
      %p202 = pneg %p74
      %p203 = pneg %p71
      %p204 = pneg %p95
      %p205 = pneg %p92
      %p206 = pneg %p116
      %p207 = pneg %p113
      %p208 = pneg %p144
      %p209 = pneg %p141
      %p210 = scmp.lt.s32.totalorder %s19, 1
      %s211 = scalar_select %p210, %s19, 1
      %p212 = scmp.lt.s32.totalorder %s20, 0
      %s213 = scalar_select %p212, %s20, 0
      %s214 = smul.addr %s211, 128
      %s215 = sadd.s32 %s213, %s214
      %s216 = smul.addr %s215, 8
      %s217 = scalar_lea.vmem %s4, %s216
      %p218 = scmp.lt.s32.totalorder %s19, 1
      %s219 = scalar_select %p218, %s19, 1
      %s220 = smul.addr %s219, 170
      %s221 = smul.addr %s220, 4
      %s222 = scalar_lea.vmem %s0, %s221
      %p223 = scmp.lt.s32.totalorder %s20, 0
      %s224 = scalar_select %p223, %s20, 0
      %s225 = smul.addr %s224, 4
      %s226 = scalar_lea.vmem %s1, %s225
      %p227 = scmp.lt.s32.totalorder %s19, 1
      %s228 = scalar_select %p227, %s19, 1
      %p229 = scmp.lt.s32.totalorder %s20, 0
      %s230 = scalar_select %p229, %s20, 0
      %s231 = smul.addr %s228, 128
      %s232 = sadd.s32 %s230, %s231
      %s233 = smul.addr %s232, 8
      %s234 = scalar_lea.vmem %s4, %s233
      %v236 = vld [vmem:[%s222] sm:$0xf]
      %v237 = vld [vmem:[%s222 + $0x4] sm:$0xf]
      %v238 = vld [vmem:[%s222 + $0x8] sm:$0xf]
      %v239 = vld [vmem:[%s222 + $0xc] sm:$0xf]
      %v240 = vld [vmem:[%s222 + $0x10] sm:$0x1]
      %v241 = vld [vmem:[%s222 + $0x14] sm:$0xf]
      %v242 = vld [vmem:[%s222 + $0x18] sm:$0xf]
      %v243 = vld [vmem:[%s222 + $0x1c] sm:$0xf]
      %v244 = vld [vmem:[%s222 + $0x20] sm:$0xf]
      %v245 = vld [vmem:[%s222 + $0x24] sm:$0x1]
      %v246 = vld [vmem:[%s222 + $0x28] sm:$0xf]
      %v247 = vld [vmem:[%s222 + $0x2c] sm:$0xf]
      %v248 = vld [vmem:[%s222 + $0x30] sm:$0xf]
      %v249 = vld [vmem:[%s222 + $0x34] sm:$0xf]
      %v250 = vld [vmem:[%s222 + $0x38] sm:$0x1]
      %v251 = vld [vmem:[%s222 + $0x3c] sm:$0xf]
      %v252 = vld [vmem:[%s222 + $0x40] sm:$0xf]
      %v253 = vld [vmem:[%s222 + $0x44] sm:$0xf]
      %v254 = vld [vmem:[%s222 + $0x48] sm:$0xf]
      %v255 = vld [vmem:[%s222 + $0x4c] sm:$0x1]
      %v256 = vld [vmem:[%s222 + $0x50] sm:$0xf]
      %v257 = vld [vmem:[%s222 + $0x54] sm:$0xf]
      %v258 = vld [vmem:[%s222 + $0x58] sm:$0xf]
      %v259 = vld [vmem:[%s222 + $0x5c] sm:$0xf]
      %v260 = vld [vmem:[%s222 + $0x60] sm:$0x1]
      %v261 = vld [vmem:[%s222 + $0x64] sm:$0xf]
      %v262 = vld [vmem:[%s222 + $0x68] sm:$0xf]
      %v263 = vld [vmem:[%s222 + $0x6c] sm:$0xf]
      %v264 = vld [vmem:[%s222 + $0x70] sm:$0xf]
      %v265 = vld [vmem:[%s222 + $0x74] sm:$0x1]
      %v266 = vld [vmem:[%s222 + $0x78] sm:$0xf]
      %v267 = vld [vmem:[%s222 + $0x7c] sm:$0xf]
      %v268 = vld [vmem:[%s222 + $0x80] sm:$0xf]
      %v269 = vld [vmem:[%s222 + $0x84] sm:$0xf]
      %v270 = vld [vmem:[%s222 + $0x88] sm:$0x1]
      %v271 = vld [vmem:[%s222 + $0x8c] sm:$0xf]
      %v272 = vld [vmem:[%s222 + $0x90] sm:$0xf]
      %v273 = vld [vmem:[%s222 + $0x94] sm:$0xf]
      %v274 = vld [vmem:[%s222 + $0x98] sm:$0xf]
      %v275 = vld [vmem:[%s222 + $0x9c] sm:$0x1]
      %v276 = vld [vmem:[%s222 + $0xa0] sm:$0xf]
      %v277 = vld [vmem:[%s222 + $0xa4] sm:$0xf]
      %v278 = vld [vmem:[%s222 + $0xa8] sm:$0xf]
      %v279 = vld [vmem:[%s222 + $0xac] sm:$0xf]
      %v280 = vld [vmem:[%s222 + $0xb0] sm:$0x1]
      %v281 = vld [vmem:[%s222 + $0xb4] sm:$0xf]
      %v282 = vld [vmem:[%s222 + $0xb8] sm:$0xf]
      %v283 = vld [vmem:[%s222 + $0xbc] sm:$0xf]
      %v284 = vld [vmem:[%s222 + $0xc0] sm:$0xf]
      %v285 = vld [vmem:[%s222 + $0xc4] sm:$0x1]
      %v286 = vld [vmem:[%s222 + $0xc8] sm:$0xf]
      %v287 = vld [vmem:[%s222 + $0xcc] sm:$0xf]
      %v288 = vld [vmem:[%s222 + $0xd0] sm:$0xf]
      %v289 = vld [vmem:[%s222 + $0xd4] sm:$0xf]
      %v290 = vld [vmem:[%s222 + $0xd8] sm:$0x1]
      %v291 = vld [vmem:[%s222 + $0xdc] sm:$0xf]
      %v292 = vld [vmem:[%s222 + $0xe0] sm:$0xf]
      %v293 = vld [vmem:[%s222 + $0xe4] sm:$0xf]
      %v294 = vld [vmem:[%s222 + $0xe8] sm:$0xf]
      %v295 = vld [vmem:[%s222 + $0xec] sm:$0x1]
      %v296 = vld [vmem:[%s222 + $0xf0] sm:$0xf]
      %v297 = vld [vmem:[%s222 + $0xf4] sm:$0xf]
      %v298 = vld [vmem:[%s222 + $0xf8] sm:$0xf]
      %v299 = vld [vmem:[%s222 + $0xfc] sm:$0xf]
      %v300 = vld [vmem:[%s222 + $0x100] sm:$0x1]
      %v301 = vld [vmem:[%s222 + $0x104] sm:$0xf]
      %v302 = vld [vmem:[%s222 + $0x108] sm:$0xf]
      %v303 = vld [vmem:[%s222 + $0x10c] sm:$0xf]
      %v304 = vld [vmem:[%s222 + $0x110] sm:$0xf]
      %v305 = vld [vmem:[%s222 + $0x114] sm:$0x1]
      %v306 = vld [vmem:[%s222 + $0x118] sm:$0xf]
      %v307 = vld [vmem:[%s222 + $0x11c] sm:$0xf]
      %v308 = vld [vmem:[%s222 + $0x120] sm:$0xf]
      %v309 = vld [vmem:[%s222 + $0x124] sm:$0xf]
      %v310 = vld [vmem:[%s222 + $0x128] sm:$0x1]
      %v311 = vld [vmem:[%s222 + $0x12c] sm:$0xf]
      %v312 = vld [vmem:[%s222 + $0x130] sm:$0xf]
      %v313 = vld [vmem:[%s222 + $0x134] sm:$0xf]
      %v314 = vld [vmem:[%s222 + $0x138] sm:$0xf]
      %v315 = vld [vmem:[%s222 + $0x13c] sm:$0x1]
      %v316 = vld [vmem:[%s222 + $0x140] sm:$0xf]
      %v317 = vld [vmem:[%s222 + $0x144] sm:$0xf]
      %v318 = vld [vmem:[%s222 + $0x148] sm:$0xf]
      %v319 = vld [vmem:[%s222 + $0x14c] sm:$0xf]
      %v320 = vld [vmem:[%s222 + $0x150] sm:$0x1]
      %v321 = vld [vmem:[%s222 + $0x154] sm:$0xf]
      %v322 = vld [vmem:[%s222 + $0x158] sm:$0xf]
      %v323 = vld [vmem:[%s222 + $0x15c] sm:$0xf]
      %v324 = vld [vmem:[%s222 + $0x160] sm:$0xf]
      %v325 = vld [vmem:[%s222 + $0x164] sm:$0x1]
      %v326 = vld [vmem:[%s222 + $0x168] sm:$0xf]
      %v327 = vld [vmem:[%s222 + $0x16c] sm:$0xf]
      %v328 = vld [vmem:[%s222 + $0x170] sm:$0xf]
      %v329 = vld [vmem:[%s222 + $0x174] sm:$0xf]
      %v330 = vld [vmem:[%s222 + $0x178] sm:$0x1]
      %v331 = vld [vmem:[%s222 + $0x17c] sm:$0xf]
      %v332 = vld [vmem:[%s222 + $0x180] sm:$0xf]
      %v333 = vld [vmem:[%s222 + $0x184] sm:$0xf]
      %v334 = vld [vmem:[%s222 + $0x188] sm:$0xf]
      %v335 = vld [vmem:[%s222 + $0x18c] sm:$0x1]
      %v336 = vld [vmem:[%s222 + $0x190] sm:$0xf]
      %v337 = vld [vmem:[%s222 + $0x194] sm:$0xf]
      %v338 = vld [vmem:[%s222 + $0x198] sm:$0xf]
      %v339 = vld [vmem:[%s222 + $0x19c] sm:$0xf]
      %v340 = vld [vmem:[%s222 + $0x1a0] sm:$0x1]
      %v341 = vld [vmem:[%s222 + $0x1a4] sm:$0xf]
      %v342 = vld [vmem:[%s222 + $0x1a8] sm:$0xf]
      %v343 = vld [vmem:[%s222 + $0x1ac] sm:$0xf]
      %v344 = vld [vmem:[%s222 + $0x1b0] sm:$0xf]
      %v345 = vld [vmem:[%s222 + $0x1b4] sm:$0x1]
      %v346 = vld [vmem:[%s222 + $0x1b8] sm:$0xf]
      %v347 = vld [vmem:[%s222 + $0x1bc] sm:$0xf]
      %v348 = vld [vmem:[%s222 + $0x1c0] sm:$0xf]
      %v349 = vld [vmem:[%s222 + $0x1c4] sm:$0xf]
      %v350 = vld [vmem:[%s222 + $0x1c8] sm:$0x1]
      %v351 = vld [vmem:[%s222 + $0x1cc] sm:$0xf]
      %v352 = vld [vmem:[%s222 + $0x1d0] sm:$0xf]
      %v353 = vld [vmem:[%s222 + $0x1d4] sm:$0xf]
      %v354 = vld [vmem:[%s222 + $0x1d8] sm:$0xf]
      %v355 = vld [vmem:[%s222 + $0x1dc] sm:$0x1]
      %v356 = vld [vmem:[%s222 + $0x1e0] sm:$0xf]
      %v357 = vld [vmem:[%s222 + $0x1e4] sm:$0xf]
      %v358 = vld [vmem:[%s222 + $0x1e8] sm:$0xf]
      %v359 = vld [vmem:[%s222 + $0x1ec] sm:$0xf]
      %v360 = vld [vmem:[%s222 + $0x1f0] sm:$0x1]
      %v361 = vld [vmem:[%s222 + $0x1f4] sm:$0xf]
      %v362 = vld [vmem:[%s222 + $0x1f8] sm:$0xf]
      %v363 = vld [vmem:[%s222 + $0x1fc] sm:$0xf]
      %v364 = vld [vmem:[%s222 + $0x200] sm:$0xf]
      %v365 = vld [vmem:[%s222 + $0x204] sm:$0x1]
      %v366 = vld [vmem:[%s222 + $0x208] sm:$0xf]
      %v367 = vld [vmem:[%s222 + $0x20c] sm:$0xf]
      %v368 = vld [vmem:[%s222 + $0x210] sm:$0xf]
      %v369 = vld [vmem:[%s222 + $0x214] sm:$0xf]
      %v370 = vld [vmem:[%s222 + $0x218] sm:$0x1]
      %v371 = vld [vmem:[%s222 + $0x21c] sm:$0xf]
      %v372 = vld [vmem:[%s222 + $0x220] sm:$0xf]
      %v373 = vld [vmem:[%s222 + $0x224] sm:$0xf]
      %v374 = vld [vmem:[%s222 + $0x228] sm:$0xf]
      %v375 = vld [vmem:[%s222 + $0x22c] sm:$0x1]
      %v376 = vld [vmem:[%s222 + $0x230] sm:$0xf]
      %v377 = vld [vmem:[%s222 + $0x234] sm:$0xf]
      %v378 = vld [vmem:[%s222 + $0x238] sm:$0xf]
      %v379 = vld [vmem:[%s222 + $0x23c] sm:$0xf]
      %v380 = vld [vmem:[%s222 + $0x240] sm:$0x1]
      %v381 = vld [vmem:[%s222 + $0x244] sm:$0xf]
      %v382 = vld [vmem:[%s222 + $0x248] sm:$0xf]
      %v383 = vld [vmem:[%s222 + $0x24c] sm:$0xf]
      %v384 = vld [vmem:[%s222 + $0x250] sm:$0xf]
      %v385 = vld [vmem:[%s222 + $0x254] sm:$0x1]
      %v386 = vld [vmem:[%s222 + $0x258] sm:$0xf]
      %v387 = vld [vmem:[%s222 + $0x25c] sm:$0xf]
      %v388 = vld [vmem:[%s222 + $0x260] sm:$0xf]
      %v389 = vld [vmem:[%s222 + $0x264] sm:$0xf]
      %v390 = vld [vmem:[%s222 + $0x268] sm:$0x1]
      %v391 = vld [vmem:[%s222 + $0x26c] sm:$0xf]
      %v392 = vld [vmem:[%s222 + $0x270] sm:$0xf]
      %v393 = vld [vmem:[%s222 + $0x274] sm:$0xf]
      %v394 = vld [vmem:[%s222 + $0x278] sm:$0xf]
      %v395 = vld [vmem:[%s222 + $0x27c] sm:$0x1]
      %v396 = vld [vmem:[%s222 + $0x280] sm:$0xf]
      %v397 = vld [vmem:[%s222 + $0x284] sm:$0xf]
      %v398 = vld [vmem:[%s222 + $0x288] sm:$0xf]
      %v399 = vld [vmem:[%s222 + $0x28c] sm:$0xf]
      %v400 = vld [vmem:[%s222 + $0x290] sm:$0x1]
      %v401 = vld [vmem:[%s222 + $0x294] sm:$0xf]
      %v402 = vld [vmem:[%s222 + $0x298] sm:$0xf]
      %v403 = vld [vmem:[%s222 + $0x29c] sm:$0xf]
      %v404 = vld [vmem:[%s222 + $0x2a0] sm:$0xf]
      %v405 = vld [vmem:[%s222 + $0x2a4] sm:$0x1]
      %v406 = vunpack.c.l.bf16 %v236
      %v407 = vunpack.c.l.bf16 %v237
      %v408 = vunpack.c.l.bf16 %v238
      %v409 = vunpack.c.l.bf16 %v239
      %v410 = vunpack.c.l.bf16 %v240
      %v411 = vunpack.c.l.bf16 %v241
      %v412 = vunpack.c.l.bf16 %v242
      %v413 = vunpack.c.l.bf16 %v243
      %v414 = vunpack.c.l.bf16 %v244
      %v415 = vunpack.c.l.bf16 %v245
      %v416 = vunpack.c.l.bf16 %v246
      %v417 = vunpack.c.l.bf16 %v247
      %v418 = vunpack.c.l.bf16 %v248
      %v419 = vunpack.c.l.bf16 %v249
      %v420 = vunpack.c.l.bf16 %v250
      %v421 = vunpack.c.l.bf16 %v251
      %v422 = vunpack.c.l.bf16 %v252
      %v423 = vunpack.c.l.bf16 %v253
      %v424 = vunpack.c.l.bf16 %v254
      %v425 = vunpack.c.l.bf16 %v255
      %v426 = vunpack.c.l.bf16 %v256
      %v427 = vunpack.c.l.bf16 %v257
      %v428 = vunpack.c.l.bf16 %v258
      %v429 = vunpack.c.l.bf16 %v259
      %v430 = vunpack.c.l.bf16 %v260
      %v431 = vunpack.c.l.bf16 %v261
      %v432 = vunpack.c.l.bf16 %v262
      %v433 = vunpack.c.l.bf16 %v263
      %v434 = vunpack.c.l.bf16 %v264
      %v435 = vunpack.c.l.bf16 %v265
      %v436 = vunpack.c.l.bf16 %v266
      %v437 = vunpack.c.l.bf16 %v267
      %v438 = vunpack.c.l.bf16 %v268
      %v439 = vunpack.c.l.bf16 %v269
      %v440 = vunpack.c.l.bf16 %v270
      %v441 = vunpack.c.l.bf16 %v271
      %v442 = vunpack.c.l.bf16 %v272
      %v443 = vunpack.c.l.bf16 %v273
      %v444 = vunpack.c.l.bf16 %v274
      %v445 = vunpack.c.l.bf16 %v275
      %v446 = vunpack.c.l.bf16 %v276
      %v447 = vunpack.c.l.bf16 %v277
      %v448 = vunpack.c.l.bf16 %v278
      %v449 = vunpack.c.l.bf16 %v279
      %v450 = vunpack.c.l.bf16 %v280
      %v451 = vunpack.c.l.bf16 %v281
      %v452 = vunpack.c.l.bf16 %v282
      %v453 = vunpack.c.l.bf16 %v283
      %v454 = vunpack.c.l.bf16 %v284
      %v455 = vunpack.c.l.bf16 %v285
      %v456 = vunpack.c.l.bf16 %v286
      %v457 = vunpack.c.l.bf16 %v287
      %v458 = vunpack.c.l.bf16 %v288
      %v459 = vunpack.c.l.bf16 %v289
      %v460 = vunpack.c.l.bf16 %v290
      %v461 = vunpack.c.l.bf16 %v291
      %v462 = vunpack.c.l.bf16 %v292
      %v463 = vunpack.c.l.bf16 %v293
      %v464 = vunpack.c.l.bf16 %v294
      %v465 = vunpack.c.l.bf16 %v295
      %v466 = vunpack.c.l.bf16 %v296
      %v467 = vunpack.c.l.bf16 %v297
      %v468 = vunpack.c.l.bf16 %v298
      %v469 = vunpack.c.l.bf16 %v299
      %v470 = vunpack.c.l.bf16 %v300
      %v471 = vunpack.c.l.bf16 %v301
      %v472 = vunpack.c.l.bf16 %v302
      %v473 = vunpack.c.l.bf16 %v303
      %v474 = vunpack.c.l.bf16 %v304
      %v475 = vunpack.c.l.bf16 %v305
      %v476 = vunpack.c.l.bf16 %v306
      %v477 = vunpack.c.l.bf16 %v307
      %v478 = vunpack.c.l.bf16 %v308
      %v479 = vunpack.c.l.bf16 %v309
      %v480 = vunpack.c.l.bf16 %v310
      %v481 = vunpack.c.l.bf16 %v311
      %v482 = vunpack.c.l.bf16 %v312
      %v483 = vunpack.c.l.bf16 %v313
      %v484 = vunpack.c.l.bf16 %v314
      %v485 = vunpack.c.l.bf16 %v315
      %v486 = vunpack.c.l.bf16 %v316
      %v487 = vunpack.c.l.bf16 %v317
      %v488 = vunpack.c.l.bf16 %v318
      %v489 = vunpack.c.l.bf16 %v319
      %v490 = vunpack.c.l.bf16 %v320
      %v491 = vunpack.c.l.bf16 %v321
      %v492 = vunpack.c.l.bf16 %v322
      %v493 = vunpack.c.l.bf16 %v323
      %v494 = vunpack.c.l.bf16 %v324
      %v495 = vunpack.c.l.bf16 %v325
      %v496 = vunpack.c.l.bf16 %v326
      %v497 = vunpack.c.l.bf16 %v327
      %v498 = vunpack.c.l.bf16 %v328
      %v499 = vunpack.c.l.bf16 %v329
      %v500 = vunpack.c.l.bf16 %v330
      %v501 = vunpack.c.l.bf16 %v331
      %v502 = vunpack.c.l.bf16 %v332
      %v503 = vunpack.c.l.bf16 %v333
      %v504 = vunpack.c.l.bf16 %v334
      %v505 = vunpack.c.l.bf16 %v335
      %v506 = vunpack.c.l.bf16 %v336
      %v507 = vunpack.c.l.bf16 %v337
      %v508 = vunpack.c.l.bf16 %v338
      %v509 = vunpack.c.l.bf16 %v339
      %v510 = vunpack.c.l.bf16 %v340
      %v511 = vunpack.c.l.bf16 %v341
      %v512 = vunpack.c.l.bf16 %v342
      %v513 = vunpack.c.l.bf16 %v343
      %v514 = vunpack.c.l.bf16 %v344
      %v515 = vunpack.c.l.bf16 %v345
      %v516 = vunpack.c.l.bf16 %v346
      %v517 = vunpack.c.l.bf16 %v347
      %v518 = vunpack.c.l.bf16 %v348
      %v519 = vunpack.c.l.bf16 %v349
      %v520 = vunpack.c.l.bf16 %v350
      %v521 = vunpack.c.l.bf16 %v351
      %v522 = vunpack.c.l.bf16 %v352
      %v523 = vunpack.c.l.bf16 %v353
      %v524 = vunpack.c.l.bf16 %v354
      %v525 = vunpack.c.l.bf16 %v355
      %v526 = vunpack.c.l.bf16 %v356
      %v527 = vunpack.c.l.bf16 %v357
      %v528 = vunpack.c.l.bf16 %v358
      %v529 = vunpack.c.l.bf16 %v359
      %v530 = vunpack.c.l.bf16 %v360
      %v531 = vunpack.c.l.bf16 %v361
      %v532 = vunpack.c.l.bf16 %v362
      %v533 = vunpack.c.l.bf16 %v363
      %v534 = vunpack.c.l.bf16 %v364
      %v535 = vunpack.c.l.bf16 %v365
      %v536 = vunpack.c.l.bf16 %v366
      %v537 = vunpack.c.l.bf16 %v367
      %v538 = vunpack.c.l.bf16 %v368
      %v539 = vunpack.c.l.bf16 %v369
      %v540 = vunpack.c.l.bf16 %v370
      %v541 = vunpack.c.l.bf16 %v371
      %v542 = vunpack.c.l.bf16 %v372
      %v543 = vunpack.c.l.bf16 %v373
      %v544 = vunpack.c.l.bf16 %v374
      %v545 = vunpack.c.l.bf16 %v375
      %v546 = vunpack.c.l.bf16 %v376
      %v547 = vunpack.c.l.bf16 %v377
      %v548 = vunpack.c.l.bf16 %v378
      %v549 = vunpack.c.l.bf16 %v379
      %v550 = vunpack.c.l.bf16 %v380
      %v551 = vunpack.c.l.bf16 %v381
      %v552 = vunpack.c.l.bf16 %v382
      %v553 = vunpack.c.l.bf16 %v383
      %v554 = vunpack.c.l.bf16 %v384
      %v555 = vunpack.c.l.bf16 %v385
      %v556 = vunpack.c.l.bf16 %v386
      %v557 = vunpack.c.l.bf16 %v387
      %v558 = vunpack.c.l.bf16 %v388
      %v559 = vunpack.c.l.bf16 %v389
      %v560 = vunpack.c.l.bf16 %v390
      %v561 = vunpack.c.l.bf16 %v391
      %v562 = vunpack.c.l.bf16 %v392
      %v563 = vunpack.c.l.bf16 %v393
      %v564 = vunpack.c.l.bf16 %v394
      %v565 = vunpack.c.l.bf16 %v395
      %v566 = vunpack.c.l.bf16 %v396
      %v567 = vunpack.c.l.bf16 %v397
      %v568 = vunpack.c.l.bf16 %v398
      %v569 = vunpack.c.l.bf16 %v399
      %v570 = vunpack.c.l.bf16 %v400
      %v571 = vunpack.c.l.bf16 %v401
      %v572 = vunpack.c.l.bf16 %v402
      %v573 = vunpack.c.l.bf16 %v403
      %v574 = vunpack.c.l.bf16 %v404
      %v575 = vunpack.c.l.bf16 %v405
      %v576 = vld [vmem:[%s2] sm:$0x1]
      %v578 = vlaneseq
      %v579 = vshrl.u32 %v578, 7
      %v580 = vsub.s32 0, %v579
      %v581 = vrot.slane %v576, %v580
      %v583 = vmul.f32 %v406, %v581
      %v584 = vmul.f32 %v407, %v581
      %v585 = vmul.f32 %v408, %v581
      %v586 = vmul.f32 %v409, %v581
      %v587 = vmul.f32 %v410, %v581
      %v588 = vmul.f32 %v411, %v581
      %v589 = vmul.f32 %v412, %v581
      %v590 = vmul.f32 %v413, %v581
      %v591 = vmul.f32 %v414, %v581
      %v592 = vmul.f32 %v415, %v581
      %v593 = vmul.f32 %v416, %v581
      %v594 = vmul.f32 %v417, %v581
      %v595 = vmul.f32 %v418, %v581
      %v596 = vmul.f32 %v419, %v581
      %v597 = vmul.f32 %v420, %v581
      %v598 = vmul.f32 %v421, %v581
      %v599 = vmul.f32 %v422, %v581
      %v600 = vmul.f32 %v423, %v581
      %v601 = vmul.f32 %v424, %v581
      %v602 = vmul.f32 %v425, %v581
      %v603 = vmul.f32 %v426, %v581
      %v604 = vmul.f32 %v427, %v581
      %v605 = vmul.f32 %v428, %v581
      %v606 = vmul.f32 %v429, %v581
      %v607 = vmul.f32 %v430, %v581
      %v608 = vmul.f32 %v431, %v581
      %v609 = vmul.f32 %v432, %v581
      %v610 = vmul.f32 %v433, %v581
      %v611 = vmul.f32 %v434, %v581
      %v612 = vmul.f32 %v435, %v581
      %v613 = vmul.f32 %v436, %v581
      %v614 = vmul.f32 %v437, %v581
      %v615 = vmul.f32 %v438, %v581
      %v616 = vmul.f32 %v439, %v581
      %v617 = vmul.f32 %v440, %v581
      %v618 = vmul.f32 %v441, %v581
      %v619 = vmul.f32 %v442, %v581
      %v620 = vmul.f32 %v443, %v581
      %v621 = vmul.f32 %v444, %v581
      %v622 = vmul.f32 %v445, %v581
      %v623 = vmul.f32 %v446, %v581
      %v624 = vmul.f32 %v447, %v581
      %v625 = vmul.f32 %v448, %v581
      %v626 = vmul.f32 %v449, %v581
      %v627 = vmul.f32 %v450, %v581
      %v628 = vmul.f32 %v451, %v581
      %v629 = vmul.f32 %v452, %v581
      %v630 = vmul.f32 %v453, %v581
      %v631 = vmul.f32 %v454, %v581
      %v632 = vmul.f32 %v455, %v581
      %v633 = vmul.f32 %v456, %v581
      %v634 = vmul.f32 %v457, %v581
      %v635 = vmul.f32 %v458, %v581
      %v636 = vmul.f32 %v459, %v581
      %v637 = vmul.f32 %v460, %v581
      %v638 = vmul.f32 %v461, %v581
      %v639 = vmul.f32 %v462, %v581
      %v640 = vmul.f32 %v463, %v581
      %v641 = vmul.f32 %v464, %v581
      %v642 = vmul.f32 %v465, %v581
      %v643 = vmul.f32 %v466, %v581
      %v644 = vmul.f32 %v467, %v581
      %v645 = vmul.f32 %v468, %v581
      %v646 = vmul.f32 %v469, %v581
      %v647 = vmul.f32 %v470, %v581
      %v648 = vmul.f32 %v471, %v581
      %v649 = vmul.f32 %v472, %v581
      %v650 = vmul.f32 %v473, %v581
      %v651 = vmul.f32 %v474, %v581
      %v652 = vmul.f32 %v475, %v581
      %v653 = vmul.f32 %v476, %v581
      %v654 = vmul.f32 %v477, %v581
      %v655 = vmul.f32 %v478, %v581
      %v656 = vmul.f32 %v479, %v581
      %v657 = vmul.f32 %v480, %v581
      %v658 = vmul.f32 %v481, %v581
      %v659 = vmul.f32 %v482, %v581
      %v660 = vmul.f32 %v483, %v581
      %v661 = vmul.f32 %v484, %v581
      %v662 = vmul.f32 %v485, %v581
      %v663 = vmul.f32 %v486, %v581
      %v664 = vmul.f32 %v487, %v581
      %v665 = vmul.f32 %v488, %v581
      %v666 = vmul.f32 %v489, %v581
      %v667 = vmul.f32 %v490, %v581
      %v668 = vmul.f32 %v491, %v581
      %v669 = vmul.f32 %v492, %v581
      %v670 = vmul.f32 %v493, %v581
      %v671 = vmul.f32 %v494, %v581
      %v672 = vmul.f32 %v495, %v581
      %v673 = vmul.f32 %v496, %v581
      %v674 = vmul.f32 %v497, %v581
      %v675 = vmul.f32 %v498, %v581
      %v676 = vmul.f32 %v499, %v581
      %v677 = vmul.f32 %v500, %v581
      %v678 = vmul.f32 %v501, %v581
      %v679 = vmul.f32 %v502, %v581
      %v680 = vmul.f32 %v503, %v581
      %v681 = vmul.f32 %v504, %v581
      %v682 = vmul.f32 %v505, %v581
      %v683 = vmul.f32 %v506, %v581
      %v684 = vmul.f32 %v507, %v581
      %v685 = vmul.f32 %v508, %v581
      %v686 = vmul.f32 %v509, %v581
      %v687 = vmul.f32 %v510, %v581
      %v688 = vmul.f32 %v511, %v581
      %v689 = vmul.f32 %v512, %v581
      %v690 = vmul.f32 %v513, %v581
      %v691 = vmul.f32 %v514, %v581
      %v692 = vmul.f32 %v515, %v581
      %v693 = vmul.f32 %v516, %v581
      %v694 = vmul.f32 %v517, %v581
      %v695 = vmul.f32 %v518, %v581
      %v696 = vmul.f32 %v519, %v581
      %v697 = vmul.f32 %v520, %v581
      %v698 = vmul.f32 %v521, %v581
      %v699 = vmul.f32 %v522, %v581
      %v700 = vmul.f32 %v523, %v581
      %v701 = vmul.f32 %v524, %v581
      %v702 = vmul.f32 %v525, %v581
      %v703 = vmul.f32 %v526, %v581
      %v704 = vmul.f32 %v527, %v581
      %v705 = vmul.f32 %v528, %v581
      %v706 = vmul.f32 %v529, %v581
      %v707 = vmul.f32 %v530, %v581
      %v708 = vmul.f32 %v531, %v581
      %v709 = vmul.f32 %v532, %v581
      %v710 = vmul.f32 %v533, %v581
      %v711 = vmul.f32 %v534, %v581
      %v712 = vmul.f32 %v535, %v581
      %v713 = vmul.f32 %v536, %v581
      %v714 = vmul.f32 %v537, %v581
      %v715 = vmul.f32 %v538, %v581
      %v716 = vmul.f32 %v539, %v581
      %v717 = vmul.f32 %v540, %v581
      %v718 = vmul.f32 %v541, %v581
      %v719 = vmul.f32 %v542, %v581
      %v720 = vmul.f32 %v543, %v581
      %v721 = vmul.f32 %v544, %v581
      %v722 = vmul.f32 %v545, %v581
      %v723 = vmul.f32 %v546, %v581
      %v724 = vmul.f32 %v547, %v581
      %v725 = vmul.f32 %v548, %v581
      %v726 = vmul.f32 %v549, %v581
      %v727 = vmul.f32 %v550, %v581
      %v728 = vmul.f32 %v551, %v581
      %v729 = vmul.f32 %v552, %v581
      %v730 = vmul.f32 %v553, %v581
      %v731 = vmul.f32 %v554, %v581
      %v732 = vmul.f32 %v555, %v581
      %v733 = vmul.f32 %v556, %v581
      %v734 = vmul.f32 %v557, %v581
      %v735 = vmul.f32 %v558, %v581
      %v736 = vmul.f32 %v559, %v581
      %v737 = vmul.f32 %v560, %v581
      %v738 = vmul.f32 %v561, %v581
      %v739 = vmul.f32 %v562, %v581
      %v740 = vmul.f32 %v563, %v581
      %v741 = vmul.f32 %v564, %v581
      %v742 = vmul.f32 %v565, %v581
      %v743 = vmul.f32 %v566, %v581
      %v744 = vmul.f32 %v567, %v581
      %v745 = vmul.f32 %v568, %v581
      %v746 = vmul.f32 %v569, %v581
      %v747 = vmul.f32 %v570, %v581
      %v748 = vmul.f32 %v571, %v581
      %v749 = vmul.f32 %v572, %v581
      %v750 = vmul.f32 %v573, %v581
      %v751 = vmul.f32 %v574, %v581
      %v752 = vmul.f32 %v575, %v581
      %v753 = vld [vmem:[%s3] sm:$0x1]
      %v755 = vlaneseq
      %v756 = vshrl.u32 %v755, 7
      %v757 = vsub.s32 0, %v756
      %v758 = vrot.slane %v753, %v757
      %v760 = vadd.f32 %v583, %v758
      %v761 = vadd.f32 %v584, %v758
      %v762 = vadd.f32 %v585, %v758
      %v763 = vadd.f32 %v586, %v758
      %v764 = vadd.f32 %v587, %v758
      %v765 = vadd.f32 %v588, %v758
      %v766 = vadd.f32 %v589, %v758
      %v767 = vadd.f32 %v590, %v758
      %v768 = vadd.f32 %v591, %v758
      %v769 = vadd.f32 %v592, %v758
      %v770 = vadd.f32 %v593, %v758
      %v771 = vadd.f32 %v594, %v758
      %v772 = vadd.f32 %v595, %v758
      %v773 = vadd.f32 %v596, %v758
      %v774 = vadd.f32 %v597, %v758
      %v775 = vadd.f32 %v598, %v758
      %v776 = vadd.f32 %v599, %v758
      %v777 = vadd.f32 %v600, %v758
      %v778 = vadd.f32 %v601, %v758
      %v779 = vadd.f32 %v602, %v758
      %v780 = vadd.f32 %v603, %v758
      %v781 = vadd.f32 %v604, %v758
      %v782 = vadd.f32 %v605, %v758
      %v783 = vadd.f32 %v606, %v758
      %v784 = vadd.f32 %v607, %v758
      %v785 = vadd.f32 %v608, %v758
      %v786 = vadd.f32 %v609, %v758
      %v787 = vadd.f32 %v610, %v758
      %v788 = vadd.f32 %v611, %v758
      %v789 = vadd.f32 %v612, %v758
      %v790 = vadd.f32 %v613, %v758
      %v791 = vadd.f32 %v614, %v758
      %v792 = vadd.f32 %v615, %v758
      %v793 = vadd.f32 %v616, %v758
      %v794 = vadd.f32 %v617, %v758
      %v795 = vadd.f32 %v618, %v758
      %v796 = vadd.f32 %v619, %v758
      %v797 = vadd.f32 %v620, %v758
      %v798 = vadd.f32 %v621, %v758
      %v799 = vadd.f32 %v622, %v758
      %v800 = vadd.f32 %v623, %v758
      %v801 = vadd.f32 %v624, %v758
      %v802 = vadd.f32 %v625, %v758
      %v803 = vadd.f32 %v626, %v758
      %v804 = vadd.f32 %v627, %v758
      %v805 = vadd.f32 %v628, %v758
      %v806 = vadd.f32 %v629, %v758
      %v807 = vadd.f32 %v630, %v758
      %v808 = vadd.f32 %v631, %v758
      %v809 = vadd.f32 %v632, %v758
      %v810 = vadd.f32 %v633, %v758
      %v811 = vadd.f32 %v634, %v758
      %v812 = vadd.f32 %v635, %v758
      %v813 = vadd.f32 %v636, %v758
      %v814 = vadd.f32 %v637, %v758
      %v815 = vadd.f32 %v638, %v758
      %v816 = vadd.f32 %v639, %v758
      %v817 = vadd.f32 %v640, %v758
      %v818 = vadd.f32 %v641, %v758
      %v819 = vadd.f32 %v642, %v758
      %v820 = vadd.f32 %v643, %v758
      %v821 = vadd.f32 %v644, %v758
      %v822 = vadd.f32 %v645, %v758
      %v823 = vadd.f32 %v646, %v758
      %v824 = vadd.f32 %v647, %v758
      %v825 = vadd.f32 %v648, %v758
      %v826 = vadd.f32 %v649, %v758
      %v827 = vadd.f32 %v650, %v758
      %v828 = vadd.f32 %v651, %v758
      %v829 = vadd.f32 %v652, %v758
      %v830 = vadd.f32 %v653, %v758
      %v831 = vadd.f32 %v654, %v758
      %v832 = vadd.f32 %v655, %v758
      %v833 = vadd.f32 %v656, %v758
      %v834 = vadd.f32 %v657, %v758
      %v835 = vadd.f32 %v658, %v758
      %v836 = vadd.f32 %v659, %v758
      %v837 = vadd.f32 %v660, %v758
      %v838 = vadd.f32 %v661, %v758
      %v839 = vadd.f32 %v662, %v758
      %v840 = vadd.f32 %v663, %v758
      %v841 = vadd.f32 %v664, %v758
      %v842 = vadd.f32 %v665, %v758
      %v843 = vadd.f32 %v666, %v758
      %v844 = vadd.f32 %v667, %v758
      %v845 = vadd.f32 %v668, %v758
      %v846 = vadd.f32 %v669, %v758
      %v847 = vadd.f32 %v670, %v758
      %v848 = vadd.f32 %v671, %v758
      %v849 = vadd.f32 %v672, %v758
      %v850 = vadd.f32 %v673, %v758
      %v851 = vadd.f32 %v674, %v758
      %v852 = vadd.f32 %v675, %v758
      %v853 = vadd.f32 %v676, %v758
      %v854 = vadd.f32 %v677, %v758
      %v855 = vadd.f32 %v678, %v758
      %v856 = vadd.f32 %v679, %v758
      %v857 = vadd.f32 %v680, %v758
      %v858 = vadd.f32 %v681, %v758
      %v859 = vadd.f32 %v682, %v758
      %v860 = vadd.f32 %v683, %v758
      %v861 = vadd.f32 %v684, %v758
      %v862 = vadd.f32 %v685, %v758
      %v863 = vadd.f32 %v686, %v758
      %v864 = vadd.f32 %v687, %v758
      %v865 = vadd.f32 %v688, %v758
      %v866 = vadd.f32 %v689, %v758
      %v867 = vadd.f32 %v690, %v758
      %v868 = vadd.f32 %v691, %v758
      %v869 = vadd.f32 %v692, %v758
      %v870 = vadd.f32 %v693, %v758
      %v871 = vadd.f32 %v694, %v758
      %v872 = vadd.f32 %v695, %v758
      %v873 = vadd.f32 %v696, %v758
      %v874 = vadd.f32 %v697, %v758
      %v875 = vadd.f32 %v698, %v758
      %v876 = vadd.f32 %v699, %v758
      %v877 = vadd.f32 %v700, %v758
      %v878 = vadd.f32 %v701, %v758
      %v879 = vadd.f32 %v702, %v758
      %v880 = vadd.f32 %v703, %v758
      %v881 = vadd.f32 %v704, %v758
      %v882 = vadd.f32 %v705, %v758
      %v883 = vadd.f32 %v706, %v758
      %v884 = vadd.f32 %v707, %v758
      %v885 = vadd.f32 %v708, %v758
      %v886 = vadd.f32 %v709, %v758
      %v887 = vadd.f32 %v710, %v758
      %v888 = vadd.f32 %v711, %v758
      %v889 = vadd.f32 %v712, %v758
      %v890 = vadd.f32 %v713, %v758
      %v891 = vadd.f32 %v714, %v758
      %v892 = vadd.f32 %v715, %v758
      %v893 = vadd.f32 %v716, %v758
      %v894 = vadd.f32 %v717, %v758
      %v895 = vadd.f32 %v718, %v758
      %v896 = vadd.f32 %v719, %v758
      %v897 = vadd.f32 %v720, %v758
      %v898 = vadd.f32 %v721, %v758
      %v899 = vadd.f32 %v722, %v758
      %v900 = vadd.f32 %v723, %v758
      %v901 = vadd.f32 %v724, %v758
      %v902 = vadd.f32 %v725, %v758
      %v903 = vadd.f32 %v726, %v758
      %v904 = vadd.f32 %v727, %v758
      %v905 = vadd.f32 %v728, %v758
      %v906 = vadd.f32 %v729, %v758
      %v907 = vadd.f32 %v730, %v758
      %v908 = vadd.f32 %v731, %v758
      %v909 = vadd.f32 %v732, %v758
      %v910 = vadd.f32 %v733, %v758
      %v911 = vadd.f32 %v734, %v758
      %v912 = vadd.f32 %v735, %v758
      %v913 = vadd.f32 %v736, %v758
      %v914 = vadd.f32 %v737, %v758
      %v915 = vadd.f32 %v738, %v758
      %v916 = vadd.f32 %v739, %v758
      %v917 = vadd.f32 %v740, %v758
      %v918 = vadd.f32 %v741, %v758
      %v919 = vadd.f32 %v742, %v758
      %v920 = vadd.f32 %v743, %v758
      %v921 = vadd.f32 %v744, %v758
      %v922 = vadd.f32 %v745, %v758
      %v923 = vadd.f32 %v746, %v758
      %v924 = vadd.f32 %v747, %v758
      %v925 = vadd.f32 %v748, %v758
      %v926 = vadd.f32 %v749, %v758
      %v927 = vadd.f32 %v750, %v758
      %v928 = vadd.f32 %v751, %v758
      %v929 = vadd.f32 %v752, %v758
      %vm930 = vcmp.gt.f32.partialorder %v760, 0.0
      %vm931 = vcmp.gt.f32.partialorder %v761, 0.0
      %vm932 = vcmp.gt.f32.partialorder %v762, 0.0
      %vm933 = vcmp.gt.f32.partialorder %v763, 0.0
      %vm934 = vcmp.gt.f32.partialorder %v764, 0.0
      %vm935 = vcmp.gt.f32.partialorder %v765, 0.0
      %vm936 = vcmp.gt.f32.partialorder %v766, 0.0
      %vm937 = vcmp.gt.f32.partialorder %v767, 0.0
      %vm938 = vcmp.gt.f32.partialorder %v768, 0.0
      %vm939 = vcmp.gt.f32.partialorder %v769, 0.0
      %vm940 = vcmp.gt.f32.partialorder %v770, 0.0
      %vm941 = vcmp.gt.f32.partialorder %v771, 0.0
      %vm942 = vcmp.gt.f32.partialorder %v772, 0.0
      %vm943 = vcmp.gt.f32.partialorder %v773, 0.0
      %vm944 = vcmp.gt.f32.partialorder %v774, 0.0
      %vm945 = vcmp.gt.f32.partialorder %v775, 0.0
      %vm946 = vcmp.gt.f32.partialorder %v776, 0.0
      %vm947 = vcmp.gt.f32.partialorder %v777, 0.0
      %vm948 = vcmp.gt.f32.partialorder %v778, 0.0
      %vm949 = vcmp.gt.f32.partialorder %v779, 0.0
      %vm950 = vcmp.gt.f32.partialorder %v780, 0.0
      %vm951 = vcmp.gt.f32.partialorder %v781, 0.0
      %vm952 = vcmp.gt.f32.partialorder %v782, 0.0
      %vm953 = vcmp.gt.f32.partialorder %v783, 0.0
      %vm954 = vcmp.gt.f32.partialorder %v784, 0.0
      %vm955 = vcmp.gt.f32.partialorder %v785, 0.0
      %vm956 = vcmp.gt.f32.partialorder %v786, 0.0
      %vm957 = vcmp.gt.f32.partialorder %v787, 0.0
      %vm958 = vcmp.gt.f32.partialorder %v788, 0.0
      %vm959 = vcmp.gt.f32.partialorder %v789, 0.0
      %vm960 = vcmp.gt.f32.partialorder %v790, 0.0
      %vm961 = vcmp.gt.f32.partialorder %v791, 0.0
      %vm962 = vcmp.gt.f32.partialorder %v792, 0.0
      %vm963 = vcmp.gt.f32.partialorder %v793, 0.0
      %vm964 = vcmp.gt.f32.partialorder %v794, 0.0
      %vm965 = vcmp.gt.f32.partialorder %v795, 0.0
      %vm966 = vcmp.gt.f32.partialorder %v796, 0.0
      %vm967 = vcmp.gt.f32.partialorder %v797, 0.0
      %vm968 = vcmp.gt.f32.partialorder %v798, 0.0
      %vm969 = vcmp.gt.f32.partialorder %v799, 0.0
      %vm970 = vcmp.gt.f32.partialorder %v800, 0.0
      %vm971 = vcmp.gt.f32.partialorder %v801, 0.0
      %vm972 = vcmp.gt.f32.partialorder %v802, 0.0
      %vm973 = vcmp.gt.f32.partialorder %v803, 0.0
      %vm974 = vcmp.gt.f32.partialorder %v804, 0.0
      %vm975 = vcmp.gt.f32.partialorder %v805, 0.0
      %vm976 = vcmp.gt.f32.partialorder %v806, 0.0
      %vm977 = vcmp.gt.f32.partialorder %v807, 0.0
      %vm978 = vcmp.gt.f32.partialorder %v808, 0.0
      %vm979 = vcmp.gt.f32.partialorder %v809, 0.0
      %vm980 = vcmp.gt.f32.partialorder %v810, 0.0
      %vm981 = vcmp.gt.f32.partialorder %v811, 0.0
      %vm982 = vcmp.gt.f32.partialorder %v812, 0.0
      %vm983 = vcmp.gt.f32.partialorder %v813, 0.0
      %vm984 = vcmp.gt.f32.partialorder %v814, 0.0
      %vm985 = vcmp.gt.f32.partialorder %v815, 0.0
      %vm986 = vcmp.gt.f32.partialorder %v816, 0.0
      %vm987 = vcmp.gt.f32.partialorder %v817, 0.0
      %vm988 = vcmp.gt.f32.partialorder %v818, 0.0
      %vm989 = vcmp.gt.f32.partialorder %v819, 0.0
      %vm990 = vcmp.gt.f32.partialorder %v820, 0.0
      %vm991 = vcmp.gt.f32.partialorder %v821, 0.0
      %vm992 = vcmp.gt.f32.partialorder %v822, 0.0
      %vm993 = vcmp.gt.f32.partialorder %v823, 0.0
      %vm994 = vcmp.gt.f32.partialorder %v824, 0.0
      %vm995 = vcmp.gt.f32.partialorder %v825, 0.0
      %vm996 = vcmp.gt.f32.partialorder %v826, 0.0
      %vm997 = vcmp.gt.f32.partialorder %v827, 0.0
      %vm998 = vcmp.gt.f32.partialorder %v828, 0.0
      %vm999 = vcmp.gt.f32.partialorder %v829, 0.0
      %vm1000 = vcmp.gt.f32.partialorder %v830, 0.0
      %vm1001 = vcmp.gt.f32.partialorder %v831, 0.0
      %vm1002 = vcmp.gt.f32.partialorder %v832, 0.0
      %vm1003 = vcmp.gt.f32.partialorder %v833, 0.0
      %vm1004 = vcmp.gt.f32.partialorder %v834, 0.0
      %vm1005 = vcmp.gt.f32.partialorder %v835, 0.0
      %vm1006 = vcmp.gt.f32.partialorder %v836, 0.0
      %vm1007 = vcmp.gt.f32.partialorder %v837, 0.0
      %vm1008 = vcmp.gt.f32.partialorder %v838, 0.0
      %vm1009 = vcmp.gt.f32.partialorder %v839, 0.0
      %vm1010 = vcmp.gt.f32.partialorder %v840, 0.0
      %vm1011 = vcmp.gt.f32.partialorder %v841, 0.0
      %vm1012 = vcmp.gt.f32.partialorder %v842, 0.0
      %vm1013 = vcmp.gt.f32.partialorder %v843, 0.0
      %vm1014 = vcmp.gt.f32.partialorder %v844, 0.0
      %vm1015 = vcmp.gt.f32.partialorder %v845, 0.0
      %vm1016 = vcmp.gt.f32.partialorder %v846, 0.0
      %vm1017 = vcmp.gt.f32.partialorder %v847, 0.0
      %vm1018 = vcmp.gt.f32.partialorder %v848, 0.0
      %vm1019 = vcmp.gt.f32.partialorder %v849, 0.0
      %vm1020 = vcmp.gt.f32.partialorder %v850, 0.0
      %vm1021 = vcmp.gt.f32.partialorder %v851, 0.0
      %vm1022 = vcmp.gt.f32.partialorder %v852, 0.0
      %vm1023 = vcmp.gt.f32.partialorder %v853, 0.0
      %vm1024 = vcmp.gt.f32.partialorder %v854, 0.0
      %vm1025 = vcmp.gt.f32.partialorder %v855, 0.0
      %vm1026 = vcmp.gt.f32.partialorder %v856, 0.0
      %vm1027 = vcmp.gt.f32.partialorder %v857, 0.0
      %vm1028 = vcmp.gt.f32.partialorder %v858, 0.0
      %vm1029 = vcmp.gt.f32.partialorder %v859, 0.0
      %vm1030 = vcmp.gt.f32.partialorder %v860, 0.0
      %vm1031 = vcmp.gt.f32.partialorder %v861, 0.0
      %vm1032 = vcmp.gt.f32.partialorder %v862, 0.0
      %vm1033 = vcmp.gt.f32.partialorder %v863, 0.0
      %vm1034 = vcmp.gt.f32.partialorder %v864, 0.0
      %vm1035 = vcmp.gt.f32.partialorder %v865, 0.0
      %vm1036 = vcmp.gt.f32.partialorder %v866, 0.0
      %vm1037 = vcmp.gt.f32.partialorder %v867, 0.0
      %vm1038 = vcmp.gt.f32.partialorder %v868, 0.0
      %vm1039 = vcmp.gt.f32.partialorder %v869, 0.0
      %vm1040 = vcmp.gt.f32.partialorder %v870, 0.0
      %vm1041 = vcmp.gt.f32.partialorder %v871, 0.0
      %vm1042 = vcmp.gt.f32.partialorder %v872, 0.0
      %vm1043 = vcmp.gt.f32.partialorder %v873, 0.0
      %vm1044 = vcmp.gt.f32.partialorder %v874, 0.0
      %vm1045 = vcmp.gt.f32.partialorder %v875, 0.0
      %vm1046 = vcmp.gt.f32.partialorder %v876, 0.0
      %vm1047 = vcmp.gt.f32.partialorder %v877, 0.0
      %vm1048 = vcmp.gt.f32.partialorder %v878, 0.0
      %vm1049 = vcmp.gt.f32.partialorder %v879, 0.0
      %vm1050 = vcmp.gt.f32.partialorder %v880, 0.0
      %vm1051 = vcmp.gt.f32.partialorder %v881, 0.0
      %vm1052 = vcmp.gt.f32.partialorder %v882, 0.0
      %vm1053 = vcmp.gt.f32.partialorder %v883, 0.0
      %vm1054 = vcmp.gt.f32.partialorder %v884, 0.0
      %vm1055 = vcmp.gt.f32.partialorder %v885, 0.0
      %vm1056 = vcmp.gt.f32.partialorder %v886, 0.0
      %vm1057 = vcmp.gt.f32.partialorder %v887, 0.0
      %vm1058 = vcmp.gt.f32.partialorder %v888, 0.0
      %vm1059 = vcmp.gt.f32.partialorder %v889, 0.0
      %vm1060 = vcmp.gt.f32.partialorder %v890, 0.0
      %vm1061 = vcmp.gt.f32.partialorder %v891, 0.0
      %vm1062 = vcmp.gt.f32.partialorder %v892, 0.0
      %vm1063 = vcmp.gt.f32.partialorder %v893, 0.0
      %vm1064 = vcmp.gt.f32.partialorder %v894, 0.0
      %vm1065 = vcmp.gt.f32.partialorder %v895, 0.0
      %vm1066 = vcmp.gt.f32.partialorder %v896, 0.0
      %vm1067 = vcmp.gt.f32.partialorder %v897, 0.0
      %vm1068 = vcmp.gt.f32.partialorder %v898, 0.0
      %vm1069 = vcmp.gt.f32.partialorder %v899, 0.0
      %vm1070 = vcmp.gt.f32.partialorder %v900, 0.0
      %vm1071 = vcmp.gt.f32.partialorder %v901, 0.0
      %vm1072 = vcmp.gt.f32.partialorder %v902, 0.0
      %vm1073 = vcmp.gt.f32.partialorder %v903, 0.0
      %vm1074 = vcmp.gt.f32.partialorder %v904, 0.0
      %vm1075 = vcmp.gt.f32.partialorder %v905, 0.0
      %vm1076 = vcmp.gt.f32.partialorder %v906, 0.0
      %vm1077 = vcmp.gt.f32.partialorder %v907, 0.0
      %vm1078 = vcmp.gt.f32.partialorder %v908, 0.0
      %vm1079 = vcmp.gt.f32.partialorder %v909, 0.0
      %vm1080 = vcmp.gt.f32.partialorder %v910, 0.0
      %vm1081 = vcmp.gt.f32.partialorder %v911, 0.0
      %vm1082 = vcmp.gt.f32.partialorder %v912, 0.0
      %vm1083 = vcmp.gt.f32.partialorder %v913, 0.0
      %vm1084 = vcmp.gt.f32.partialorder %v914, 0.0
      %vm1085 = vcmp.gt.f32.partialorder %v915, 0.0
      %vm1086 = vcmp.gt.f32.partialorder %v916, 0.0
      %vm1087 = vcmp.gt.f32.partialorder %v917, 0.0
      %vm1088 = vcmp.gt.f32.partialorder %v918, 0.0
      %vm1089 = vcmp.gt.f32.partialorder %v919, 0.0
      %vm1090 = vcmp.gt.f32.partialorder %v920, 0.0
      %vm1091 = vcmp.gt.f32.partialorder %v921, 0.0
      %vm1092 = vcmp.gt.f32.partialorder %v922, 0.0
      %vm1093 = vcmp.gt.f32.partialorder %v923, 0.0
      %vm1094 = vcmp.gt.f32.partialorder %v924, 0.0
      %vm1095 = vcmp.gt.f32.partialorder %v925, 0.0
      %vm1096 = vcmp.gt.f32.partialorder %v926, 0.0
      %vm1097 = vcmp.gt.f32.partialorder %v927, 0.0
      %vm1098 = vcmp.gt.f32.partialorder %v928, 0.0
      %vm1099 = vcmp.gt.f32.partialorder %v929, 0.0
      %v1100 = vmul.f32 %v760, 0.2
      %v1101 = vmul.f32 %v761, 0.2
      %v1102 = vmul.f32 %v762, 0.2
      %v1103 = vmul.f32 %v763, 0.2
      %v1104 = vmul.f32 %v764, 0.2
      %v1105 = vmul.f32 %v765, 0.2
      %v1106 = vmul.f32 %v766, 0.2
      %v1107 = vmul.f32 %v767, 0.2
      %v1108 = vmul.f32 %v768, 0.2
      %v1109 = vmul.f32 %v769, 0.2
      %v1110 = vmul.f32 %v770, 0.2
      %v1111 = vmul.f32 %v771, 0.2
      %v1112 = vmul.f32 %v772, 0.2
      %v1113 = vmul.f32 %v773, 0.2
      %v1114 = vmul.f32 %v774, 0.2
      %v1115 = vmul.f32 %v775, 0.2
      %v1116 = vmul.f32 %v776, 0.2
      %v1117 = vmul.f32 %v777, 0.2
      %v1118 = vmul.f32 %v778, 0.2
      %v1119 = vmul.f32 %v779, 0.2
      %v1120 = vmul.f32 %v780, 0.2
      %v1121 = vmul.f32 %v781, 0.2
      %v1122 = vmul.f32 %v782, 0.2
      %v1123 = vmul.f32 %v783, 0.2
      %v1124 = vmul.f32 %v784, 0.2
      %v1125 = vmul.f32 %v785, 0.2
      %v1126 = vmul.f32 %v786, 0.2
      %v1127 = vmul.f32 %v787, 0.2
      %v1128 = vmul.f32 %v788, 0.2
      %v1129 = vmul.f32 %v789, 0.2
      %v1130 = vmul.f32 %v790, 0.2
      %v1131 = vmul.f32 %v791, 0.2
      %v1132 = vmul.f32 %v792, 0.2
      %v1133 = vmul.f32 %v793, 0.2
      %v1134 = vmul.f32 %v794, 0.2
      %v1135 = vmul.f32 %v795, 0.2
      %v1136 = vmul.f32 %v796, 0.2
      %v1137 = vmul.f32 %v797, 0.2
      %v1138 = vmul.f32 %v798, 0.2
      %v1139 = vmul.f32 %v799, 0.2
      %v1140 = vmul.f32 %v800, 0.2
      %v1141 = vmul.f32 %v801, 0.2
      %v1142 = vmul.f32 %v802, 0.2
      %v1143 = vmul.f32 %v803, 0.2
      %v1144 = vmul.f32 %v804, 0.2
      %v1145 = vmul.f32 %v805, 0.2
      %v1146 = vmul.f32 %v806, 0.2
      %v1147 = vmul.f32 %v807, 0.2
      %v1148 = vmul.f32 %v808, 0.2
      %v1149 = vmul.f32 %v809, 0.2
      %v1150 = vmul.f32 %v810, 0.2
      %v1151 = vmul.f32 %v811, 0.2
      %v1152 = vmul.f32 %v812, 0.2
      %v1153 = vmul.f32 %v813, 0.2
      %v1154 = vmul.f32 %v814, 0.2
      %v1155 = vmul.f32 %v815, 0.2
      %v1156 = vmul.f32 %v816, 0.2
      %v1157 = vmul.f32 %v817, 0.2
      %v1158 = vmul.f32 %v818, 0.2
      %v1159 = vmul.f32 %v819, 0.2
      %v1160 = vmul.f32 %v820, 0.2
      %v1161 = vmul.f32 %v821, 0.2
      %v1162 = vmul.f32 %v822, 0.2
      %v1163 = vmul.f32 %v823, 0.2
      %v1164 = vmul.f32 %v824, 0.2
      %v1165 = vmul.f32 %v825, 0.2
      %v1166 = vmul.f32 %v826, 0.2
      %v1167 = vmul.f32 %v827, 0.2
      %v1168 = vmul.f32 %v828, 0.2
      %v1169 = vmul.f32 %v829, 0.2
      %v1170 = vmul.f32 %v830, 0.2
      %v1171 = vmul.f32 %v831, 0.2
      %v1172 = vmul.f32 %v832, 0.2
      %v1173 = vmul.f32 %v833, 0.2
      %v1174 = vmul.f32 %v834, 0.2
      %v1175 = vmul.f32 %v835, 0.2
      %v1176 = vmul.f32 %v836, 0.2
      %v1177 = vmul.f32 %v837, 0.2
      %v1178 = vmul.f32 %v838, 0.2
      %v1179 = vmul.f32 %v839, 0.2
      %v1180 = vmul.f32 %v840, 0.2
      %v1181 = vmul.f32 %v841, 0.2
      %v1182 = vmul.f32 %v842, 0.2
      %v1183 = vmul.f32 %v843, 0.2
      %v1184 = vmul.f32 %v844, 0.2
      %v1185 = vmul.f32 %v845, 0.2
      %v1186 = vmul.f32 %v846, 0.2
      %v1187 = vmul.f32 %v847, 0.2
      %v1188 = vmul.f32 %v848, 0.2
      %v1189 = vmul.f32 %v849, 0.2
      %v1190 = vmul.f32 %v850, 0.2
      %v1191 = vmul.f32 %v851, 0.2
      %v1192 = vmul.f32 %v852, 0.2
      %v1193 = vmul.f32 %v853, 0.2
      %v1194 = vmul.f32 %v854, 0.2
      %v1195 = vmul.f32 %v855, 0.2
      %v1196 = vmul.f32 %v856, 0.2
      %v1197 = vmul.f32 %v857, 0.2
      %v1198 = vmul.f32 %v858, 0.2
      %v1199 = vmul.f32 %v859, 0.2
      %v1200 = vmul.f32 %v860, 0.2
      %v1201 = vmul.f32 %v861, 0.2
      %v1202 = vmul.f32 %v862, 0.2
      %v1203 = vmul.f32 %v863, 0.2
      %v1204 = vmul.f32 %v864, 0.2
      %v1205 = vmul.f32 %v865, 0.2
      %v1206 = vmul.f32 %v866, 0.2
      %v1207 = vmul.f32 %v867, 0.2
      %v1208 = vmul.f32 %v868, 0.2
      %v1209 = vmul.f32 %v869, 0.2
      %v1210 = vmul.f32 %v870, 0.2
      %v1211 = vmul.f32 %v871, 0.2
      %v1212 = vmul.f32 %v872, 0.2
      %v1213 = vmul.f32 %v873, 0.2
      %v1214 = vmul.f32 %v874, 0.2
      %v1215 = vmul.f32 %v875, 0.2
      %v1216 = vmul.f32 %v876, 0.2
      %v1217 = vmul.f32 %v877, 0.2
      %v1218 = vmul.f32 %v878, 0.2
      %v1219 = vmul.f32 %v879, 0.2
      %v1220 = vmul.f32 %v880, 0.2
      %v1221 = vmul.f32 %v881, 0.2
      %v1222 = vmul.f32 %v882, 0.2
      %v1223 = vmul.f32 %v883, 0.2
      %v1224 = vmul.f32 %v884, 0.2
      %v1225 = vmul.f32 %v885, 0.2
      %v1226 = vmul.f32 %v886, 0.2
      %v1227 = vmul.f32 %v887, 0.2
      %v1228 = vmul.f32 %v888, 0.2
      %v1229 = vmul.f32 %v889, 0.2
      %v1230 = vmul.f32 %v890, 0.2
      %v1231 = vmul.f32 %v891, 0.2
      %v1232 = vmul.f32 %v892, 0.2
      %v1233 = vmul.f32 %v893, 0.2
      %v1234 = vmul.f32 %v894, 0.2
      %v1235 = vmul.f32 %v895, 0.2
      %v1236 = vmul.f32 %v896, 0.2
      %v1237 = vmul.f32 %v897, 0.2
      %v1238 = vmul.f32 %v898, 0.2
      %v1239 = vmul.f32 %v899, 0.2
      %v1240 = vmul.f32 %v900, 0.2
      %v1241 = vmul.f32 %v901, 0.2
      %v1242 = vmul.f32 %v902, 0.2
      %v1243 = vmul.f32 %v903, 0.2
      %v1244 = vmul.f32 %v904, 0.2
      %v1245 = vmul.f32 %v905, 0.2
      %v1246 = vmul.f32 %v906, 0.2
      %v1247 = vmul.f32 %v907, 0.2
      %v1248 = vmul.f32 %v908, 0.2
      %v1249 = vmul.f32 %v909, 0.2
      %v1250 = vmul.f32 %v910, 0.2
      %v1251 = vmul.f32 %v911, 0.2
      %v1252 = vmul.f32 %v912, 0.2
      %v1253 = vmul.f32 %v913, 0.2
      %v1254 = vmul.f32 %v914, 0.2
      %v1255 = vmul.f32 %v915, 0.2
      %v1256 = vmul.f32 %v916, 0.2
      %v1257 = vmul.f32 %v917, 0.2
      %v1258 = vmul.f32 %v918, 0.2
      %v1259 = vmul.f32 %v919, 0.2
      %v1260 = vmul.f32 %v920, 0.2
      %v1261 = vmul.f32 %v921, 0.2
      %v1262 = vmul.f32 %v922, 0.2
      %v1263 = vmul.f32 %v923, 0.2
      %v1264 = vmul.f32 %v924, 0.2
      %v1265 = vmul.f32 %v925, 0.2
      %v1266 = vmul.f32 %v926, 0.2
      %v1267 = vmul.f32 %v927, 0.2
      %v1268 = vmul.f32 %v928, 0.2
      %v1269 = vmul.f32 %v929, 0.2
      %v1270 = vsel %vm930, %v760, %v1100
      %v1271 = vsel %vm931, %v761, %v1101
      %v1272 = vsel %vm932, %v762, %v1102
      %v1273 = vsel %vm933, %v763, %v1103
      %v1274 = vsel %vm934, %v764, %v1104
      %v1275 = vsel %vm935, %v765, %v1105
      %v1276 = vsel %vm936, %v766, %v1106
      %v1277 = vsel %vm937, %v767, %v1107
      %v1278 = vsel %vm938, %v768, %v1108
      %v1279 = vsel %vm939, %v769, %v1109
      %v1280 = vsel %vm940, %v770, %v1110
      %v1281 = vsel %vm941, %v771, %v1111
      %v1282 = vsel %vm942, %v772, %v1112
      %v1283 = vsel %vm943, %v773, %v1113
      %v1284 = vsel %vm944, %v774, %v1114
      %v1285 = vsel %vm945, %v775, %v1115
      %v1286 = vsel %vm946, %v776, %v1116
      %v1287 = vsel %vm947, %v777, %v1117
      %v1288 = vsel %vm948, %v778, %v1118
      %v1289 = vsel %vm949, %v779, %v1119
      %v1290 = vsel %vm950, %v780, %v1120
      %v1291 = vsel %vm951, %v781, %v1121
      %v1292 = vsel %vm952, %v782, %v1122
      %v1293 = vsel %vm953, %v783, %v1123
      %v1294 = vsel %vm954, %v784, %v1124
      %v1295 = vsel %vm955, %v785, %v1125
      %v1296 = vsel %vm956, %v786, %v1126
      %v1297 = vsel %vm957, %v787, %v1127
      %v1298 = vsel %vm958, %v788, %v1128
      %v1299 = vsel %vm959, %v789, %v1129
      %v1300 = vsel %vm960, %v790, %v1130
      %v1301 = vsel %vm961, %v791, %v1131
      %v1302 = vsel %vm962, %v792, %v1132
      %v1303 = vsel %vm963, %v793, %v1133
      %v1304 = vsel %vm964, %v794, %v1134
      %v1305 = vsel %vm965, %v795, %v1135
      %v1306 = vsel %vm966, %v796, %v1136
      %v1307 = vsel %vm967, %v797, %v1137
      %v1308 = vsel %vm968, %v798, %v1138
      %v1309 = vsel %vm969, %v799, %v1139
      %v1310 = vsel %vm970, %v800, %v1140
      %v1311 = vsel %vm971, %v801, %v1141
      %v1312 = vsel %vm972, %v802, %v1142
      %v1313 = vsel %vm973, %v803, %v1143
      %v1314 = vsel %vm974, %v804, %v1144
      %v1315 = vsel %vm975, %v805, %v1145
      %v1316 = vsel %vm976, %v806, %v1146
      %v1317 = vsel %vm977, %v807, %v1147
      %v1318 = vsel %vm978, %v808, %v1148
      %v1319 = vsel %vm979, %v809, %v1149
      %v1320 = vsel %vm980, %v810, %v1150
      %v1321 = vsel %vm981, %v811, %v1151
      %v1322 = vsel %vm982, %v812, %v1152
      %v1323 = vsel %vm983, %v813, %v1153
      %v1324 = vsel %vm984, %v814, %v1154
      %v1325 = vsel %vm985, %v815, %v1155
      %v1326 = vsel %vm986, %v816, %v1156
      %v1327 = vsel %vm987, %v817, %v1157
      %v1328 = vsel %vm988, %v818, %v1158
      %v1329 = vsel %vm989, %v819, %v1159
      %v1330 = vsel %vm990, %v820, %v1160
      %v1331 = vsel %vm991, %v821, %v1161
      %v1332 = vsel %vm992, %v822, %v1162
      %v1333 = vsel %vm993, %v823, %v1163
      %v1334 = vsel %vm994, %v824, %v1164
      %v1335 = vsel %vm995, %v825, %v1165
      %v1336 = vsel %vm996, %v826, %v1166
      %v1337 = vsel %vm997, %v827, %v1167
      %v1338 = vsel %vm998, %v828, %v1168
      %v1339 = vsel %vm999, %v829, %v1169
      %v1340 = vsel %vm1000, %v830, %v1170
      %v1341 = vsel %vm1001, %v831, %v1171
      %v1342 = vsel %vm1002, %v832, %v1172
      %v1343 = vsel %vm1003, %v833, %v1173
      %v1344 = vsel %vm1004, %v834, %v1174
      %v1345 = vsel %vm1005, %v835, %v1175
      %v1346 = vsel %vm1006, %v836, %v1176
      %v1347 = vsel %vm1007, %v837, %v1177
      %v1348 = vsel %vm1008, %v838, %v1178
      %v1349 = vsel %vm1009, %v839, %v1179
      %v1350 = vsel %vm1010, %v840, %v1180
      %v1351 = vsel %vm1011, %v841, %v1181
      %v1352 = vsel %vm1012, %v842, %v1182
      %v1353 = vsel %vm1013, %v843, %v1183
      %v1354 = vsel %vm1014, %v844, %v1184
      %v1355 = vsel %vm1015, %v845, %v1185
      %v1356 = vsel %vm1016, %v846, %v1186
      %v1357 = vsel %vm1017, %v847, %v1187
      %v1358 = vsel %vm1018, %v848, %v1188
      %v1359 = vsel %vm1019, %v849, %v1189
      %v1360 = vsel %vm1020, %v850, %v1190
      %v1361 = vsel %vm1021, %v851, %v1191
      %v1362 = vsel %vm1022, %v852, %v1192
      %v1363 = vsel %vm1023, %v853, %v1193
      %v1364 = vsel %vm1024, %v854, %v1194
      %v1365 = vsel %vm1025, %v855, %v1195
      %v1366 = vsel %vm1026, %v856, %v1196
      %v1367 = vsel %vm1027, %v857, %v1197
      %v1368 = vsel %vm1028, %v858, %v1198
      %v1369 = vsel %vm1029, %v859, %v1199
      %v1370 = vsel %vm1030, %v860, %v1200
      %v1371 = vsel %vm1031, %v861, %v1201
      %v1372 = vsel %vm1032, %v862, %v1202
      %v1373 = vsel %vm1033, %v863, %v1203
      %v1374 = vsel %vm1034, %v864, %v1204
      %v1375 = vsel %vm1035, %v865, %v1205
      %v1376 = vsel %vm1036, %v866, %v1206
      %v1377 = vsel %vm1037, %v867, %v1207
      %v1378 = vsel %vm1038, %v868, %v1208
      %v1379 = vsel %vm1039, %v869, %v1209
      %v1380 = vsel %vm1040, %v870, %v1210
      %v1381 = vsel %vm1041, %v871, %v1211
      %v1382 = vsel %vm1042, %v872, %v1212
      %v1383 = vsel %vm1043, %v873, %v1213
      %v1384 = vsel %vm1044, %v874, %v1214
      %v1385 = vsel %vm1045, %v875, %v1215
      %v1386 = vsel %vm1046, %v876, %v1216
      %v1387 = vsel %vm1047, %v877, %v1217
      %v1388 = vsel %vm1048, %v878, %v1218
      %v1389 = vsel %vm1049, %v879, %v1219
      %v1390 = vsel %vm1050, %v880, %v1220
      %v1391 = vsel %vm1051, %v881, %v1221
      %v1392 = vsel %vm1052, %v882, %v1222
      %v1393 = vsel %vm1053, %v883, %v1223
      %v1394 = vsel %vm1054, %v884, %v1224
      %v1395 = vsel %vm1055, %v885, %v1225
      %v1396 = vsel %vm1056, %v886, %v1226
      %v1397 = vsel %vm1057, %v887, %v1227
      %v1398 = vsel %vm1058, %v888, %v1228
      %v1399 = vsel %vm1059, %v889, %v1229
      %v1400 = vsel %vm1060, %v890, %v1230
      %v1401 = vsel %vm1061, %v891, %v1231
      %v1402 = vsel %vm1062, %v892, %v1232
      %v1403 = vsel %vm1063, %v893, %v1233
      %v1404 = vsel %vm1064, %v894, %v1234
      %v1405 = vsel %vm1065, %v895, %v1235
      %v1406 = vsel %vm1066, %v896, %v1236
      %v1407 = vsel %vm1067, %v897, %v1237
      %v1408 = vsel %vm1068, %v898, %v1238
      %v1409 = vsel %vm1069, %v899, %v1239
      %v1410 = vsel %vm1070, %v900, %v1240
      %v1411 = vsel %vm1071, %v901, %v1241
      %v1412 = vsel %vm1072, %v902, %v1242
      %v1413 = vsel %vm1073, %v903, %v1243
      %v1414 = vsel %vm1074, %v904, %v1244
      %v1415 = vsel %vm1075, %v905, %v1245
      %v1416 = vsel %vm1076, %v906, %v1246
      %v1417 = vsel %vm1077, %v907, %v1247
      %v1418 = vsel %vm1078, %v908, %v1248
      %v1419 = vsel %vm1079, %v909, %v1249
      %v1420 = vsel %vm1080, %v910, %v1250
      %v1421 = vsel %vm1081, %v911, %v1251
      %v1422 = vsel %vm1082, %v912, %v1252
      %v1423 = vsel %vm1083, %v913, %v1253
      %v1424 = vsel %vm1084, %v914, %v1254
      %v1425 = vsel %vm1085, %v915, %v1255
      %v1426 = vsel %vm1086, %v916, %v1256
      %v1427 = vsel %vm1087, %v917, %v1257
      %v1428 = vsel %vm1088, %v918, %v1258
      %v1429 = vsel %vm1089, %v919, %v1259
      %v1430 = vsel %vm1090, %v920, %v1260
      %v1431 = vsel %vm1091, %v921, %v1261
      %v1432 = vsel %vm1092, %v922, %v1262
      %v1433 = vsel %vm1093, %v923, %v1263
      %v1434 = vsel %vm1094, %v924, %v1264
      %v1435 = vsel %vm1095, %v925, %v1265
      %v1436 = vsel %vm1096, %v926, %v1266
      %v1437 = vsel %vm1097, %v927, %v1267
      %v1438 = vsel %vm1098, %v928, %v1268
      %v1439 = vsel %vm1099, %v929, %v1269
      %v1440 = vlaneseq
      %v1441 = vshrl.u32 %v1440, 7
      %v1442 = vadd.s32 %v1441, 8
      %v1443 = vadd.s32 %v1441, 16
      %v1444 = vadd.s32 %v1441, 24
      %v1445 = vadd.s32 %v1441, 32
      %vm1446 = vcmp.ge.s32.totalorder %v1441, 1
      %vm1447 = vcmp.ge.s32.totalorder %v1442, 1
      %vm1448 = vcmp.ge.s32.totalorder %v1443, 1
      %vm1449 = vcmp.ge.s32.totalorder %v1444, 1
      %vm1450 = vcmp.ge.s32.totalorder %v1445, 1
      %vm1451 = vmand 0, %vm1446
      %vm1452 = vmand 0, %vm1447
      %vm1453 = vmand 0, %vm1448
      %vm1454 = vmand 0, %vm1449
      %vm1455 = vmand 0, %vm1450
      %vm1456 = vmand 1, %vm1446
      %vm1457 = vmand 1, %vm1447
      %vm1458 = vmand 1, %vm1448
      %vm1459 = vmand 1, %vm1449
      %vm1460 = vmand 1, %vm1450
      %vm1461 = vcmp.le.s32.totalorder %v1441, 32
      %vm1462 = vcmp.le.s32.totalorder %v1442, 32
      %vm1463 = vcmp.le.s32.totalorder %v1443, 32
      %vm1464 = vcmp.le.s32.totalorder %v1444, 32
      %vm1465 = vcmp.le.s32.totalorder %v1445, 32
      %vm1466 = vmand %vm1451, %vm1461
      %vm1467 = vmand %vm1452, %vm1462
      %vm1468 = vmand %vm1453, %vm1463
      %vm1469 = vmand %vm1454, %vm1464
      %vm1470 = vmand %vm1455, %vm1465
      %vm1471 = vmand %vm1456, %vm1461
      %vm1472 = vmand %vm1457, %vm1462
      %vm1473 = vmand %vm1458, %vm1463
      %vm1474 = vmand %vm1459, %vm1464
      %vm1475 = vmand %vm1460, %vm1465
      %v1476 = vsel %vm1466, 1, 0
      %v1477 = vsel %vm1467, 1, 0
      %v1478 = vsel %vm1468, 1, 0
      %v1479 = vsel %vm1469, 1, 0
      %v1480 = vsel %vm1470, 1, 0
      %v1481 = vsel %vm1471, 1, 0
      %v1482 = vsel %vm1472, 1, 0
      %v1483 = vsel %vm1473, 1, 0
      %v1484 = vsel %vm1474, 1, 0
      %v1485 = vsel %vm1475, 1, 0
      %vm1486 = vcmp.eq.s32.totalorder %v1476, 1
      %vm1487 = vcmp.eq.s32.totalorder %v1477, 1
      %vm1488 = vcmp.eq.s32.totalorder %v1478, 1
      %vm1489 = vcmp.eq.s32.totalorder %v1479, 1
      %vm1490 = vcmp.eq.s32.totalorder %v1480, 1
      %vm1491 = vcmp.eq.s32.totalorder %v1481, 1
      %vm1492 = vcmp.eq.s32.totalorder %v1482, 1
      %vm1493 = vcmp.eq.s32.totalorder %v1483, 1
      %vm1494 = vcmp.eq.s32.totalorder %v1484, 1
      %vm1495 = vcmp.eq.s32.totalorder %v1485, 1
      %v1496 = vsel %vm1486, %v1270, 0.0
      %v1497 = vsel %vm1487, %v1271, 0.0
      %v1498 = vsel %vm1488, %v1272, 0.0
      %v1499 = vsel %vm1489, %v1273, 0.0
      %v1500 = vsel %vm1490, %v1274, 0.0
      %v1501 = vsel %vm1491, %v1275, 0.0
      %v1502 = vsel %vm1492, %v1276, 0.0
      %v1503 = vsel %vm1493, %v1277, 0.0
      %v1504 = vsel %vm1494, %v1278, 0.0
      %v1505 = vsel %vm1495, %v1279, 0.0
      %v1506 = vsel %vm1491, %v1280, 0.0
      %v1507 = vsel %vm1492, %v1281, 0.0
      %v1508 = vsel %vm1493, %v1282, 0.0
      %v1509 = vsel %vm1494, %v1283, 0.0
      %v1510 = vsel %vm1495, %v1284, 0.0
      %v1511 = vsel %vm1491, %v1285, 0.0
      %v1512 = vsel %vm1492, %v1286, 0.0
      %v1513 = vsel %vm1493, %v1287, 0.0
      %v1514 = vsel %vm1494, %v1288, 0.0
      %v1515 = vsel %vm1495, %v1289, 0.0
      %v1516 = vsel %vm1491, %v1290, 0.0
      %v1517 = vsel %vm1492, %v1291, 0.0
      %v1518 = vsel %vm1493, %v1292, 0.0
      %v1519 = vsel %vm1494, %v1293, 0.0
      %v1520 = vsel %vm1495, %v1294, 0.0
      %v1521 = vsel %vm1491, %v1295, 0.0
      %v1522 = vsel %vm1492, %v1296, 0.0
      %v1523 = vsel %vm1493, %v1297, 0.0
      %v1524 = vsel %vm1494, %v1298, 0.0
      %v1525 = vsel %vm1495, %v1299, 0.0
      %v1526 = vsel %vm1491, %v1300, 0.0
      %v1527 = vsel %vm1492, %v1301, 0.0
      %v1528 = vsel %vm1493, %v1302, 0.0
      %v1529 = vsel %vm1494, %v1303, 0.0
      %v1530 = vsel %vm1495, %v1304, 0.0
      %v1531 = vsel %vm1491, %v1305, 0.0
      %v1532 = vsel %vm1492, %v1306, 0.0
      %v1533 = vsel %vm1493, %v1307, 0.0
      %v1534 = vsel %vm1494, %v1308, 0.0
      %v1535 = vsel %vm1495, %v1309, 0.0
      %v1536 = vsel %vm1491, %v1310, 0.0
      %v1537 = vsel %vm1492, %v1311, 0.0
      %v1538 = vsel %vm1493, %v1312, 0.0
      %v1539 = vsel %vm1494, %v1313, 0.0
      %v1540 = vsel %vm1495, %v1314, 0.0
      %v1541 = vsel %vm1491, %v1315, 0.0
      %v1542 = vsel %vm1492, %v1316, 0.0
      %v1543 = vsel %vm1493, %v1317, 0.0
      %v1544 = vsel %vm1494, %v1318, 0.0
      %v1545 = vsel %vm1495, %v1319, 0.0
      %v1546 = vsel %vm1491, %v1320, 0.0
      %v1547 = vsel %vm1492, %v1321, 0.0
      %v1548 = vsel %vm1493, %v1322, 0.0
      %v1549 = vsel %vm1494, %v1323, 0.0
      %v1550 = vsel %vm1495, %v1324, 0.0
      %v1551 = vsel %vm1491, %v1325, 0.0
      %v1552 = vsel %vm1492, %v1326, 0.0
      %v1553 = vsel %vm1493, %v1327, 0.0
      %v1554 = vsel %vm1494, %v1328, 0.0
      %v1555 = vsel %vm1495, %v1329, 0.0
      %v1556 = vsel %vm1491, %v1330, 0.0
      %v1557 = vsel %vm1492, %v1331, 0.0
      %v1558 = vsel %vm1493, %v1332, 0.0
      %v1559 = vsel %vm1494, %v1333, 0.0
      %v1560 = vsel %vm1495, %v1334, 0.0
      %v1561 = vsel %vm1491, %v1335, 0.0
      %v1562 = vsel %vm1492, %v1336, 0.0
      %v1563 = vsel %vm1493, %v1337, 0.0
      %v1564 = vsel %vm1494, %v1338, 0.0
      %v1565 = vsel %vm1495, %v1339, 0.0
      %v1566 = vsel %vm1491, %v1340, 0.0
      %v1567 = vsel %vm1492, %v1341, 0.0
      %v1568 = vsel %vm1493, %v1342, 0.0
      %v1569 = vsel %vm1494, %v1343, 0.0
      %v1570 = vsel %vm1495, %v1344, 0.0
      %v1571 = vsel %vm1491, %v1345, 0.0
      %v1572 = vsel %vm1492, %v1346, 0.0
      %v1573 = vsel %vm1493, %v1347, 0.0
      %v1574 = vsel %vm1494, %v1348, 0.0
      %v1575 = vsel %vm1495, %v1349, 0.0
      %v1576 = vsel %vm1491, %v1350, 0.0
      %v1577 = vsel %vm1492, %v1351, 0.0
      %v1578 = vsel %vm1493, %v1352, 0.0
      %v1579 = vsel %vm1494, %v1353, 0.0
      %v1580 = vsel %vm1495, %v1354, 0.0
      %v1581 = vsel %vm1491, %v1355, 0.0
      %v1582 = vsel %vm1492, %v1356, 0.0
      %v1583 = vsel %vm1493, %v1357, 0.0
      %v1584 = vsel %vm1494, %v1358, 0.0
      %v1585 = vsel %vm1495, %v1359, 0.0
      %v1586 = vsel %vm1491, %v1360, 0.0
      %v1587 = vsel %vm1492, %v1361, 0.0
      %v1588 = vsel %vm1493, %v1362, 0.0
      %v1589 = vsel %vm1494, %v1363, 0.0
      %v1590 = vsel %vm1495, %v1364, 0.0
      %v1591 = vsel %vm1491, %v1365, 0.0
      %v1592 = vsel %vm1492, %v1366, 0.0
      %v1593 = vsel %vm1493, %v1367, 0.0
      %v1594 = vsel %vm1494, %v1368, 0.0
      %v1595 = vsel %vm1495, %v1369, 0.0
      %v1596 = vsel %vm1491, %v1370, 0.0
      %v1597 = vsel %vm1492, %v1371, 0.0
      %v1598 = vsel %vm1493, %v1372, 0.0
      %v1599 = vsel %vm1494, %v1373, 0.0
      %v1600 = vsel %vm1495, %v1374, 0.0
      %v1601 = vsel %vm1491, %v1375, 0.0
      %v1602 = vsel %vm1492, %v1376, 0.0
      %v1603 = vsel %vm1493, %v1377, 0.0
      %v1604 = vsel %vm1494, %v1378, 0.0
      %v1605 = vsel %vm1495, %v1379, 0.0
      %v1606 = vsel %vm1491, %v1380, 0.0
      %v1607 = vsel %vm1492, %v1381, 0.0
      %v1608 = vsel %vm1493, %v1382, 0.0
      %v1609 = vsel %vm1494, %v1383, 0.0
      %v1610 = vsel %vm1495, %v1384, 0.0
      %v1611 = vsel %vm1491, %v1385, 0.0
      %v1612 = vsel %vm1492, %v1386, 0.0
      %v1613 = vsel %vm1493, %v1387, 0.0
      %v1614 = vsel %vm1494, %v1388, 0.0
      %v1615 = vsel %vm1495, %v1389, 0.0
      %v1616 = vsel %vm1491, %v1390, 0.0
      %v1617 = vsel %vm1492, %v1391, 0.0
      %v1618 = vsel %vm1493, %v1392, 0.0
      %v1619 = vsel %vm1494, %v1393, 0.0
      %v1620 = vsel %vm1495, %v1394, 0.0
      %v1621 = vsel %vm1491, %v1395, 0.0
      %v1622 = vsel %vm1492, %v1396, 0.0
      %v1623 = vsel %vm1493, %v1397, 0.0
      %v1624 = vsel %vm1494, %v1398, 0.0
      %v1625 = vsel %vm1495, %v1399, 0.0
      %v1626 = vsel %vm1491, %v1400, 0.0
      %v1627 = vsel %vm1492, %v1401, 0.0
      %v1628 = vsel %vm1493, %v1402, 0.0
      %v1629 = vsel %vm1494, %v1403, 0.0
      %v1630 = vsel %vm1495, %v1404, 0.0
      %v1631 = vsel %vm1491, %v1405, 0.0
      %v1632 = vsel %vm1492, %v1406, 0.0
      %v1633 = vsel %vm1493, %v1407, 0.0
      %v1634 = vsel %vm1494, %v1408, 0.0
      %v1635 = vsel %vm1495, %v1409, 0.0
      %v1636 = vsel %vm1491, %v1410, 0.0
      %v1637 = vsel %vm1492, %v1411, 0.0
      %v1638 = vsel %vm1493, %v1412, 0.0
      %v1639 = vsel %vm1494, %v1413, 0.0
      %v1640 = vsel %vm1495, %v1414, 0.0
      %v1641 = vsel %vm1491, %v1415, 0.0
      %v1642 = vsel %vm1492, %v1416, 0.0
      %v1643 = vsel %vm1493, %v1417, 0.0
      %v1644 = vsel %vm1494, %v1418, 0.0
      %v1645 = vsel %vm1495, %v1419, 0.0
      %v1646 = vsel %vm1491, %v1420, 0.0
      %v1647 = vsel %vm1492, %v1421, 0.0
      %v1648 = vsel %vm1493, %v1422, 0.0
      %v1649 = vsel %vm1494, %v1423, 0.0
      %v1650 = vsel %vm1495, %v1424, 0.0
      %v1651 = vsel %vm1491, %v1425, 0.0
      %v1652 = vsel %vm1492, %v1426, 0.0
      %v1653 = vsel %vm1493, %v1427, 0.0
      %v1654 = vsel %vm1494, %v1428, 0.0
      %v1655 = vsel %vm1495, %v1429, 0.0
      %v1656 = vsel %vm1491, %v1430, 0.0
      %v1657 = vsel %vm1492, %v1431, 0.0
      %v1658 = vsel %vm1493, %v1432, 0.0
      %v1659 = vsel %vm1494, %v1433, 0.0
      %v1660 = vsel %vm1495, %v1434, 0.0
      %v1661 = vsel %vm1486, %v1435, 0.0
      %v1662 = vsel %vm1487, %v1436, 0.0
      %v1663 = vsel %vm1488, %v1437, 0.0
      %v1664 = vsel %vm1489, %v1438, 0.0
      %v1665 = vsel %vm1490, %v1439, 0.0
      %v1666 = vpack.c.bf16 %v1497, %v1496
      %v1667 = vpack.c.bf16 %v1499, %v1498
      %v1668 = vpack.c.bf16 %v1500, %v1500
      %v1669 = vpack.c.bf16 %v1502, %v1501
      %v1670 = vpack.c.bf16 %v1504, %v1503
      %v1671 = vpack.c.bf16 %v1505, %v1505
      %v1672 = vpack.c.bf16 %v1507, %v1506
      %v1673 = vpack.c.bf16 %v1509, %v1508
      %v1674 = vpack.c.bf16 %v1510, %v1510
      %v1675 = vpack.c.bf16 %v1512, %v1511
      %v1676 = vpack.c.bf16 %v1514, %v1513
      %v1677 = vpack.c.bf16 %v1515, %v1515
      %v1678 = vpack.c.bf16 %v1517, %v1516
      %v1679 = vpack.c.bf16 %v1519, %v1518
      %v1680 = vpack.c.bf16 %v1520, %v1520
      %v1681 = vpack.c.bf16 %v1522, %v1521
      %v1682 = vpack.c.bf16 %v1524, %v1523
      %v1683 = vpack.c.bf16 %v1525, %v1525
      %v1684 = vpack.c.bf16 %v1527, %v1526
      %v1685 = vpack.c.bf16 %v1529, %v1528
      %v1686 = vpack.c.bf16 %v1530, %v1530
      %v1687 = vpack.c.bf16 %v1532, %v1531
      %v1688 = vpack.c.bf16 %v1534, %v1533
      %v1689 = vpack.c.bf16 %v1535, %v1535
      %v1690 = vpack.c.bf16 %v1537, %v1536
      %v1691 = vpack.c.bf16 %v1539, %v1538
      %v1692 = vpack.c.bf16 %v1540, %v1540
      %v1693 = vpack.c.bf16 %v1542, %v1541
      %v1694 = vpack.c.bf16 %v1544, %v1543
      %v1695 = vpack.c.bf16 %v1545, %v1545
      %v1696 = vpack.c.bf16 %v1547, %v1546
      %v1697 = vpack.c.bf16 %v1549, %v1548
      %v1698 = vpack.c.bf16 %v1550, %v1550
      %v1699 = vpack.c.bf16 %v1552, %v1551
      %v1700 = vpack.c.bf16 %v1554, %v1553
      %v1701 = vpack.c.bf16 %v1555, %v1555
      %v1702 = vpack.c.bf16 %v1557, %v1556
      %v1703 = vpack.c.bf16 %v1559, %v1558
      %v1704 = vpack.c.bf16 %v1560, %v1560
      %v1705 = vpack.c.bf16 %v1562, %v1561
      %v1706 = vpack.c.bf16 %v1564, %v1563
      %v1707 = vpack.c.bf16 %v1565, %v1565
      %v1708 = vpack.c.bf16 %v1567, %v1566
      %v1709 = vpack.c.bf16 %v1569, %v1568
      %v1710 = vpack.c.bf16 %v1570, %v1570
      %v1711 = vpack.c.bf16 %v1572, %v1571
      %v1712 = vpack.c.bf16 %v1574, %v1573
      %v1713 = vpack.c.bf16 %v1575, %v1575
      %v1714 = vpack.c.bf16 %v1577, %v1576
      %v1715 = vpack.c.bf16 %v1579, %v1578
      %v1716 = vpack.c.bf16 %v1580, %v1580
      %v1717 = vpack.c.bf16 %v1582, %v1581
      %v1718 = vpack.c.bf16 %v1584, %v1583
      %v1719 = vpack.c.bf16 %v1585, %v1585
      %v1720 = vpack.c.bf16 %v1587, %v1586
      %v1721 = vpack.c.bf16 %v1589, %v1588
      %v1722 = vpack.c.bf16 %v1590, %v1590
      %v1723 = vpack.c.bf16 %v1592, %v1591
      %v1724 = vpack.c.bf16 %v1594, %v1593
      %v1725 = vpack.c.bf16 %v1595, %v1595
      %v1726 = vpack.c.bf16 %v1597, %v1596
      %v1727 = vpack.c.bf16 %v1599, %v1598
      %v1728 = vpack.c.bf16 %v1600, %v1600
      %v1729 = vpack.c.bf16 %v1602, %v1601
      %v1730 = vpack.c.bf16 %v1604, %v1603
      %v1731 = vpack.c.bf16 %v1605, %v1605
      %v1732 = vpack.c.bf16 %v1607, %v1606
      %v1733 = vpack.c.bf16 %v1609, %v1608
      %v1734 = vpack.c.bf16 %v1610, %v1610
      %v1735 = vpack.c.bf16 %v1612, %v1611
      %v1736 = vpack.c.bf16 %v1614, %v1613
      %v1737 = vpack.c.bf16 %v1615, %v1615
      %v1738 = vpack.c.bf16 %v1617, %v1616
      %v1739 = vpack.c.bf16 %v1619, %v1618
      %v1740 = vpack.c.bf16 %v1620, %v1620
      %v1741 = vpack.c.bf16 %v1622, %v1621
      %v1742 = vpack.c.bf16 %v1624, %v1623
      %v1743 = vpack.c.bf16 %v1625, %v1625
      %v1744 = vpack.c.bf16 %v1627, %v1626
      %v1745 = vpack.c.bf16 %v1629, %v1628
      %v1746 = vpack.c.bf16 %v1630, %v1630
      %v1747 = vpack.c.bf16 %v1632, %v1631
      %v1748 = vpack.c.bf16 %v1634, %v1633
      %v1749 = vpack.c.bf16 %v1635, %v1635
      %v1750 = vpack.c.bf16 %v1637, %v1636
      %v1751 = vpack.c.bf16 %v1639, %v1638
      %v1752 = vpack.c.bf16 %v1640, %v1640
      %v1753 = vpack.c.bf16 %v1642, %v1641
      %v1754 = vpack.c.bf16 %v1644, %v1643
      %v1755 = vpack.c.bf16 %v1645, %v1645
      %v1756 = vpack.c.bf16 %v1647, %v1646
      %v1757 = vpack.c.bf16 %v1649, %v1648
      %v1758 = vpack.c.bf16 %v1650, %v1650
      %v1759 = vpack.c.bf16 %v1652, %v1651
      %v1760 = vpack.c.bf16 %v1654, %v1653
      %v1761 = vpack.c.bf16 %v1655, %v1655
      %v1762 = vpack.c.bf16 %v1657, %v1656
      %v1763 = vpack.c.bf16 %v1659, %v1658
      %v1764 = vpack.c.bf16 %v1660, %v1660
      %v1765 = vpack.c.bf16 %v1662, %v1661
      %v1766 = vpack.c.bf16 %v1664, %v1663
      %v1767 = vpack.c.bf16 %v1665, %v1665
      %vm1768 = vsmask.f32 7424
      %v1770 = vshrl.u32 %v1666, 16
      %v1772 = vshll.u32 %v1666, 16
      %v1774 = vrot.slane %v1772, 1
      %v1775 = vor.u32 %v1770, %v1774
      %v1777 = vshll.u32 %v1667, 16
      %v1779 = vrot.slane %v1777, 1
      %v1780 = vsel %vm1768, %v1775, %v1779
      %v1781 = vshrl.u32 %v1667, 16
      %v1783 = vor.u32 %v1781, %v1779
      %v1785 = vshll.u32 %v1668, 16
      %v1787 = vrot.slane %v1785, 1
      %v1788 = vsel %vm1768, %v1783, %v1787
      %v1790 = vshrl.u32 %v1669, 16
      %v1792 = vshll.u32 %v1669, 16
      %v1794 = vrot.slane %v1792, 1
      %v1795 = vor.u32 %v1790, %v1794
      %v1797 = vshll.u32 %v1670, 16
      %v1799 = vrot.slane %v1797, 1
      %v1800 = vsel %vm1768, %v1795, %v1799
      %v1801 = vshrl.u32 %v1670, 16
      %v1803 = vor.u32 %v1801, %v1799
      %v1805 = vshll.u32 %v1671, 16
      %v1807 = vrot.slane %v1805, 1
      %v1808 = vsel %vm1768, %v1803, %v1807
      %v1810 = vshrl.u32 %v1672, 16
      %v1812 = vshll.u32 %v1672, 16
      %v1814 = vrot.slane %v1812, 1
      %v1815 = vor.u32 %v1810, %v1814
      %v1817 = vshll.u32 %v1673, 16
      %v1819 = vrot.slane %v1817, 1
      %v1820 = vsel %vm1768, %v1815, %v1819
      %v1821 = vshrl.u32 %v1673, 16
      %v1823 = vor.u32 %v1821, %v1819
      %v1825 = vshll.u32 %v1674, 16
      %v1827 = vrot.slane %v1825, 1
      %v1828 = vsel %vm1768, %v1823, %v1827
      %v1830 = vshrl.u32 %v1675, 16
      %v1832 = vshll.u32 %v1675, 16
      %v1834 = vrot.slane %v1832, 1
      %v1835 = vor.u32 %v1830, %v1834
      %v1837 = vshll.u32 %v1676, 16
      %v1839 = vrot.slane %v1837, 1
      %v1840 = vsel %vm1768, %v1835, %v1839
      %v1841 = vshrl.u32 %v1676, 16
      %v1843 = vor.u32 %v1841, %v1839
      %v1845 = vshll.u32 %v1677, 16
      %v1847 = vrot.slane %v1845, 1
      %v1848 = vsel %vm1768, %v1843, %v1847
      %v1850 = vshrl.u32 %v1678, 16
      %v1852 = vshll.u32 %v1678, 16
      %v1854 = vrot.slane %v1852, 1
      %v1855 = vor.u32 %v1850, %v1854
      %v1857 = vshll.u32 %v1679, 16
      %v1859 = vrot.slane %v1857, 1
      %v1860 = vsel %vm1768, %v1855, %v1859
      %v1861 = vshrl.u32 %v1679, 16
      %v1863 = vor.u32 %v1861, %v1859
      %v1865 = vshll.u32 %v1680, 16
      %v1867 = vrot.slane %v1865, 1
      %v1868 = vsel %vm1768, %v1863, %v1867
      %v1870 = vshrl.u32 %v1681, 16
      %v1872 = vshll.u32 %v1681, 16
      %v1874 = vrot.slane %v1872, 1
      %v1875 = vor.u32 %v1870, %v1874
      %v1877 = vshll.u32 %v1682, 16
      %v1879 = vrot.slane %v1877, 1
      %v1880 = vsel %vm1768, %v1875, %v1879
      %v1881 = vshrl.u32 %v1682, 16
      %v1883 = vor.u32 %v1881, %v1879
      %v1885 = vshll.u32 %v1683, 16
      %v1887 = vrot.slane %v1885, 1
      %v1888 = vsel %vm1768, %v1883, %v1887
      %v1890 = vshrl.u32 %v1684, 16
      %v1892 = vshll.u32 %v1684, 16
      %v1894 = vrot.slane %v1892, 1
      %v1895 = vor.u32 %v1890, %v1894
      %v1897 = vshll.u32 %v1685, 16
      %v1899 = vrot.slane %v1897, 1
      %v1900 = vsel %vm1768, %v1895, %v1899
      %v1901 = vshrl.u32 %v1685, 16
      %v1903 = vor.u32 %v1901, %v1899
      %v1905 = vshll.u32 %v1686, 16
      %v1907 = vrot.slane %v1905, 1
      %v1908 = vsel %vm1768, %v1903, %v1907
      %v1910 = vshrl.u32 %v1687, 16
      %v1912 = vshll.u32 %v1687, 16
      %v1914 = vrot.slane %v1912, 1
      %v1915 = vor.u32 %v1910, %v1914
      %v1917 = vshll.u32 %v1688, 16
      %v1919 = vrot.slane %v1917, 1
      %v1920 = vsel %vm1768, %v1915, %v1919
      %v1921 = vshrl.u32 %v1688, 16
      %v1923 = vor.u32 %v1921, %v1919
      %v1925 = vshll.u32 %v1689, 16
      %v1927 = vrot.slane %v1925, 1
      %v1928 = vsel %vm1768, %v1923, %v1927
      %v1930 = vshrl.u32 %v1690, 16
      %v1932 = vshll.u32 %v1690, 16
      %v1934 = vrot.slane %v1932, 1
      %v1935 = vor.u32 %v1930, %v1934
      %v1937 = vshll.u32 %v1691, 16
      %v1939 = vrot.slane %v1937, 1
      %v1940 = vsel %vm1768, %v1935, %v1939
      %v1941 = vshrl.u32 %v1691, 16
      %v1943 = vor.u32 %v1941, %v1939
      %v1945 = vshll.u32 %v1692, 16
      %v1947 = vrot.slane %v1945, 1
      %v1948 = vsel %vm1768, %v1943, %v1947
      %v1950 = vshrl.u32 %v1693, 16
      %v1952 = vshll.u32 %v1693, 16
      %v1954 = vrot.slane %v1952, 1
      %v1955 = vor.u32 %v1950, %v1954
      %v1957 = vshll.u32 %v1694, 16
      %v1959 = vrot.slane %v1957, 1
      %v1960 = vsel %vm1768, %v1955, %v1959
      %v1961 = vshrl.u32 %v1694, 16
      %v1963 = vor.u32 %v1961, %v1959
      %v1965 = vshll.u32 %v1695, 16
      %v1967 = vrot.slane %v1965, 1
      %v1968 = vsel %vm1768, %v1963, %v1967
      %v1970 = vshrl.u32 %v1696, 16
      %v1972 = vshll.u32 %v1696, 16
      %v1974 = vrot.slane %v1972, 1
      %v1975 = vor.u32 %v1970, %v1974
      %v1977 = vshll.u32 %v1697, 16
      %v1979 = vrot.slane %v1977, 1
      %v1980 = vsel %vm1768, %v1975, %v1979
      %v1981 = vshrl.u32 %v1697, 16
      %v1983 = vor.u32 %v1981, %v1979
      %v1985 = vshll.u32 %v1698, 16
      %v1987 = vrot.slane %v1985, 1
      %v1988 = vsel %vm1768, %v1983, %v1987
      %v1990 = vshrl.u32 %v1699, 16
      %v1992 = vshll.u32 %v1699, 16
      %v1994 = vrot.slane %v1992, 1
      %v1995 = vor.u32 %v1990, %v1994
      %v1997 = vshll.u32 %v1700, 16
      %v1999 = vrot.slane %v1997, 1
      %v2000 = vsel %vm1768, %v1995, %v1999
      %v2001 = vshrl.u32 %v1700, 16
      %v2003 = vor.u32 %v2001, %v1999
      %v2005 = vshll.u32 %v1701, 16
      %v2007 = vrot.slane %v2005, 1
      %v2008 = vsel %vm1768, %v2003, %v2007
      %v2010 = vshrl.u32 %v1702, 16
      %v2012 = vshll.u32 %v1702, 16
      %v2014 = vrot.slane %v2012, 1
      %v2015 = vor.u32 %v2010, %v2014
      %v2017 = vshll.u32 %v1703, 16
      %v2019 = vrot.slane %v2017, 1
      %v2020 = vsel %vm1768, %v2015, %v2019
      %v2021 = vshrl.u32 %v1703, 16
      %v2023 = vor.u32 %v2021, %v2019
      %v2025 = vshll.u32 %v1704, 16
      %v2027 = vrot.slane %v2025, 1
      %v2028 = vsel %vm1768, %v2023, %v2027
      %v2030 = vshrl.u32 %v1705, 16
      %v2032 = vshll.u32 %v1705, 16
      %v2034 = vrot.slane %v2032, 1
      %v2035 = vor.u32 %v2030, %v2034
      %v2037 = vshll.u32 %v1706, 16
      %v2039 = vrot.slane %v2037, 1
      %v2040 = vsel %vm1768, %v2035, %v2039
      %v2041 = vshrl.u32 %v1706, 16
      %v2043 = vor.u32 %v2041, %v2039
      %v2045 = vshll.u32 %v1707, 16
      %v2047 = vrot.slane %v2045, 1
      %v2048 = vsel %vm1768, %v2043, %v2047
      %v2050 = vshrl.u32 %v1708, 16
      %v2052 = vshll.u32 %v1708, 16
      %v2054 = vrot.slane %v2052, 1
      %v2055 = vor.u32 %v2050, %v2054
      %v2057 = vshll.u32 %v1709, 16
      %v2059 = vrot.slane %v2057, 1
      %v2060 = vsel %vm1768, %v2055, %v2059
      %v2061 = vshrl.u32 %v1709, 16
      %v2063 = vor.u32 %v2061, %v2059
      %v2065 = vshll.u32 %v1710, 16
      %v2067 = vrot.slane %v2065, 1
      %v2068 = vsel %vm1768, %v2063, %v2067
      %v2070 = vshrl.u32 %v1711, 16
      %v2072 = vshll.u32 %v1711, 16
      %v2074 = vrot.slane %v2072, 1
      %v2075 = vor.u32 %v2070, %v2074
      %v2077 = vshll.u32 %v1712, 16
      %v2079 = vrot.slane %v2077, 1
      %v2080 = vsel %vm1768, %v2075, %v2079
      %v2081 = vshrl.u32 %v1712, 16
      %v2083 = vor.u32 %v2081, %v2079
      %v2085 = vshll.u32 %v1713, 16
      %v2087 = vrot.slane %v2085, 1
      %v2088 = vsel %vm1768, %v2083, %v2087
      %v2090 = vshrl.u32 %v1714, 16
      %v2092 = vshll.u32 %v1714, 16
      %v2094 = vrot.slane %v2092, 1
      %v2095 = vor.u32 %v2090, %v2094
      %v2097 = vshll.u32 %v1715, 16
      %v2099 = vrot.slane %v2097, 1
      %v2100 = vsel %vm1768, %v2095, %v2099
      %v2101 = vshrl.u32 %v1715, 16
      %v2103 = vor.u32 %v2101, %v2099
      %v2105 = vshll.u32 %v1716, 16
      %v2107 = vrot.slane %v2105, 1
      %v2108 = vsel %vm1768, %v2103, %v2107
      %v2110 = vshrl.u32 %v1717, 16
      %v2112 = vshll.u32 %v1717, 16
      %v2114 = vrot.slane %v2112, 1
      %v2115 = vor.u32 %v2110, %v2114
      %v2117 = vshll.u32 %v1718, 16
      %v2119 = vrot.slane %v2117, 1
      %v2120 = vsel %vm1768, %v2115, %v2119
      %v2121 = vshrl.u32 %v1718, 16
      %v2123 = vor.u32 %v2121, %v2119
      %v2125 = vshll.u32 %v1719, 16
      %v2127 = vrot.slane %v2125, 1
      %v2128 = vsel %vm1768, %v2123, %v2127
      %v2130 = vshrl.u32 %v1720, 16
      %v2132 = vshll.u32 %v1720, 16
      %v2134 = vrot.slane %v2132, 1
      %v2135 = vor.u32 %v2130, %v2134
      %v2137 = vshll.u32 %v1721, 16
      %v2139 = vrot.slane %v2137, 1
      %v2140 = vsel %vm1768, %v2135, %v2139
      %v2141 = vshrl.u32 %v1721, 16
      %v2143 = vor.u32 %v2141, %v2139
      %v2145 = vshll.u32 %v1722, 16
      %v2147 = vrot.slane %v2145, 1
      %v2148 = vsel %vm1768, %v2143, %v2147
      %v2150 = vshrl.u32 %v1723, 16
      %v2152 = vshll.u32 %v1723, 16
      %v2154 = vrot.slane %v2152, 1
      %v2155 = vor.u32 %v2150, %v2154
      %v2157 = vshll.u32 %v1724, 16
      %v2159 = vrot.slane %v2157, 1
      %v2160 = vsel %vm1768, %v2155, %v2159
      %v2161 = vshrl.u32 %v1724, 16
      %v2163 = vor.u32 %v2161, %v2159
      %v2165 = vshll.u32 %v1725, 16
      %v2167 = vrot.slane %v2165, 1
      %v2168 = vsel %vm1768, %v2163, %v2167
      %v2170 = vshrl.u32 %v1726, 16
      %v2172 = vshll.u32 %v1726, 16
      %v2174 = vrot.slane %v2172, 1
      %v2175 = vor.u32 %v2170, %v2174
      %v2177 = vshll.u32 %v1727, 16
      %v2179 = vrot.slane %v2177, 1
      %v2180 = vsel %vm1768, %v2175, %v2179
      %v2181 = vshrl.u32 %v1727, 16
      %v2183 = vor.u32 %v2181, %v2179
      %v2185 = vshll.u32 %v1728, 16
      %v2187 = vrot.slane %v2185, 1
      %v2188 = vsel %vm1768, %v2183, %v2187
      %v2190 = vshrl.u32 %v1729, 16
      %v2192 = vshll.u32 %v1729, 16
      %v2194 = vrot.slane %v2192, 1
      %v2195 = vor.u32 %v2190, %v2194
      %v2197 = vshll.u32 %v1730, 16
      %v2199 = vrot.slane %v2197, 1
      %v2200 = vsel %vm1768, %v2195, %v2199
      %v2201 = vshrl.u32 %v1730, 16
      %v2203 = vor.u32 %v2201, %v2199
      %v2205 = vshll.u32 %v1731, 16
      %v2207 = vrot.slane %v2205, 1
      %v2208 = vsel %vm1768, %v2203, %v2207
      %v2210 = vshrl.u32 %v1732, 16
      %v2212 = vshll.u32 %v1732, 16
      %v2214 = vrot.slane %v2212, 1
      %v2215 = vor.u32 %v2210, %v2214
      %v2217 = vshll.u32 %v1733, 16
      %v2219 = vrot.slane %v2217, 1
      %v2220 = vsel %vm1768, %v2215, %v2219
      %v2221 = vshrl.u32 %v1733, 16
      %v2223 = vor.u32 %v2221, %v2219
      %v2225 = vshll.u32 %v1734, 16
      %v2227 = vrot.slane %v2225, 1
      %v2228 = vsel %vm1768, %v2223, %v2227
      %v2230 = vshrl.u32 %v1735, 16
      %v2232 = vshll.u32 %v1735, 16
      %v2234 = vrot.slane %v2232, 1
      %v2235 = vor.u32 %v2230, %v2234
      %v2237 = vshll.u32 %v1736, 16
      %v2239 = vrot.slane %v2237, 1
      %v2240 = vsel %vm1768, %v2235, %v2239
      %v2241 = vshrl.u32 %v1736, 16
      %v2243 = vor.u32 %v2241, %v2239
      %v2245 = vshll.u32 %v1737, 16
      %v2247 = vrot.slane %v2245, 1
      %v2248 = vsel %vm1768, %v2243, %v2247
      %v2250 = vshrl.u32 %v1738, 16
      %v2252 = vshll.u32 %v1738, 16
      %v2254 = vrot.slane %v2252, 1
      %v2255 = vor.u32 %v2250, %v2254
      %v2257 = vshll.u32 %v1739, 16
      %v2259 = vrot.slane %v2257, 1
      %v2260 = vsel %vm1768, %v2255, %v2259
      %v2261 = vshrl.u32 %v1739, 16
      %v2263 = vor.u32 %v2261, %v2259
      %v2265 = vshll.u32 %v1740, 16
      %v2267 = vrot.slane %v2265, 1
      %v2268 = vsel %vm1768, %v2263, %v2267
      %v2270 = vshrl.u32 %v1741, 16
      %v2272 = vshll.u32 %v1741, 16
      %v2274 = vrot.slane %v2272, 1
      %v2275 = vor.u32 %v2270, %v2274
      %v2277 = vshll.u32 %v1742, 16
      %v2279 = vrot.slane %v2277, 1
      %v2280 = vsel %vm1768, %v2275, %v2279
      %v2281 = vshrl.u32 %v1742, 16
      %v2283 = vor.u32 %v2281, %v2279
      %v2285 = vshll.u32 %v1743, 16
      %v2287 = vrot.slane %v2285, 1
      %v2288 = vsel %vm1768, %v2283, %v2287
      %v2290 = vshrl.u32 %v1744, 16
      %v2292 = vshll.u32 %v1744, 16
      %v2294 = vrot.slane %v2292, 1
      %v2295 = vor.u32 %v2290, %v2294
      %v2297 = vshll.u32 %v1745, 16
      %v2299 = vrot.slane %v2297, 1
      %v2300 = vsel %vm1768, %v2295, %v2299
      %v2301 = vshrl.u32 %v1745, 16
      %v2303 = vor.u32 %v2301, %v2299
      %v2305 = vshll.u32 %v1746, 16
      %v2307 = vrot.slane %v2305, 1
      %v2308 = vsel %vm1768, %v2303, %v2307
      %v2310 = vshrl.u32 %v1747, 16
      %v2312 = vshll.u32 %v1747, 16
      %v2314 = vrot.slane %v2312, 1
      %v2315 = vor.u32 %v2310, %v2314
      %v2317 = vshll.u32 %v1748, 16
      %v2319 = vrot.slane %v2317, 1
      %v2320 = vsel %vm1768, %v2315, %v2319
      %v2321 = vshrl.u32 %v1748, 16
      %v2323 = vor.u32 %v2321, %v2319
      %v2325 = vshll.u32 %v1749, 16
      %v2327 = vrot.slane %v2325, 1
      %v2328 = vsel %vm1768, %v2323, %v2327
      %v2330 = vshrl.u32 %v1750, 16
      %v2332 = vshll.u32 %v1750, 16
      %v2334 = vrot.slane %v2332, 1
      %v2335 = vor.u32 %v2330, %v2334
      %v2337 = vshll.u32 %v1751, 16
      %v2339 = vrot.slane %v2337, 1
      %v2340 = vsel %vm1768, %v2335, %v2339
      %v2341 = vshrl.u32 %v1751, 16
      %v2343 = vor.u32 %v2341, %v2339
      %v2345 = vshll.u32 %v1752, 16
      %v2347 = vrot.slane %v2345, 1
      %v2348 = vsel %vm1768, %v2343, %v2347
      %v2350 = vshrl.u32 %v1753, 16
      %v2352 = vshll.u32 %v1753, 16
      %v2354 = vrot.slane %v2352, 1
      %v2355 = vor.u32 %v2350, %v2354
      %v2357 = vshll.u32 %v1754, 16
      %v2359 = vrot.slane %v2357, 1
      %v2360 = vsel %vm1768, %v2355, %v2359
      %v2361 = vshrl.u32 %v1754, 16
      %v2363 = vor.u32 %v2361, %v2359
      %v2365 = vshll.u32 %v1755, 16
      %v2367 = vrot.slane %v2365, 1
      %v2368 = vsel %vm1768, %v2363, %v2367
      %v2370 = vshrl.u32 %v1756, 16
      %v2372 = vshll.u32 %v1756, 16
      %v2374 = vrot.slane %v2372, 1
      %v2375 = vor.u32 %v2370, %v2374
      %v2377 = vshll.u32 %v1757, 16
      %v2379 = vrot.slane %v2377, 1
      %v2380 = vsel %vm1768, %v2375, %v2379
      %v2381 = vshrl.u32 %v1757, 16
      %v2383 = vor.u32 %v2381, %v2379
      %v2385 = vshll.u32 %v1758, 16
      %v2387 = vrot.slane %v2385, 1
      %v2388 = vsel %vm1768, %v2383, %v2387
      %v2390 = vshrl.u32 %v1759, 16
      %v2392 = vshll.u32 %v1759, 16
      %v2394 = vrot.slane %v2392, 1
      %v2395 = vor.u32 %v2390, %v2394
      %v2397 = vshll.u32 %v1760, 16
      %v2399 = vrot.slane %v2397, 1
      %v2400 = vsel %vm1768, %v2395, %v2399
      %v2401 = vshrl.u32 %v1760, 16
      %v2403 = vor.u32 %v2401, %v2399
      %v2405 = vshll.u32 %v1761, 16
      %v2407 = vrot.slane %v2405, 1
      %v2408 = vsel %vm1768, %v2403, %v2407
      %vm2505 = vcmask 1046528
      %v2506 = vrot.slane %v1666, 1
      %v2507 = vrot.slane %v1667, 1
      %v2508 = vsel %vm2505, %v2506, %v2507
      %v2509 = vrot.slane %v1668, 1
      %v2510 = vsel %vm2505, %v2507, %v2509
      %v2511 = vrot.slane %v1669, 1
      %v2512 = vrot.slane %v1670, 1
      %v2513 = vsel %vm2505, %v2511, %v2512
      %v2514 = vrot.slane %v1671, 1
      %v2515 = vsel %vm2505, %v2512, %v2514
      %v2516 = vrot.slane %v1672, 1
      %v2517 = vrot.slane %v1673, 1
      %v2518 = vsel %vm2505, %v2516, %v2517
      %v2519 = vrot.slane %v1674, 1
      %v2520 = vsel %vm2505, %v2517, %v2519
      %v2521 = vrot.slane %v1675, 1
      %v2522 = vrot.slane %v1676, 1
      %v2523 = vsel %vm2505, %v2521, %v2522
      %v2524 = vrot.slane %v1677, 1
      %v2525 = vsel %vm2505, %v2522, %v2524
      %v2526 = vrot.slane %v1678, 1
      %v2527 = vrot.slane %v1679, 1
      %v2528 = vsel %vm2505, %v2526, %v2527
      %v2529 = vrot.slane %v1680, 1
      %v2530 = vsel %vm2505, %v2527, %v2529
      %v2531 = vrot.slane %v1681, 1
      %v2532 = vrot.slane %v1682, 1
      %v2533 = vsel %vm2505, %v2531, %v2532
      %v2534 = vrot.slane %v1683, 1
      %v2535 = vsel %vm2505, %v2532, %v2534
      %v2536 = vrot.slane %v1684, 1
      %v2537 = vrot.slane %v1685, 1
      %v2538 = vsel %vm2505, %v2536, %v2537
      %v2539 = vrot.slane %v1686, 1
      %v2540 = vsel %vm2505, %v2537, %v2539
      %v2541 = vrot.slane %v1687, 1
      %v2542 = vrot.slane %v1688, 1
      %v2543 = vsel %vm2505, %v2541, %v2542
      %v2544 = vrot.slane %v1689, 1
      %v2545 = vsel %vm2505, %v2542, %v2544
      %v2546 = vrot.slane %v1690, 1
      %v2547 = vrot.slane %v1691, 1
      %v2548 = vsel %vm2505, %v2546, %v2547
      %v2549 = vrot.slane %v1692, 1
      %v2550 = vsel %vm2505, %v2547, %v2549
      %v2551 = vrot.slane %v1693, 1
      %v2552 = vrot.slane %v1694, 1
      %v2553 = vsel %vm2505, %v2551, %v2552
      %v2554 = vrot.slane %v1695, 1
      %v2555 = vsel %vm2505, %v2552, %v2554
      %v2556 = vrot.slane %v1696, 1
      %v2557 = vrot.slane %v1697, 1
      %v2558 = vsel %vm2505, %v2556, %v2557
      %v2559 = vrot.slane %v1698, 1
      %v2560 = vsel %vm2505, %v2557, %v2559
      %v2561 = vrot.slane %v1699, 1
      %v2562 = vrot.slane %v1700, 1
      %v2563 = vsel %vm2505, %v2561, %v2562
      %v2564 = vrot.slane %v1701, 1
      %v2565 = vsel %vm2505, %v2562, %v2564
      %v2566 = vrot.slane %v1702, 1
      %v2567 = vrot.slane %v1703, 1
      %v2568 = vsel %vm2505, %v2566, %v2567
      %v2569 = vrot.slane %v1704, 1
      %v2570 = vsel %vm2505, %v2567, %v2569
      %v2571 = vrot.slane %v1705, 1
      %v2572 = vrot.slane %v1706, 1
      %v2573 = vsel %vm2505, %v2571, %v2572
      %v2574 = vrot.slane %v1707, 1
      %v2575 = vsel %vm2505, %v2572, %v2574
      %v2576 = vrot.slane %v1708, 1
      %v2577 = vrot.slane %v1709, 1
      %v2578 = vsel %vm2505, %v2576, %v2577
      %v2579 = vrot.slane %v1710, 1
      %v2580 = vsel %vm2505, %v2577, %v2579
      %v2581 = vrot.slane %v1711, 1
      %v2582 = vrot.slane %v1712, 1
      %v2583 = vsel %vm2505, %v2581, %v2582
      %v2584 = vrot.slane %v1713, 1
      %v2585 = vsel %vm2505, %v2582, %v2584
      %v2586 = vrot.slane %v1714, 1
      %v2587 = vrot.slane %v1715, 1
      %v2588 = vsel %vm2505, %v2586, %v2587
      %v2589 = vrot.slane %v1716, 1
      %v2590 = vsel %vm2505, %v2587, %v2589
      %v2591 = vrot.slane %v1717, 1
      %v2592 = vrot.slane %v1718, 1
      %v2593 = vsel %vm2505, %v2591, %v2592
      %v2594 = vrot.slane %v1719, 1
      %v2595 = vsel %vm2505, %v2592, %v2594
      %v2596 = vrot.slane %v1720, 1
      %v2597 = vrot.slane %v1721, 1
      %v2598 = vsel %vm2505, %v2596, %v2597
      %v2599 = vrot.slane %v1722, 1
      %v2600 = vsel %vm2505, %v2597, %v2599
      %v2601 = vrot.slane %v1723, 1
      %v2602 = vrot.slane %v1724, 1
      %v2603 = vsel %vm2505, %v2601, %v2602
      %v2604 = vrot.slane %v1725, 1
      %v2605 = vsel %vm2505, %v2602, %v2604
      %v2606 = vrot.slane %v1726, 1
      %v2607 = vrot.slane %v1727, 1
      %v2608 = vsel %vm2505, %v2606, %v2607
      %v2609 = vrot.slane %v1728, 1
      %v2610 = vsel %vm2505, %v2607, %v2609
      %v2611 = vrot.slane %v1729, 1
      %v2612 = vrot.slane %v1730, 1
      %v2613 = vsel %vm2505, %v2611, %v2612
      %v2614 = vrot.slane %v1731, 1
      %v2615 = vsel %vm2505, %v2612, %v2614
      %v2616 = vrot.slane %v1732, 1
      %v2617 = vrot.slane %v1733, 1
      %v2618 = vsel %vm2505, %v2616, %v2617
      %v2619 = vrot.slane %v1734, 1
      %v2620 = vsel %vm2505, %v2617, %v2619
      %v2621 = vrot.slane %v1735, 1
      %v2622 = vrot.slane %v1736, 1
      %v2623 = vsel %vm2505, %v2621, %v2622
      %v2624 = vrot.slane %v1737, 1
      %v2625 = vsel %vm2505, %v2622, %v2624
      %v2626 = vrot.slane %v1738, 1
      %v2627 = vrot.slane %v1739, 1
      %v2628 = vsel %vm2505, %v2626, %v2627
      %v2629 = vrot.slane %v1740, 1
      %v2630 = vsel %vm2505, %v2627, %v2629
      %v2631 = vrot.slane %v1741, 1
      %v2632 = vrot.slane %v1742, 1
      %v2633 = vsel %vm2505, %v2631, %v2632
      %v2634 = vrot.slane %v1743, 1
      %v2635 = vsel %vm2505, %v2632, %v2634
      %v2636 = vrot.slane %v1744, 1
      %v2637 = vrot.slane %v1745, 1
      %v2638 = vsel %vm2505, %v2636, %v2637
      %v2639 = vrot.slane %v1746, 1
      %v2640 = vsel %vm2505, %v2637, %v2639
      %v2641 = vrot.slane %v1747, 1
      %v2642 = vrot.slane %v1748, 1
      %v2643 = vsel %vm2505, %v2641, %v2642
      %v2644 = vrot.slane %v1749, 1
      %v2645 = vsel %vm2505, %v2642, %v2644
      %v2646 = vrot.slane %v1750, 1
      %v2647 = vrot.slane %v1751, 1
      %v2648 = vsel %vm2505, %v2646, %v2647
      %v2649 = vrot.slane %v1752, 1
      %v2650 = vsel %vm2505, %v2647, %v2649
      %v2651 = vrot.slane %v1753, 1
      %v2652 = vrot.slane %v1754, 1
      %v2653 = vsel %vm2505, %v2651, %v2652
      %v2654 = vrot.slane %v1755, 1
      %v2655 = vsel %vm2505, %v2652, %v2654
      %v2656 = vrot.slane %v1756, 1
      %v2657 = vrot.slane %v1757, 1
      %v2658 = vsel %vm2505, %v2656, %v2657
      %v2659 = vrot.slane %v1758, 1
      %v2660 = vsel %vm2505, %v2657, %v2659
      %v2661 = vrot.slane %v1759, 1
      %v2662 = vrot.slane %v1760, 1
      %v2663 = vsel %vm2505, %v2661, %v2662
      %v2664 = vrot.slane %v1761, 1
      %v2665 = vsel %vm2505, %v2662, %v2664
      %v2667 = vshrl.u32 %v1762, 16
      %v2669 = vshll.u32 %v1762, 16
      %v2671 = vrot.slane %v2669, 1
      %v2672 = vor.u32 %v2667, %v2671
      %v2674 = vshll.u32 %v1763, 16
      %v2676 = vrot.slane %v2674, 1
      %v2677 = vsel %vm1768, %v2672, %v2676
      %v2678 = vshrl.u32 %v1763, 16
      %v2680 = vor.u32 %v2678, %v2676
      %v2682 = vshll.u32 %v1764, 16
      %v2684 = vrot.slane %v2682, 1
      %v2685 = vsel %vm1768, %v2680, %v2684
      %v2689 = vrot.slane %v1762, 1
      %v2690 = vrot.slane %v1763, 1
      %v2691 = vsel %vm2505, %v2689, %v2690
      %v2692 = vrot.slane %v1764, 1
      %v2693 = vsel %vm2505, %v2690, %v2692
      %v2695 = vshrl.u32 %v1765, 16
      %v2697 = vshll.u32 %v1765, 16
      %v2699 = vrot.slane %v2697, 1
      %v2700 = vor.u32 %v2695, %v2699
      %v2702 = vshll.u32 %v1766, 16
      %v2704 = vrot.slane %v2702, 1
      %v2705 = vsel %vm1768, %v2700, %v2704
      %v2706 = vshrl.u32 %v1766, 16
      %v2708 = vor.u32 %v2706, %v2704
      %v2710 = vshll.u32 %v1767, 16
      %v2712 = vrot.slane %v2710, 1
      %v2713 = vsel %vm1768, %v2708, %v2712
      %v2717 = vrot.slane %v1765, 1
      %v2718 = vrot.slane %v1766, 1
      %v2719 = vsel %vm2505, %v2717, %v2718
      %v2720 = vrot.slane %v1767, 1
      %v2721 = vsel %vm2505, %v2718, %v2720
      %2722 = vrot.lane.b32.xlu0 %v1780, 4
      %v2723 = vpop.permute.xlu0 %2722
      %2724 = vrot.lane.b32.xlu0 %v1788, 4
      %v2725 = vpop.permute.xlu0 %2724
      %2726 = vrot.lane.b32.xlu0 %v1800, 4
      %v2727 = vpop.permute.xlu0 %2726
      %2728 = vrot.lane.b32.xlu0 %v1808, 4
      %v2729 = vpop.permute.xlu0 %2728
      %2730 = vrot.lane.b32.xlu0 %v1820, 4
      %v2731 = vpop.permute.xlu0 %2730
      %2732 = vrot.lane.b32.xlu0 %v1828, 4
      %v2733 = vpop.permute.xlu0 %2732
      %2734 = vrot.lane.b32.xlu0 %v1840, 4
      %v2735 = vpop.permute.xlu0 %2734
      %2736 = vrot.lane.b32.xlu0 %v1848, 4
      %v2737 = vpop.permute.xlu0 %2736
      %2738 = vrot.lane.b32.xlu0 %v1860, 4
      %v2739 = vpop.permute.xlu0 %2738
      %2740 = vrot.lane.b32.xlu0 %v1868, 4
      %v2741 = vpop.permute.xlu0 %2740
      %2742 = vrot.lane.b32.xlu0 %v1880, 4
      %v2743 = vpop.permute.xlu0 %2742
      %2744 = vrot.lane.b32.xlu0 %v1888, 4
      %v2745 = vpop.permute.xlu0 %2744
      %2746 = vrot.lane.b32.xlu0 %v1900, 4
      %v2747 = vpop.permute.xlu0 %2746
      %2748 = vrot.lane.b32.xlu0 %v1908, 4
      %v2749 = vpop.permute.xlu0 %2748
      %2750 = vrot.lane.b32.xlu0 %v1920, 4
      %v2751 = vpop.permute.xlu0 %2750
      %2752 = vrot.lane.b32.xlu0 %v1928, 4
      %v2753 = vpop.permute.xlu0 %2752
      %2754 = vrot.lane.b32.xlu0 %v1940, 4
      %v2755 = vpop.permute.xlu0 %2754
      %2756 = vrot.lane.b32.xlu0 %v1948, 4
      %v2757 = vpop.permute.xlu0 %2756
      %2758 = vrot.lane.b32.xlu0 %v1960, 4
      %v2759 = vpop.permute.xlu0 %2758
      %2760 = vrot.lane.b32.xlu0 %v1968, 4
      %v2761 = vpop.permute.xlu0 %2760
      %2762 = vrot.lane.b32.xlu0 %v1980, 4
      %v2763 = vpop.permute.xlu0 %2762
      %2764 = vrot.lane.b32.xlu0 %v1988, 4
      %v2765 = vpop.permute.xlu0 %2764
      %2766 = vrot.lane.b32.xlu0 %v2000, 4
      %v2767 = vpop.permute.xlu0 %2766
      %2768 = vrot.lane.b32.xlu0 %v2008, 4
      %v2769 = vpop.permute.xlu0 %2768
      %2770 = vrot.lane.b32.xlu0 %v2020, 4
      %v2771 = vpop.permute.xlu0 %2770
      %2772 = vrot.lane.b32.xlu0 %v2028, 4
      %v2773 = vpop.permute.xlu0 %2772
      %2774 = vrot.lane.b32.xlu0 %v2040, 4
      %v2775 = vpop.permute.xlu0 %2774
      %2776 = vrot.lane.b32.xlu0 %v2048, 4
      %v2777 = vpop.permute.xlu0 %2776
      %2778 = vrot.lane.b32.xlu0 %v2060, 4
      %v2779 = vpop.permute.xlu0 %2778
      %2780 = vrot.lane.b32.xlu0 %v2068, 4
      %v2781 = vpop.permute.xlu0 %2780
      %2782 = vrot.lane.b32.xlu0 %v2080, 4
      %v2783 = vpop.permute.xlu0 %2782
      %2784 = vrot.lane.b32.xlu0 %v2088, 4
      %v2785 = vpop.permute.xlu0 %2784
      %2786 = vrot.lane.b32.xlu0 %v2100, 4
      %v2787 = vpop.permute.xlu0 %2786
      %2788 = vrot.lane.b32.xlu0 %v2108, 4
      %v2789 = vpop.permute.xlu0 %2788
      %2790 = vrot.lane.b32.xlu0 %v2120, 4
      %v2791 = vpop.permute.xlu0 %2790
      %2792 = vrot.lane.b32.xlu0 %v2128, 4
      %v2793 = vpop.permute.xlu0 %2792
      %2794 = vrot.lane.b32.xlu0 %v2140, 4
      %v2795 = vpop.permute.xlu0 %2794
      %2796 = vrot.lane.b32.xlu0 %v2148, 4
      %v2797 = vpop.permute.xlu0 %2796
      %2798 = vrot.lane.b32.xlu0 %v2160, 4
      %v2799 = vpop.permute.xlu0 %2798
      %2800 = vrot.lane.b32.xlu0 %v2168, 4
      %v2801 = vpop.permute.xlu0 %2800
      %2802 = vrot.lane.b32.xlu0 %v2180, 4
      %v2803 = vpop.permute.xlu0 %2802
      %2804 = vrot.lane.b32.xlu0 %v2188, 4
      %v2805 = vpop.permute.xlu0 %2804
      %2806 = vrot.lane.b32.xlu0 %v2200, 4
      %v2807 = vpop.permute.xlu0 %2806
      %2808 = vrot.lane.b32.xlu0 %v2208, 4
      %v2809 = vpop.permute.xlu0 %2808
      %2810 = vrot.lane.b32.xlu0 %v2220, 4
      %v2811 = vpop.permute.xlu0 %2810
      %2812 = vrot.lane.b32.xlu0 %v2228, 4
      %v2813 = vpop.permute.xlu0 %2812
      %2814 = vrot.lane.b32.xlu0 %v2240, 4
      %v2815 = vpop.permute.xlu0 %2814
      %2816 = vrot.lane.b32.xlu0 %v2248, 4
      %v2817 = vpop.permute.xlu0 %2816
      %2818 = vrot.lane.b32.xlu0 %v2260, 4
      %v2819 = vpop.permute.xlu0 %2818
      %2820 = vrot.lane.b32.xlu0 %v2268, 4
      %v2821 = vpop.permute.xlu0 %2820
      %2822 = vrot.lane.b32.xlu0 %v2280, 4
      %v2823 = vpop.permute.xlu0 %2822
      %2824 = vrot.lane.b32.xlu0 %v2288, 4
      %v2825 = vpop.permute.xlu0 %2824
      %2826 = vrot.lane.b32.xlu0 %v2300, 4
      %v2827 = vpop.permute.xlu0 %2826
      %2828 = vrot.lane.b32.xlu0 %v2308, 4
      %v2829 = vpop.permute.xlu0 %2828
      %2830 = vrot.lane.b32.xlu0 %v2320, 4
      %v2831 = vpop.permute.xlu0 %2830
      %2832 = vrot.lane.b32.xlu0 %v2328, 4
      %v2833 = vpop.permute.xlu0 %2832
      %2834 = vrot.lane.b32.xlu0 %v2340, 4
      %v2835 = vpop.permute.xlu0 %2834
      %2836 = vrot.lane.b32.xlu0 %v2348, 4
      %v2837 = vpop.permute.xlu0 %2836
      %2838 = vrot.lane.b32.xlu0 %v2360, 4
      %v2839 = vpop.permute.xlu0 %2838
      %2840 = vrot.lane.b32.xlu0 %v2368, 4
      %v2841 = vpop.permute.xlu0 %2840
      %2842 = vrot.lane.b32.xlu0 %v2380, 4
      %v2843 = vpop.permute.xlu0 %2842
      %2844 = vrot.lane.b32.xlu0 %v2388, 4
      %v2845 = vpop.permute.xlu0 %2844
      %2846 = vrot.lane.b32.xlu0 %v2400, 4
      %v2847 = vpop.permute.xlu0 %2846
      %2848 = vrot.lane.b32.xlu0 %v2408, 4
      %v2849 = vpop.permute.xlu0 %2848
      %2850 = vrot.lane.b32.xlu0 %v2508, 8
      %v2851 = vpop.permute.xlu0 %2850
      %2852 = vrot.lane.b32.xlu0 %v2510, 8
      %v2853 = vpop.permute.xlu0 %2852
      %2854 = vrot.lane.b32.xlu0 %v2513, 8
      %v2855 = vpop.permute.xlu0 %2854
      %2856 = vrot.lane.b32.xlu0 %v2515, 8
      %v2857 = vpop.permute.xlu0 %2856
      %2858 = vrot.lane.b32.xlu0 %v2518, 8
      %v2859 = vpop.permute.xlu0 %2858
      %2860 = vrot.lane.b32.xlu0 %v2520, 8
      %v2861 = vpop.permute.xlu0 %2860
      %2862 = vrot.lane.b32.xlu0 %v2523, 8
      %v2863 = vpop.permute.xlu0 %2862
      %2864 = vrot.lane.b32.xlu0 %v2525, 8
      %v2865 = vpop.permute.xlu0 %2864
      %2866 = vrot.lane.b32.xlu0 %v2528, 8
      %v2867 = vpop.permute.xlu0 %2866
      %2868 = vrot.lane.b32.xlu0 %v2530, 8
      %v2869 = vpop.permute.xlu0 %2868
      %2870 = vrot.lane.b32.xlu0 %v2533, 8
      %v2871 = vpop.permute.xlu0 %2870
      %2872 = vrot.lane.b32.xlu0 %v2535, 8
      %v2873 = vpop.permute.xlu0 %2872
      %2874 = vrot.lane.b32.xlu0 %v2538, 8
      %v2875 = vpop.permute.xlu0 %2874
      %2876 = vrot.lane.b32.xlu0 %v2540, 8
      %v2877 = vpop.permute.xlu0 %2876
      %2878 = vrot.lane.b32.xlu0 %v2543, 8
      %v2879 = vpop.permute.xlu0 %2878
      %2880 = vrot.lane.b32.xlu0 %v2545, 8
      %v2881 = vpop.permute.xlu0 %2880
      %2882 = vrot.lane.b32.xlu0 %v2548, 8
      %v2883 = vpop.permute.xlu0 %2882
      %2884 = vrot.lane.b32.xlu0 %v2550, 8
      %v2885 = vpop.permute.xlu0 %2884
      %2886 = vrot.lane.b32.xlu0 %v2553, 8
      %v2887 = vpop.permute.xlu0 %2886
      %2888 = vrot.lane.b32.xlu0 %v2555, 8
      %v2889 = vpop.permute.xlu0 %2888
      %2890 = vrot.lane.b32.xlu0 %v2558, 8
      %v2891 = vpop.permute.xlu0 %2890
      %2892 = vrot.lane.b32.xlu0 %v2560, 8
      %v2893 = vpop.permute.xlu0 %2892
      %2894 = vrot.lane.b32.xlu0 %v2563, 8
      %v2895 = vpop.permute.xlu0 %2894
      %2896 = vrot.lane.b32.xlu0 %v2565, 8
      %v2897 = vpop.permute.xlu0 %2896
      %2898 = vrot.lane.b32.xlu0 %v2568, 8
      %v2899 = vpop.permute.xlu0 %2898
      %2900 = vrot.lane.b32.xlu0 %v2570, 8
      %v2901 = vpop.permute.xlu0 %2900
      %2902 = vrot.lane.b32.xlu0 %v2573, 8
      %v2903 = vpop.permute.xlu0 %2902
      %2904 = vrot.lane.b32.xlu0 %v2575, 8
      %v2905 = vpop.permute.xlu0 %2904
      %2906 = vrot.lane.b32.xlu0 %v2578, 8
      %v2907 = vpop.permute.xlu0 %2906
      %2908 = vrot.lane.b32.xlu0 %v2580, 8
      %v2909 = vpop.permute.xlu0 %2908
      %2910 = vrot.lane.b32.xlu0 %v2583, 8
      %v2911 = vpop.permute.xlu0 %2910
      %2912 = vrot.lane.b32.xlu0 %v2585, 8
      %v2913 = vpop.permute.xlu0 %2912
      %2914 = vrot.lane.b32.xlu0 %v2588, 8
      %v2915 = vpop.permute.xlu0 %2914
      %2916 = vrot.lane.b32.xlu0 %v2590, 8
      %v2917 = vpop.permute.xlu0 %2916
      %2918 = vrot.lane.b32.xlu0 %v2593, 8
      %v2919 = vpop.permute.xlu0 %2918
      %2920 = vrot.lane.b32.xlu0 %v2595, 8
      %v2921 = vpop.permute.xlu0 %2920
      %2922 = vrot.lane.b32.xlu0 %v2598, 8
      %v2923 = vpop.permute.xlu0 %2922
      %2924 = vrot.lane.b32.xlu0 %v2600, 8
      %v2925 = vpop.permute.xlu0 %2924
      %2926 = vrot.lane.b32.xlu0 %v2603, 8
      %v2927 = vpop.permute.xlu0 %2926
      %2928 = vrot.lane.b32.xlu0 %v2605, 8
      %v2929 = vpop.permute.xlu0 %2928
      %2930 = vrot.lane.b32.xlu0 %v2608, 8
      %v2931 = vpop.permute.xlu0 %2930
      %2932 = vrot.lane.b32.xlu0 %v2610, 8
      %v2933 = vpop.permute.xlu0 %2932
      %2934 = vrot.lane.b32.xlu0 %v2613, 8
      %v2935 = vpop.permute.xlu0 %2934
      %2936 = vrot.lane.b32.xlu0 %v2615, 8
      %v2937 = vpop.permute.xlu0 %2936
      %2938 = vrot.lane.b32.xlu0 %v2618, 8
      %v2939 = vpop.permute.xlu0 %2938
      %2940 = vrot.lane.b32.xlu0 %v2620, 8
      %v2941 = vpop.permute.xlu0 %2940
      %2942 = vrot.lane.b32.xlu0 %v2623, 8
      %v2943 = vpop.permute.xlu0 %2942
      %2944 = vrot.lane.b32.xlu0 %v2625, 8
      %v2945 = vpop.permute.xlu0 %2944
      %2946 = vrot.lane.b32.xlu0 %v2628, 8
      %v2947 = vpop.permute.xlu0 %2946
      %2948 = vrot.lane.b32.xlu0 %v2630, 8
      %v2949 = vpop.permute.xlu0 %2948
      %2950 = vrot.lane.b32.xlu0 %v2633, 8
      %v2951 = vpop.permute.xlu0 %2950
      %2952 = vrot.lane.b32.xlu0 %v2635, 8
      %v2953 = vpop.permute.xlu0 %2952
      %2954 = vrot.lane.b32.xlu0 %v2638, 8
      %v2955 = vpop.permute.xlu0 %2954
      %2956 = vrot.lane.b32.xlu0 %v2640, 8
      %v2957 = vpop.permute.xlu0 %2956
      %2958 = vrot.lane.b32.xlu0 %v2643, 8
      %v2959 = vpop.permute.xlu0 %2958
      %2960 = vrot.lane.b32.xlu0 %v2645, 8
      %v2961 = vpop.permute.xlu0 %2960
      %2962 = vrot.lane.b32.xlu0 %v2648, 8
      %v2963 = vpop.permute.xlu0 %2962
      %2964 = vrot.lane.b32.xlu0 %v2650, 8
      %v2965 = vpop.permute.xlu0 %2964
      %2966 = vrot.lane.b32.xlu0 %v2653, 8
      %v2967 = vpop.permute.xlu0 %2966
      %2968 = vrot.lane.b32.xlu0 %v2655, 8
      %v2969 = vpop.permute.xlu0 %2968
      %2970 = vrot.lane.b32.xlu0 %v2658, 8
      %v2971 = vpop.permute.xlu0 %2970
      %2972 = vrot.lane.b32.xlu0 %v2660, 8
      %v2973 = vpop.permute.xlu0 %2972
      %2974 = vrot.lane.b32.xlu0 %v2663, 8
      %v2975 = vpop.permute.xlu0 %2974
      %2976 = vrot.lane.b32.xlu0 %v2665, 8
      %v2977 = vpop.permute.xlu0 %2976
      %2978 = vrot.lane.b32.xlu0 %v1669, 12
      %v2979 = vpop.permute.xlu0 %2978
      %2980 = vrot.lane.b32.xlu0 %v1670, 12
      %v2981 = vpop.permute.xlu0 %2980
      %2982 = vrot.lane.b32.xlu0 %v1672, 12
      %v2983 = vpop.permute.xlu0 %2982
      %2984 = vrot.lane.b32.xlu0 %v1673, 12
      %v2985 = vpop.permute.xlu0 %2984
      %2986 = vrot.lane.b32.xlu0 %v1675, 12
      %v2987 = vpop.permute.xlu0 %2986
      %2988 = vrot.lane.b32.xlu0 %v1676, 12
      %v2989 = vpop.permute.xlu0 %2988
      %2990 = vrot.lane.b32.xlu0 %v1678, 12
      %v2991 = vpop.permute.xlu0 %2990
      %2992 = vrot.lane.b32.xlu0 %v1679, 12
      %v2993 = vpop.permute.xlu0 %2992
      %2994 = vrot.lane.b32.xlu0 %v1681, 12
      %v2995 = vpop.permute.xlu0 %2994
      %2996 = vrot.lane.b32.xlu0 %v1682, 12
      %v2997 = vpop.permute.xlu0 %2996
      %2998 = vrot.lane.b32.xlu0 %v1684, 12
      %v2999 = vpop.permute.xlu0 %2998
      %3000 = vrot.lane.b32.xlu0 %v1685, 12
      %v3001 = vpop.permute.xlu0 %3000
      %3002 = vrot.lane.b32.xlu0 %v1687, 12
      %v3003 = vpop.permute.xlu0 %3002
      %3004 = vrot.lane.b32.xlu0 %v1688, 12
      %v3005 = vpop.permute.xlu0 %3004
      %3006 = vrot.lane.b32.xlu0 %v1690, 12
      %v3007 = vpop.permute.xlu0 %3006
      %3008 = vrot.lane.b32.xlu0 %v1691, 12
      %v3009 = vpop.permute.xlu0 %3008
      %3010 = vrot.lane.b32.xlu0 %v1693, 12
      %v3011 = vpop.permute.xlu0 %3010
      %3012 = vrot.lane.b32.xlu0 %v1694, 12
      %v3013 = vpop.permute.xlu0 %3012
      %3014 = vrot.lane.b32.xlu0 %v1696, 12
      %v3015 = vpop.permute.xlu0 %3014
      %3016 = vrot.lane.b32.xlu0 %v1697, 12
      %v3017 = vpop.permute.xlu0 %3016
      %3018 = vrot.lane.b32.xlu0 %v1699, 12
      %v3019 = vpop.permute.xlu0 %3018
      %3020 = vrot.lane.b32.xlu0 %v1700, 12
      %v3021 = vpop.permute.xlu0 %3020
      %3022 = vrot.lane.b32.xlu0 %v1702, 12
      %v3023 = vpop.permute.xlu0 %3022
      %3024 = vrot.lane.b32.xlu0 %v1703, 12
      %v3025 = vpop.permute.xlu0 %3024
      %3026 = vrot.lane.b32.xlu0 %v1705, 12
      %v3027 = vpop.permute.xlu0 %3026
      %3028 = vrot.lane.b32.xlu0 %v1706, 12
      %v3029 = vpop.permute.xlu0 %3028
      %3030 = vrot.lane.b32.xlu0 %v1708, 12
      %v3031 = vpop.permute.xlu0 %3030
      %3032 = vrot.lane.b32.xlu0 %v1709, 12
      %v3033 = vpop.permute.xlu0 %3032
      %3034 = vrot.lane.b32.xlu0 %v1711, 12
      %v3035 = vpop.permute.xlu0 %3034
      %3036 = vrot.lane.b32.xlu0 %v1712, 12
      %v3037 = vpop.permute.xlu0 %3036
      %3038 = vrot.lane.b32.xlu0 %v1714, 12
      %v3039 = vpop.permute.xlu0 %3038
      %3040 = vrot.lane.b32.xlu0 %v1715, 12
      %v3041 = vpop.permute.xlu0 %3040
      %3042 = vrot.lane.b32.xlu0 %v1717, 12
      %v3043 = vpop.permute.xlu0 %3042
      %3044 = vrot.lane.b32.xlu0 %v1718, 12
      %v3045 = vpop.permute.xlu0 %3044
      %3046 = vrot.lane.b32.xlu0 %v1720, 12
      %v3047 = vpop.permute.xlu0 %3046
      %3048 = vrot.lane.b32.xlu0 %v1721, 12
      %v3049 = vpop.permute.xlu0 %3048
      %3050 = vrot.lane.b32.xlu0 %v1723, 12
      %v3051 = vpop.permute.xlu0 %3050
      %3052 = vrot.lane.b32.xlu0 %v1724, 12
      %v3053 = vpop.permute.xlu0 %3052
      %3054 = vrot.lane.b32.xlu0 %v1726, 12
      %v3055 = vpop.permute.xlu0 %3054
      %3056 = vrot.lane.b32.xlu0 %v1727, 12
      %v3057 = vpop.permute.xlu0 %3056
      %3058 = vrot.lane.b32.xlu0 %v1729, 12
      %v3059 = vpop.permute.xlu0 %3058
      %3060 = vrot.lane.b32.xlu0 %v1730, 12
      %v3061 = vpop.permute.xlu0 %3060
      %3062 = vrot.lane.b32.xlu0 %v1732, 12
      %v3063 = vpop.permute.xlu0 %3062
      %3064 = vrot.lane.b32.xlu0 %v1733, 12
      %v3065 = vpop.permute.xlu0 %3064
      %3066 = vrot.lane.b32.xlu0 %v1735, 12
      %v3067 = vpop.permute.xlu0 %3066
      %3068 = vrot.lane.b32.xlu0 %v1736, 12
      %v3069 = vpop.permute.xlu0 %3068
      %3070 = vrot.lane.b32.xlu0 %v1738, 12
      %v3071 = vpop.permute.xlu0 %3070
      %3072 = vrot.lane.b32.xlu0 %v1739, 12
      %v3073 = vpop.permute.xlu0 %3072
      %3074 = vrot.lane.b32.xlu0 %v1741, 12
      %v3075 = vpop.permute.xlu0 %3074
      %3076 = vrot.lane.b32.xlu0 %v1742, 12
      %v3077 = vpop.permute.xlu0 %3076
      %3078 = vrot.lane.b32.xlu0 %v1744, 12
      %v3079 = vpop.permute.xlu0 %3078
      %3080 = vrot.lane.b32.xlu0 %v1745, 12
      %v3081 = vpop.permute.xlu0 %3080
      %3082 = vrot.lane.b32.xlu0 %v1747, 12
      %v3083 = vpop.permute.xlu0 %3082
      %3084 = vrot.lane.b32.xlu0 %v1748, 12
      %v3085 = vpop.permute.xlu0 %3084
      %3086 = vrot.lane.b32.xlu0 %v1750, 12
      %v3087 = vpop.permute.xlu0 %3086
      %3088 = vrot.lane.b32.xlu0 %v1751, 12
      %v3089 = vpop.permute.xlu0 %3088
      %3090 = vrot.lane.b32.xlu0 %v1753, 12
      %v3091 = vpop.permute.xlu0 %3090
      %3092 = vrot.lane.b32.xlu0 %v1754, 12
      %v3093 = vpop.permute.xlu0 %3092
      %3094 = vrot.lane.b32.xlu0 %v1756, 12
      %v3095 = vpop.permute.xlu0 %3094
      %3096 = vrot.lane.b32.xlu0 %v1757, 12
      %v3097 = vpop.permute.xlu0 %3096
      %3098 = vrot.lane.b32.xlu0 %v1759, 12
      %v3099 = vpop.permute.xlu0 %3098
      %3100 = vrot.lane.b32.xlu0 %v1760, 12
      %v3101 = vpop.permute.xlu0 %3100
      %3102 = vrot.lane.b32.xlu0 %v1762, 12
      %v3103 = vpop.permute.xlu0 %3102
      %3104 = vrot.lane.b32.xlu0 %v1763, 12
      %v3105 = vpop.permute.xlu0 %3104
      %3106 = vrot.lane.b32.xlu0 %v1800, 16
      %v3107 = vpop.permute.xlu0 %3106
      %3108 = vrot.lane.b32.xlu0 %v1808, 16
      %v3109 = vpop.permute.xlu0 %3108
      %3110 = vrot.lane.b32.xlu0 %v1820, 16
      %v3111 = vpop.permute.xlu0 %3110
      %3112 = vrot.lane.b32.xlu0 %v1828, 16
      %v3113 = vpop.permute.xlu0 %3112
      %3114 = vrot.lane.b32.xlu0 %v1840, 16
      %v3115 = vpop.permute.xlu0 %3114
      %3116 = vrot.lane.b32.xlu0 %v1848, 16
      %v3117 = vpop.permute.xlu0 %3116
      %3118 = vrot.lane.b32.xlu0 %v1860, 16
      %v3119 = vpop.permute.xlu0 %3118
      %3120 = vrot.lane.b32.xlu0 %v1868, 16
      %v3121 = vpop.permute.xlu0 %3120
      %3122 = vrot.lane.b32.xlu0 %v1880, 16
      %v3123 = vpop.permute.xlu0 %3122
      %3124 = vrot.lane.b32.xlu0 %v1888, 16
      %v3125 = vpop.permute.xlu0 %3124
      %3126 = vrot.lane.b32.xlu0 %v1900, 16
      %v3127 = vpop.permute.xlu0 %3126
      %3128 = vrot.lane.b32.xlu0 %v1908, 16
      %v3129 = vpop.permute.xlu0 %3128
      %3130 = vrot.lane.b32.xlu0 %v1920, 16
      %v3131 = vpop.permute.xlu0 %3130
      %3132 = vrot.lane.b32.xlu0 %v1928, 16
      %v3133 = vpop.permute.xlu0 %3132
      %3134 = vrot.lane.b32.xlu0 %v1940, 16
      %v3135 = vpop.permute.xlu0 %3134
      %3136 = vrot.lane.b32.xlu0 %v1948, 16
      %v3137 = vpop.permute.xlu0 %3136
      %3138 = vrot.lane.b32.xlu0 %v1960, 16
      %v3139 = vpop.permute.xlu0 %3138
      %3140 = vrot.lane.b32.xlu0 %v1968, 16
      %v3141 = vpop.permute.xlu0 %3140
      %3142 = vrot.lane.b32.xlu0 %v1980, 16
      %v3143 = vpop.permute.xlu0 %3142
      %3144 = vrot.lane.b32.xlu0 %v1988, 16
      %v3145 = vpop.permute.xlu0 %3144
      %3146 = vrot.lane.b32.xlu0 %v2000, 16
      %v3147 = vpop.permute.xlu0 %3146
      %3148 = vrot.lane.b32.xlu0 %v2008, 16
      %v3149 = vpop.permute.xlu0 %3148
      %3150 = vrot.lane.b32.xlu0 %v2020, 16
      %v3151 = vpop.permute.xlu0 %3150
      %3152 = vrot.lane.b32.xlu0 %v2028, 16
      %v3153 = vpop.permute.xlu0 %3152
      %3154 = vrot.lane.b32.xlu0 %v2040, 16
      %v3155 = vpop.permute.xlu0 %3154
      %3156 = vrot.lane.b32.xlu0 %v2048, 16
      %v3157 = vpop.permute.xlu0 %3156
      %3158 = vrot.lane.b32.xlu0 %v2060, 16
      %v3159 = vpop.permute.xlu0 %3158
      %3160 = vrot.lane.b32.xlu0 %v2068, 16
      %v3161 = vpop.permute.xlu0 %3160
      %3162 = vrot.lane.b32.xlu0 %v2080, 16
      %v3163 = vpop.permute.xlu0 %3162
      %3164 = vrot.lane.b32.xlu0 %v2088, 16
      %v3165 = vpop.permute.xlu0 %3164
      %3166 = vrot.lane.b32.xlu0 %v2100, 16
      %v3167 = vpop.permute.xlu0 %3166
      %3168 = vrot.lane.b32.xlu0 %v2108, 16
      %v3169 = vpop.permute.xlu0 %3168
      %3170 = vrot.lane.b32.xlu0 %v2120, 16
      %v3171 = vpop.permute.xlu0 %3170
      %3172 = vrot.lane.b32.xlu0 %v2128, 16
      %v3173 = vpop.permute.xlu0 %3172
      %3174 = vrot.lane.b32.xlu0 %v2140, 16
      %v3175 = vpop.permute.xlu0 %3174
      %3176 = vrot.lane.b32.xlu0 %v2148, 16
      %v3177 = vpop.permute.xlu0 %3176
      %3178 = vrot.lane.b32.xlu0 %v2160, 16
      %v3179 = vpop.permute.xlu0 %3178
      %3180 = vrot.lane.b32.xlu0 %v2168, 16
      %v3181 = vpop.permute.xlu0 %3180
      %3182 = vrot.lane.b32.xlu0 %v2180, 16
      %v3183 = vpop.permute.xlu0 %3182
      %3184 = vrot.lane.b32.xlu0 %v2188, 16
      %v3185 = vpop.permute.xlu0 %3184
      %3186 = vrot.lane.b32.xlu0 %v2200, 16
      %v3187 = vpop.permute.xlu0 %3186
      %3188 = vrot.lane.b32.xlu0 %v2208, 16
      %v3189 = vpop.permute.xlu0 %3188
      %3190 = vrot.lane.b32.xlu0 %v2220, 16
      %v3191 = vpop.permute.xlu0 %3190
      %3192 = vrot.lane.b32.xlu0 %v2228, 16
      %v3193 = vpop.permute.xlu0 %3192
      %3194 = vrot.lane.b32.xlu0 %v2240, 16
      %v3195 = vpop.permute.xlu0 %3194
      %3196 = vrot.lane.b32.xlu0 %v2248, 16
      %v3197 = vpop.permute.xlu0 %3196
      %3198 = vrot.lane.b32.xlu0 %v2260, 16
      %v3199 = vpop.permute.xlu0 %3198
      %3200 = vrot.lane.b32.xlu0 %v2268, 16
      %v3201 = vpop.permute.xlu0 %3200
      %3202 = vrot.lane.b32.xlu0 %v2280, 16
      %v3203 = vpop.permute.xlu0 %3202
      %3204 = vrot.lane.b32.xlu0 %v2288, 16
      %v3205 = vpop.permute.xlu0 %3204
      %3206 = vrot.lane.b32.xlu0 %v2300, 16
      %v3207 = vpop.permute.xlu0 %3206
      %3208 = vrot.lane.b32.xlu0 %v2308, 16
      %v3209 = vpop.permute.xlu0 %3208
      %3210 = vrot.lane.b32.xlu0 %v2320, 16
      %v3211 = vpop.permute.xlu0 %3210
      %3212 = vrot.lane.b32.xlu0 %v2328, 16
      %v3213 = vpop.permute.xlu0 %3212
      %3214 = vrot.lane.b32.xlu0 %v2340, 16
      %v3215 = vpop.permute.xlu0 %3214
      %3216 = vrot.lane.b32.xlu0 %v2348, 16
      %v3217 = vpop.permute.xlu0 %3216
      %3218 = vrot.lane.b32.xlu0 %v2360, 16
      %v3219 = vpop.permute.xlu0 %3218
      %3220 = vrot.lane.b32.xlu0 %v2368, 16
      %v3221 = vpop.permute.xlu0 %3220
      %3222 = vrot.lane.b32.xlu0 %v2380, 16
      %v3223 = vpop.permute.xlu0 %3222
      %3224 = vrot.lane.b32.xlu0 %v2388, 16
      %v3225 = vpop.permute.xlu0 %3224
      %3226 = vrot.lane.b32.xlu0 %v2400, 16
      %v3227 = vpop.permute.xlu0 %3226
      %3228 = vrot.lane.b32.xlu0 %v2408, 16
      %v3229 = vpop.permute.xlu0 %3228
      %3230 = vrot.lane.b32.xlu0 %v2677, 16
      %v3231 = vpop.permute.xlu0 %3230
      %3232 = vrot.lane.b32.xlu0 %v2685, 16
      %v3233 = vpop.permute.xlu0 %3232
      %3234 = vrot.lane.b32.xlu0 %v2513, 20
      %v3235 = vpop.permute.xlu0 %3234
      %3236 = vrot.lane.b32.xlu0 %v2515, 20
      %v3237 = vpop.permute.xlu0 %3236
      %3238 = vrot.lane.b32.xlu0 %v2518, 20
      %v3239 = vpop.permute.xlu0 %3238
      %3240 = vrot.lane.b32.xlu0 %v2520, 20
      %v3241 = vpop.permute.xlu0 %3240
      %3242 = vrot.lane.b32.xlu0 %v2523, 20
      %v3243 = vpop.permute.xlu0 %3242
      %3244 = vrot.lane.b32.xlu0 %v2525, 20
      %v3245 = vpop.permute.xlu0 %3244
      %3246 = vrot.lane.b32.xlu0 %v2528, 20
      %v3247 = vpop.permute.xlu0 %3246
      %3248 = vrot.lane.b32.xlu0 %v2530, 20
      %v3249 = vpop.permute.xlu0 %3248
      %3250 = vrot.lane.b32.xlu0 %v2533, 20
      %v3251 = vpop.permute.xlu0 %3250
      %3252 = vrot.lane.b32.xlu0 %v2535, 20
      %v3253 = vpop.permute.xlu0 %3252
      %3254 = vrot.lane.b32.xlu0 %v2538, 20
      %v3255 = vpop.permute.xlu0 %3254
      %3256 = vrot.lane.b32.xlu0 %v2540, 20
      %v3257 = vpop.permute.xlu0 %3256
      %3258 = vrot.lane.b32.xlu0 %v2543, 20
      %v3259 = vpop.permute.xlu0 %3258
      %3260 = vrot.lane.b32.xlu0 %v2545, 20
      %v3261 = vpop.permute.xlu0 %3260
      %3262 = vrot.lane.b32.xlu0 %v2548, 20
      %v3263 = vpop.permute.xlu0 %3262
      %3264 = vrot.lane.b32.xlu0 %v2550, 20
      %v3265 = vpop.permute.xlu0 %3264
      %3266 = vrot.lane.b32.xlu0 %v2553, 20
      %v3267 = vpop.permute.xlu0 %3266
      %3268 = vrot.lane.b32.xlu0 %v2555, 20
      %v3269 = vpop.permute.xlu0 %3268
      %3270 = vrot.lane.b32.xlu0 %v2558, 20
      %v3271 = vpop.permute.xlu0 %3270
      %3272 = vrot.lane.b32.xlu0 %v2560, 20
      %v3273 = vpop.permute.xlu0 %3272
      %3274 = vrot.lane.b32.xlu0 %v2563, 20
      %v3275 = vpop.permute.xlu0 %3274
      %3276 = vrot.lane.b32.xlu0 %v2565, 20
      %v3277 = vpop.permute.xlu0 %3276
      %3278 = vrot.lane.b32.xlu0 %v2568, 20
      %v3279 = vpop.permute.xlu0 %3278
      %3280 = vrot.lane.b32.xlu0 %v2570, 20
      %v3281 = vpop.permute.xlu0 %3280
      %3282 = vrot.lane.b32.xlu0 %v2573, 20
      %v3283 = vpop.permute.xlu0 %3282
      %3284 = vrot.lane.b32.xlu0 %v2575, 20
      %v3285 = vpop.permute.xlu0 %3284
      %3286 = vrot.lane.b32.xlu0 %v2578, 20
      %v3287 = vpop.permute.xlu0 %3286
      %3288 = vrot.lane.b32.xlu0 %v2580, 20
      %v3289 = vpop.permute.xlu0 %3288
      %3290 = vrot.lane.b32.xlu0 %v2583, 20
      %v3291 = vpop.permute.xlu0 %3290
      %3292 = vrot.lane.b32.xlu0 %v2585, 20
      %v3293 = vpop.permute.xlu0 %3292
      %3294 = vrot.lane.b32.xlu0 %v2588, 20
      %v3295 = vpop.permute.xlu0 %3294
      %3296 = vrot.lane.b32.xlu0 %v2590, 20
      %v3297 = vpop.permute.xlu0 %3296
      %3298 = vrot.lane.b32.xlu0 %v2593, 20
      %v3299 = vpop.permute.xlu0 %3298
      %3300 = vrot.lane.b32.xlu0 %v2595, 20
      %v3301 = vpop.permute.xlu0 %3300
      %3302 = vrot.lane.b32.xlu0 %v2598, 20
      %v3303 = vpop.permute.xlu0 %3302
      %3304 = vrot.lane.b32.xlu0 %v2600, 20
      %v3305 = vpop.permute.xlu0 %3304
      %3306 = vrot.lane.b32.xlu0 %v2603, 20
      %v3307 = vpop.permute.xlu0 %3306
      %3308 = vrot.lane.b32.xlu0 %v2605, 20
      %v3309 = vpop.permute.xlu0 %3308
      %3310 = vrot.lane.b32.xlu0 %v2608, 20
      %v3311 = vpop.permute.xlu0 %3310
      %3312 = vrot.lane.b32.xlu0 %v2610, 20
      %v3313 = vpop.permute.xlu0 %3312
      %3314 = vrot.lane.b32.xlu0 %v2613, 20
      %v3315 = vpop.permute.xlu0 %3314
      %3316 = vrot.lane.b32.xlu0 %v2615, 20
      %v3317 = vpop.permute.xlu0 %3316
      %3318 = vrot.lane.b32.xlu0 %v2618, 20
      %v3319 = vpop.permute.xlu0 %3318
      %3320 = vrot.lane.b32.xlu0 %v2620, 20
      %v3321 = vpop.permute.xlu0 %3320
      %3322 = vrot.lane.b32.xlu0 %v2623, 20
      %v3323 = vpop.permute.xlu0 %3322
      %3324 = vrot.lane.b32.xlu0 %v2625, 20
      %v3325 = vpop.permute.xlu0 %3324
      %3326 = vrot.lane.b32.xlu0 %v2628, 20
      %v3327 = vpop.permute.xlu0 %3326
      %3328 = vrot.lane.b32.xlu0 %v2630, 20
      %v3329 = vpop.permute.xlu0 %3328
      %3330 = vrot.lane.b32.xlu0 %v2633, 20
      %v3331 = vpop.permute.xlu0 %3330
      %3332 = vrot.lane.b32.xlu0 %v2635, 20
      %v3333 = vpop.permute.xlu0 %3332
      %3334 = vrot.lane.b32.xlu0 %v2638, 20
      %v3335 = vpop.permute.xlu0 %3334
      %3336 = vrot.lane.b32.xlu0 %v2640, 20
      %v3337 = vpop.permute.xlu0 %3336
      %3338 = vrot.lane.b32.xlu0 %v2643, 20
      %v3339 = vpop.permute.xlu0 %3338
      %3340 = vrot.lane.b32.xlu0 %v2645, 20
      %v3341 = vpop.permute.xlu0 %3340
      %3342 = vrot.lane.b32.xlu0 %v2648, 20
      %v3343 = vpop.permute.xlu0 %3342
      %3344 = vrot.lane.b32.xlu0 %v2650, 20
      %v3345 = vpop.permute.xlu0 %3344
      %3346 = vrot.lane.b32.xlu0 %v2653, 20
      %v3347 = vpop.permute.xlu0 %3346
      %3348 = vrot.lane.b32.xlu0 %v2655, 20
      %v3349 = vpop.permute.xlu0 %3348
      %3350 = vrot.lane.b32.xlu0 %v2658, 20
      %v3351 = vpop.permute.xlu0 %3350
      %3352 = vrot.lane.b32.xlu0 %v2660, 20
      %v3353 = vpop.permute.xlu0 %3352
      %3354 = vrot.lane.b32.xlu0 %v2663, 20
      %v3355 = vpop.permute.xlu0 %3354
      %3356 = vrot.lane.b32.xlu0 %v2665, 20
      %v3357 = vpop.permute.xlu0 %3356
      %3358 = vrot.lane.b32.xlu0 %v2691, 20
      %v3359 = vpop.permute.xlu0 %3358
      %3360 = vrot.lane.b32.xlu0 %v2693, 20
      %v3361 = vpop.permute.xlu0 %3360
      %3362 = vrot.lane.b32.xlu0 %v1672, 24
      %v3363 = vpop.permute.xlu0 %3362
      %3364 = vrot.lane.b32.xlu0 %v1673, 24
      %v3365 = vpop.permute.xlu0 %3364
      %3366 = vrot.lane.b32.xlu0 %v1675, 24
      %v3367 = vpop.permute.xlu0 %3366
      %3368 = vrot.lane.b32.xlu0 %v1676, 24
      %v3369 = vpop.permute.xlu0 %3368
      %3370 = vrot.lane.b32.xlu0 %v1678, 24
      %v3371 = vpop.permute.xlu0 %3370
      %3372 = vrot.lane.b32.xlu0 %v1679, 24
      %v3373 = vpop.permute.xlu0 %3372
      %3374 = vrot.lane.b32.xlu0 %v1681, 24
      %v3375 = vpop.permute.xlu0 %3374
      %3376 = vrot.lane.b32.xlu0 %v1682, 24
      %v3377 = vpop.permute.xlu0 %3376
      %3378 = vrot.lane.b32.xlu0 %v1684, 24
      %v3379 = vpop.permute.xlu0 %3378
      %3380 = vrot.lane.b32.xlu0 %v1685, 24
      %v3381 = vpop.permute.xlu0 %3380
      %3382 = vrot.lane.b32.xlu0 %v1687, 24
      %v3383 = vpop.permute.xlu0 %3382
      %3384 = vrot.lane.b32.xlu0 %v1688, 24
      %v3385 = vpop.permute.xlu0 %3384
      %3386 = vrot.lane.b32.xlu0 %v1690, 24
      %v3387 = vpop.permute.xlu0 %3386
      %3388 = vrot.lane.b32.xlu0 %v1691, 24
      %v3389 = vpop.permute.xlu0 %3388
      %3390 = vrot.lane.b32.xlu0 %v1693, 24
      %v3391 = vpop.permute.xlu0 %3390
      %3392 = vrot.lane.b32.xlu0 %v1694, 24
      %v3393 = vpop.permute.xlu0 %3392
      %3394 = vrot.lane.b32.xlu0 %v1696, 24
      %v3395 = vpop.permute.xlu0 %3394
      %3396 = vrot.lane.b32.xlu0 %v1697, 24
      %v3397 = vpop.permute.xlu0 %3396
      %3398 = vrot.lane.b32.xlu0 %v1699, 24
      %v3399 = vpop.permute.xlu0 %3398
      %3400 = vrot.lane.b32.xlu0 %v1700, 24
      %v3401 = vpop.permute.xlu0 %3400
      %3402 = vrot.lane.b32.xlu0 %v1702, 24
      %v3403 = vpop.permute.xlu0 %3402
      %3404 = vrot.lane.b32.xlu0 %v1703, 24
      %v3405 = vpop.permute.xlu0 %3404
      %3406 = vrot.lane.b32.xlu0 %v1705, 24
      %v3407 = vpop.permute.xlu0 %3406
      %3408 = vrot.lane.b32.xlu0 %v1706, 24
      %v3409 = vpop.permute.xlu0 %3408
      %3410 = vrot.lane.b32.xlu0 %v1708, 24
      %v3411 = vpop.permute.xlu0 %3410
      %3412 = vrot.lane.b32.xlu0 %v1709, 24
      %v3413 = vpop.permute.xlu0 %3412
      %3414 = vrot.lane.b32.xlu0 %v1711, 24
      %v3415 = vpop.permute.xlu0 %3414
      %3416 = vrot.lane.b32.xlu0 %v1712, 24
      %v3417 = vpop.permute.xlu0 %3416
      %3418 = vrot.lane.b32.xlu0 %v1714, 24
      %v3419 = vpop.permute.xlu0 %3418
      %3420 = vrot.lane.b32.xlu0 %v1715, 24
      %v3421 = vpop.permute.xlu0 %3420
      %3422 = vrot.lane.b32.xlu0 %v1717, 24
      %v3423 = vpop.permute.xlu0 %3422
      %3424 = vrot.lane.b32.xlu0 %v1718, 24
      %v3425 = vpop.permute.xlu0 %3424
      %3426 = vrot.lane.b32.xlu0 %v1720, 24
      %v3427 = vpop.permute.xlu0 %3426
      %3428 = vrot.lane.b32.xlu0 %v1721, 24
      %v3429 = vpop.permute.xlu0 %3428
      %3430 = vrot.lane.b32.xlu0 %v1723, 24
      %v3431 = vpop.permute.xlu0 %3430
      %3432 = vrot.lane.b32.xlu0 %v1724, 24
      %v3433 = vpop.permute.xlu0 %3432
      %3434 = vrot.lane.b32.xlu0 %v1726, 24
      %v3435 = vpop.permute.xlu0 %3434
      %3436 = vrot.lane.b32.xlu0 %v1727, 24
      %v3437 = vpop.permute.xlu0 %3436
      %3438 = vrot.lane.b32.xlu0 %v1729, 24
      %v3439 = vpop.permute.xlu0 %3438
      %3440 = vrot.lane.b32.xlu0 %v1730, 24
      %v3441 = vpop.permute.xlu0 %3440
      %3442 = vrot.lane.b32.xlu0 %v1732, 24
      %v3443 = vpop.permute.xlu0 %3442
      %3444 = vrot.lane.b32.xlu0 %v1733, 24
      %v3445 = vpop.permute.xlu0 %3444
      %3446 = vrot.lane.b32.xlu0 %v1735, 24
      %v3447 = vpop.permute.xlu0 %3446
      %3448 = vrot.lane.b32.xlu0 %v1736, 24
      %v3449 = vpop.permute.xlu0 %3448
      %3450 = vrot.lane.b32.xlu0 %v1738, 24
      %v3451 = vpop.permute.xlu0 %3450
      %3452 = vrot.lane.b32.xlu0 %v1739, 24
      %v3453 = vpop.permute.xlu0 %3452
      %3454 = vrot.lane.b32.xlu0 %v1741, 24
      %v3455 = vpop.permute.xlu0 %3454
      %3456 = vrot.lane.b32.xlu0 %v1742, 24
      %v3457 = vpop.permute.xlu0 %3456
      %3458 = vrot.lane.b32.xlu0 %v1744, 24
      %v3459 = vpop.permute.xlu0 %3458
      %3460 = vrot.lane.b32.xlu0 %v1745, 24
      %v3461 = vpop.permute.xlu0 %3460
      %3462 = vrot.lane.b32.xlu0 %v1747, 24
      %v3463 = vpop.permute.xlu0 %3462
      %3464 = vrot.lane.b32.xlu0 %v1748, 24
      %v3465 = vpop.permute.xlu0 %3464
      %3466 = vrot.lane.b32.xlu0 %v1750, 24
      %v3467 = vpop.permute.xlu0 %3466
      %3468 = vrot.lane.b32.xlu0 %v1751, 24
      %v3469 = vpop.permute.xlu0 %3468
      %3470 = vrot.lane.b32.xlu0 %v1753, 24
      %v3471 = vpop.permute.xlu0 %3470
      %3472 = vrot.lane.b32.xlu0 %v1754, 24
      %v3473 = vpop.permute.xlu0 %3472
      %3474 = vrot.lane.b32.xlu0 %v1756, 24
      %v3475 = vpop.permute.xlu0 %3474
      %3476 = vrot.lane.b32.xlu0 %v1757, 24
      %v3477 = vpop.permute.xlu0 %3476
      %3478 = vrot.lane.b32.xlu0 %v1759, 24
      %v3479 = vpop.permute.xlu0 %3478
      %3480 = vrot.lane.b32.xlu0 %v1760, 24
      %v3481 = vpop.permute.xlu0 %3480
      %3482 = vrot.lane.b32.xlu0 %v1762, 24
      %v3483 = vpop.permute.xlu0 %3482
      %3484 = vrot.lane.b32.xlu0 %v1763, 24
      %v3485 = vpop.permute.xlu0 %3484
      %3486 = vrot.lane.b32.xlu0 %v1765, 24
      %v3487 = vpop.permute.xlu0 %3486
      %3488 = vrot.lane.b32.xlu0 %v1766, 24
      %v3489 = vpop.permute.xlu0 %3488
      %3490 = vrot.lane.b32.xlu0 %v1820, 28
      %v3491 = vpop.permute.xlu0 %3490
      %3492 = vrot.lane.b32.xlu0 %v1828, 28
      %v3493 = vpop.permute.xlu0 %3492
      %3494 = vrot.lane.b32.xlu0 %v1840, 28
      %v3495 = vpop.permute.xlu0 %3494
      %3496 = vrot.lane.b32.xlu0 %v1848, 28
      %v3497 = vpop.permute.xlu0 %3496
      %3498 = vrot.lane.b32.xlu0 %v1860, 28
      %v3499 = vpop.permute.xlu0 %3498
      %3500 = vrot.lane.b32.xlu0 %v1868, 28
      %v3501 = vpop.permute.xlu0 %3500
      %3502 = vrot.lane.b32.xlu0 %v1880, 28
      %v3503 = vpop.permute.xlu0 %3502
      %3504 = vrot.lane.b32.xlu0 %v1888, 28
      %v3505 = vpop.permute.xlu0 %3504
      %3506 = vrot.lane.b32.xlu0 %v1900, 28
      %v3507 = vpop.permute.xlu0 %3506
      %3508 = vrot.lane.b32.xlu0 %v1908, 28
      %v3509 = vpop.permute.xlu0 %3508
      %3510 = vrot.lane.b32.xlu0 %v1920, 28
      %v3511 = vpop.permute.xlu0 %3510
      %3512 = vrot.lane.b32.xlu0 %v1928, 28
      %v3513 = vpop.permute.xlu0 %3512
      %3514 = vrot.lane.b32.xlu0 %v1940, 28
      %v3515 = vpop.permute.xlu0 %3514
      %3516 = vrot.lane.b32.xlu0 %v1948, 28
      %v3517 = vpop.permute.xlu0 %3516
      %3518 = vrot.lane.b32.xlu0 %v1960, 28
      %v3519 = vpop.permute.xlu0 %3518
      %3520 = vrot.lane.b32.xlu0 %v1968, 28
      %v3521 = vpop.permute.xlu0 %3520
      %3522 = vrot.lane.b32.xlu0 %v1980, 28
      %v3523 = vpop.permute.xlu0 %3522
      %3524 = vrot.lane.b32.xlu0 %v1988, 28
      %v3525 = vpop.permute.xlu0 %3524
      %3526 = vrot.lane.b32.xlu0 %v2000, 28
      %v3527 = vpop.permute.xlu0 %3526
      %3528 = vrot.lane.b32.xlu0 %v2008, 28
      %v3529 = vpop.permute.xlu0 %3528
      %3530 = vrot.lane.b32.xlu0 %v2020, 28
      %v3531 = vpop.permute.xlu0 %3530
      %3532 = vrot.lane.b32.xlu0 %v2028, 28
      %v3533 = vpop.permute.xlu0 %3532
      %3534 = vrot.lane.b32.xlu0 %v2040, 28
      %v3535 = vpop.permute.xlu0 %3534
      %3536 = vrot.lane.b32.xlu0 %v2048, 28
      %v3537 = vpop.permute.xlu0 %3536
      %3538 = vrot.lane.b32.xlu0 %v2060, 28
      %v3539 = vpop.permute.xlu0 %3538
      %3540 = vrot.lane.b32.xlu0 %v2068, 28
      %v3541 = vpop.permute.xlu0 %3540
      %3542 = vrot.lane.b32.xlu0 %v2080, 28
      %v3543 = vpop.permute.xlu0 %3542
      %3544 = vrot.lane.b32.xlu0 %v2088, 28
      %v3545 = vpop.permute.xlu0 %3544
      %3546 = vrot.lane.b32.xlu0 %v2100, 28
      %v3547 = vpop.permute.xlu0 %3546
      %3548 = vrot.lane.b32.xlu0 %v2108, 28
      %v3549 = vpop.permute.xlu0 %3548
      %3550 = vrot.lane.b32.xlu0 %v2120, 28
      %v3551 = vpop.permute.xlu0 %3550
      %3552 = vrot.lane.b32.xlu0 %v2128, 28
      %v3553 = vpop.permute.xlu0 %3552
      %3554 = vrot.lane.b32.xlu0 %v2140, 28
      %v3555 = vpop.permute.xlu0 %3554
      %3556 = vrot.lane.b32.xlu0 %v2148, 28
      %v3557 = vpop.permute.xlu0 %3556
      %3558 = vrot.lane.b32.xlu0 %v2160, 28
      %v3559 = vpop.permute.xlu0 %3558
      %3560 = vrot.lane.b32.xlu0 %v2168, 28
      %v3561 = vpop.permute.xlu0 %3560
      %3562 = vrot.lane.b32.xlu0 %v2180, 28
      %v3563 = vpop.permute.xlu0 %3562
      %3564 = vrot.lane.b32.xlu0 %v2188, 28
      %v3565 = vpop.permute.xlu0 %3564
      %3566 = vrot.lane.b32.xlu0 %v2200, 28
      %v3567 = vpop.permute.xlu0 %3566
      %3568 = vrot.lane.b32.xlu0 %v2208, 28
      %v3569 = vpop.permute.xlu0 %3568
      %3570 = vrot.lane.b32.xlu0 %v2220, 28
      %v3571 = vpop.permute.xlu0 %3570
      %3572 = vrot.lane.b32.xlu0 %v2228, 28
      %v3573 = vpop.permute.xlu0 %3572
      %3574 = vrot.lane.b32.xlu0 %v2240, 28
      %v3575 = vpop.permute.xlu0 %3574
      %3576 = vrot.lane.b32.xlu0 %v2248, 28
      %v3577 = vpop.permute.xlu0 %3576
      %3578 = vrot.lane.b32.xlu0 %v2260, 28
      %v3579 = vpop.permute.xlu0 %3578
      %3580 = vrot.lane.b32.xlu0 %v2268, 28
      %v3581 = vpop.permute.xlu0 %3580
      %3582 = vrot.lane.b32.xlu0 %v2280, 28
      %v3583 = vpop.permute.xlu0 %3582
      %3584 = vrot.lane.b32.xlu0 %v2288, 28
      %v3585 = vpop.permute.xlu0 %3584
      %3586 = vrot.lane.b32.xlu0 %v2300, 28
      %v3587 = vpop.permute.xlu0 %3586
      %3588 = vrot.lane.b32.xlu0 %v2308, 28
      %v3589 = vpop.permute.xlu0 %3588
      %3590 = vrot.lane.b32.xlu0 %v2320, 28
      %v3591 = vpop.permute.xlu0 %3590
      %3592 = vrot.lane.b32.xlu0 %v2328, 28
      %v3593 = vpop.permute.xlu0 %3592
      %3594 = vrot.lane.b32.xlu0 %v2340, 28
      %v3595 = vpop.permute.xlu0 %3594
      %3596 = vrot.lane.b32.xlu0 %v2348, 28
      %v3597 = vpop.permute.xlu0 %3596
      %3598 = vrot.lane.b32.xlu0 %v2360, 28
      %v3599 = vpop.permute.xlu0 %3598
      %3600 = vrot.lane.b32.xlu0 %v2368, 28
      %v3601 = vpop.permute.xlu0 %3600
      %3602 = vrot.lane.b32.xlu0 %v2380, 28
      %v3603 = vpop.permute.xlu0 %3602
      %3604 = vrot.lane.b32.xlu0 %v2388, 28
      %v3605 = vpop.permute.xlu0 %3604
      %3606 = vrot.lane.b32.xlu0 %v2400, 28
      %v3607 = vpop.permute.xlu0 %3606
      %3608 = vrot.lane.b32.xlu0 %v2408, 28
      %v3609 = vpop.permute.xlu0 %3608
      %3610 = vrot.lane.b32.xlu0 %v2677, 28
      %v3611 = vpop.permute.xlu0 %3610
      %3612 = vrot.lane.b32.xlu0 %v2685, 28
      %v3613 = vpop.permute.xlu0 %3612
      %3614 = vrot.lane.b32.xlu0 %v2705, 28
      %v3615 = vpop.permute.xlu0 %3614
      %3616 = vrot.lane.b32.xlu0 %v2713, 28
      %v3617 = vpop.permute.xlu0 %3616
      %3618 = vrot.lane.b32.xlu0 %v2518, 32
      %v3619 = vpop.permute.xlu0 %3618
      %3620 = vrot.lane.b32.xlu0 %v2520, 32
      %v3621 = vpop.permute.xlu0 %3620
      %3622 = vrot.lane.b32.xlu0 %v2523, 32
      %v3623 = vpop.permute.xlu0 %3622
      %3624 = vrot.lane.b32.xlu0 %v2525, 32
      %v3625 = vpop.permute.xlu0 %3624
      %3626 = vrot.lane.b32.xlu0 %v2528, 32
      %v3627 = vpop.permute.xlu0 %3626
      %3628 = vrot.lane.b32.xlu0 %v2530, 32
      %v3629 = vpop.permute.xlu0 %3628
      %3630 = vrot.lane.b32.xlu0 %v2533, 32
      %v3631 = vpop.permute.xlu0 %3630
      %3632 = vrot.lane.b32.xlu0 %v2535, 32
      %v3633 = vpop.permute.xlu0 %3632
      %3634 = vrot.lane.b32.xlu0 %v2538, 32
      %v3635 = vpop.permute.xlu0 %3634
      %3636 = vrot.lane.b32.xlu0 %v2540, 32
      %v3637 = vpop.permute.xlu0 %3636
      %3638 = vrot.lane.b32.xlu0 %v2543, 32
      %v3639 = vpop.permute.xlu0 %3638
      %3640 = vrot.lane.b32.xlu0 %v2545, 32
      %v3641 = vpop.permute.xlu0 %3640
      %3642 = vrot.lane.b32.xlu0 %v2548, 32
      %v3643 = vpop.permute.xlu0 %3642
      %3644 = vrot.lane.b32.xlu0 %v2550, 32
      %v3645 = vpop.permute.xlu0 %3644
      %3646 = vrot.lane.b32.xlu0 %v2553, 32
      %v3647 = vpop.permute.xlu0 %3646
      %3648 = vrot.lane.b32.xlu0 %v2555, 32
      %v3649 = vpop.permute.xlu0 %3648
      %3650 = vrot.lane.b32.xlu0 %v2558, 32
      %v3651 = vpop.permute.xlu0 %3650
      %3652 = vrot.lane.b32.xlu0 %v2560, 32
      %v3653 = vpop.permute.xlu0 %3652
      %3654 = vrot.lane.b32.xlu0 %v2563, 32
      %v3655 = vpop.permute.xlu0 %3654
      %3656 = vrot.lane.b32.xlu0 %v2565, 32
      %v3657 = vpop.permute.xlu0 %3656
      %3658 = vrot.lane.b32.xlu0 %v2568, 32
      %v3659 = vpop.permute.xlu0 %3658
      %3660 = vrot.lane.b32.xlu0 %v2570, 32
      %v3661 = vpop.permute.xlu0 %3660
      %3662 = vrot.lane.b32.xlu0 %v2573, 32
      %v3663 = vpop.permute.xlu0 %3662
      %3664 = vrot.lane.b32.xlu0 %v2575, 32
      %v3665 = vpop.permute.xlu0 %3664
      %3666 = vrot.lane.b32.xlu0 %v2578, 32
      %v3667 = vpop.permute.xlu0 %3666
      %3668 = vrot.lane.b32.xlu0 %v2580, 32
      %v3669 = vpop.permute.xlu0 %3668
      %3670 = vrot.lane.b32.xlu0 %v2583, 32
      %v3671 = vpop.permute.xlu0 %3670
      %3672 = vrot.lane.b32.xlu0 %v2585, 32
      %v3673 = vpop.permute.xlu0 %3672
      %3674 = vrot.lane.b32.xlu0 %v2588, 32
      %v3675 = vpop.permute.xlu0 %3674
      %3676 = vrot.lane.b32.xlu0 %v2590, 32
      %v3677 = vpop.permute.xlu0 %3676
      %3678 = vrot.lane.b32.xlu0 %v2593, 32
      %v3679 = vpop.permute.xlu0 %3678
      %3680 = vrot.lane.b32.xlu0 %v2595, 32
      %v3681 = vpop.permute.xlu0 %3680
      %3682 = vrot.lane.b32.xlu0 %v2598, 32
      %v3683 = vpop.permute.xlu0 %3682
      %3684 = vrot.lane.b32.xlu0 %v2600, 32
      %v3685 = vpop.permute.xlu0 %3684
      %3686 = vrot.lane.b32.xlu0 %v2603, 32
      %v3687 = vpop.permute.xlu0 %3686
      %3688 = vrot.lane.b32.xlu0 %v2605, 32
      %v3689 = vpop.permute.xlu0 %3688
      %3690 = vrot.lane.b32.xlu0 %v2608, 32
      %v3691 = vpop.permute.xlu0 %3690
      %3692 = vrot.lane.b32.xlu0 %v2610, 32
      %v3693 = vpop.permute.xlu0 %3692
      %3694 = vrot.lane.b32.xlu0 %v2613, 32
      %v3695 = vpop.permute.xlu0 %3694
      %3696 = vrot.lane.b32.xlu0 %v2615, 32
      %v3697 = vpop.permute.xlu0 %3696
      %3698 = vrot.lane.b32.xlu0 %v2618, 32
      %v3699 = vpop.permute.xlu0 %3698
      %3700 = vrot.lane.b32.xlu0 %v2620, 32
      %v3701 = vpop.permute.xlu0 %3700
      %3702 = vrot.lane.b32.xlu0 %v2623, 32
      %v3703 = vpop.permute.xlu0 %3702
      %3704 = vrot.lane.b32.xlu0 %v2625, 32
      %v3705 = vpop.permute.xlu0 %3704
      %3706 = vrot.lane.b32.xlu0 %v2628, 32
      %v3707 = vpop.permute.xlu0 %3706
      %3708 = vrot.lane.b32.xlu0 %v2630, 32
      %v3709 = vpop.permute.xlu0 %3708
      %3710 = vrot.lane.b32.xlu0 %v2633, 32
      %v3711 = vpop.permute.xlu0 %3710
      %3712 = vrot.lane.b32.xlu0 %v2635, 32
      %v3713 = vpop.permute.xlu0 %3712
      %3714 = vrot.lane.b32.xlu0 %v2638, 32
      %v3715 = vpop.permute.xlu0 %3714
      %3716 = vrot.lane.b32.xlu0 %v2640, 32
      %v3717 = vpop.permute.xlu0 %3716
      %3718 = vrot.lane.b32.xlu0 %v2643, 32
      %v3719 = vpop.permute.xlu0 %3718
      %3720 = vrot.lane.b32.xlu0 %v2645, 32
      %v3721 = vpop.permute.xlu0 %3720
      %3722 = vrot.lane.b32.xlu0 %v2648, 32
      %v3723 = vpop.permute.xlu0 %3722
      %3724 = vrot.lane.b32.xlu0 %v2650, 32
      %v3725 = vpop.permute.xlu0 %3724
      %3726 = vrot.lane.b32.xlu0 %v2653, 32
      %v3727 = vpop.permute.xlu0 %3726
      %3728 = vrot.lane.b32.xlu0 %v2655, 32
      %v3729 = vpop.permute.xlu0 %3728
      %3730 = vrot.lane.b32.xlu0 %v2658, 32
      %v3731 = vpop.permute.xlu0 %3730
      %3732 = vrot.lane.b32.xlu0 %v2660, 32
      %v3733 = vpop.permute.xlu0 %3732
      %3734 = vrot.lane.b32.xlu0 %v2663, 32
      %v3735 = vpop.permute.xlu0 %3734
      %3736 = vrot.lane.b32.xlu0 %v2665, 32
      %v3737 = vpop.permute.xlu0 %3736
      %3738 = vrot.lane.b32.xlu0 %v2691, 32
      %v3739 = vpop.permute.xlu0 %3738
      %3740 = vrot.lane.b32.xlu0 %v2693, 32
      %v3741 = vpop.permute.xlu0 %3740
      %3742 = vrot.lane.b32.xlu0 %v2719, 32
      %v3743 = vpop.permute.xlu0 %3742
      %3744 = vrot.lane.b32.xlu0 %v2721, 32
      %v3745 = vpop.permute.xlu0 %3744
      %vm3746 = vcmask 31744
      %v3748 = vsel %vm3746, %v1666, %v2723
      %v3750 = vsel %vm3746, %v1667, %v2725
      %v3752 = vsel %vm3746, %v1669, %v2727
      %v3754 = vsel %vm3746, %v1670, %v2729
      %v3756 = vsel %vm3746, %v1672, %v2731
      %v3758 = vsel %vm3746, %v1673, %v2733
      %v3760 = vsel %vm3746, %v1675, %v2735
      %v3762 = vsel %vm3746, %v1676, %v2737
      %v3764 = vsel %vm3746, %v1678, %v2739
      %v3766 = vsel %vm3746, %v1679, %v2741
      %v3768 = vsel %vm3746, %v1681, %v2743
      %v3770 = vsel %vm3746, %v1682, %v2745
      %v3772 = vsel %vm3746, %v1684, %v2747
      %v3774 = vsel %vm3746, %v1685, %v2749
      %v3776 = vsel %vm3746, %v1687, %v2751
      %v3778 = vsel %vm3746, %v1688, %v2753
      %v3780 = vsel %vm3746, %v1690, %v2755
      %v3782 = vsel %vm3746, %v1691, %v2757
      %v3784 = vsel %vm3746, %v1693, %v2759
      %v3786 = vsel %vm3746, %v1694, %v2761
      %v3788 = vsel %vm3746, %v1696, %v2763
      %v3790 = vsel %vm3746, %v1697, %v2765
      %v3792 = vsel %vm3746, %v1699, %v2767
      %v3794 = vsel %vm3746, %v1700, %v2769
      %v3796 = vsel %vm3746, %v1702, %v2771
      %v3798 = vsel %vm3746, %v1703, %v2773
      %v3800 = vsel %vm3746, %v1705, %v2775
      %v3802 = vsel %vm3746, %v1706, %v2777
      %v3804 = vsel %vm3746, %v1708, %v2779
      %v3806 = vsel %vm3746, %v1709, %v2781
      %v3808 = vsel %vm3746, %v1711, %v2783
      %v3810 = vsel %vm3746, %v1712, %v2785
      %v3812 = vsel %vm3746, %v1714, %v2787
      %v3814 = vsel %vm3746, %v1715, %v2789
      %v3816 = vsel %vm3746, %v1717, %v2791
      %v3818 = vsel %vm3746, %v1718, %v2793
      %v3820 = vsel %vm3746, %v1720, %v2795
      %v3822 = vsel %vm3746, %v1721, %v2797
      %v3824 = vsel %vm3746, %v1723, %v2799
      %v3826 = vsel %vm3746, %v1724, %v2801
      %v3828 = vsel %vm3746, %v1726, %v2803
      %v3830 = vsel %vm3746, %v1727, %v2805
      %v3832 = vsel %vm3746, %v1729, %v2807
      %v3834 = vsel %vm3746, %v1730, %v2809
      %v3836 = vsel %vm3746, %v1732, %v2811
      %v3838 = vsel %vm3746, %v1733, %v2813
      %v3840 = vsel %vm3746, %v1735, %v2815
      %v3842 = vsel %vm3746, %v1736, %v2817
      %v3844 = vsel %vm3746, %v1738, %v2819
      %v3846 = vsel %vm3746, %v1739, %v2821
      %v3848 = vsel %vm3746, %v1741, %v2823
      %v3850 = vsel %vm3746, %v1742, %v2825
      %v3852 = vsel %vm3746, %v1744, %v2827
      %v3854 = vsel %vm3746, %v1745, %v2829
      %v3856 = vsel %vm3746, %v1747, %v2831
      %v3858 = vsel %vm3746, %v1748, %v2833
      %v3860 = vsel %vm3746, %v1750, %v2835
      %v3862 = vsel %vm3746, %v1751, %v2837
      %v3864 = vsel %vm3746, %v1753, %v2839
      %v3866 = vsel %vm3746, %v1754, %v2841
      %v3868 = vsel %vm3746, %v1756, %v2843
      %v3870 = vsel %vm3746, %v1757, %v2845
      %v3872 = vsel %vm3746, %v1759, %v2847
      %v3874 = vsel %vm3746, %v1760, %v2849
      %vm3875 = vcmask 64512
      %v3877 = vsel %vm3875, %v3748, %v2851
      %v3879 = vsel %vm3875, %v3750, %v2853
      %v3881 = vsel %vm3875, %v3752, %v2855
      %v3883 = vsel %vm3875, %v3754, %v2857
      %v3885 = vsel %vm3875, %v3756, %v2859
      %v3887 = vsel %vm3875, %v3758, %v2861
      %v3889 = vsel %vm3875, %v3760, %v2863
      %v3891 = vsel %vm3875, %v3762, %v2865
      %v3893 = vsel %vm3875, %v3764, %v2867
      %v3895 = vsel %vm3875, %v3766, %v2869
      %v3897 = vsel %vm3875, %v3768, %v2871
      %v3899 = vsel %vm3875, %v3770, %v2873
      %v3901 = vsel %vm3875, %v3772, %v2875
      %v3903 = vsel %vm3875, %v3774, %v2877
      %v3905 = vsel %vm3875, %v3776, %v2879
      %v3907 = vsel %vm3875, %v3778, %v2881
      %v3909 = vsel %vm3875, %v3780, %v2883
      %v3911 = vsel %vm3875, %v3782, %v2885
      %v3913 = vsel %vm3875, %v3784, %v2887
      %v3915 = vsel %vm3875, %v3786, %v2889
      %v3917 = vsel %vm3875, %v3788, %v2891
      %v3919 = vsel %vm3875, %v3790, %v2893
      %v3921 = vsel %vm3875, %v3792, %v2895
      %v3923 = vsel %vm3875, %v3794, %v2897
      %v3925 = vsel %vm3875, %v3796, %v2899
      %v3927 = vsel %vm3875, %v3798, %v2901
      %v3929 = vsel %vm3875, %v3800, %v2903
      %v3931 = vsel %vm3875, %v3802, %v2905
      %v3933 = vsel %vm3875, %v3804, %v2907
      %v3935 = vsel %vm3875, %v3806, %v2909
      %v3937 = vsel %vm3875, %v3808, %v2911
      %v3939 = vsel %vm3875, %v3810, %v2913
      %v3941 = vsel %vm3875, %v3812, %v2915
      %v3943 = vsel %vm3875, %v3814, %v2917
      %v3945 = vsel %vm3875, %v3816, %v2919
      %v3947 = vsel %vm3875, %v3818, %v2921
      %v3949 = vsel %vm3875, %v3820, %v2923
      %v3951 = vsel %vm3875, %v3822, %v2925
      %v3953 = vsel %vm3875, %v3824, %v2927
      %v3955 = vsel %vm3875, %v3826, %v2929
      %v3957 = vsel %vm3875, %v3828, %v2931
      %v3959 = vsel %vm3875, %v3830, %v2933
      %v3961 = vsel %vm3875, %v3832, %v2935
      %v3963 = vsel %vm3875, %v3834, %v2937
      %v3965 = vsel %vm3875, %v3836, %v2939
      %v3967 = vsel %vm3875, %v3838, %v2941
      %v3969 = vsel %vm3875, %v3840, %v2943
      %v3971 = vsel %vm3875, %v3842, %v2945
      %v3973 = vsel %vm3875, %v3844, %v2947
      %v3975 = vsel %vm3875, %v3846, %v2949
      %v3977 = vsel %vm3875, %v3848, %v2951
      %v3979 = vsel %vm3875, %v3850, %v2953
      %v3981 = vsel %vm3875, %v3852, %v2955
      %v3983 = vsel %vm3875, %v3854, %v2957
      %v3985 = vsel %vm3875, %v3856, %v2959
      %v3987 = vsel %vm3875, %v3858, %v2961
      %v3989 = vsel %vm3875, %v3860, %v2963
      %v3991 = vsel %vm3875, %v3862, %v2965
      %v3993 = vsel %vm3875, %v3864, %v2967
      %v3995 = vsel %vm3875, %v3866, %v2969
      %v3997 = vsel %vm3875, %v3868, %v2971
      %v3999 = vsel %vm3875, %v3870, %v2973
      %v4001 = vsel %vm3875, %v3872, %v2975
      %v4003 = vsel %vm3875, %v3874, %v2977
      %vm4004 = vcmask 97280
      %v4006 = vsel %vm4004, %v3877, %v2979
      %v4008 = vsel %vm4004, %v3879, %v2981
      %v4010 = vsel %vm4004, %v3881, %v2983
      %v4012 = vsel %vm4004, %v3883, %v2985
      %v4014 = vsel %vm4004, %v3885, %v2987
      %v4016 = vsel %vm4004, %v3887, %v2989
      %v4018 = vsel %vm4004, %v3889, %v2991
      %v4020 = vsel %vm4004, %v3891, %v2993
      %v4022 = vsel %vm4004, %v3893, %v2995
      %v4024 = vsel %vm4004, %v3895, %v2997
      %v4026 = vsel %vm4004, %v3897, %v2999
      %v4028 = vsel %vm4004, %v3899, %v3001
      %v4030 = vsel %vm4004, %v3901, %v3003
      %v4032 = vsel %vm4004, %v3903, %v3005
      %v4034 = vsel %vm4004, %v3905, %v3007
      %v4036 = vsel %vm4004, %v3907, %v3009
      %v4038 = vsel %vm4004, %v3909, %v3011
      %v4040 = vsel %vm4004, %v3911, %v3013
      %v4042 = vsel %vm4004, %v3913, %v3015
      %v4044 = vsel %vm4004, %v3915, %v3017
      %v4046 = vsel %vm4004, %v3917, %v3019
      %v4048 = vsel %vm4004, %v3919, %v3021
      %v4050 = vsel %vm4004, %v3921, %v3023
      %v4052 = vsel %vm4004, %v3923, %v3025
      %v4054 = vsel %vm4004, %v3925, %v3027
      %v4056 = vsel %vm4004, %v3927, %v3029
      %v4058 = vsel %vm4004, %v3929, %v3031
      %v4060 = vsel %vm4004, %v3931, %v3033
      %v4062 = vsel %vm4004, %v3933, %v3035
      %v4064 = vsel %vm4004, %v3935, %v3037
      %v4066 = vsel %vm4004, %v3937, %v3039
      %v4068 = vsel %vm4004, %v3939, %v3041
      %v4070 = vsel %vm4004, %v3941, %v3043
      %v4072 = vsel %vm4004, %v3943, %v3045
      %v4074 = vsel %vm4004, %v3945, %v3047
      %v4076 = vsel %vm4004, %v3947, %v3049
      %v4078 = vsel %vm4004, %v3949, %v3051
      %v4080 = vsel %vm4004, %v3951, %v3053
      %v4082 = vsel %vm4004, %v3953, %v3055
      %v4084 = vsel %vm4004, %v3955, %v3057
      %v4086 = vsel %vm4004, %v3957, %v3059
      %v4088 = vsel %vm4004, %v3959, %v3061
      %v4090 = vsel %vm4004, %v3961, %v3063
      %v4092 = vsel %vm4004, %v3963, %v3065
      %v4094 = vsel %vm4004, %v3965, %v3067
      %v4096 = vsel %vm4004, %v3967, %v3069
      %v4098 = vsel %vm4004, %v3969, %v3071
      %v4100 = vsel %vm4004, %v3971, %v3073
      %v4102 = vsel %vm4004, %v3973, %v3075
      %v4104 = vsel %vm4004, %v3975, %v3077
      %v4106 = vsel %vm4004, %v3977, %v3079
      %v4108 = vsel %vm4004, %v3979, %v3081
      %v4110 = vsel %vm4004, %v3981, %v3083
      %v4112 = vsel %vm4004, %v3983, %v3085
      %v4114 = vsel %vm4004, %v3985, %v3087
      %v4116 = vsel %vm4004, %v3987, %v3089
      %v4118 = vsel %vm4004, %v3989, %v3091
      %v4120 = vsel %vm4004, %v3991, %v3093
      %v4122 = vsel %vm4004, %v3993, %v3095
      %v4124 = vsel %vm4004, %v3995, %v3097
      %v4126 = vsel %vm4004, %v3997, %v3099
      %v4128 = vsel %vm4004, %v3999, %v3101
      %v4130 = vsel %vm4004, %v4001, %v3103
      %v4132 = vsel %vm4004, %v4003, %v3105
      %vm4133 = vcmask 130048
      %v4135 = vsel %vm4133, %v4006, %v3107
      %v4137 = vsel %vm4133, %v4008, %v3109
      %v4139 = vsel %vm4133, %v4010, %v3111
      %v4141 = vsel %vm4133, %v4012, %v3113
      %v4143 = vsel %vm4133, %v4014, %v3115
      %v4145 = vsel %vm4133, %v4016, %v3117
      %v4147 = vsel %vm4133, %v4018, %v3119
      %v4149 = vsel %vm4133, %v4020, %v3121
      %v4151 = vsel %vm4133, %v4022, %v3123
      %v4153 = vsel %vm4133, %v4024, %v3125
      %v4155 = vsel %vm4133, %v4026, %v3127
      %v4157 = vsel %vm4133, %v4028, %v3129
      %v4159 = vsel %vm4133, %v4030, %v3131
      %v4161 = vsel %vm4133, %v4032, %v3133
      %v4163 = vsel %vm4133, %v4034, %v3135
      %v4165 = vsel %vm4133, %v4036, %v3137
      %v4167 = vsel %vm4133, %v4038, %v3139
      %v4169 = vsel %vm4133, %v4040, %v3141
      %v4171 = vsel %vm4133, %v4042, %v3143
      %v4173 = vsel %vm4133, %v4044, %v3145
      %v4175 = vsel %vm4133, %v4046, %v3147
      %v4177 = vsel %vm4133, %v4048, %v3149
      %v4179 = vsel %vm4133, %v4050, %v3151
      %v4181 = vsel %vm4133, %v4052, %v3153
      %v4183 = vsel %vm4133, %v4054, %v3155
      %v4185 = vsel %vm4133, %v4056, %v3157
      %v4187 = vsel %vm4133, %v4058, %v3159
      %v4189 = vsel %vm4133, %v4060, %v3161
      %v4191 = vsel %vm4133, %v4062, %v3163
      %v4193 = vsel %vm4133, %v4064, %v3165
      %v4195 = vsel %vm4133, %v4066, %v3167
      %v4197 = vsel %vm4133, %v4068, %v3169
      %v4199 = vsel %vm4133, %v4070, %v3171
      %v4201 = vsel %vm4133, %v4072, %v3173
      %v4203 = vsel %vm4133, %v4074, %v3175
      %v4205 = vsel %vm4133, %v4076, %v3177
      %v4207 = vsel %vm4133, %v4078, %v3179
      %v4209 = vsel %vm4133, %v4080, %v3181
      %v4211 = vsel %vm4133, %v4082, %v3183
      %v4213 = vsel %vm4133, %v4084, %v3185
      %v4215 = vsel %vm4133, %v4086, %v3187
      %v4217 = vsel %vm4133, %v4088, %v3189
      %v4219 = vsel %vm4133, %v4090, %v3191
      %v4221 = vsel %vm4133, %v4092, %v3193
      %v4223 = vsel %vm4133, %v4094, %v3195
      %v4225 = vsel %vm4133, %v4096, %v3197
      %v4227 = vsel %vm4133, %v4098, %v3199
      %v4229 = vsel %vm4133, %v4100, %v3201
      %v4231 = vsel %vm4133, %v4102, %v3203
      %v4233 = vsel %vm4133, %v4104, %v3205
      %v4235 = vsel %vm4133, %v4106, %v3207
      %v4237 = vsel %vm4133, %v4108, %v3209
      %v4239 = vsel %vm4133, %v4110, %v3211
      %v4241 = vsel %vm4133, %v4112, %v3213
      %v4243 = vsel %vm4133, %v4114, %v3215
      %v4245 = vsel %vm4133, %v4116, %v3217
      %v4247 = vsel %vm4133, %v4118, %v3219
      %v4249 = vsel %vm4133, %v4120, %v3221
      %v4251 = vsel %vm4133, %v4122, %v3223
      %v4253 = vsel %vm4133, %v4124, %v3225
      %v4255 = vsel %vm4133, %v4126, %v3227
      %v4257 = vsel %vm4133, %v4128, %v3229
      %v4259 = vsel %vm4133, %v4130, %v3231
      %v4261 = vsel %vm4133, %v4132, %v3233
      %vm4262 = vcmask 162816
      %v4264 = vsel %vm4262, %v4135, %v3235
      %v4266 = vsel %vm4262, %v4137, %v3237
      %v4268 = vsel %vm4262, %v4139, %v3239
      %v4270 = vsel %vm4262, %v4141, %v3241
      %v4272 = vsel %vm4262, %v4143, %v3243
      %v4274 = vsel %vm4262, %v4145, %v3245
      %v4276 = vsel %vm4262, %v4147, %v3247
      %v4278 = vsel %vm4262, %v4149, %v3249
      %v4280 = vsel %vm4262, %v4151, %v3251
      %v4282 = vsel %vm4262, %v4153, %v3253
      %v4284 = vsel %vm4262, %v4155, %v3255
      %v4286 = vsel %vm4262, %v4157, %v3257
      %v4288 = vsel %vm4262, %v4159, %v3259
      %v4290 = vsel %vm4262, %v4161, %v3261
      %v4292 = vsel %vm4262, %v4163, %v3263
      %v4294 = vsel %vm4262, %v4165, %v3265
      %v4296 = vsel %vm4262, %v4167, %v3267
      %v4298 = vsel %vm4262, %v4169, %v3269
      %v4300 = vsel %vm4262, %v4171, %v3271
      %v4302 = vsel %vm4262, %v4173, %v3273
      %v4304 = vsel %vm4262, %v4175, %v3275
      %v4306 = vsel %vm4262, %v4177, %v3277
      %v4308 = vsel %vm4262, %v4179, %v3279
      %v4310 = vsel %vm4262, %v4181, %v3281
      %v4312 = vsel %vm4262, %v4183, %v3283
      %v4314 = vsel %vm4262, %v4185, %v3285
      %v4316 = vsel %vm4262, %v4187, %v3287
      %v4318 = vsel %vm4262, %v4189, %v3289
      %v4320 = vsel %vm4262, %v4191, %v3291
      %v4322 = vsel %vm4262, %v4193, %v3293
      %v4324 = vsel %vm4262, %v4195, %v3295
      %v4326 = vsel %vm4262, %v4197, %v3297
      %v4328 = vsel %vm4262, %v4199, %v3299
      %v4330 = vsel %vm4262, %v4201, %v3301
      %v4332 = vsel %vm4262, %v4203, %v3303
      %v4334 = vsel %vm4262, %v4205, %v3305
      %v4336 = vsel %vm4262, %v4207, %v3307
      %v4338 = vsel %vm4262, %v4209, %v3309
      %v4340 = vsel %vm4262, %v4211, %v3311
      %v4342 = vsel %vm4262, %v4213, %v3313
      %v4344 = vsel %vm4262, %v4215, %v3315
      %v4346 = vsel %vm4262, %v4217, %v3317
      %v4348 = vsel %vm4262, %v4219, %v3319
      %v4350 = vsel %vm4262, %v4221, %v3321
      %v4352 = vsel %vm4262, %v4223, %v3323
      %v4354 = vsel %vm4262, %v4225, %v3325
      %v4356 = vsel %vm4262, %v4227, %v3327
      %v4358 = vsel %vm4262, %v4229, %v3329
      %v4360 = vsel %vm4262, %v4231, %v3331
      %v4362 = vsel %vm4262, %v4233, %v3333
      %v4364 = vsel %vm4262, %v4235, %v3335
      %v4366 = vsel %vm4262, %v4237, %v3337
      %v4368 = vsel %vm4262, %v4239, %v3339
      %v4370 = vsel %vm4262, %v4241, %v3341
      %v4372 = vsel %vm4262, %v4243, %v3343
      %v4374 = vsel %vm4262, %v4245, %v3345
      %v4376 = vsel %vm4262, %v4247, %v3347
      %v4378 = vsel %vm4262, %v4249, %v3349
      %v4380 = vsel %vm4262, %v4251, %v3351
      %v4382 = vsel %vm4262, %v4253, %v3353
      %v4384 = vsel %vm4262, %v4255, %v3355
      %v4386 = vsel %vm4262, %v4257, %v3357
      %v4388 = vsel %vm4262, %v4259, %v3359
      %v4390 = vsel %vm4262, %v4261, %v3361
      %vm4391 = vcmask 195584
      %v4393 = vsel %vm4391, %v4264, %v3363
      %v4395 = vsel %vm4391, %v4266, %v3365
      %v4397 = vsel %vm4391, %v4268, %v3367
      %v4399 = vsel %vm4391, %v4270, %v3369
      %v4401 = vsel %vm4391, %v4272, %v3371
      %v4403 = vsel %vm4391, %v4274, %v3373
      %v4405 = vsel %vm4391, %v4276, %v3375
      %v4407 = vsel %vm4391, %v4278, %v3377
      %v4409 = vsel %vm4391, %v4280, %v3379
      %v4411 = vsel %vm4391, %v4282, %v3381
      %v4413 = vsel %vm4391, %v4284, %v3383
      %v4415 = vsel %vm4391, %v4286, %v3385
      %v4417 = vsel %vm4391, %v4288, %v3387
      %v4419 = vsel %vm4391, %v4290, %v3389
      %v4421 = vsel %vm4391, %v4292, %v3391
      %v4423 = vsel %vm4391, %v4294, %v3393
      %v4425 = vsel %vm4391, %v4296, %v3395
      %v4427 = vsel %vm4391, %v4298, %v3397
      %v4429 = vsel %vm4391, %v4300, %v3399
      %v4431 = vsel %vm4391, %v4302, %v3401
      %v4433 = vsel %vm4391, %v4304, %v3403
      %v4435 = vsel %vm4391, %v4306, %v3405
      %v4437 = vsel %vm4391, %v4308, %v3407
      %v4439 = vsel %vm4391, %v4310, %v3409
      %v4441 = vsel %vm4391, %v4312, %v3411
      %v4443 = vsel %vm4391, %v4314, %v3413
      %v4445 = vsel %vm4391, %v4316, %v3415
      %v4447 = vsel %vm4391, %v4318, %v3417
      %v4449 = vsel %vm4391, %v4320, %v3419
      %v4451 = vsel %vm4391, %v4322, %v3421
      %v4453 = vsel %vm4391, %v4324, %v3423
      %v4455 = vsel %vm4391, %v4326, %v3425
      %v4457 = vsel %vm4391, %v4328, %v3427
      %v4459 = vsel %vm4391, %v4330, %v3429
      %v4461 = vsel %vm4391, %v4332, %v3431
      %v4463 = vsel %vm4391, %v4334, %v3433
      %v4465 = vsel %vm4391, %v4336, %v3435
      %v4467 = vsel %vm4391, %v4338, %v3437
      %v4469 = vsel %vm4391, %v4340, %v3439
      %v4471 = vsel %vm4391, %v4342, %v3441
      %v4473 = vsel %vm4391, %v4344, %v3443
      %v4475 = vsel %vm4391, %v4346, %v3445
      %v4477 = vsel %vm4391, %v4348, %v3447
      %v4479 = vsel %vm4391, %v4350, %v3449
      %v4481 = vsel %vm4391, %v4352, %v3451
      %v4483 = vsel %vm4391, %v4354, %v3453
      %v4485 = vsel %vm4391, %v4356, %v3455
      %v4487 = vsel %vm4391, %v4358, %v3457
      %v4489 = vsel %vm4391, %v4360, %v3459
      %v4491 = vsel %vm4391, %v4362, %v3461
      %v4493 = vsel %vm4391, %v4364, %v3463
      %v4495 = vsel %vm4391, %v4366, %v3465
      %v4497 = vsel %vm4391, %v4368, %v3467
      %v4499 = vsel %vm4391, %v4370, %v3469
      %v4501 = vsel %vm4391, %v4372, %v3471
      %v4503 = vsel %vm4391, %v4374, %v3473
      %v4505 = vsel %vm4391, %v4376, %v3475
      %v4507 = vsel %vm4391, %v4378, %v3477
      %v4509 = vsel %vm4391, %v4380, %v3479
      %v4511 = vsel %vm4391, %v4382, %v3481
      %v4513 = vsel %vm4391, %v4384, %v3483
      %v4515 = vsel %vm4391, %v4386, %v3485
      %v4517 = vsel %vm4391, %v4388, %v3487
      %v4519 = vsel %vm4391, %v4390, %v3489
      %vm4520 = vcmask 228352
      %v4522 = vsel %vm4520, %v4393, %v3491
      %v4524 = vsel %vm4520, %v4395, %v3493
      %v4526 = vsel %vm4520, %v4397, %v3495
      %v4528 = vsel %vm4520, %v4399, %v3497
      %v4530 = vsel %vm4520, %v4401, %v3499
      %v4532 = vsel %vm4520, %v4403, %v3501
      %v4534 = vsel %vm4520, %v4405, %v3503
      %v4536 = vsel %vm4520, %v4407, %v3505
      %v4538 = vsel %vm4520, %v4409, %v3507
      %v4540 = vsel %vm4520, %v4411, %v3509
      %v4542 = vsel %vm4520, %v4413, %v3511
      %v4544 = vsel %vm4520, %v4415, %v3513
      %v4546 = vsel %vm4520, %v4417, %v3515
      %v4548 = vsel %vm4520, %v4419, %v3517
      %v4550 = vsel %vm4520, %v4421, %v3519
      %v4552 = vsel %vm4520, %v4423, %v3521
      %v4554 = vsel %vm4520, %v4425, %v3523
      %v4556 = vsel %vm4520, %v4427, %v3525
      %v4558 = vsel %vm4520, %v4429, %v3527
      %v4560 = vsel %vm4520, %v4431, %v3529
      %v4562 = vsel %vm4520, %v4433, %v3531
      %v4564 = vsel %vm4520, %v4435, %v3533
      %v4566 = vsel %vm4520, %v4437, %v3535
      %v4568 = vsel %vm4520, %v4439, %v3537
      %v4570 = vsel %vm4520, %v4441, %v3539
      %v4572 = vsel %vm4520, %v4443, %v3541
      %v4574 = vsel %vm4520, %v4445, %v3543
      %v4576 = vsel %vm4520, %v4447, %v3545
      %v4578 = vsel %vm4520, %v4449, %v3547
      %v4580 = vsel %vm4520, %v4451, %v3549
      %v4582 = vsel %vm4520, %v4453, %v3551
      %v4584 = vsel %vm4520, %v4455, %v3553
      %v4586 = vsel %vm4520, %v4457, %v3555
      %v4588 = vsel %vm4520, %v4459, %v3557
      %v4590 = vsel %vm4520, %v4461, %v3559
      %v4592 = vsel %vm4520, %v4463, %v3561
      %v4594 = vsel %vm4520, %v4465, %v3563
      %v4596 = vsel %vm4520, %v4467, %v3565
      %v4598 = vsel %vm4520, %v4469, %v3567
      %v4600 = vsel %vm4520, %v4471, %v3569
      %v4602 = vsel %vm4520, %v4473, %v3571
      %v4604 = vsel %vm4520, %v4475, %v3573
      %v4606 = vsel %vm4520, %v4477, %v3575
      %v4608 = vsel %vm4520, %v4479, %v3577
      %v4610 = vsel %vm4520, %v4481, %v3579
      %v4612 = vsel %vm4520, %v4483, %v3581
      %v4614 = vsel %vm4520, %v4485, %v3583
      %v4616 = vsel %vm4520, %v4487, %v3585
      %v4618 = vsel %vm4520, %v4489, %v3587
      %v4620 = vsel %vm4520, %v4491, %v3589
      %v4622 = vsel %vm4520, %v4493, %v3591
      %v4624 = vsel %vm4520, %v4495, %v3593
      %v4626 = vsel %vm4520, %v4497, %v3595
      %v4628 = vsel %vm4520, %v4499, %v3597
      %v4630 = vsel %vm4520, %v4501, %v3599
      %v4632 = vsel %vm4520, %v4503, %v3601
      %v4634 = vsel %vm4520, %v4505, %v3603
      %v4636 = vsel %vm4520, %v4507, %v3605
      %v4638 = vsel %vm4520, %v4509, %v3607
      %v4640 = vsel %vm4520, %v4511, %v3609
      %v4642 = vsel %vm4520, %v4513, %v3611
      %v4644 = vsel %vm4520, %v4515, %v3613
      %v4646 = vsel %vm4520, %v4517, %v3615
      %v4648 = vsel %vm4520, %v4519, %v3617
      %vm4649 = vcmask 261120
      %v4651 = vsel %vm4649, %v4522, %v3619
      %v4653 = vsel %vm4649, %v4524, %v3621
      %v4655 = vsel %vm4649, %v4526, %v3623
      %v4657 = vsel %vm4649, %v4528, %v3625
      %v4659 = vsel %vm4649, %v4530, %v3627
      %v4661 = vsel %vm4649, %v4532, %v3629
      %v4663 = vsel %vm4649, %v4534, %v3631
      %v4665 = vsel %vm4649, %v4536, %v3633
      %v4667 = vsel %vm4649, %v4538, %v3635
      %v4669 = vsel %vm4649, %v4540, %v3637
      %v4671 = vsel %vm4649, %v4542, %v3639
      %v4673 = vsel %vm4649, %v4544, %v3641
      %v4675 = vsel %vm4649, %v4546, %v3643
      %v4677 = vsel %vm4649, %v4548, %v3645
      %v4679 = vsel %vm4649, %v4550, %v3647
      %v4681 = vsel %vm4649, %v4552, %v3649
      %v4683 = vsel %vm4649, %v4554, %v3651
      %v4685 = vsel %vm4649, %v4556, %v3653
      %v4687 = vsel %vm4649, %v4558, %v3655
      %v4689 = vsel %vm4649, %v4560, %v3657
      %v4691 = vsel %vm4649, %v4562, %v3659
      %v4693 = vsel %vm4649, %v4564, %v3661
      %v4695 = vsel %vm4649, %v4566, %v3663
      %v4697 = vsel %vm4649, %v4568, %v3665
      %v4699 = vsel %vm4649, %v4570, %v3667
      %v4701 = vsel %vm4649, %v4572, %v3669
      %v4703 = vsel %vm4649, %v4574, %v3671
      %v4705 = vsel %vm4649, %v4576, %v3673
      %v4707 = vsel %vm4649, %v4578, %v3675
      %v4709 = vsel %vm4649, %v4580, %v3677
      %v4711 = vsel %vm4649, %v4582, %v3679
      %v4713 = vsel %vm4649, %v4584, %v3681
      %v4715 = vsel %vm4649, %v4586, %v3683
      %v4717 = vsel %vm4649, %v4588, %v3685
      %v4719 = vsel %vm4649, %v4590, %v3687
      %v4721 = vsel %vm4649, %v4592, %v3689
      %v4723 = vsel %vm4649, %v4594, %v3691
      %v4725 = vsel %vm4649, %v4596, %v3693
      %v4727 = vsel %vm4649, %v4598, %v3695
      %v4729 = vsel %vm4649, %v4600, %v3697
      %v4731 = vsel %vm4649, %v4602, %v3699
      %v4733 = vsel %vm4649, %v4604, %v3701
      %v4735 = vsel %vm4649, %v4606, %v3703
      %v4737 = vsel %vm4649, %v4608, %v3705
      %v4739 = vsel %vm4649, %v4610, %v3707
      %v4741 = vsel %vm4649, %v4612, %v3709
      %v4743 = vsel %vm4649, %v4614, %v3711
      %v4745 = vsel %vm4649, %v4616, %v3713
      %v4747 = vsel %vm4649, %v4618, %v3715
      %v4749 = vsel %vm4649, %v4620, %v3717
      %v4751 = vsel %vm4649, %v4622, %v3719
      %v4753 = vsel %vm4649, %v4624, %v3721
      %v4755 = vsel %vm4649, %v4626, %v3723
      %v4757 = vsel %vm4649, %v4628, %v3725
      %v4759 = vsel %vm4649, %v4630, %v3727
      %v4761 = vsel %vm4649, %v4632, %v3729
      %v4763 = vsel %vm4649, %v4634, %v3731
      %v4765 = vsel %vm4649, %v4636, %v3733
      %v4767 = vsel %vm4649, %v4638, %v3735
      %v4769 = vsel %vm4649, %v4640, %v3737
      %v4771 = vsel %vm4649, %v4642, %v3739
      %v4773 = vsel %vm4649, %v4644, %v3741
      %v4775 = vsel %vm4649, %v4646, %v3743
      %v4777 = vsel %vm4649, %v4648, %v3745
      %v4778 = vld [vmem:[%s226] sm:$0xf]
      %v4779 = vld [vmem:[%s226 + $0x4] sm:$0xf]
      %v4780 = vld [vmem:[%s226 + $0x8] sm:$0xf]
      %v4781 = vld [vmem:[%s226 + $0xc] sm:$0xf]
      %v4782 = vld [vmem:[%s226 + $0x10] sm:$0x3]
      %v4788 = vunpack.c.l.b16 %v4778
      %v4789 = vunpack.c.l.b16 %v4779
      %v4790 = vunpack.c.l.b16 %v4780
      %v4791 = vunpack.c.l.b16 %v4781
      %v4792 = vunpack.c.l.b16 %v4782
      %v4793 = vpack.c.b16 %v4789, %v4788
      %v4794 = vpack.c.b16 %v4791, %v4790
      %v4795 = vpack.c.b16 %v4792, %v4792
      %vm4798 = vcmask 293888
      %v4799 = vsel %vm4798, %v4651, 0
      %v4801 = vsel %vm4798, %v4653, 0
      %v4803 = vsel %vm4798, %v4655, 0
      %v4805 = vsel %vm4798, %v4657, 0
      %v4807 = vsel %vm4798, %v4659, 0
      %v4809 = vsel %vm4798, %v4661, 0
      %v4811 = vsel %vm4798, %v4663, 0
      %v4813 = vsel %vm4798, %v4665, 0
      %v4815 = vsel %vm4798, %v4667, 0
      %v4817 = vsel %vm4798, %v4669, 0
      %v4819 = vsel %vm4798, %v4671, 0
      %v4821 = vsel %vm4798, %v4673, 0
      %v4823 = vsel %vm4798, %v4675, 0
      %v4825 = vsel %vm4798, %v4677, 0
      %v4827 = vsel %vm4798, %v4679, 0
      %v4829 = vsel %vm4798, %v4681, 0
      %v4831 = vsel %vm4798, %v4683, 0
      %v4833 = vsel %vm4798, %v4685, 0
      %v4835 = vsel %vm4798, %v4687, 0
      %v4837 = vsel %vm4798, %v4689, 0
      %v4839 = vsel %vm4798, %v4691, 0
      %v4841 = vsel %vm4798, %v4693, 0
      %v4843 = vsel %vm4798, %v4695, 0
      %v4845 = vsel %vm4798, %v4697, 0
      %v4847 = vsel %vm4798, %v4699, 0
      %v4849 = vsel %vm4798, %v4701, 0
      %v4851 = vsel %vm4798, %v4703, 0
      %v4853 = vsel %vm4798, %v4705, 0
      %v4855 = vsel %vm4798, %v4707, 0
      %v4857 = vsel %vm4798, %v4709, 0
      %v4859 = vsel %vm4798, %v4711, 0
      %v4861 = vsel %vm4798, %v4713, 0
      %v4863 = vsel %vm4798, %v4715, 0
      %v4865 = vsel %vm4798, %v4717, 0
      %v4867 = vsel %vm4798, %v4719, 0
      %v4869 = vsel %vm4798, %v4721, 0
      %v4871 = vsel %vm4798, %v4723, 0
      %v4873 = vsel %vm4798, %v4725, 0
      %v4875 = vsel %vm4798, %v4727, 0
      %v4877 = vsel %vm4798, %v4729, 0
      %v4879 = vsel %vm4798, %v4731, 0
      %v4881 = vsel %vm4798, %v4733, 0
      %v4883 = vsel %vm4798, %v4735, 0
      %v4885 = vsel %vm4798, %v4737, 0
      %v4887 = vsel %vm4798, %v4739, 0
      %v4889 = vsel %vm4798, %v4741, 0
      %v4891 = vsel %vm4798, %v4743, 0
      %v4893 = vsel %vm4798, %v4745, 0
      %v4895 = vsel %vm4798, %v4747, 0
      %v4897 = vsel %vm4798, %v4749, 0
      %v4899 = vsel %vm4798, %v4751, 0
      %v4901 = vsel %vm4798, %v4753, 0
      %v4903 = vsel %vm4798, %v4755, 0
      %v4905 = vsel %vm4798, %v4757, 0
      %v4907 = vsel %vm4798, %v4759, 0
      %v4909 = vsel %vm4798, %v4761, 0
      %v4911 = vsel %vm4798, %v4763, 0
      %v4913 = vsel %vm4798, %v4765, 0
      %v4915 = vsel %vm4798, %v4767, 0
      %v4917 = vsel %vm4798, %v4769, 0
      %v4919 = vsel %vm4798, %v4771, 0
      %v4921 = vsel %vm4798, %v4773, 0
      %v4923 = vsel %vm4798, %v4775, 0
      %v4925 = vsel %vm4798, %v4777, 0
      %vm4927 = vcmask 1041408
      %v4929 = vsel %vm4927, %v4795, 0
      %4931 = vmatprep.subr.bf16.mxu0 0
      %4932 = vmatpush1.bf16.msra.mxu0 0
      %4933 = vmatprep.subr.bf16.mxu0 0
      %4934 = vmatpush1.bf16.msra.mxu0 0
      %4935 = vmatprep.subr.bf16.mxu0 0
      %4936 = vmatpush1.bf16.msra.mxu0 0
      %4937 = vmatprep.subr.bf16.mxu0 0
      %4938 = vmatpush1.bf16.msra.mxu0 0
      %4939 = vmatprep.subr.bf16.mxu0 0
      %4940 = vmatpush1.bf16.msra.mxu0 0
      %4941 = vmatprep.subr.bf16.mxu0 0
      %4942 = vmatpush1.bf16.msra.mxu0 %v4929
      %4943 = vmatprep.subr.bf16.mxu0 0
      %4944 = vmatpush1.bf16.msra.mxu0 %v4794
      %4945 = vmatprep.subr.bf16.mxu0 0
      %4946 = vmatpush1.bf16.msra.mxu0 %v4793
      %4947 = vmatprep.subr.bf16.mxu0 0
      %4948 = vmatpush2.bf16.msra.mxu0 0
      %4949 = vmatprep.subr.bf16.mxu0 0
      %4950 = vmatpush2.bf16.msra.mxu0 0
      %4951 = vmatprep.subr.bf16.mxu0 0
      %4952 = vmatpush2.bf16.msra.mxu0 0
      %4953 = vmatprep.subr.bf16.mxu0 0
      %4954 = vmatpush2.bf16.msra.mxu0 0
      %4955 = vmatprep.subr.bf16.mxu0 0
      %4956 = vmatpush2.bf16.msra.mxu0 0
      %4957 = vmatprep.subr.bf16.mxu0 0
      %4958 = vmatpush2.bf16.msra.mxu0 0
      %4959 = vmatprep.subr.bf16.mxu0 0
      %4960 = vmatpush2.bf16.msra.mxu0 0
      %4961 = vmatprep.subr.bf16.mxu0 0
      %4962 = vmatpush2.bf16.msra.mxu0 0
      %4963 = vmatprep.mubr.bf16.mxu0 0
      %4964 = vmatmul.mubr.bf16.gmra.mxu0 %v4799
      %v4965 = vpop.f32.mrf.mxu0
      %v4966 = vadd.f32 0.0, %v4965
      %v4967 = vpop.f32.mrf.mxu0
      %v4968 = vpop.f32.mrf.mxu0
      %v4969 = vadd.f32 0.0, %v4968
      %v4970 = vpop.f32.mrf.mxu0
      %4971 = vmatprep.mubr.bf16.mxu0 0
      %4972 = vmatmul.mubr.bf16.gmra.mxu0 %v4801
      %v4973 = vpop.f32.mrf.mxu0
      %v4974 = vadd.f32 0.0, %v4973
      %v4975 = vpop.f32.mrf.mxu0
      %v4976 = vpop.f32.mrf.mxu0
      %v4977 = vadd.f32 0.0, %v4976
      %v4978 = vpop.f32.mrf.mxu0
      %4979 = vmatprep.mubr.bf16.mxu0 0
      %4980 = vmatmul.mubr.bf16.gmra.mxu0 %v4803
      %v4981 = vpop.f32.mrf.mxu0
      %v4982 = vadd.f32 0.0, %v4981
      %v4983 = vpop.f32.mrf.mxu0
      %v4984 = vpop.f32.mrf.mxu0
      %v4985 = vadd.f32 0.0, %v4984
      %v4986 = vpop.f32.mrf.mxu0
      %4987 = vmatprep.mubr.bf16.mxu0 0
      %4988 = vmatmul.mubr.bf16.gmra.mxu0 %v4805
      %v4989 = vpop.f32.mrf.mxu0
      %v4990 = vadd.f32 0.0, %v4989
      %v4991 = vpop.f32.mrf.mxu0
      %v4992 = vpop.f32.mrf.mxu0
      %v4993 = vadd.f32 0.0, %v4992
      %v4994 = vpop.f32.mrf.mxu0
      %4995 = vmatprep.mubr.bf16.mxu0 0
      %4996 = vmatmul.mubr.bf16.gmra.mxu0 %v4807
      %v4997 = vpop.f32.mrf.mxu0
      %v4998 = vadd.f32 0.0, %v4997
      %v4999 = vpop.f32.mrf.mxu0
      %v5000 = vpop.f32.mrf.mxu0
      %v5001 = vadd.f32 0.0, %v5000
      %v5002 = vpop.f32.mrf.mxu0
      %5003 = vmatprep.mubr.bf16.mxu0 0
      %5004 = vmatmul.mubr.bf16.gmra.mxu0 %v4809
      %v5005 = vpop.f32.mrf.mxu0
      %v5006 = vadd.f32 0.0, %v5005
      %v5007 = vpop.f32.mrf.mxu0
      %v5008 = vpop.f32.mrf.mxu0
      %v5009 = vadd.f32 0.0, %v5008
      %v5010 = vpop.f32.mrf.mxu0
      %5011 = vmatprep.mubr.bf16.mxu0 0
      %5012 = vmatmul.mubr.bf16.gmra.mxu0 %v4811
      %v5013 = vpop.f32.mrf.mxu0
      %v5014 = vadd.f32 0.0, %v5013
      %v5015 = vpop.f32.mrf.mxu0
      %v5016 = vpop.f32.mrf.mxu0
      %v5017 = vadd.f32 0.0, %v5016
      %v5018 = vpop.f32.mrf.mxu0
      %5019 = vmatprep.mubr.bf16.mxu0 0
      %5020 = vmatmul.mubr.bf16.gmra.mxu0 %v4813
      %v5021 = vpop.f32.mrf.mxu0
      %v5022 = vadd.f32 0.0, %v5021
      %v5023 = vpop.f32.mrf.mxu0
      %v5024 = vpop.f32.mrf.mxu0
      %v5025 = vadd.f32 0.0, %v5024
      %v5026 = vpop.f32.mrf.mxu0
      %5027 = vmatprep.mubr.bf16.mxu0 0
      %5028 = vmatmul.mubr.bf16.gmra.mxu0 %v4815
      %v5029 = vpop.f32.mrf.mxu0
      %v5030 = vadd.f32 0.0, %v5029
      %v5031 = vpop.f32.mrf.mxu0
      %v5032 = vpop.f32.mrf.mxu0
      %v5033 = vadd.f32 0.0, %v5032
      %v5034 = vpop.f32.mrf.mxu0
      %5035 = vmatprep.mubr.bf16.mxu0 0
      %5036 = vmatmul.mubr.bf16.gmra.mxu0 %v4817
      %v5037 = vpop.f32.mrf.mxu0
      %v5038 = vadd.f32 0.0, %v5037
      %v5039 = vpop.f32.mrf.mxu0
      %v5040 = vpop.f32.mrf.mxu0
      %v5041 = vadd.f32 0.0, %v5040
      %v5042 = vpop.f32.mrf.mxu0
      %5043 = vmatprep.mubr.bf16.mxu0 0
      %5044 = vmatmul.mubr.bf16.gmra.mxu0 %v4819
      %v5045 = vpop.f32.mrf.mxu0
      %v5046 = vadd.f32 0.0, %v5045
      %v5047 = vpop.f32.mrf.mxu0
      %v5048 = vpop.f32.mrf.mxu0
      %v5049 = vadd.f32 0.0, %v5048
      %v5050 = vpop.f32.mrf.mxu0
      %5051 = vmatprep.mubr.bf16.mxu0 0
      %5052 = vmatmul.mubr.bf16.gmra.mxu0 %v4821
      %v5053 = vpop.f32.mrf.mxu0
      %v5054 = vadd.f32 0.0, %v5053
      %v5055 = vpop.f32.mrf.mxu0
      %v5056 = vpop.f32.mrf.mxu0
      %v5057 = vadd.f32 0.0, %v5056
      %v5058 = vpop.f32.mrf.mxu0
      %5059 = vmatprep.mubr.bf16.mxu0 0
      %5060 = vmatmul.mubr.bf16.gmra.mxu0 %v4823
      %v5061 = vpop.f32.mrf.mxu0
      %v5062 = vadd.f32 0.0, %v5061
      %v5063 = vpop.f32.mrf.mxu0
      %v5064 = vpop.f32.mrf.mxu0
      %v5065 = vadd.f32 0.0, %v5064
      %v5066 = vpop.f32.mrf.mxu0
      %5067 = vmatprep.mubr.bf16.mxu0 0
      %5068 = vmatmul.mubr.bf16.gmra.mxu0 %v4825
      %v5069 = vpop.f32.mrf.mxu0
      %v5070 = vadd.f32 0.0, %v5069
      %v5071 = vpop.f32.mrf.mxu0
      %v5072 = vpop.f32.mrf.mxu0
      %v5073 = vadd.f32 0.0, %v5072
      %v5074 = vpop.f32.mrf.mxu0
      %5075 = vmatprep.mubr.bf16.mxu0 0
      %5076 = vmatmul.mubr.bf16.gmra.mxu0 %v4827
      %v5077 = vpop.f32.mrf.mxu0
      %v5078 = vadd.f32 0.0, %v5077
      %v5079 = vpop.f32.mrf.mxu0
      %v5080 = vpop.f32.mrf.mxu0
      %v5081 = vadd.f32 0.0, %v5080
      %v5082 = vpop.f32.mrf.mxu0
      %5083 = vmatprep.mubr.bf16.mxu0 0
      %5084 = vmatmul.mubr.bf16.gmra.mxu0 %v4829
      %v5085 = vpop.f32.mrf.mxu0
      %v5086 = vadd.f32 0.0, %v5085
      %v5087 = vpop.f32.mrf.mxu0
      %v5088 = vpop.f32.mrf.mxu0
      %v5089 = vadd.f32 0.0, %v5088
      %v5090 = vpop.f32.mrf.mxu0
      %5091 = vmatprep.mubr.bf16.mxu0 0
      %5092 = vmatmul.mubr.bf16.gmra.mxu0 %v4831
      %v5093 = vpop.f32.mrf.mxu0
      %v5094 = vadd.f32 0.0, %v5093
      %v5095 = vpop.f32.mrf.mxu0
      %v5096 = vpop.f32.mrf.mxu0
      %v5097 = vadd.f32 0.0, %v5096
      %v5098 = vpop.f32.mrf.mxu0
      %5099 = vmatprep.mubr.bf16.mxu0 0
      %5100 = vmatmul.mubr.bf16.gmra.mxu0 %v4833
      %v5101 = vpop.f32.mrf.mxu0
      %v5102 = vadd.f32 0.0, %v5101
      %v5103 = vpop.f32.mrf.mxu0
      %v5104 = vpop.f32.mrf.mxu0
      %v5105 = vadd.f32 0.0, %v5104
      %v5106 = vpop.f32.mrf.mxu0
      %5107 = vmatprep.mubr.bf16.mxu0 0
      %5108 = vmatmul.mubr.bf16.gmra.mxu0 %v4835
      %v5109 = vpop.f32.mrf.mxu0
      %v5110 = vadd.f32 0.0, %v5109
      %v5111 = vpop.f32.mrf.mxu0
      %v5112 = vpop.f32.mrf.mxu0
      %v5113 = vadd.f32 0.0, %v5112
      %v5114 = vpop.f32.mrf.mxu0
      %5115 = vmatprep.mubr.bf16.mxu0 0
      %5116 = vmatmul.mubr.bf16.gmra.mxu0 %v4837
      %v5117 = vpop.f32.mrf.mxu0
      %v5118 = vadd.f32 0.0, %v5117
      %v5119 = vpop.f32.mrf.mxu0
      %v5120 = vpop.f32.mrf.mxu0
      %v5121 = vadd.f32 0.0, %v5120
      %v5122 = vpop.f32.mrf.mxu0
      %5123 = vmatprep.mubr.bf16.mxu0 0
      %5124 = vmatmul.mubr.bf16.gmra.mxu0 %v4839
      %v5125 = vpop.f32.mrf.mxu0
      %v5126 = vadd.f32 0.0, %v5125
      %v5127 = vpop.f32.mrf.mxu0
      %v5128 = vpop.f32.mrf.mxu0
      %v5129 = vadd.f32 0.0, %v5128
      %v5130 = vpop.f32.mrf.mxu0
      %5131 = vmatprep.mubr.bf16.mxu0 0
      %5132 = vmatmul.mubr.bf16.gmra.mxu0 %v4841
      %v5133 = vpop.f32.mrf.mxu0
      %v5134 = vadd.f32 0.0, %v5133
      %v5135 = vpop.f32.mrf.mxu0
      %v5136 = vpop.f32.mrf.mxu0
      %v5137 = vadd.f32 0.0, %v5136
      %v5138 = vpop.f32.mrf.mxu0
      %5139 = vmatprep.mubr.bf16.mxu0 0
      %5140 = vmatmul.mubr.bf16.gmra.mxu0 %v4843
      %v5141 = vpop.f32.mrf.mxu0
      %v5142 = vadd.f32 0.0, %v5141
      %v5143 = vpop.f32.mrf.mxu0
      %v5144 = vpop.f32.mrf.mxu0
      %v5145 = vadd.f32 0.0, %v5144
      %v5146 = vpop.f32.mrf.mxu0
      %5147 = vmatprep.mubr.bf16.mxu0 0
      %5148 = vmatmul.mubr.bf16.gmra.mxu0 %v4845
      %v5149 = vpop.f32.mrf.mxu0
      %v5150 = vadd.f32 0.0, %v5149
      %v5151 = vpop.f32.mrf.mxu0
      %v5152 = vpop.f32.mrf.mxu0
      %v5153 = vadd.f32 0.0, %v5152
      %v5154 = vpop.f32.mrf.mxu0
      %5155 = vmatprep.mubr.bf16.mxu0 0
      %5156 = vmatmul.mubr.bf16.gmra.mxu0 %v4847
      %v5157 = vpop.f32.mrf.mxu0
      %v5158 = vadd.f32 0.0, %v5157
      %v5159 = vpop.f32.mrf.mxu0
      %v5160 = vpop.f32.mrf.mxu0
      %v5161 = vadd.f32 0.0, %v5160
      %v5162 = vpop.f32.mrf.mxu0
      %5163 = vmatprep.mubr.bf16.mxu0 0
      %5164 = vmatmul.mubr.bf16.gmra.mxu0 %v4849
      %v5165 = vpop.f32.mrf.mxu0
      %v5166 = vadd.f32 0.0, %v5165
      %v5167 = vpop.f32.mrf.mxu0
      %v5168 = vpop.f32.mrf.mxu0
      %v5169 = vadd.f32 0.0, %v5168
      %v5170 = vpop.f32.mrf.mxu0
      %5171 = vmatprep.mubr.bf16.mxu0 0
      %5172 = vmatmul.mubr.bf16.gmra.mxu0 %v4851
      %v5173 = vpop.f32.mrf.mxu0
      %v5174 = vadd.f32 0.0, %v5173
      %v5175 = vpop.f32.mrf.mxu0
      %v5176 = vpop.f32.mrf.mxu0
      %v5177 = vadd.f32 0.0, %v5176
      %v5178 = vpop.f32.mrf.mxu0
      %5179 = vmatprep.mubr.bf16.mxu0 0
      %5180 = vmatmul.mubr.bf16.gmra.mxu0 %v4853
      %v5181 = vpop.f32.mrf.mxu0
      %v5182 = vadd.f32 0.0, %v5181
      %v5183 = vpop.f32.mrf.mxu0
      %v5184 = vpop.f32.mrf.mxu0
      %v5185 = vadd.f32 0.0, %v5184
      %v5186 = vpop.f32.mrf.mxu0
      %5187 = vmatprep.mubr.bf16.mxu0 0
      %5188 = vmatmul.mubr.bf16.gmra.mxu0 %v4855
      %v5189 = vpop.f32.mrf.mxu0
      %v5190 = vadd.f32 0.0, %v5189
      %v5191 = vpop.f32.mrf.mxu0
      %v5192 = vpop.f32.mrf.mxu0
      %v5193 = vadd.f32 0.0, %v5192
      %v5194 = vpop.f32.mrf.mxu0
      %5195 = vmatprep.mubr.bf16.mxu0 0
      %5196 = vmatmul.mubr.bf16.gmra.mxu0 %v4857
      %v5197 = vpop.f32.mrf.mxu0
      %v5198 = vadd.f32 0.0, %v5197
      %v5199 = vpop.f32.mrf.mxu0
      %v5200 = vpop.f32.mrf.mxu0
      %v5201 = vadd.f32 0.0, %v5200
      %v5202 = vpop.f32.mrf.mxu0
      %5203 = vmatprep.mubr.bf16.mxu0 0
      %5204 = vmatmul.mubr.bf16.gmra.mxu0 %v4859
      %v5205 = vpop.f32.mrf.mxu0
      %v5206 = vadd.f32 0.0, %v5205
      %v5207 = vpop.f32.mrf.mxu0
      %v5208 = vpop.f32.mrf.mxu0
      %v5209 = vadd.f32 0.0, %v5208
      %v5210 = vpop.f32.mrf.mxu0
      %5211 = vmatprep.mubr.bf16.mxu0 0
      %5212 = vmatmul.mubr.bf16.gmra.mxu0 %v4861
      %v5213 = vpop.f32.mrf.mxu0
      %v5214 = vadd.f32 0.0, %v5213
      %v5215 = vpop.f32.mrf.mxu0
      %v5216 = vpop.f32.mrf.mxu0
      %v5217 = vadd.f32 0.0, %v5216
      %v5218 = vpop.f32.mrf.mxu0
      %5219 = vmatprep.mubr.bf16.mxu0 0
      %5220 = vmatmul.mubr.bf16.gmra.mxu0 %v4863
      %v5221 = vpop.f32.mrf.mxu0
      %v5222 = vadd.f32 0.0, %v5221
      %v5223 = vpop.f32.mrf.mxu0
      %v5224 = vpop.f32.mrf.mxu0
      %v5225 = vadd.f32 0.0, %v5224
      %v5226 = vpop.f32.mrf.mxu0
      %5227 = vmatprep.mubr.bf16.mxu0 0
      %5228 = vmatmul.mubr.bf16.gmra.mxu0 %v4865
      %v5229 = vpop.f32.mrf.mxu0
      %v5230 = vadd.f32 0.0, %v5229
      %v5231 = vpop.f32.mrf.mxu0
      %v5232 = vpop.f32.mrf.mxu0
      %v5233 = vadd.f32 0.0, %v5232
      %v5234 = vpop.f32.mrf.mxu0
      %5235 = vmatprep.mubr.bf16.mxu0 0
      %5236 = vmatmul.mubr.bf16.gmra.mxu0 %v4867
      %v5237 = vpop.f32.mrf.mxu0
      %v5238 = vadd.f32 0.0, %v5237
      %v5239 = vpop.f32.mrf.mxu0
      %v5240 = vpop.f32.mrf.mxu0
      %v5241 = vadd.f32 0.0, %v5240
      %v5242 = vpop.f32.mrf.mxu0
      %5243 = vmatprep.mubr.bf16.mxu0 0
      %5244 = vmatmul.mubr.bf16.gmra.mxu0 %v4869
      %v5245 = vpop.f32.mrf.mxu0
      %v5246 = vadd.f32 0.0, %v5245
      %v5247 = vpop.f32.mrf.mxu0
      %v5248 = vpop.f32.mrf.mxu0
      %v5249 = vadd.f32 0.0, %v5248
      %v5250 = vpop.f32.mrf.mxu0
      %5251 = vmatprep.mubr.bf16.mxu0 0
      %5252 = vmatmul.mubr.bf16.gmra.mxu0 %v4871
      %v5253 = vpop.f32.mrf.mxu0
      %v5254 = vadd.f32 0.0, %v5253
      %v5255 = vpop.f32.mrf.mxu0
      %v5256 = vpop.f32.mrf.mxu0
      %v5257 = vadd.f32 0.0, %v5256
      %v5258 = vpop.f32.mrf.mxu0
      %5259 = vmatprep.mubr.bf16.mxu0 0
      %5260 = vmatmul.mubr.bf16.gmra.mxu0 %v4873
      %v5261 = vpop.f32.mrf.mxu0
      %v5262 = vadd.f32 0.0, %v5261
      %v5263 = vpop.f32.mrf.mxu0
      %v5264 = vpop.f32.mrf.mxu0
      %v5265 = vadd.f32 0.0, %v5264
      %v5266 = vpop.f32.mrf.mxu0
      %5267 = vmatprep.mubr.bf16.mxu0 0
      %5268 = vmatmul.mubr.bf16.gmra.mxu0 %v4875
      %v5269 = vpop.f32.mrf.mxu0
      %v5270 = vadd.f32 0.0, %v5269
      %v5271 = vpop.f32.mrf.mxu0
      %v5272 = vpop.f32.mrf.mxu0
      %v5273 = vadd.f32 0.0, %v5272
      %v5274 = vpop.f32.mrf.mxu0
      %5275 = vmatprep.mubr.bf16.mxu0 0
      %5276 = vmatmul.mubr.bf16.gmra.mxu0 %v4877
      %v5277 = vpop.f32.mrf.mxu0
      %v5278 = vadd.f32 0.0, %v5277
      %v5279 = vpop.f32.mrf.mxu0
      %v5280 = vpop.f32.mrf.mxu0
      %v5281 = vadd.f32 0.0, %v5280
      %v5282 = vpop.f32.mrf.mxu0
      %5283 = vmatprep.mubr.bf16.mxu0 0
      %5284 = vmatmul.mubr.bf16.gmra.mxu0 %v4879
      %v5285 = vpop.f32.mrf.mxu0
      %v5286 = vadd.f32 0.0, %v5285
      %v5287 = vpop.f32.mrf.mxu0
      %v5288 = vpop.f32.mrf.mxu0
      %v5289 = vadd.f32 0.0, %v5288
      %v5290 = vpop.f32.mrf.mxu0
      %5291 = vmatprep.mubr.bf16.mxu0 0
      %5292 = vmatmul.mubr.bf16.gmra.mxu0 %v4881
      %v5293 = vpop.f32.mrf.mxu0
      %v5294 = vadd.f32 0.0, %v5293
      %v5295 = vpop.f32.mrf.mxu0
      %v5296 = vpop.f32.mrf.mxu0
      %v5297 = vadd.f32 0.0, %v5296
      %v5298 = vpop.f32.mrf.mxu0
      %5299 = vmatprep.mubr.bf16.mxu0 0
      %5300 = vmatmul.mubr.bf16.gmra.mxu0 %v4883
      %v5301 = vpop.f32.mrf.mxu0
      %v5302 = vadd.f32 0.0, %v5301
      %v5303 = vpop.f32.mrf.mxu0
      %v5304 = vpop.f32.mrf.mxu0
      %v5305 = vadd.f32 0.0, %v5304
      %v5306 = vpop.f32.mrf.mxu0
      %5307 = vmatprep.mubr.bf16.mxu0 0
      %5308 = vmatmul.mubr.bf16.gmra.mxu0 %v4885
      %v5309 = vpop.f32.mrf.mxu0
      %v5310 = vadd.f32 0.0, %v5309
      %v5311 = vpop.f32.mrf.mxu0
      %v5312 = vpop.f32.mrf.mxu0
      %v5313 = vadd.f32 0.0, %v5312
      %v5314 = vpop.f32.mrf.mxu0
      %5315 = vmatprep.mubr.bf16.mxu0 0
      %5316 = vmatmul.mubr.bf16.gmra.mxu0 %v4887
      %v5317 = vpop.f32.mrf.mxu0
      %v5318 = vadd.f32 0.0, %v5317
      %v5319 = vpop.f32.mrf.mxu0
      %v5320 = vpop.f32.mrf.mxu0
      %v5321 = vadd.f32 0.0, %v5320
      %v5322 = vpop.f32.mrf.mxu0
      %5323 = vmatprep.mubr.bf16.mxu0 0
      %5324 = vmatmul.mubr.bf16.gmra.mxu0 %v4889
      %v5325 = vpop.f32.mrf.mxu0
      %v5326 = vadd.f32 0.0, %v5325
      %v5327 = vpop.f32.mrf.mxu0
      %v5328 = vpop.f32.mrf.mxu0
      %v5329 = vadd.f32 0.0, %v5328
      %v5330 = vpop.f32.mrf.mxu0
      %5331 = vmatprep.mubr.bf16.mxu0 0
      %5332 = vmatmul.mubr.bf16.gmra.mxu0 %v4891
      %v5333 = vpop.f32.mrf.mxu0
      %v5334 = vadd.f32 0.0, %v5333
      %v5335 = vpop.f32.mrf.mxu0
      %v5336 = vpop.f32.mrf.mxu0
      %v5337 = vadd.f32 0.0, %v5336
      %v5338 = vpop.f32.mrf.mxu0
      %5339 = vmatprep.mubr.bf16.mxu0 0
      %5340 = vmatmul.mubr.bf16.gmra.mxu0 %v4893
      %v5341 = vpop.f32.mrf.mxu0
      %v5342 = vadd.f32 0.0, %v5341
      %v5343 = vpop.f32.mrf.mxu0
      %v5344 = vpop.f32.mrf.mxu0
      %v5345 = vadd.f32 0.0, %v5344
      %v5346 = vpop.f32.mrf.mxu0
      %5347 = vmatprep.mubr.bf16.mxu0 0
      %5348 = vmatmul.mubr.bf16.gmra.mxu0 %v4895
      %v5349 = vpop.f32.mrf.mxu0
      %v5350 = vadd.f32 0.0, %v5349
      %v5351 = vpop.f32.mrf.mxu0
      %v5352 = vpop.f32.mrf.mxu0
      %v5353 = vadd.f32 0.0, %v5352
      %v5354 = vpop.f32.mrf.mxu0
      %5355 = vmatprep.mubr.bf16.mxu0 0
      %5356 = vmatmul.mubr.bf16.gmra.mxu0 %v4897
      %v5357 = vpop.f32.mrf.mxu0
      %v5358 = vadd.f32 0.0, %v5357
      %v5359 = vpop.f32.mrf.mxu0
      %v5360 = vpop.f32.mrf.mxu0
      %v5361 = vadd.f32 0.0, %v5360
      %v5362 = vpop.f32.mrf.mxu0
      %5363 = vmatprep.mubr.bf16.mxu0 0
      %5364 = vmatmul.mubr.bf16.gmra.mxu0 %v4899
      %v5365 = vpop.f32.mrf.mxu0
      %v5366 = vadd.f32 0.0, %v5365
      %v5367 = vpop.f32.mrf.mxu0
      %v5368 = vpop.f32.mrf.mxu0
      %v5369 = vadd.f32 0.0, %v5368
      %v5370 = vpop.f32.mrf.mxu0
      %5371 = vmatprep.mubr.bf16.mxu0 0
      %5372 = vmatmul.mubr.bf16.gmra.mxu0 %v4901
      %v5373 = vpop.f32.mrf.mxu0
      %v5374 = vadd.f32 0.0, %v5373
      %v5375 = vpop.f32.mrf.mxu0
      %v5376 = vpop.f32.mrf.mxu0
      %v5377 = vadd.f32 0.0, %v5376
      %v5378 = vpop.f32.mrf.mxu0
      %5379 = vmatprep.mubr.bf16.mxu0 0
      %5380 = vmatmul.mubr.bf16.gmra.mxu0 %v4903
      %v5381 = vpop.f32.mrf.mxu0
      %v5382 = vadd.f32 0.0, %v5381
      %v5383 = vpop.f32.mrf.mxu0
      %v5384 = vpop.f32.mrf.mxu0
      %v5385 = vadd.f32 0.0, %v5384
      %v5386 = vpop.f32.mrf.mxu0
      %5387 = vmatprep.mubr.bf16.mxu0 0
      %5388 = vmatmul.mubr.bf16.gmra.mxu0 %v4905
      %v5389 = vpop.f32.mrf.mxu0
      %v5390 = vadd.f32 0.0, %v5389
      %v5391 = vpop.f32.mrf.mxu0
      %v5392 = vpop.f32.mrf.mxu0
      %v5393 = vadd.f32 0.0, %v5392
      %v5394 = vpop.f32.mrf.mxu0
      %5395 = vmatprep.mubr.bf16.mxu0 0
      %5396 = vmatmul.mubr.bf16.gmra.mxu0 %v4907
      %v5397 = vpop.f32.mrf.mxu0
      %v5398 = vadd.f32 0.0, %v5397
      %v5399 = vpop.f32.mrf.mxu0
      %v5400 = vpop.f32.mrf.mxu0
      %v5401 = vadd.f32 0.0, %v5400
      %v5402 = vpop.f32.mrf.mxu0
      %5403 = vmatprep.mubr.bf16.mxu0 0
      %5404 = vmatmul.mubr.bf16.gmra.mxu0 %v4909
      %v5405 = vpop.f32.mrf.mxu0
      %v5406 = vadd.f32 0.0, %v5405
      %v5407 = vpop.f32.mrf.mxu0
      %v5408 = vpop.f32.mrf.mxu0
      %v5409 = vadd.f32 0.0, %v5408
      %v5410 = vpop.f32.mrf.mxu0
      %5411 = vmatprep.mubr.bf16.mxu0 0
      %5412 = vmatmul.mubr.bf16.gmra.mxu0 %v4911
      %v5413 = vpop.f32.mrf.mxu0
      %v5414 = vadd.f32 0.0, %v5413
      %v5415 = vpop.f32.mrf.mxu0
      %v5416 = vpop.f32.mrf.mxu0
      %v5417 = vadd.f32 0.0, %v5416
      %v5418 = vpop.f32.mrf.mxu0
      %5419 = vmatprep.mubr.bf16.mxu0 0
      %5420 = vmatmul.mubr.bf16.gmra.mxu0 %v4913
      %v5421 = vpop.f32.mrf.mxu0
      %v5422 = vadd.f32 0.0, %v5421
      %v5423 = vpop.f32.mrf.mxu0
      %v5424 = vpop.f32.mrf.mxu0
      %v5425 = vadd.f32 0.0, %v5424
      %v5426 = vpop.f32.mrf.mxu0
      %5427 = vmatprep.mubr.bf16.mxu0 0
      %5428 = vmatmul.mubr.bf16.gmra.mxu0 %v4915
      %v5429 = vpop.f32.mrf.mxu0
      %v5430 = vadd.f32 0.0, %v5429
      %v5431 = vpop.f32.mrf.mxu0
      %v5432 = vpop.f32.mrf.mxu0
      %v5433 = vadd.f32 0.0, %v5432
      %v5434 = vpop.f32.mrf.mxu0
      %5435 = vmatprep.mubr.bf16.mxu0 0
      %5436 = vmatmul.mubr.bf16.gmra.mxu0 %v4917
      %v5437 = vpop.f32.mrf.mxu0
      %v5438 = vadd.f32 0.0, %v5437
      %v5439 = vpop.f32.mrf.mxu0
      %v5440 = vpop.f32.mrf.mxu0
      %v5441 = vadd.f32 0.0, %v5440
      %v5442 = vpop.f32.mrf.mxu0
      %5443 = vmatprep.mubr.bf16.mxu0 0
      %5444 = vmatmul.mubr.bf16.gmra.mxu0 %v4919
      %v5445 = vpop.f32.mrf.mxu0
      %v5446 = vadd.f32 0.0, %v5445
      %v5447 = vpop.f32.mrf.mxu0
      %v5448 = vpop.f32.mrf.mxu0
      %v5449 = vadd.f32 0.0, %v5448
      %v5450 = vpop.f32.mrf.mxu0
      %5451 = vmatprep.mubr.bf16.mxu0 0
      %5452 = vmatmul.mubr.bf16.gmra.mxu0 %v4921
      %v5453 = vpop.f32.mrf.mxu0
      %v5454 = vadd.f32 0.0, %v5453
      %v5455 = vpop.f32.mrf.mxu0
      %v5456 = vpop.f32.mrf.mxu0
      %v5457 = vadd.f32 0.0, %v5456
      %v5458 = vpop.f32.mrf.mxu0
      %5459 = vmatprep.mubr.bf16.mxu0 0
      %5460 = vmatmul.mubr.bf16.gmra.mxu0 %v4923
      %v5461 = vpop.f32.mrf.mxu0
      %v5462 = vadd.f32 0.0, %v5461
      %v5463 = vpop.f32.mrf.mxu0
      %v5464 = vpop.f32.mrf.mxu0
      %v5465 = vadd.f32 0.0, %v5464
      %v5466 = vpop.f32.mrf.mxu0
      %5467 = vmatprep.mubr.bf16.mxu0 0
      %5468 = vmatmul.mubr.bf16.gmra.mxu0 %v4925
      %v5469 = vpop.f32.mrf.mxu0
      %v5470 = vadd.f32 0.0, %v5469
      %v5471 = vpop.f32.mrf.mxu0
      %v5472 = vpop.f32.mrf.mxu0
      %v5473 = vadd.f32 0.0, %v5472
      %v5474 = vpop.f32.mrf.mxu0
      %5475 = vdwg.mxu0
      %v5476 = vtanh.pop %v4966
      %v5477 = vtanh.pop %v4969
      %v5478 = vtanh.pop %v4974
      %v5479 = vtanh.pop %v4977
      %v5480 = vtanh.pop %v4982
      %v5481 = vtanh.pop %v4985
      %v5482 = vtanh.pop %v4990
      %v5483 = vtanh.pop %v4993
      %v5484 = vtanh.pop %v4998
      %v5485 = vtanh.pop %v5001
      %v5486 = vtanh.pop %v5006
      %v5487 = vtanh.pop %v5009
      %v5488 = vtanh.pop %v5014
      %v5489 = vtanh.pop %v5017
      %v5490 = vtanh.pop %v5022
      %v5491 = vtanh.pop %v5025
      %v5492 = vtanh.pop %v5030
      %v5493 = vtanh.pop %v5033
      %v5494 = vtanh.pop %v5038
      %v5495 = vtanh.pop %v5041
      %v5496 = vtanh.pop %v5046
      %v5497 = vtanh.pop %v5049
      %v5498 = vtanh.pop %v5054
      %v5499 = vtanh.pop %v5057
      %v5500 = vtanh.pop %v5062
      %v5501 = vtanh.pop %v5065
      %v5502 = vtanh.pop %v5070
      %v5503 = vtanh.pop %v5073
      %v5504 = vtanh.pop %v5078
      %v5505 = vtanh.pop %v5081
      %v5506 = vtanh.pop %v5086
      %v5507 = vtanh.pop %v5089
      %v5508 = vtanh.pop %v5094
      %v5509 = vtanh.pop %v5097
      %v5510 = vtanh.pop %v5102
      %v5511 = vtanh.pop %v5105
      %v5512 = vtanh.pop %v5110
      %v5513 = vtanh.pop %v5113
      %v5514 = vtanh.pop %v5118
      %v5515 = vtanh.pop %v5121
      %v5516 = vtanh.pop %v5126
      %v5517 = vtanh.pop %v5129
      %v5518 = vtanh.pop %v5134
      %v5519 = vtanh.pop %v5137
      %v5520 = vtanh.pop %v5142
      %v5521 = vtanh.pop %v5145
      %v5522 = vtanh.pop %v5150
      %v5523 = vtanh.pop %v5153
      %v5524 = vtanh.pop %v5158
      %v5525 = vtanh.pop %v5161
      %v5526 = vtanh.pop %v5166
      %v5527 = vtanh.pop %v5169
      %v5528 = vtanh.pop %v5174
      %v5529 = vtanh.pop %v5177
      %v5530 = vtanh.pop %v5182
      %v5531 = vtanh.pop %v5185
      %v5532 = vtanh.pop %v5190
      %v5533 = vtanh.pop %v5193
      %v5534 = vtanh.pop %v5198
      %v5535 = vtanh.pop %v5201
      %v5536 = vtanh.pop %v5206
      %v5537 = vtanh.pop %v5209
      %v5538 = vtanh.pop %v5214
      %v5539 = vtanh.pop %v5217
      %v5540 = vtanh.pop %v5222
      %v5541 = vtanh.pop %v5225
      %v5542 = vtanh.pop %v5230
      %v5543 = vtanh.pop %v5233
      %v5544 = vtanh.pop %v5238
      %v5545 = vtanh.pop %v5241
      %v5546 = vtanh.pop %v5246
      %v5547 = vtanh.pop %v5249
      %v5548 = vtanh.pop %v5254
      %v5549 = vtanh.pop %v5257
      %v5550 = vtanh.pop %v5262
      %v5551 = vtanh.pop %v5265
      %v5552 = vtanh.pop %v5270
      %v5553 = vtanh.pop %v5273
      %v5554 = vtanh.pop %v5278
      %v5555 = vtanh.pop %v5281
      %v5556 = vtanh.pop %v5286
      %v5557 = vtanh.pop %v5289
      %v5558 = vtanh.pop %v5294
      %v5559 = vtanh.pop %v5297
      %v5560 = vtanh.pop %v5302
      %v5561 = vtanh.pop %v5305
      %v5562 = vtanh.pop %v5310
      %v5563 = vtanh.pop %v5313
      %v5564 = vtanh.pop %v5318
      %v5565 = vtanh.pop %v5321
      %v5566 = vtanh.pop %v5326
      %v5567 = vtanh.pop %v5329
      %v5568 = vtanh.pop %v5334
      %v5569 = vtanh.pop %v5337
      %v5570 = vtanh.pop %v5342
      %v5571 = vtanh.pop %v5345
      %v5572 = vtanh.pop %v5350
      %v5573 = vtanh.pop %v5353
      %v5574 = vtanh.pop %v5358
      %v5575 = vtanh.pop %v5361
      %v5576 = vtanh.pop %v5366
      %v5577 = vtanh.pop %v5369
      %v5578 = vtanh.pop %v5374
      %v5579 = vtanh.pop %v5377
      %v5580 = vtanh.pop %v5382
      %v5581 = vtanh.pop %v5385
      %v5582 = vtanh.pop %v5390
      %v5583 = vtanh.pop %v5393
      %v5584 = vtanh.pop %v5398
      %v5585 = vtanh.pop %v5401
      %v5586 = vtanh.pop %v5406
      %v5587 = vtanh.pop %v5409
      %v5588 = vtanh.pop %v5414
      %v5589 = vtanh.pop %v5417
      %v5590 = vtanh.pop %v5422
      %v5591 = vtanh.pop %v5425
      %v5592 = vtanh.pop %v5430
      %v5593 = vtanh.pop %v5433
      %v5594 = vtanh.pop %v5438
      %v5595 = vtanh.pop %v5441
      %v5596 = vtanh.pop %v5446
      %v5597 = vtanh.pop %v5449
      %v5598 = vtanh.pop %v5454
      %v5599 = vtanh.pop %v5457
      %v5600 = vtanh.pop %v5462
      %v5601 = vtanh.pop %v5465
      %v5602 = vtanh.pop %v5470
      %v5603 = vtanh.pop %v5473
      %5604 = vst [vmem:[%s234] sm:$0xff] %v5476
      %5605 = vst [vmem:[%s234 + $0x8] sm:$0xff] %v5477
      %5606 = vst [vmem:[%s234 + $0x10] sm:$0xff] %v5478
      %5607 = vst [vmem:[%s234 + $0x18] sm:$0xff] %v5479
      %5608 = vst [vmem:[%s234 + $0x20] sm:$0xff] %v5480
      %5609 = vst [vmem:[%s234 + $0x28] sm:$0xff] %v5481
      %5610 = vst [vmem:[%s234 + $0x30] sm:$0xff] %v5482
      %5611 = vst [vmem:[%s234 + $0x38] sm:$0xff] %v5483
      %5612 = vst [vmem:[%s234 + $0x40] sm:$0xff] %v5484
      %5613 = vst [vmem:[%s234 + $0x48] sm:$0xff] %v5485
      %5614 = vst [vmem:[%s234 + $0x50] sm:$0xff] %v5486
      %5615 = vst [vmem:[%s234 + $0x58] sm:$0xff] %v5487
      %5616 = vst [vmem:[%s234 + $0x60] sm:$0xff] %v5488
      %5617 = vst [vmem:[%s234 + $0x68] sm:$0xff] %v5489
      %5618 = vst [vmem:[%s234 + $0x70] sm:$0xff] %v5490
      %5619 = vst [vmem:[%s234 + $0x78] sm:$0xff] %v5491
      %5620 = vst [vmem:[%s234 + $0x80] sm:$0xff] %v5492
      %5621 = vst [vmem:[%s234 + $0x88] sm:$0xff] %v5493
      %5622 = vst [vmem:[%s234 + $0x90] sm:$0xff] %v5494
      %5623 = vst [vmem:[%s234 + $0x98] sm:$0xff] %v5495
      %5624 = vst [vmem:[%s234 + $0xa0] sm:$0xff] %v5496
      %5625 = vst [vmem:[%s234 + $0xa8] sm:$0xff] %v5497
      %5626 = vst [vmem:[%s234 + $0xb0] sm:$0xff] %v5498
      %5627 = vst [vmem:[%s234 + $0xb8] sm:$0xff] %v5499
      %5628 = vst [vmem:[%s234 + $0xc0] sm:$0xff] %v5500
      %5629 = vst [vmem:[%s234 + $0xc8] sm:$0xff] %v5501
      %5630 = vst [vmem:[%s234 + $0xd0] sm:$0xff] %v5502
      %5631 = vst [vmem:[%s234 + $0xd8] sm:$0xff] %v5503
      %5632 = vst [vmem:[%s234 + $0xe0] sm:$0xff] %v5504
      %5633 = vst [vmem:[%s234 + $0xe8] sm:$0xff] %v5505
      %5634 = vst [vmem:[%s234 + $0xf0] sm:$0xff] %v5506
      %5635 = vst [vmem:[%s234 + $0xf8] sm:$0xff] %v5507
      %5636 = vst [vmem:[%s234 + $0x100] sm:$0xff] %v5508
      %5637 = vst [vmem:[%s234 + $0x108] sm:$0xff] %v5509
      %5638 = vst [vmem:[%s234 + $0x110] sm:$0xff] %v5510
      %5639 = vst [vmem:[%s234 + $0x118] sm:$0xff] %v5511
      %5640 = vst [vmem:[%s234 + $0x120] sm:$0xff] %v5512
      %5641 = vst [vmem:[%s234 + $0x128] sm:$0xff] %v5513
      %5642 = vst [vmem:[%s234 + $0x130] sm:$0xff] %v5514
      %5643 = vst [vmem:[%s234 + $0x138] sm:$0xff] %v5515
      %5644 = vst [vmem:[%s234 + $0x140] sm:$0xff] %v5516
      %5645 = vst [vmem:[%s234 + $0x148] sm:$0xff] %v5517
      %5646 = vst [vmem:[%s234 + $0x150] sm:$0xff] %v5518
      %5647 = vst [vmem:[%s234 + $0x158] sm:$0xff] %v5519
      %5648 = vst [vmem:[%s234 + $0x160] sm:$0xff] %v5520
      %5649 = vst [vmem:[%s234 + $0x168] sm:$0xff] %v5521
      %5650 = vst [vmem:[%s234 + $0x170] sm:$0xff] %v5522
      %5651 = vst [vmem:[%s234 + $0x178] sm:$0xff] %v5523
      %5652 = vst [vmem:[%s234 + $0x180] sm:$0xff] %v5524
      %5653 = vst [vmem:[%s234 + $0x188] sm:$0xff] %v5525
      %5654 = vst [vmem:[%s234 + $0x190] sm:$0xff] %v5526
      %5655 = vst [vmem:[%s234 + $0x198] sm:$0xff] %v5527
      %5656 = vst [vmem:[%s234 + $0x1a0] sm:$0xff] %v5528
      %5657 = vst [vmem:[%s234 + $0x1a8] sm:$0xff] %v5529
      %5658 = vst [vmem:[%s234 + $0x1b0] sm:$0xff] %v5530
      %5659 = vst [vmem:[%s234 + $0x1b8] sm:$0xff] %v5531
      %5660 = vst [vmem:[%s234 + $0x1c0] sm:$0xff] %v5532
      %5661 = vst [vmem:[%s234 + $0x1c8] sm:$0xff] %v5533
      %5662 = vst [vmem:[%s234 + $0x1d0] sm:$0xff] %v5534
      %5663 = vst [vmem:[%s234 + $0x1d8] sm:$0xff] %v5535
      %5664 = vst [vmem:[%s234 + $0x1e0] sm:$0xff] %v5536
      %5665 = vst [vmem:[%s234 + $0x1e8] sm:$0xff] %v5537
      %5666 = vst [vmem:[%s234 + $0x1f0] sm:$0xff] %v5538
      %5667 = vst [vmem:[%s234 + $0x1f8] sm:$0xff] %v5539
      %5668 = vst [vmem:[%s234 + $0x200] sm:$0xff] %v5540
      %5669 = vst [vmem:[%s234 + $0x208] sm:$0xff] %v5541
      %5670 = vst [vmem:[%s234 + $0x210] sm:$0xff] %v5542
      %5671 = vst [vmem:[%s234 + $0x218] sm:$0xff] %v5543
      %5672 = vst [vmem:[%s234 + $0x220] sm:$0xff] %v5544
      %5673 = vst [vmem:[%s234 + $0x228] sm:$0xff] %v5545
      %5674 = vst [vmem:[%s234 + $0x230] sm:$0xff] %v5546
      %5675 = vst [vmem:[%s234 + $0x238] sm:$0xff] %v5547
      %5676 = vst [vmem:[%s234 + $0x240] sm:$0xff] %v5548
      %5677 = vst [vmem:[%s234 + $0x248] sm:$0xff] %v5549
      %5678 = vst [vmem:[%s234 + $0x250] sm:$0xff] %v5550
      %5679 = vst [vmem:[%s234 + $0x258] sm:$0xff] %v5551
      %5680 = vst [vmem:[%s234 + $0x260] sm:$0xff] %v5552
      %5681 = vst [vmem:[%s234 + $0x268] sm:$0xff] %v5553
      %5682 = vst [vmem:[%s234 + $0x270] sm:$0xff] %v5554
      %5683 = vst [vmem:[%s234 + $0x278] sm:$0xff] %v5555
      %5684 = vst [vmem:[%s234 + $0x280] sm:$0xff] %v5556
      %5685 = vst [vmem:[%s234 + $0x288] sm:$0xff] %v5557
      %5686 = vst [vmem:[%s234 + $0x290] sm:$0xff] %v5558
      %5687 = vst [vmem:[%s234 + $0x298] sm:$0xff] %v5559
      %5688 = vst [vmem:[%s234 + $0x2a0] sm:$0xff] %v5560
      %5689 = vst [vmem:[%s234 + $0x2a8] sm:$0xff] %v5561
      %5690 = vst [vmem:[%s234 + $0x2b0] sm:$0xff] %v5562
      %5691 = vst [vmem:[%s234 + $0x2b8] sm:$0xff] %v5563
      %5692 = vst [vmem:[%s234 + $0x2c0] sm:$0xff] %v5564
      %5693 = vst [vmem:[%s234 + $0x2c8] sm:$0xff] %v5565
      %5694 = vst [vmem:[%s234 + $0x2d0] sm:$0xff] %v5566
      %5695 = vst [vmem:[%s234 + $0x2d8] sm:$0xff] %v5567
      %5696 = vst [vmem:[%s234 + $0x2e0] sm:$0xff] %v5568
      %5697 = vst [vmem:[%s234 + $0x2e8] sm:$0xff] %v5569
      %5698 = vst [vmem:[%s234 + $0x2f0] sm:$0xff] %v5570
      %5699 = vst [vmem:[%s234 + $0x2f8] sm:$0xff] %v5571
      %5700 = vst [vmem:[%s234 + $0x300] sm:$0xff] %v5572
      %5701 = vst [vmem:[%s234 + $0x308] sm:$0xff] %v5573
      %5702 = vst [vmem:[%s234 + $0x310] sm:$0xff] %v5574
      %5703 = vst [vmem:[%s234 + $0x318] sm:$0xff] %v5575
      %5704 = vst [vmem:[%s234 + $0x320] sm:$0xff] %v5576
      %5705 = vst [vmem:[%s234 + $0x328] sm:$0xff] %v5577
      %5706 = vst [vmem:[%s234 + $0x330] sm:$0xff] %v5578
      %5707 = vst [vmem:[%s234 + $0x338] sm:$0xff] %v5579
      %5708 = vst [vmem:[%s234 + $0x340] sm:$0xff] %v5580
      %5709 = vst [vmem:[%s234 + $0x348] sm:$0xff] %v5581
      %5710 = vst [vmem:[%s234 + $0x350] sm:$0xff] %v5582
      %5711 = vst [vmem:[%s234 + $0x358] sm:$0xff] %v5583
      %5712 = vst [vmem:[%s234 + $0x360] sm:$0xff] %v5584
      %5713 = vst [vmem:[%s234 + $0x368] sm:$0xff] %v5585
      %5714 = vst [vmem:[%s234 + $0x370] sm:$0xff] %v5586
      %5715 = vst [vmem:[%s234 + $0x378] sm:$0xff] %v5587
      %5716 = vst [vmem:[%s234 + $0x380] sm:$0xff] %v5588
      %5717 = vst [vmem:[%s234 + $0x388] sm:$0xff] %v5589
      %5718 = vst [vmem:[%s234 + $0x390] sm:$0xff] %v5590
      %5719 = vst [vmem:[%s234 + $0x398] sm:$0xff] %v5591
      %5720 = vst [vmem:[%s234 + $0x3a0] sm:$0xff] %v5592
      %5721 = vst [vmem:[%s234 + $0x3a8] sm:$0xff] %v5593
      %5722 = vst [vmem:[%s234 + $0x3b0] sm:$0xff] %v5594
      %5723 = vst [vmem:[%s234 + $0x3b8] sm:$0xff] %v5595
      %5724 = vst [vmem:[%s234 + $0x3c0] sm:$0xff] %v5596
      %5725 = vst [vmem:[%s234 + $0x3c8] sm:$0xff] %v5597
      %5726 = vst [vmem:[%s234 + $0x3d0] sm:$0xff] %v5598
      %5727 = vst [vmem:[%s234 + $0x3d8] sm:$0xff] %v5599
      %5728 = vst [vmem:[%s234 + $0x3e0] sm:$0xff] %v5600
      %5729 = vst [vmem:[%s234 + $0x3e8] sm:$0xff] %v5601
      %5730 = vst [vmem:[%s234 + $0x3f0] sm:$0xff] %v5602
      %5731 = vst [vmem:[%s234 + $0x3f8] sm:$0xff] %v5603
      %p5732 = scmp.lt.s32.totalorder %s19, 1
      %s5733 = scalar_select %p5732, %s19, 1
      %p5734 = scmp.lt.s32.totalorder %s20, 0
      %s5735 = scalar_select %p5734, %s20, 0
      %s5736 = smul.addr %s5733, 128
      %s5737 = sadd.s32 %s5735, %s5736
      %s5738 = smul.addr %s5737, 8
      %s5739 = scalar_lea.vmem %s4, %s5738
      // Predicated region
      $region37: #{generator_forward.9} parent=35 // pred_check
        %p5740 = pneg %p141
      $region38: #{generator_forward.9} parent=35 // pred_check_branch
        %5742 = sbr.rel (%p5740) target = $region40
      $region39: #{generator_forward.9} parent=35 // pred_region
        _
      $region40: #{generator_forward.9} parent=35 // pred_fallthru
        _
    $region36: #{generator_forward.9} parent=5 // pred_fallthru
      _
    %p5743 = scmp.le.s32.totalorder 2, %s10
    // Predicated region
    $region41: #{generator_forward.9} parent=5 // pred_check
      %p5744 = pneg %p5743
    $region42: #{generator_forward.9} parent=5 // pred_check_branch
      %5746 = sbr.rel (%p5744) target = $region44
    $region43: #{generator_forward.9} parent=5 // pred_region
      %s5747 = ssub.s32 %s10, 2
      // Predicated region
      $region45: #{generator_forward.9} parent=43 // pred_check
        %p5748 = pneg %p147
      $region46: #{generator_forward.9} parent=43 // pred_check_branch
        %5750 = sbr.rel (%p5748) target = $region48
      $region47: #{generator_forward.9} parent=43 // pred_region
        %p5751 = scmp.lt.s32.totalorder %s21, 1
        %s5752 = scalar_select %p5751, %s21, 1
        %p5753 = scmp.lt.s32.totalorder %s22, 0
        %s5754 = scalar_select %p5753, %s22, 0
        %s5755 = smul.addr %s5752, 128
        %s5756 = sadd.s32 %s5754, %s5755
        %s5757 = smul.addr %s5756, 8
        %s5758 = scalar_lea.vmem %s4, %s5757
      $region48: #{generator_forward.9} parent=43 // pred_fallthru
        _
    $region44: #{generator_forward.9} parent=5 // pred_fallthru
      _
  $region6: #{generator_forward.9} parent=0 // loop_footer
    %s14 = sadd.s32 1, %s10
  $region7: #{generator_forward.9} parent=0 // loop_footer_branch
    %9 = sbr.rel target = $region3
  $region8: #{generator_forward.9} parent=0 // loop_exit
    _

</llo_original>
